<compile_context>
chip_gen: v5e
topology: v5e:2x2
jax: 0.10.0
libtpu: 0.0.40
codegen_flags: <defaults>
</compile_context>

<pallas_src>
import jax
import jax.numpy as jnp
from jax.experimental import pallas as pl
from jax.experimental.pallas import tpu as pltpu

C_IN = 86        # squeeze channels   (conv2d206 input)
C_MID = 2064     # excite channels    (conv2d206 output / conv2d207 input)
C_OUT = 344      # conv2d207 output channels
C_OUT_PAD = 384  # padded to 3 x 128 lanes
H = W = 7
N = 1
NHW = N * H * W          # 49 valid spatial rows
M_PAD = 56               # rows padded to a multiple of 8 (zero rows)
K_SPLIT = 1024           # w2 K-chunk split point (128-aligned for y slicing)
BN_EPS = 1e-3


def _se_bn_kernel(s_ref, x_ref, w1_ref, b1_ref, w2a_hbm, w2b_hbm,
                  gamma_ref, beta_ref, out_ref, w2a_buf, w2b_buf, sem):
    # s_ref:     (N, C_IN)              f32   squeezed input x647
    # x_ref:     (M_PAD, C_MID)         bf16  x644 rows (cast+pad fused in wrapper)
    # w1_ref:    (C_IN, C_MID)          bf16  conv2d206 weight (pre-transposed)
    # b1_ref:    (1, C_MID)             f32   conv2d206 bias
    # w2a_hbm:   (K_SPLIT, C_OUT_PAD)   bf16  conv2d207 weight, K rows [0, 1024)   (HBM)
    # w2b_hbm:   (C_MID-K_SPLIT, C_OUT_PAD) bf16  K rows [1024, 2064)              (HBM)
    # gamma_ref / beta_ref: (1, C_OUT_PAD) f32  BN affine (padded)
    # out_ref:   (C_OUT, NHW)           f32   channel-major output
    # w2a_buf / w2b_buf: VMEM double buffers, sem: DMA semaphores (2,)

    # Kick off the first w2 chunk DMA immediately; gate math hides under it.
    cp_a = pltpu.make_async_copy(w2a_hbm, w2a_buf, sem.at[0])
    cp_a.start()

    # 1x1 conv #1 + bias: tiny MXU matmul (bf16 operands, f32 accumulation).
    z = jnp.dot(s_ref[...].astype(jnp.bfloat16), w1_ref[...],
                preferred_element_type=jnp.float32) + b1_ref[...]
    gate = jax.nn.sigmoid(z)                                  # (N, C_MID) f32

    # Broadcast gate over all spatial rows in f32; bf16 only for the MXU.
    # Padded rows of x are zero -> padded rows of y / acc stay exactly zero.
    y = (x_ref[...].astype(jnp.float32) * gate).astype(jnp.bfloat16)

    # Double-buffered w2: wait chunk A, start chunk B, compute on A under B's DMA.
    cp_a.wait()
    cp_b = pltpu.make_async_copy(w2b_hbm, w2b_buf, sem.at[1])
    cp_b.start()

    acc = jnp.dot(y[:, :K_SPLIT], w2a_buf[...],
                  preferred_element_type=jnp.float32)         # (M_PAD, C_OUT_PAD)
    cp_b.wait()
    acc = acc + jnp.dot(y[:, K_SPLIT:], w2b_buf[...],
                        preferred_element_type=jnp.float32)

    # BatchNorm2d, training mode: one-pass per-channel batch statistics over
    # the NHW valid rows (zero pad rows contribute nothing to the sums).
    inv_n = 1.0 / float(NHW)
    s1 = jnp.sum(acc, axis=0, keepdims=True)                  # (1, C_OUT_PAD)
    s2 = jnp.sum(acc * acc, axis=0, keepdims=True)
    mean = s1 * inv_n
    var = s2 * inv_n - mean * mean
    scale = jax.lax.rsqrt(var + BN_EPS) * gamma_ref[...]
    shift = beta_ref[...] - mean * scale
    norm = acc * scale + shift                                # (M_PAD, C_OUT_PAD)

    # Transpose in-kernel (idle XLU slot), drop row/channel padding, and store
    # channel-major so the wrapper only needs a free reshape to NCHW.
    norm_t = jnp.transpose(norm, (1, 0))                      # (C_OUT_PAD, M_PAD)
    out_ref[...] = norm_t[:C_OUT, :NHW].astype(out_ref.dtype)


def prepare_params(w1, b1, w2, gamma, beta):
    """One-time parameter prep (do OUTSIDE the jitted forward).

    Converts PyTorch conv weights (O, I, 1, 1) to matmul layout, casts matmul
    weights to bf16, pads output channels 344 -> 384, and pre-chunks w2 into
    two contiguous K-slabs for the in-kernel double-buffered DMA.
    """
    w1_m = jnp.transpose(w1.reshape(C_MID, C_IN), (1, 0)).astype(jnp.bfloat16)
    b1_r = b1.reshape(1, C_MID).astype(jnp.float32)
    w2_m = jnp.transpose(w2.reshape(C_OUT, C_MID), (1, 0))               # (C_MID, C_OUT)
    w2_p = jnp.pad(w2_m, ((0, 0), (0, C_OUT_PAD - C_OUT))).astype(jnp.bfloat16)
    w2_a = w2_p[:K_SPLIT]                                                # (1024, 384)
    w2_b = w2_p[K_SPLIT:]                                                # (1040, 384)
    gamma_p = jnp.pad(gamma.astype(jnp.float32),
                      (0, C_OUT_PAD - C_OUT)).reshape(1, C_OUT_PAD)
    beta_p = jnp.pad(beta.astype(jnp.float32),
                     (0, C_OUT_PAD - C_OUT)).reshape(1, C_OUT_PAD)
    return w1_m, b1_r, w2_a, w2_b, gamma_p, beta_p


def se_conv_bn(x647, x644, w1_m, b1_r, w2_a, w2_b, gamma_p, beta_p):
    """x647: (N, C_IN, 1, 1)  x644: (N, C_MID, H, W)  -> (N, C_OUT, H, W)."""
    n, c_in, _, _ = x647.shape
    _, c_mid, h, w = x644.shape
    assert n == 1, "kernel written for batch size 1 (as in the module)"

    s_rows = x647.reshape(n, c_in)                                       # (N, C_IN) f32
    # NCHW -> rows x channels, with bf16 cast and +7 zero rows fused into the
    # same XLA transpose fusion (single pass over x644, half-width write).
    x_rows = jnp.transpose(x644, (0, 2, 3, 1)).reshape(h * w, c_mid)
    x_rows = jnp.pad(x_rows, ((0, M_PAD - h * w), (0, 0))).astype(jnp.bfloat16)

    vmem = pl.BlockSpec(memory_space=pltpu.MemorySpace.VMEM)
    hbm = pl.BlockSpec(memory_space=pl.ANY)
    out_cm = pl.pallas_call(
        _se_bn_kernel,
        out_shape=jax.ShapeDtypeStruct((C_OUT, h * w), jnp.float32),
        in_specs=[vmem, vmem, vmem, vmem, hbm, hbm, vmem, vmem],
        out_specs=vmem,
        scratch_shapes=[
            pltpu.VMEM((K_SPLIT, C_OUT_PAD), jnp.bfloat16),
            pltpu.VMEM((C_MID - K_SPLIT, C_OUT_PAD), jnp.bfloat16),
            pltpu.SemaphoreType.DMA((2,)),
        ],
    )(s_rows, x_rows, w1_m, b1_r, w2_a, w2_b, gamma_p, beta_p)

    # channel-major (C_OUT, H*W) -> NCHW is a free reshape.
    return out_cm.reshape(n, C_OUT, h, w)


def _reference(x647, x644, w1, b1, w2, gamma, beta):
    """Pure-JAX f32 reference (NCHW, training-mode BN) for validation."""
    z = jax.lax.conv_general_dilated(x647, w1, (1, 1), "VALID",
                                     dimension_numbers=("NCHW", "OIHW", "NCHW"))
    z = z + b1.reshape(1, C_MID, 1, 1)
    y = jax.nn.sigmoid(z) * x644
    o = jax.lax.conv_general_dilated(y, w2, (1, 1), "VALID",
                                     dimension_numbers=("NCHW", "OIHW", "NCHW"))
    mean = jnp.mean(o, axis=(0, 2, 3), keepdims=True)
    var = jnp.mean((o - mean) ** 2, axis=(0, 2, 3), keepdims=True)
    return ((o - mean) * jax.lax.rsqrt(var + BN_EPS)
            * gamma.reshape(1, C_OUT, 1, 1) + beta.reshape(1, C_OUT, 1, 1))


if __name__ == "__main__":
    key = jax.random.PRNGKey(0)
    k0, k1, k2, k3, k4 = jax.random.split(key, 5)

    # Inputs (shapes implied by the module's forward)
    x644 = jax.random.normal(k0, (N, C_MID, H, W), dtype=jnp.float32)
    x647 = jax.random.normal(k1, (N, C_IN, 1, 1), dtype=jnp.float32)

    # Deterministic parameter init (synthetic; PyTorch-like small scales)
    w1 = jax.random.normal(k2, (C_MID, C_IN, 1, 1), dtype=jnp.float32) * 0.05
    b1 = jax.random.normal(k3, (C_MID,), dtype=jnp.float32) * 0.05
    w2 = jax.random.normal(k4, (C_OUT, C_MID, 1, 1), dtype=jnp.float32) * 0.02
    gamma = jnp.ones((C_OUT,), dtype=jnp.float32)   # BatchNorm2d default affine
    beta = jnp.zeros((C_OUT,), dtype=jnp.float32)

    # One-time parameter prep (layout + bf16 + padding + chunking), not jitted.
    params = jax.block_until_ready(prepare_params(w1, b1, w2, gamma, beta))

    # TODO(synk): BatchNorm running_mean/running_var in-place updates (the
    # PyTorch module's training-mode side effect) are not reproduced; only
    # the forward output (batch-statistics normalization) is.
    fwd = jax.jit(se_conv_bn)
    out = fwd(x647, x644, *params)
    out = jax.block_until_ready(out)

    ref = _reference(x647, x644, w1, b1, w2, gamma, beta)
    assert out.shape == (N, C_OUT, H, W), out.shape
    # bf16 matmul weights -> loosened tolerance vs. the f32 reference.
    assert jnp.allclose(out, ref, atol=3e-2, rtol=3e-2), float(
        jnp.max(jnp.abs(out - ref)))

    print("KERNEL_OK")
</pallas_src>

<mosaic_0001>
module attributes {stable_mosaic.version = 11 : i64} {
  func.func @_se_bn_kernel(%arg0: memref<1x86xf32, #tpu.memory_space<vmem>>, %arg1: memref<56x2064xbf16, #tpu.memory_space<vmem>>, %arg2: memref<86x2064xbf16, #tpu.memory_space<vmem>>, %arg3: memref<1x2064xf32, #tpu.memory_space<vmem>>, %arg4: memref<1024x384xbf16, #tpu.memory_space<any>>, %arg5: memref<1040x384xbf16, #tpu.memory_space<any>>, %arg6: memref<1x384xf32, #tpu.memory_space<vmem>>, %arg7: memref<1x384xf32, #tpu.memory_space<vmem>>, %arg8: memref<344x49xf32, #tpu.memory_space<vmem>>, %arg9: memref<1024x384xbf16, #tpu.memory_space<vmem>>, %arg10: memref<1040x384xbf16, #tpu.memory_space<vmem>>, %arg11: memref<2x!tpu.dma_semaphore, #tpu.memory_space<semaphore_mem>>) attributes {dimension_semantics = [], scalar_prefetch = 0 : i64, scratch_operands = 3 : i64, tpu.core_type = #tpu.core_type<tc>} {
    %c0_i32 = arith.constant 0 : i32
    %0 = tpu.memref_slice %arg11[%c0_i32] : memref<2x!tpu.dma_semaphore, #tpu.memory_space<semaphore_mem>> -> memref<1x!tpu.dma_semaphore, #tpu.memory_space<semaphore_mem>>
    %1 = tpu.memref_squeeze %0 : memref<1x!tpu.dma_semaphore, #tpu.memory_space<semaphore_mem>> -> memref<!tpu.dma_semaphore, #tpu.memory_space<semaphore_mem>>
    tpu.enqueue_dma source(%arg4 : memref<1024x384xbf16, #tpu.memory_space<any>>) target(%arg9 : memref<1024x384xbf16, #tpu.memory_space<vmem>>) target_semaphore(%1 : memref<!tpu.dma_semaphore, #tpu.memory_space<semaphore_mem>>)
    %c0 = arith.constant 0 : index
    %c0_0 = arith.constant 0 : index
    %2 = vector.load %arg0[%c0, %c0_0] : memref<1x86xf32, #tpu.memory_space<vmem>>, vector<1x86xf32>
    %3 = arith.truncf %2 : vector<1x86xf32> to vector<1x86xbf16>
    %c0_1 = arith.constant 0 : index
    %c0_2 = arith.constant 0 : index
    %4 = vector.load %arg2[%c0_1, %c0_2] : memref<86x2064xbf16, #tpu.memory_space<vmem>>, vector<86x2064xbf16>
    %cst = arith.constant dense<0.000000e+00> : vector<1x2064xf32>
    %5 = tpu.matmul %3, %4, %cst {dimension_numbers = #tpu.dot_dimension_numbers<[1], [0], [0], [1], [0, 0, 1, 1], [], []>} : vector<1x86xbf16>, vector<86x2064xbf16>, vector<1x2064xf32> -> vector<1x2064xf32>
    %c0_3 = arith.constant 0 : index
    %c0_4 = arith.constant 0 : index
    %6 = vector.load %arg3[%c0_3, %c0_4] : memref<1x2064xf32, #tpu.memory_space<vmem>>, vector<1x2064xf32>
    %7 = arith.addf %5, %6 : vector<1x2064xf32>
    %8 = arith.negf %7 : vector<1x2064xf32>
    %9 = math.exp %8 : vector<1x2064xf32>
    %cst_5 = arith.constant 1.000000e+00 : f32
    %10 = vector.broadcast %cst_5 : f32 to vector<1x2064xf32>
    %11 = arith.addf %10, %9 : vector<1x2064xf32>
    %12 = arith.divf %10, %11 : vector<1x2064xf32>
    %c0_6 = arith.constant 0 : index
    %c0_7 = arith.constant 0 : index
    %13 = vector.load %arg1[%c0_6, %c0_7] : memref<56x2064xbf16, #tpu.memory_space<vmem>>, vector<56x2064xbf16>
    %14 = arith.extf %13 : vector<56x2064xbf16> to vector<56x2064xf32>
    %15 = vector.broadcast %12 : vector<1x2064xf32> to vector<56x2064xf32>
    %16 = arith.mulf %14, %15 : vector<56x2064xf32>
    %17 = arith.truncf %16 : vector<56x2064xf32> to vector<56x2064xbf16>
    %c0_i32_8 = arith.constant 0 : i32
    %18 = tpu.memref_slice %arg11[%c0_i32_8] : memref<2x!tpu.dma_semaphore, #tpu.memory_space<semaphore_mem>> -> memref<1x!tpu.dma_semaphore, #tpu.memory_space<semaphore_mem>>
    %19 = tpu.memref_squeeze %18 : memref<1x!tpu.dma_semaphore, #tpu.memory_space<semaphore_mem>> -> memref<!tpu.dma_semaphore, #tpu.memory_space<semaphore_mem>>
    tpu.wait_dma2 semaphore(%19 : memref<!tpu.dma_semaphore, #tpu.memory_space<semaphore_mem>>) src(%arg4 : memref<1024x384xbf16, #tpu.memory_space<any>>) dst(%arg9 : memref<1024x384xbf16, #tpu.memory_space<vmem>>)
    %c1_i32 = arith.constant 1 : i32
    %20 = tpu.memref_slice %arg11[%c1_i32] : memref<2x!tpu.dma_semaphore, #tpu.memory_space<semaphore_mem>> -> memref<1x!tpu.dma_semaphore, #tpu.memory_space<semaphore_mem>>
    %21 = tpu.memref_squeeze %20 : memref<1x!tpu.dma_semaphore, #tpu.memory_space<semaphore_mem>> -> memref<!tpu.dma_semaphore, #tpu.memory_space<semaphore_mem>>
    tpu.enqueue_dma source(%arg5 : memref<1040x384xbf16, #tpu.memory_space<any>>) target(%arg10 : memref<1040x384xbf16, #tpu.memory_space<vmem>>) target_semaphore(%21 : memref<!tpu.dma_semaphore, #tpu.memory_space<semaphore_mem>>)
    %22 = vector.extract_strided_slice %17 {offsets = [0, 0], sizes = [56, 1024], strides = [1, 1]} : vector<56x2064xbf16> to vector<56x1024xbf16>
    %c0_9 = arith.constant 0 : index
    %c0_10 = arith.constant 0 : index
    %23 = vector.load %arg9[%c0_9, %c0_10] : memref<1024x384xbf16, #tpu.memory_space<vmem>>, vector<1024x384xbf16>
    %cst_11 = arith.constant dense<0.000000e+00> : vector<56x384xf32>
    %24 = tpu.matmul %22, %23, %cst_11 {dimension_numbers = #tpu.dot_dimension_numbers<[1], [0], [0], [1], [0, 0, 1, 1], [], []>} : vector<56x1024xbf16>, vector<1024x384xbf16>, vector<56x384xf32> -> vector<56x384xf32>
    %c1_i32_12 = arith.constant 1 : i32
    %25 = tpu.memref_slice %arg11[%c1_i32_12] : memref<2x!tpu.dma_semaphore, #tpu.memory_space<semaphore_mem>> -> memref<1x!tpu.dma_semaphore, #tpu.memory_space<semaphore_mem>>
    %26 = tpu.memref_squeeze %25 : memref<1x!tpu.dma_semaphore, #tpu.memory_space<semaphore_mem>> -> memref<!tpu.dma_semaphore, #tpu.memory_space<semaphore_mem>>
    tpu.wait_dma2 semaphore(%26 : memref<!tpu.dma_semaphore, #tpu.memory_space<semaphore_mem>>) src(%arg5 : memref<1040x384xbf16, #tpu.memory_space<any>>) dst(%arg10 : memref<1040x384xbf16, #tpu.memory_space<vmem>>)
    %27 = vector.extract_strided_slice %17 {offsets = [0, 1024], sizes = [56, 1040], strides = [1, 1]} : vector<56x2064xbf16> to vector<56x1040xbf16>
    %c0_13 = arith.constant 0 : index
    %c0_14 = arith.constant 0 : index
    %28 = vector.load %arg10[%c0_13, %c0_14] : memref<1040x384xbf16, #tpu.memory_space<vmem>>, vector<1040x384xbf16>
    %cst_15 = arith.constant dense<0.000000e+00> : vector<56x384xf32>
    %29 = tpu.matmul %27, %28, %cst_15 {dimension_numbers = #tpu.dot_dimension_numbers<[1], [0], [0], [1], [0, 0, 1, 1], [], []>} : vector<56x1040xbf16>, vector<1040x384xbf16>, vector<56x384xf32> -> vector<56x384xf32>
    %30 = arith.addf %24, %29 : vector<56x384xf32>
    %cst_16 = arith.constant dense<0.000000e+00> : vector<384xf32>
    %31 = vector.multi_reduction <add>, %30, %cst_16 [0] : vector<56x384xf32> to vector<384xf32>
    %32 = vector.shape_cast %31 : vector<384xf32> to vector<1x384xf32>
    %33 = arith.mulf %30, %30 : vector<56x384xf32>
    %cst_17 = arith.constant dense<0.000000e+00> : vector<384xf32>
    %34 = vector.multi_reduction <add>, %33, %cst_17 [0] : vector<56x384xf32> to vector<384xf32>
    %35 = vector.shape_cast %34 : vector<384xf32> to vector<1x384xf32>
    %cst_18 = arith.constant 0.0204081628 : f32
    %36 = vector.broadcast %cst_18 : f32 to vector<1x384xf32>
    %37 = arith.mulf %32, %36 : vector<1x384xf32>
    %cst_19 = arith.constant 0.0204081628 : f32
    %38 = vector.broadcast %cst_19 : f32 to vector<1x384xf32>
    %39 = arith.mulf %35, %38 : vector<1x384xf32>
    %40 = arith.mulf %37, %37 : vector<1x384xf32>
    %41 = arith.subf %39, %40 : vector<1x384xf32>
    %cst_20 = arith.constant 1.000000e-03 : f32
    %42 = vector.broadcast %cst_20 : f32 to vector<1x384xf32>
    %43 = arith.addf %41, %42 : vector<1x384xf32>
    %44 = math.rsqrt %43 : vector<1x384xf32>
    %c0_21 = arith.constant 0 : index
    %c0_22 = arith.constant 0 : index
    %45 = vector.load %arg6[%c0_21, %c0_22] : memref<1x384xf32, #tpu.memory_space<vmem>>, vector<1x384xf32>
    %46 = arith.mulf %44, %45 : vector<1x384xf32>
    %c0_23 = arith.constant 0 : index
    %c0_24 = arith.constant 0 : index
    %47 = vector.load %arg7[%c0_23, %c0_24] : memref<1x384xf32, #tpu.memory_space<vmem>>, vector<1x384xf32>
    %48 = arith.mulf %37, %46 : vector<1x384xf32>
    %49 = arith.subf %47, %48 : vector<1x384xf32>
    %50 = vector.broadcast %46 : vector<1x384xf32> to vector<56x384xf32>
    %51 = arith.mulf %30, %50 : vector<56x384xf32>
    %52 = vector.broadcast %49 : vector<1x384xf32> to vector<56x384xf32>
    %53 = arith.addf %51, %52 : vector<56x384xf32>
    %54 = tpu.transpose %53, [1, 0] : vector<56x384xf32> -> vector<384x56xf32>
    %55 = vector.extract_strided_slice %54 {offsets = [0, 0], sizes = [344, 49], strides = [1, 1]} : vector<384x56xf32> to vector<344x49xf32>
    %c0_25 = arith.constant 0 : index
    %c0_26 = arith.constant 0 : index
    %56 = vector.load %arg8[%c0_25, %c0_26] : memref<344x49xf32, #tpu.memory_space<vmem>>, vector<344x49xf32>
    tpu.vector_store %arg8[%c0_25, %c0_26], %55 {strides = array<i32>} : memref<344x49xf32, #tpu.memory_space<vmem>>, vector<344x49xf32>,
    return
  }
}

</mosaic_0001>

<llo_original>
// kernel: se_conv_bn.1
$region0: #{se_conv_bn.1}
  #allocation0 [shape = 'u32[]', space=smem, size = 0x4, offset = 0x4, fixed_abs, tag = 'smem constant byte address 0x4 - core index']
  #allocation1 [shape = 'u32[72,128]{1,0:T(1,128)}', space=vmem, size = 0x9000, scoped, tag = 'internal scratch']
  #allocation2 [shape = 'bf16[1024,384]{1,0:T(8,128)(2,1)}', space=vmem, size = 0xc0000, scoped, tag = 'scratch operand']
  #allocation3 [shape = 'bf16[1040,384]{1,0:T(8,128)(2,1)}', space=vmem, size = 0xc3000, scoped, tag = 'scratch operand']
  #allocation4 [shape = 's32[2]{0}', space=sflag, size = 0x8, scoped, tag = 'scratch operand']
  #allocation7 [shape = 's32[]', space=sflag, size = 0x4, offset = 0, fixed_abs, tag = 'sflag constant byte address 0x0 - dummy sync flag']
  #allocation8 [shape = 's32[]', space=sflag, size = 0x4, offset = 0, fixed_abs, tag = 'sflag constant byte address 0x0 - dummy sync flag']
  %s0 = inlined_call_operand.vmem [shape: f32[1,86], index: 0, kind: input, shape index: {}]
  %s1 = inlined_call_operand.vmem [shape: bf16[56,2064], index: 1, kind: input, shape index: {}]
  %s2 = inlined_call_operand.hbm [shape: bf16[86,2064], index: 2, kind: input, shape index: {}]
  %s3 = inlined_call_operand.vmem [shape: f32[1,2064], index: 3, kind: input, shape index: {}]
  %s4 = inlined_call_operand.vmem [shape: bf16[1024,384], index: 4, kind: input, shape index: {}]
  %s5 = inlined_call_operand.vmem [shape: bf16[1040,384], index: 5, kind: input, shape index: {}]
  %s6 = inlined_call_operand.vmem [shape: f32[1,384], index: 6, kind: input, shape index: {}]
  %s7 = inlined_call_operand.vmem [shape: f32[1,384], index: 7, kind: input, shape index: {}]
  %s8 = inlined_call_operand.vmem [shape: f32[344,49], index: 8, kind: output, shape index: {}]
  %s9 = sld [smem:[#allocation0]]
  $region76: #{se_conv_bn.1} parent=0
    _
  %s11 = ssub.s32 1, %s9
  %s12 = scalar_select 0, %s11, %s9
  $region1: #{se_conv_bn.1} parent=0
    #allocation5 [shape = 'u8[382976]{0}', space=vmem, size = 0x5d800, scoped, tag = 'input window, operand 2, single buffered']
    #allocation6 [shape = 's32[1]{0}', space=sflag, size = 0x4, scoped, tag = 'scoped memory for se_conv_bn.1']
    %13 = vsyncpa [#allocation6], 0
    // Predicated region
    $region2: #{se_conv_bn.1} parent=1 // pred_check
      _
    $region3: #{se_conv_bn.1} parent=1 // pred_check_branch
      %15 = sbr.rel (0) target = $region5
    $region4: #{se_conv_bn.1} parent=1 // pred_region
      _
    $region5: #{se_conv_bn.1} parent=1 // pred_fallthru
      _
    // Predicated region
    $region6: #{se_conv_bn.1} parent=1 // pred_check
      _
    $region7: #{se_conv_bn.1} parent=1 // pred_check_branch
      %17 = sbr.rel (0) target = $region9
    $region8: #{se_conv_bn.1} parent=1 // pred_region
      _
    $region9: #{se_conv_bn.1} parent=1 // pred_fallthru
      _
    // Predicated region
    $region10: #{se_conv_bn.1} parent=1 // pred_check
      _
    $region11: #{se_conv_bn.1} parent=1 // pred_check_branch
      %19 = sbr.rel (0) target = $region13
    $region12: #{se_conv_bn.1} parent=1 // pred_region
      %21 = vsyncadd [#allocation6], 0
      %s22 = sshll.u32 %s2, 4
      %s23 = int_to_ptr.hbm [resolvable:$true] %s22
      %s24 = sshll.u32 [#allocation5], 4
      %s25 = int_to_ptr.vmem [resolvable:$true] %s24
      %30 = dma.hbm_to_vmem [thread:$0]  %s23, 11968, %s25, [#allocation6], 1088, 1088, 68
    $region13: #{se_conv_bn.1} parent=1 // pred_fallthru
      _
    // Predicated region
    $region14: #{se_conv_bn.1} parent=1 // pred_check
      _
    $region15: #{se_conv_bn.1} parent=1 // pred_check_branch
      %32 = sbr.rel (0) target = $region17
    $region16: #{se_conv_bn.1} parent=1 // pred_region
      _
    $region17: #{se_conv_bn.1} parent=1 // pred_fallthru
      _
    // Predicated region
    $region18: #{se_conv_bn.1} parent=1 // pred_check
      _
    $region19: #{se_conv_bn.1} parent=1 // pred_check_branch
      %34 = sbr.rel (0) target = $region21
    $region20: #{se_conv_bn.1} parent=1 // pred_region
      _
    $region21: #{se_conv_bn.1} parent=1 // pred_fallthru
      _
    // Predicated region
    $region22: #{se_conv_bn.1} parent=1 // pred_check
      _
    $region23: #{se_conv_bn.1} parent=1 // pred_check_branch
      %36 = sbr.rel (0) target = $region25
    $region24: #{se_conv_bn.1} parent=1 // pred_region
      _
    $region25: #{se_conv_bn.1} parent=1 // pred_fallthru
      _
    // Predicated region
    $region26: #{se_conv_bn.1} parent=1 // pred_check
      _
    $region27: #{se_conv_bn.1} parent=1 // pred_check_branch
      %38 = sbr.rel (0) target = $region29
    $region28: #{se_conv_bn.1} parent=1 // pred_region
      %40 = dma.done [#allocation6], 11968
    $region29: #{se_conv_bn.1} parent=1 // pred_fallthru
      _
    // Predicated region
    $region30: #{se_conv_bn.1} parent=1 // pred_check
      _
    $region31: #{se_conv_bn.1} parent=1 // pred_check_branch
      %43 = sbr.rel (0) target = $region33
    $region32: #{se_conv_bn.1} parent=1 // pred_region
      loop: start=0, step=1, limit=1
      $region34: #{se_conv_bn.1} parent=32 // loop_pre_header
        _
      $region35: #{se_conv_bn.1} parent=32 // loop_header
        %s45 = sphi 0, %s49
        %p46 = scmp.ge.s32.totalorder %s45, 1
        %s50 = sphi %s4, %s4
        %s51 = sphi [#allocation2], [#allocation2]
      $region36: #{se_conv_bn.1} parent=32 // loop_header_branch
        %48 = sbr.rel (%p46) target = $region40
      $region37: #{se_conv_bn.1} parent=32 // loop_body
        %v52 = vld [vmem:[%s50] sm:$0xff]
        %53 = vst [vmem:[%s51] sm:$0xff] %v52
        %v54 = vld [vmem:[%s50 + $0x8] sm:$0xff]
        %55 = vst [vmem:[%s51 + $0x8] sm:$0xff] %v54
        %v56 = vld [vmem:[%s50 + $0x10] sm:$0xff]
        %57 = vst [vmem:[%s51 + $0x10] sm:$0xff] %v56
        %v58 = vld [vmem:[%s50 + $0x18] sm:$0xff]
        %59 = vst [vmem:[%s51 + $0x18] sm:$0xff] %v58
        %v60 = vld [vmem:[%s50 + $0x20] sm:$0xff]
        %61 = vst [vmem:[%s51 + $0x20] sm:$0xff] %v60
        %v62 = vld [vmem:[%s50 + $0x28] sm:$0xff]
        %63 = vst [vmem:[%s51 + $0x28] sm:$0xff] %v62
        %v64 = vld [vmem:[%s50 + $0x30] sm:$0xff]
        %65 = vst [vmem:[%s51 + $0x30] sm:$0xff] %v64
        %v66 = vld [vmem:[%s50 + $0x38] sm:$0xff]
        %67 = vst [vmem:[%s51 + $0x38] sm:$0xff] %v66
        %v68 = vld [vmem:[%s50 + $0x40] sm:$0xff]
        %69 = vst [vmem:[%s51 + $0x40] sm:$0xff] %v68
        %v70 = vld [vmem:[%s50 + $0x48] sm:$0xff]
        %71 = vst [vmem:[%s51 + $0x48] sm:$0xff] %v70
        %v72 = vld [vmem:[%s50 + $0x50] sm:$0xff]
        %73 = vst [vmem:[%s51 + $0x50] sm:$0xff] %v72
        %v74 = vld [vmem:[%s50 + $0x58] sm:$0xff]
        %75 = vst [vmem:[%s51 + $0x58] sm:$0xff] %v74
        %v76 = vld [vmem:[%s50 + $0x60] sm:$0xff]
        %77 = vst [vmem:[%s51 + $0x60] sm:$0xff] %v76
        %v78 = vld [vmem:[%s50 + $0x68] sm:$0xff]
        %79 = vst [vmem:[%s51 + $0x68] sm:$0xff] %v78
        %v80 = vld [vmem:[%s50 + $0x70] sm:$0xff]
        %81 = vst [vmem:[%s51 + $0x70] sm:$0xff] %v80
        %v82 = vld [vmem:[%s50 + $0x78] sm:$0xff]
        %83 = vst [vmem:[%s51 + $0x78] sm:$0xff] %v82
        %v84 = vld [vmem:[%s50 + $0x80] sm:$0xff]
        %85 = vst [vmem:[%s51 + $0x80] sm:$0xff] %v84
        %v86 = vld [vmem:[%s50 + $0x88] sm:$0xff]
        %87 = vst [vmem:[%s51 + $0x88] sm:$0xff] %v86
        %v88 = vld [vmem:[%s50 + $0x90] sm:$0xff]
        %89 = vst [vmem:[%s51 + $0x90] sm:$0xff] %v88
        %v90 = vld [vmem:[%s50 + $0x98] sm:$0xff]
        %91 = vst [vmem:[%s51 + $0x98] sm:$0xff] %v90
        %v92 = vld [vmem:[%s50 + $0xa0] sm:$0xff]
        %93 = vst [vmem:[%s51 + $0xa0] sm:$0xff] %v92
        %v94 = vld [vmem:[%s50 + $0xa8] sm:$0xff]
        %95 = vst [vmem:[%s51 + $0xa8] sm:$0xff] %v94
        %v96 = vld [vmem:[%s50 + $0xb0] sm:$0xff]
        %97 = vst [vmem:[%s51 + $0xb0] sm:$0xff] %v96
        %v98 = vld [vmem:[%s50 + $0xb8] sm:$0xff]
        %99 = vst [vmem:[%s51 + $0xb8] sm:$0xff] %v98
        %v100 = vld [vmem:[%s50 + $0xc0] sm:$0xff]
        %101 = vst [vmem:[%s51 + $0xc0] sm:$0xff] %v100
        %v102 = vld [vmem:[%s50 + $0xc8] sm:$0xff]
        %103 = vst [vmem:[%s51 + $0xc8] sm:$0xff] %v102
        %v104 = vld [vmem:[%s50 + $0xd0] sm:$0xff]
        %105 = vst [vmem:[%s51 + $0xd0] sm:$0xff] %v104
        %v106 = vld [vmem:[%s50 + $0xd8] sm:$0xff]
        %107 = vst [vmem:[%s51 + $0xd8] sm:$0xff] %v106
        %v108 = vld [vmem:[%s50 + $0xe0] sm:$0xff]
        %109 = vst [vmem:[%s51 + $0xe0] sm:$0xff] %v108
        %v110 = vld [vmem:[%s50 + $0xe8] sm:$0xff]
        %111 = vst [vmem:[%s51 + $0xe8] sm:$0xff] %v110
        %v112 = vld [vmem:[%s50 + $0xf0] sm:$0xff]
        %113 = vst [vmem:[%s51 + $0xf0] sm:$0xff] %v112
        %v114 = vld [vmem:[%s50 + $0xf8] sm:$0xff]
        %115 = vst [vmem:[%s51 + $0xf8] sm:$0xff] %v114
        %v116 = vld [vmem:[%s50 + $0x100] sm:$0xff]
        %117 = vst [vmem:[%s51 + $0x100] sm:$0xff] %v116
        %v118 = vld [vmem:[%s50 + $0x108] sm:$0xff]
        %119 = vst [vmem:[%s51 + $0x108] sm:$0xff] %v118
        %v120 = vld [vmem:[%s50 + $0x110] sm:$0xff]
        %121 = vst [vmem:[%s51 + $0x110] sm:$0xff] %v120
        %v122 = vld [vmem:[%s50 + $0x118] sm:$0xff]
        %123 = vst [vmem:[%s51 + $0x118] sm:$0xff] %v122
        %v124 = vld [vmem:[%s50 + $0x120] sm:$0xff]
        %125 = vst [vmem:[%s51 + $0x120] sm:$0xff] %v124
        %v126 = vld [vmem:[%s50 + $0x128] sm:$0xff]
        %127 = vst [vmem:[%s51 + $0x128] sm:$0xff] %v126
        %v128 = vld [vmem:[%s50 + $0x130] sm:$0xff]
        %129 = vst [vmem:[%s51 + $0x130] sm:$0xff] %v128
        %v130 = vld [vmem:[%s50 + $0x138] sm:$0xff]
        %131 = vst [vmem:[%s51 + $0x138] sm:$0xff] %v130
        %v132 = vld [vmem:[%s50 + $0x140] sm:$0xff]
        %133 = vst [vmem:[%s51 + $0x140] sm:$0xff] %v132
        %v134 = vld [vmem:[%s50 + $0x148] sm:$0xff]
        %135 = vst [vmem:[%s51 + $0x148] sm:$0xff] %v134
        %v136 = vld [vmem:[%s50 + $0x150] sm:$0xff]
        %137 = vst [vmem:[%s51 + $0x150] sm:$0xff] %v136
        %v138 = vld [vmem:[%s50 + $0x158] sm:$0xff]
        %139 = vst [vmem:[%s51 + $0x158] sm:$0xff] %v138
        %v140 = vld [vmem:[%s50 + $0x160] sm:$0xff]
        %141 = vst [vmem:[%s51 + $0x160] sm:$0xff] %v140
        %v142 = vld [vmem:[%s50 + $0x168] sm:$0xff]
        %143 = vst [vmem:[%s51 + $0x168] sm:$0xff] %v142
        %v144 = vld [vmem:[%s50 + $0x170] sm:$0xff]
        %145 = vst [vmem:[%s51 + $0x170] sm:$0xff] %v144
        %v146 = vld [vmem:[%s50 + $0x178] sm:$0xff]
        %147 = vst [vmem:[%s51 + $0x178] sm:$0xff] %v146
        %v148 = vld [vmem:[%s50 + $0x180] sm:$0xff]
        %149 = vst [vmem:[%s51 + $0x180] sm:$0xff] %v148
        %v150 = vld [vmem:[%s50 + $0x188] sm:$0xff]
        %151 = vst [vmem:[%s51 + $0x188] sm:$0xff] %v150
        %v152 = vld [vmem:[%s50 + $0x190] sm:$0xff]
        %153 = vst [vmem:[%s51 + $0x190] sm:$0xff] %v152
        %v154 = vld [vmem:[%s50 + $0x198] sm:$0xff]
        %155 = vst [vmem:[%s51 + $0x198] sm:$0xff] %v154
        %v156 = vld [vmem:[%s50 + $0x1a0] sm:$0xff]
        %157 = vst [vmem:[%s51 + $0x1a0] sm:$0xff] %v156
        %v158 = vld [vmem:[%s50 + $0x1a8] sm:$0xff]
        %159 = vst [vmem:[%s51 + $0x1a8] sm:$0xff] %v158
        %v160 = vld [vmem:[%s50 + $0x1b0] sm:$0xff]
        %161 = vst [vmem:[%s51 + $0x1b0] sm:$0xff] %v160
        %v162 = vld [vmem:[%s50 + $0x1b8] sm:$0xff]
        %163 = vst [vmem:[%s51 + $0x1b8] sm:$0xff] %v162
        %v164 = vld [vmem:[%s50 + $0x1c0] sm:$0xff]
        %165 = vst [vmem:[%s51 + $0x1c0] sm:$0xff] %v164
        %v166 = vld [vmem:[%s50 + $0x1c8] sm:$0xff]
        %167 = vst [vmem:[%s51 + $0x1c8] sm:$0xff] %v166
        %v168 = vld [vmem:[%s50 + $0x1d0] sm:$0xff]
        %169 = vst [vmem:[%s51 + $0x1d0] sm:$0xff] %v168
        %v170 = vld [vmem:[%s50 + $0x1d8] sm:$0xff]
        %171 = vst [vmem:[%s51 + $0x1d8] sm:$0xff] %v170
        %v172 = vld [vmem:[%s50 + $0x1e0] sm:$0xff]
        %173 = vst [vmem:[%s51 + $0x1e0] sm:$0xff] %v172
        %v174 = vld [vmem:[%s50 + $0x1e8] sm:$0xff]
        %175 = vst [vmem:[%s51 + $0x1e8] sm:$0xff] %v174
        %v176 = vld [vmem:[%s50 + $0x1f0] sm:$0xff]
        %177 = vst [vmem:[%s51 + $0x1f0] sm:$0xff] %v176
        %v178 = vld [vmem:[%s50 + $0x1f8] sm:$0xff]
        %179 = vst [vmem:[%s51 + $0x1f8] sm:$0xff] %v178
        %v180 = vld [vmem:[%s50 + $0x200] sm:$0xff]
        %181 = vst [vmem:[%s51 + $0x200] sm:$0xff] %v180
        %v182 = vld [vmem:[%s50 + $0x208] sm:$0xff]
        %183 = vst [vmem:[%s51 + $0x208] sm:$0xff] %v182
        %v184 = vld [vmem:[%s50 + $0x210] sm:$0xff]
        %185 = vst [vmem:[%s51 + $0x210] sm:$0xff] %v184
        %v186 = vld [vmem:[%s50 + $0x218] sm:$0xff]
        %187 = vst [vmem:[%s51 + $0x218] sm:$0xff] %v186
        %v188 = vld [vmem:[%s50 + $0x220] sm:$0xff]
        %189 = vst [vmem:[%s51 + $0x220] sm:$0xff] %v188
        %v190 = vld [vmem:[%s50 + $0x228] sm:$0xff]
        %191 = vst [vmem:[%s51 + $0x228] sm:$0xff] %v190
        %v192 = vld [vmem:[%s50 + $0x230] sm:$0xff]
        %193 = vst [vmem:[%s51 + $0x230] sm:$0xff] %v192
        %v194 = vld [vmem:[%s50 + $0x238] sm:$0xff]
        %195 = vst [vmem:[%s51 + $0x238] sm:$0xff] %v194
        %v196 = vld [vmem:[%s50 + $0x240] sm:$0xff]
        %197 = vst [vmem:[%s51 + $0x240] sm:$0xff] %v196
        %v198 = vld [vmem:[%s50 + $0x248] sm:$0xff]
        %199 = vst [vmem:[%s51 + $0x248] sm:$0xff] %v198
        %v200 = vld [vmem:[%s50 + $0x250] sm:$0xff]
        %201 = vst [vmem:[%s51 + $0x250] sm:$0xff] %v200
        %v202 = vld [vmem:[%s50 + $0x258] sm:$0xff]
        %203 = vst [vmem:[%s51 + $0x258] sm:$0xff] %v202
        %v204 = vld [vmem:[%s50 + $0x260] sm:$0xff]
        %205 = vst [vmem:[%s51 + $0x260] sm:$0xff] %v204
        %v206 = vld [vmem:[%s50 + $0x268] sm:$0xff]
        %207 = vst [vmem:[%s51 + $0x268] sm:$0xff] %v206
        %v208 = vld [vmem:[%s50 + $0x270] sm:$0xff]
        %209 = vst [vmem:[%s51 + $0x270] sm:$0xff] %v208
        %v210 = vld [vmem:[%s50 + $0x278] sm:$0xff]
        %211 = vst [vmem:[%s51 + $0x278] sm:$0xff] %v210
        %v212 = vld [vmem:[%s50 + $0x280] sm:$0xff]
        %213 = vst [vmem:[%s51 + $0x280] sm:$0xff] %v212
        %v214 = vld [vmem:[%s50 + $0x288] sm:$0xff]
        %215 = vst [vmem:[%s51 + $0x288] sm:$0xff] %v214
        %v216 = vld [vmem:[%s50 + $0x290] sm:$0xff]
        %217 = vst [vmem:[%s51 + $0x290] sm:$0xff] %v216
        %v218 = vld [vmem:[%s50 + $0x298] sm:$0xff]
        %219 = vst [vmem:[%s51 + $0x298] sm:$0xff] %v218
        %v220 = vld [vmem:[%s50 + $0x2a0] sm:$0xff]
        %221 = vst [vmem:[%s51 + $0x2a0] sm:$0xff] %v220
        %v222 = vld [vmem:[%s50 + $0x2a8] sm:$0xff]
        %223 = vst [vmem:[%s51 + $0x2a8] sm:$0xff] %v222
        %v224 = vld [vmem:[%s50 + $0x2b0] sm:$0xff]
        %225 = vst [vmem:[%s51 + $0x2b0] sm:$0xff] %v224
        %v226 = vld [vmem:[%s50 + $0x2b8] sm:$0xff]
        %227 = vst [vmem:[%s51 + $0x2b8] sm:$0xff] %v226
        %v228 = vld [vmem:[%s50 + $0x2c0] sm:$0xff]
        %229 = vst [vmem:[%s51 + $0x2c0] sm:$0xff] %v228
        %v230 = vld [vmem:[%s50 + $0x2c8] sm:$0xff]
        %231 = vst [vmem:[%s51 + $0x2c8] sm:$0xff] %v230
        %v232 = vld [vmem:[%s50 + $0x2d0] sm:$0xff]
        %233 = vst [vmem:[%s51 + $0x2d0] sm:$0xff] %v232
        %v234 = vld [vmem:[%s50 + $0x2d8] sm:$0xff]
        %235 = vst [vmem:[%s51 + $0x2d8] sm:$0xff] %v234
        %v236 = vld [vmem:[%s50 + $0x2e0] sm:$0xff]
        %237 = vst [vmem:[%s51 + $0x2e0] sm:$0xff] %v236
        %v238 = vld [vmem:[%s50 + $0x2e8] sm:$0xff]
        %239 = vst [vmem:[%s51 + $0x2e8] sm:$0xff] %v238
        %v240 = vld [vmem:[%s50 + $0x2f0] sm:$0xff]
        %241 = vst [vmem:[%s51 + $0x2f0] sm:$0xff] %v240
        %v242 = vld [vmem:[%s50 + $0x2f8] sm:$0xff]
        %243 = vst [vmem:[%s51 + $0x2f8] sm:$0xff] %v242
        %v244 = vld [vmem:[%s50 + $0x300] sm:$0xff]
        %245 = vst [vmem:[%s51 + $0x300] sm:$0xff] %v244
        %v246 = vld [vmem:[%s50 + $0x308] sm:$0xff]
        %247 = vst [vmem:[%s51 + $0x308] sm:$0xff] %v246
        %v248 = vld [vmem:[%s50 + $0x310] sm:$0xff]
        %249 = vst [vmem:[%s51 + $0x310] sm:$0xff] %v248
        %v250 = vld [vmem:[%s50 + $0x318] sm:$0xff]
        %251 = vst [vmem:[%s51 + $0x318] sm:$0xff] %v250
        %v252 = vld [vmem:[%s50 + $0x320] sm:$0xff]
        %253 = vst [vmem:[%s51 + $0x320] sm:$0xff] %v252
        %v254 = vld [vmem:[%s50 + $0x328] sm:$0xff]
        %255 = vst [vmem:[%s51 + $0x328] sm:$0xff] %v254
        %v256 = vld [vmem:[%s50 + $0x330] sm:$0xff]
        %257 = vst [vmem:[%s51 + $0x330] sm:$0xff] %v256
        %v258 = vld [vmem:[%s50 + $0x338] sm:$0xff]
        %259 = vst [vmem:[%s51 + $0x338] sm:$0xff] %v258
        %v260 = vld [vmem:[%s50 + $0x340] sm:$0xff]
        %261 = vst [vmem:[%s51 + $0x340] sm:$0xff] %v260
        %v262 = vld [vmem:[%s50 + $0x348] sm:$0xff]
        %263 = vst [vmem:[%s51 + $0x348] sm:$0xff] %v262
        %v264 = vld [vmem:[%s50 + $0x350] sm:$0xff]
        %265 = vst [vmem:[%s51 + $0x350] sm:$0xff] %v264
        %v266 = vld [vmem:[%s50 + $0x358] sm:$0xff]
        %267 = vst [vmem:[%s51 + $0x358] sm:$0xff] %v266
        %v268 = vld [vmem:[%s50 + $0x360] sm:$0xff]
        %269 = vst [vmem:[%s51 + $0x360] sm:$0xff] %v268
        %v270 = vld [vmem:[%s50 + $0x368] sm:$0xff]
        %271 = vst [vmem:[%s51 + $0x368] sm:$0xff] %v270
        %v272 = vld [vmem:[%s50 + $0x370] sm:$0xff]
        %273 = vst [vmem:[%s51 + $0x370] sm:$0xff] %v272
        %v274 = vld [vmem:[%s50 + $0x378] sm:$0xff]
        %275 = vst [vmem:[%s51 + $0x378] sm:$0xff] %v274
        %v276 = vld [vmem:[%s50 + $0x380] sm:$0xff]
        %277 = vst [vmem:[%s51 + $0x380] sm:$0xff] %v276
        %v278 = vld [vmem:[%s50 + $0x388] sm:$0xff]
        %279 = vst [vmem:[%s51 + $0x388] sm:$0xff] %v278
        %v280 = vld [vmem:[%s50 + $0x390] sm:$0xff]
        %281 = vst [vmem:[%s51 + $0x390] sm:$0xff] %v280
        %v282 = vld [vmem:[%s50 + $0x398] sm:$0xff]
        %283 = vst [vmem:[%s51 + $0x398] sm:$0xff] %v282
        %v284 = vld [vmem:[%s50 + $0x3a0] sm:$0xff]
        %285 = vst [vmem:[%s51 + $0x3a0] sm:$0xff] %v284
        %v286 = vld [vmem:[%s50 + $0x3a8] sm:$0xff]
        %287 = vst [vmem:[%s51 + $0x3a8] sm:$0xff] %v286
        %v288 = vld [vmem:[%s50 + $0x3b0] sm:$0xff]
        %289 = vst [vmem:[%s51 + $0x3b0] sm:$0xff] %v288
        %v290 = vld [vmem:[%s50 + $0x3b8] sm:$0xff]
        %291 = vst [vmem:[%s51 + $0x3b8] sm:$0xff] %v290
        %v292 = vld [vmem:[%s50 + $0x3c0] sm:$0xff]
        %293 = vst [vmem:[%s51 + $0x3c0] sm:$0xff] %v292
        %v294 = vld [vmem:[%s50 + $0x3c8] sm:$0xff]
        %295 = vst [vmem:[%s51 + $0x3c8] sm:$0xff] %v294
        %v296 = vld [vmem:[%s50 + $0x3d0] sm:$0xff]
        %297 = vst [vmem:[%s51 + $0x3d0] sm:$0xff] %v296
        %v298 = vld [vmem:[%s50 + $0x3d8] sm:$0xff]
        %299 = vst [vmem:[%s51 + $0x3d8] sm:$0xff] %v298
        %v300 = vld [vmem:[%s50 + $0x3e0] sm:$0xff]
        %301 = vst [vmem:[%s51 + $0x3e0] sm:$0xff] %v300
        %v302 = vld [vmem:[%s50 + $0x3e8] sm:$0xff]
        %303 = vst [vmem:[%s51 + $0x3e8] sm:$0xff] %v302
        %v304 = vld [vmem:[%s50 + $0x3f0] sm:$0xff]
        %305 = vst [vmem:[%s51 + $0x3f0] sm:$0xff] %v304
        %v306 = vld [vmem:[%s50 + $0x3f8] sm:$0xff]
        %307 = vst [vmem:[%s51 + $0x3f8] sm:$0xff] %v306
        %v308 = vld [vmem:[%s50 + $0x400] sm:$0xff]
        %309 = vst [vmem:[%s51 + $0x400] sm:$0xff] %v308
        %v310 = vld [vmem:[%s50 + $0x408] sm:$0xff]
        %311 = vst [vmem:[%s51 + $0x408] sm:$0xff] %v310
        %v312 = vld [vmem:[%s50 + $0x410] sm:$0xff]
        %313 = vst [vmem:[%s51 + $0x410] sm:$0xff] %v312
        %v314 = vld [vmem:[%s50 + $0x418] sm:$0xff]
        %315 = vst [vmem:[%s51 + $0x418] sm:$0xff] %v314
        %v316 = vld [vmem:[%s50 + $0x420] sm:$0xff]
        %317 = vst [vmem:[%s51 + $0x420] sm:$0xff] %v316
        %v318 = vld [vmem:[%s50 + $0x428] sm:$0xff]
        %319 = vst [vmem:[%s51 + $0x428] sm:$0xff] %v318
        %v320 = vld [vmem:[%s50 + $0x430] sm:$0xff]
        %321 = vst [vmem:[%s51 + $0x430] sm:$0xff] %v320
        %v322 = vld [vmem:[%s50 + $0x438] sm:$0xff]
        %323 = vst [vmem:[%s51 + $0x438] sm:$0xff] %v322
        %v324 = vld [vmem:[%s50 + $0x440] sm:$0xff]
        %325 = vst [vmem:[%s51 + $0x440] sm:$0xff] %v324
        %v326 = vld [vmem:[%s50 + $0x448] sm:$0xff]
        %327 = vst [vmem:[%s51 + $0x448] sm:$0xff] %v326
        %v328 = vld [vmem:[%s50 + $0x450] sm:$0xff]
        %329 = vst [vmem:[%s51 + $0x450] sm:$0xff] %v328
        %v330 = vld [vmem:[%s50 + $0x458] sm:$0xff]
        %331 = vst [vmem:[%s51 + $0x458] sm:$0xff] %v330
        %v332 = vld [vmem:[%s50 + $0x460] sm:$0xff]
        %333 = vst [vmem:[%s51 + $0x460] sm:$0xff] %v332
        %v334 = vld [vmem:[%s50 + $0x468] sm:$0xff]
        %335 = vst [vmem:[%s51 + $0x468] sm:$0xff] %v334
        %v336 = vld [vmem:[%s50 + $0x470] sm:$0xff]
        %337 = vst [vmem:[%s51 + $0x470] sm:$0xff] %v336
        %v338 = vld [vmem:[%s50 + $0x478] sm:$0xff]
        %339 = vst [vmem:[%s51 + $0x478] sm:$0xff] %v338
        %v340 = vld [vmem:[%s50 + $0x480] sm:$0xff]
        %341 = vst [vmem:[%s51 + $0x480] sm:$0xff] %v340
        %v342 = vld [vmem:[%s50 + $0x488] sm:$0xff]
        %343 = vst [vmem:[%s51 + $0x488] sm:$0xff] %v342
        %v344 = vld [vmem:[%s50 + $0x490] sm:$0xff]
        %345 = vst [vmem:[%s51 + $0x490] sm:$0xff] %v344
        %v346 = vld [vmem:[%s50 + $0x498] sm:$0xff]
        %347 = vst [vmem:[%s51 + $0x498] sm:$0xff] %v346
        %v348 = vld [vmem:[%s50 + $0x4a0] sm:$0xff]
        %349 = vst [vmem:[%s51 + $0x4a0] sm:$0xff] %v348
        %v350 = vld [vmem:[%s50 + $0x4a8] sm:$0xff]
        %351 = vst [vmem:[%s51 + $0x4a8] sm:$0xff] %v350
        %v352 = vld [vmem:[%s50 + $0x4b0] sm:$0xff]
        %353 = vst [vmem:[%s51 + $0x4b0] sm:$0xff] %v352
        %v354 = vld [vmem:[%s50 + $0x4b8] sm:$0xff]
        %355 = vst [vmem:[%s51 + $0x4b8] sm:$0xff] %v354
        %v356 = vld [vmem:[%s50 + $0x4c0] sm:$0xff]
        %357 = vst [vmem:[%s51 + $0x4c0] sm:$0xff] %v356
        %v358 = vld [vmem:[%s50 + $0x4c8] sm:$0xff]
        %359 = vst [vmem:[%s51 + $0x4c8] sm:$0xff] %v358
        %v360 = vld [vmem:[%s50 + $0x4d0] sm:$0xff]
        %361 = vst [vmem:[%s51 + $0x4d0] sm:$0xff] %v360
        %v362 = vld [vmem:[%s50 + $0x4d8] sm:$0xff]
        %363 = vst [vmem:[%s51 + $0x4d8] sm:$0xff] %v362
        %v364 = vld [vmem:[%s50 + $0x4e0] sm:$0xff]
        %365 = vst [vmem:[%s51 + $0x4e0] sm:$0xff] %v364
        %v366 = vld [vmem:[%s50 + $0x4e8] sm:$0xff]
        %367 = vst [vmem:[%s51 + $0x4e8] sm:$0xff] %v366
        %v368 = vld [vmem:[%s50 + $0x4f0] sm:$0xff]
        %369 = vst [vmem:[%s51 + $0x4f0] sm:$0xff] %v368
        %v370 = vld [vmem:[%s50 + $0x4f8] sm:$0xff]
        %371 = vst [vmem:[%s51 + $0x4f8] sm:$0xff] %v370
        %v372 = vld [vmem:[%s50 + $0x500] sm:$0xff]
        %373 = vst [vmem:[%s51 + $0x500] sm:$0xff] %v372
        %v374 = vld [vmem:[%s50 + $0x508] sm:$0xff]
        %375 = vst [vmem:[%s51 + $0x508] sm:$0xff] %v374
        %v376 = vld [vmem:[%s50 + $0x510] sm:$0xff]
        %377 = vst [vmem:[%s51 + $0x510] sm:$0xff] %v376
        %v378 = vld [vmem:[%s50 + $0x518] sm:$0xff]
        %379 = vst [vmem:[%s51 + $0x518] sm:$0xff] %v378
        %v380 = vld [vmem:[%s50 + $0x520] sm:$0xff]
        %381 = vst [vmem:[%s51 + $0x520] sm:$0xff] %v380
        %v382 = vld [vmem:[%s50 + $0x528] sm:$0xff]
        %383 = vst [vmem:[%s51 + $0x528] sm:$0xff] %v382
        %v384 = vld [vmem:[%s50 + $0x530] sm:$0xff]
        %385 = vst [vmem:[%s51 + $0x530] sm:$0xff] %v384
        %v386 = vld [vmem:[%s50 + $0x538] sm:$0xff]
        %387 = vst [vmem:[%s51 + $0x538] sm:$0xff] %v386
        %v388 = vld [vmem:[%s50 + $0x540] sm:$0xff]
        %389 = vst [vmem:[%s51 + $0x540] sm:$0xff] %v388
        %v390 = vld [vmem:[%s50 + $0x548] sm:$0xff]
        %391 = vst [vmem:[%s51 + $0x548] sm:$0xff] %v390
        %v392 = vld [vmem:[%s50 + $0x550] sm:$0xff]
        %393 = vst [vmem:[%s51 + $0x550] sm:$0xff] %v392
        %v394 = vld [vmem:[%s50 + $0x558] sm:$0xff]
        %395 = vst [vmem:[%s51 + $0x558] sm:$0xff] %v394
        %v396 = vld [vmem:[%s50 + $0x560] sm:$0xff]
        %397 = vst [vmem:[%s51 + $0x560] sm:$0xff] %v396
        %v398 = vld [vmem:[%s50 + $0x568] sm:$0xff]
        %399 = vst [vmem:[%s51 + $0x568] sm:$0xff] %v398
        %v400 = vld [vmem:[%s50 + $0x570] sm:$0xff]
        %401 = vst [vmem:[%s51 + $0x570] sm:$0xff] %v400
        %v402 = vld [vmem:[%s50 + $0x578] sm:$0xff]
        %403 = vst [vmem:[%s51 + $0x578] sm:$0xff] %v402
        %v404 = vld [vmem:[%s50 + $0x580] sm:$0xff]
        %405 = vst [vmem:[%s51 + $0x580] sm:$0xff] %v404
        %v406 = vld [vmem:[%s50 + $0x588] sm:$0xff]
        %407 = vst [vmem:[%s51 + $0x588] sm:$0xff] %v406
        %v408 = vld [vmem:[%s50 + $0x590] sm:$0xff]
        %409 = vst [vmem:[%s51 + $0x590] sm:$0xff] %v408
        %v410 = vld [vmem:[%s50 + $0x598] sm:$0xff]
        %411 = vst [vmem:[%s51 + $0x598] sm:$0xff] %v410
        %v412 = vld [vmem:[%s50 + $0x5a0] sm:$0xff]
        %413 = vst [vmem:[%s51 + $0x5a0] sm:$0xff] %v412
        %v414 = vld [vmem:[%s50 + $0x5a8] sm:$0xff]
        %415 = vst [vmem:[%s51 + $0x5a8] sm:$0xff] %v414
        %v416 = vld [vmem:[%s50 + $0x5b0] sm:$0xff]
        %417 = vst [vmem:[%s51 + $0x5b0] sm:$0xff] %v416
        %v418 = vld [vmem:[%s50 + $0x5b8] sm:$0xff]
        %419 = vst [vmem:[%s51 + $0x5b8] sm:$0xff] %v418
        %v420 = vld [vmem:[%s50 + $0x5c0] sm:$0xff]
        %421 = vst [vmem:[%s51 + $0x5c0] sm:$0xff] %v420
        %v422 = vld [vmem:[%s50 + $0x5c8] sm:$0xff]
        %423 = vst [vmem:[%s51 + $0x5c8] sm:$0xff] %v422
        %v424 = vld [vmem:[%s50 + $0x5d0] sm:$0xff]
        %425 = vst [vmem:[%s51 + $0x5d0] sm:$0xff] %v424
        %v426 = vld [vmem:[%s50 + $0x5d8] sm:$0xff]
        %427 = vst [vmem:[%s51 + $0x5d8] sm:$0xff] %v426
        %v428 = vld [vmem:[%s50 + $0x5e0] sm:$0xff]
        %429 = vst [vmem:[%s51 + $0x5e0] sm:$0xff] %v428
        %v430 = vld [vmem:[%s50 + $0x5e8] sm:$0xff]
        %431 = vst [vmem:[%s51 + $0x5e8] sm:$0xff] %v430
        %v432 = vld [vmem:[%s50 + $0x5f0] sm:$0xff]
        %433 = vst [vmem:[%s51 + $0x5f0] sm:$0xff] %v432
        %v434 = vld [vmem:[%s50 + $0x5f8] sm:$0xff]
        %435 = vst [vmem:[%s51 + $0x5f8] sm:$0xff] %v434
      $region38: #{se_conv_bn.1} parent=32 // loop_footer
        %s49 = sadd.s32 1, %s45
      $region39: #{se_conv_bn.1} parent=32 // loop_footer_branch
        %44 = sbr.rel target = $region35
      $region40: #{se_conv_bn.1} parent=32 // loop_exit
        _
    $region33: #{se_conv_bn.1} parent=1 // pred_fallthru
      _
    // Predicated region
    $region41: #{se_conv_bn.1} parent=1 // pred_check
      _
    $region42: #{se_conv_bn.1} parent=1 // pred_check_branch
      %437 = sbr.rel target = $region44
    $region43: #{se_conv_bn.1} parent=1 // pred_region
      _
    $region44: #{se_conv_bn.1} parent=1 // pred_fallthru
      _
    // Predicated region
    $region45: #{se_conv_bn.1} parent=1 // pred_check
      _
    $region46: #{se_conv_bn.1} parent=1 // pred_check_branch
      %440 = sbr.rel (0) target = $region48
    $region47: #{se_conv_bn.1} parent=1 // pred_region
      %441 = vsyncadd [#allocation4], 24576
    $region48: #{se_conv_bn.1} parent=1 // pred_fallthru
      _
    %v442 = vld [vmem:[%s0] sm:$0x1]
    %v443 = vpack.c.bf16 %v442, %v442
    %v444 = vld [vmem:[#allocation5] sm:$0xff]
    %v445 = vld [vmem:[#allocation5 + $0x8] sm:$0xff]
    %v446 = vld [vmem:[#allocation5 + $0x10] sm:$0xff]
    %v447 = vld [vmem:[#allocation5 + $0x18] sm:$0xff]
    %v448 = vld [vmem:[#allocation5 + $0x20] sm:$0xff]
    %v449 = vld [vmem:[#allocation5 + $0x28] sm:$0xff]
    %v450 = vld [vmem:[#allocation5 + $0x30] sm:$0xff]
    %v451 = vld [vmem:[#allocation5 + $0x38] sm:$0xff]
    %v452 = vld [vmem:[#allocation5 + $0x40] sm:$0xf]
    %v453 = vld [vmem:[#allocation5 + $0x44] sm:$0xff]
    %v454 = vld [vmem:[#allocation5 + $0x4c] sm:$0xff]
    %v455 = vld [vmem:[#allocation5 + $0x54] sm:$0xff]
    %v456 = vld [vmem:[#allocation5 + $0x5c] sm:$0xff]
    %v457 = vld [vmem:[#allocation5 + $0x64] sm:$0xff]
    %v458 = vld [vmem:[#allocation5 + $0x6c] sm:$0xff]
    %v459 = vld [vmem:[#allocation5 + $0x74] sm:$0xff]
    %v460 = vld [vmem:[#allocation5 + $0x7c] sm:$0xff]
    %v461 = vld [vmem:[#allocation5 + $0x84] sm:$0xf]
    %v462 = vld [vmem:[#allocation5 + $0x88] sm:$0xff]
    %v463 = vld [vmem:[#allocation5 + $0x90] sm:$0xff]
    %v464 = vld [vmem:[#allocation5 + $0x98] sm:$0xff]
    %v465 = vld [vmem:[#allocation5 + $0xa0] sm:$0xff]
    %v466 = vld [vmem:[#allocation5 + $0xa8] sm:$0xff]
    %v467 = vld [vmem:[#allocation5 + $0xb0] sm:$0xff]
    %v468 = vld [vmem:[#allocation5 + $0xb8] sm:$0xff]
    %v469 = vld [vmem:[#allocation5 + $0xc0] sm:$0xff]
    %v470 = vld [vmem:[#allocation5 + $0xc8] sm:$0xf]
    %v471 = vld [vmem:[#allocation5 + $0xcc] sm:$0xff]
    %v472 = vld [vmem:[#allocation5 + $0xd4] sm:$0xff]
    %v473 = vld [vmem:[#allocation5 + $0xdc] sm:$0xff]
    %v474 = vld [vmem:[#allocation5 + $0xe4] sm:$0xff]
    %v475 = vld [vmem:[#allocation5 + $0xec] sm:$0xff]
    %v476 = vld [vmem:[#allocation5 + $0xf4] sm:$0xff]
    %v477 = vld [vmem:[#allocation5 + $0xfc] sm:$0xff]
    %v478 = vld [vmem:[#allocation5 + $0x104] sm:$0xff]
    %v479 = vld [vmem:[#allocation5 + $0x10c] sm:$0xf]
    %v480 = vld [vmem:[#allocation5 + $0x110] sm:$0xff]
    %v481 = vld [vmem:[#allocation5 + $0x118] sm:$0xff]
    %v482 = vld [vmem:[#allocation5 + $0x120] sm:$0xff]
    %v483 = vld [vmem:[#allocation5 + $0x128] sm:$0xff]
    %v484 = vld [vmem:[#allocation5 + $0x130] sm:$0xff]
    %v485 = vld [vmem:[#allocation5 + $0x138] sm:$0xff]
    %v486 = vld [vmem:[#allocation5 + $0x140] sm:$0xff]
    %v487 = vld [vmem:[#allocation5 + $0x148] sm:$0xff]
    %v488 = vld [vmem:[#allocation5 + $0x150] sm:$0xf]
    %v489 = vld [vmem:[#allocation5 + $0x154] sm:$0xff]
    %v490 = vld [vmem:[#allocation5 + $0x15c] sm:$0xff]
    %v491 = vld [vmem:[#allocation5 + $0x164] sm:$0xff]
    %v492 = vld [vmem:[#allocation5 + $0x16c] sm:$0xff]
    %v493 = vld [vmem:[#allocation5 + $0x174] sm:$0xff]
    %v494 = vld [vmem:[#allocation5 + $0x17c] sm:$0xff]
    %v495 = vld [vmem:[#allocation5 + $0x184] sm:$0xff]
    %v496 = vld [vmem:[#allocation5 + $0x18c] sm:$0xff]
    %v497 = vld [vmem:[#allocation5 + $0x194] sm:$0xf]
    %v498 = vld [vmem:[#allocation5 + $0x198] sm:$0xff]
    %v499 = vld [vmem:[#allocation5 + $0x1a0] sm:$0xff]
    %v500 = vld [vmem:[#allocation5 + $0x1a8] sm:$0xff]
    %v501 = vld [vmem:[#allocation5 + $0x1b0] sm:$0xff]
    %v502 = vld [vmem:[#allocation5 + $0x1b8] sm:$0xff]
    %v503 = vld [vmem:[#allocation5 + $0x1c0] sm:$0xff]
    %v504 = vld [vmem:[#allocation5 + $0x1c8] sm:$0xff]
    %v505 = vld [vmem:[#allocation5 + $0x1d0] sm:$0xff]
    %v506 = vld [vmem:[#allocation5 + $0x1d8] sm:$0xf]
    %v507 = vld [vmem:[#allocation5 + $0x1dc] sm:$0xff]
    %v508 = vld [vmem:[#allocation5 + $0x1e4] sm:$0xff]
    %v509 = vld [vmem:[#allocation5 + $0x1ec] sm:$0xff]
    %v510 = vld [vmem:[#allocation5 + $0x1f4] sm:$0xff]
    %v511 = vld [vmem:[#allocation5 + $0x1fc] sm:$0xff]
    %v512 = vld [vmem:[#allocation5 + $0x204] sm:$0xff]
    %v513 = vld [vmem:[#allocation5 + $0x20c] sm:$0xff]
    %v514 = vld [vmem:[#allocation5 + $0x214] sm:$0xff]
    %v515 = vld [vmem:[#allocation5 + $0x21c] sm:$0xf]
    %v516 = vld [vmem:[#allocation5 + $0x220] sm:$0xff]
    %v517 = vld [vmem:[#allocation5 + $0x228] sm:$0xff]
    %v518 = vld [vmem:[#allocation5 + $0x230] sm:$0xff]
    %v519 = vld [vmem:[#allocation5 + $0x238] sm:$0xff]
    %v520 = vld [vmem:[#allocation5 + $0x240] sm:$0xff]
    %v521 = vld [vmem:[#allocation5 + $0x248] sm:$0xff]
    %v522 = vld [vmem:[#allocation5 + $0x250] sm:$0xff]
    %v523 = vld [vmem:[#allocation5 + $0x258] sm:$0xff]
    %v524 = vld [vmem:[#allocation5 + $0x260] sm:$0xf]
    %v525 = vld [vmem:[#allocation5 + $0x264] sm:$0xff]
    %v526 = vld [vmem:[#allocation5 + $0x26c] sm:$0xff]
    %v527 = vld [vmem:[#allocation5 + $0x274] sm:$0xff]
    %v528 = vld [vmem:[#allocation5 + $0x27c] sm:$0xff]
    %v529 = vld [vmem:[#allocation5 + $0x284] sm:$0xff]
    %v530 = vld [vmem:[#allocation5 + $0x28c] sm:$0xff]
    %v531 = vld [vmem:[#allocation5 + $0x294] sm:$0xff]
    %v532 = vld [vmem:[#allocation5 + $0x29c] sm:$0xff]
    %v533 = vld [vmem:[#allocation5 + $0x2a4] sm:$0xf]
    %v534 = vld [vmem:[#allocation5 + $0x2a8] sm:$0x77]
    %v535 = vld [vmem:[#allocation5 + $0x2b0] sm:$0x77]
    %v536 = vld [vmem:[#allocation5 + $0x2b8] sm:$0x77]
    %v537 = vld [vmem:[#allocation5 + $0x2c0] sm:$0x77]
    %v538 = vld [vmem:[#allocation5 + $0x2c8] sm:$0x77]
    %v539 = vld [vmem:[#allocation5 + $0x2d0] sm:$0x77]
    %v540 = vld [vmem:[#allocation5 + $0x2d8] sm:$0x77]
    %v541 = vld [vmem:[#allocation5 + $0x2e0] sm:$0x77]
    %v542 = vld [vmem:[#allocation5 + $0x2e8] sm:$0x7]
    %v543 = vld [vmem:[%s3] sm:$0xff]
    %v544 = vld [vmem:[%s3 + $0x8] sm:$0xff]
    %v545 = vld [vmem:[%s3 + $0x10] sm:$0x1]
    %v645 = vunpack.c.l.b16 %v444
    %v646 = vunpack.c.h.b16 %v444
    %v647 = vunpack.c.l.b16 %v445
    %v648 = vunpack.c.h.b16 %v445
    %v649 = vunpack.c.l.b16 %v446
    %v650 = vunpack.c.h.b16 %v446
    %v651 = vunpack.c.l.b16 %v447
    %v652 = vunpack.c.h.b16 %v447
    %v653 = vunpack.c.l.b16 %v448
    %v654 = vunpack.c.h.b16 %v448
    %v655 = vunpack.c.l.b16 %v449
    %v656 = vunpack.c.h.b16 %v449
    %v657 = vunpack.c.l.b16 %v450
    %v658 = vunpack.c.h.b16 %v450
    %v659 = vunpack.c.l.b16 %v451
    %v660 = vunpack.c.h.b16 %v451
    %v661 = vunpack.c.l.b16 %v452
    %v662 = vunpack.c.l.b16 %v453
    %v663 = vunpack.c.h.b16 %v453
    %v664 = vunpack.c.l.b16 %v454
    %v665 = vunpack.c.h.b16 %v454
    %v666 = vunpack.c.l.b16 %v455
    %v667 = vunpack.c.h.b16 %v455
    %v668 = vunpack.c.l.b16 %v456
    %v669 = vunpack.c.h.b16 %v456
    %v670 = vunpack.c.l.b16 %v457
    %v671 = vunpack.c.h.b16 %v457
    %v672 = vunpack.c.l.b16 %v458
    %v673 = vunpack.c.h.b16 %v458
    %v674 = vunpack.c.l.b16 %v459
    %v675 = vunpack.c.h.b16 %v459
    %v676 = vunpack.c.l.b16 %v460
    %v677 = vunpack.c.h.b16 %v460
    %v678 = vunpack.c.l.b16 %v461
    %v679 = vunpack.c.l.b16 %v462
    %v680 = vunpack.c.h.b16 %v462
    %v681 = vunpack.c.l.b16 %v463
    %v682 = vunpack.c.h.b16 %v463
    %v683 = vunpack.c.l.b16 %v464
    %v684 = vunpack.c.h.b16 %v464
    %v685 = vunpack.c.l.b16 %v465
    %v686 = vunpack.c.h.b16 %v465
    %v687 = vunpack.c.l.b16 %v466
    %v688 = vunpack.c.h.b16 %v466
    %v689 = vunpack.c.l.b16 %v467
    %v690 = vunpack.c.h.b16 %v467
    %v691 = vunpack.c.l.b16 %v468
    %v692 = vunpack.c.h.b16 %v468
    %v693 = vunpack.c.l.b16 %v469
    %v694 = vunpack.c.h.b16 %v469
    %v695 = vunpack.c.l.b16 %v470
    %v696 = vunpack.c.l.b16 %v471
    %v697 = vunpack.c.h.b16 %v471
    %v698 = vunpack.c.l.b16 %v472
    %v699 = vunpack.c.h.b16 %v472
    %v700 = vunpack.c.l.b16 %v473
    %v701 = vunpack.c.h.b16 %v473
    %v702 = vunpack.c.l.b16 %v474
    %v703 = vunpack.c.h.b16 %v474
    %v704 = vunpack.c.l.b16 %v475
    %v705 = vunpack.c.h.b16 %v475
    %v706 = vunpack.c.l.b16 %v476
    %v707 = vunpack.c.h.b16 %v476
    %v708 = vunpack.c.l.b16 %v477
    %v709 = vunpack.c.h.b16 %v477
    %v710 = vunpack.c.l.b16 %v478
    %v711 = vunpack.c.h.b16 %v478
    %v712 = vunpack.c.l.b16 %v479
    %v713 = vunpack.c.l.b16 %v480
    %v714 = vunpack.c.h.b16 %v480
    %v715 = vunpack.c.l.b16 %v481
    %v716 = vunpack.c.h.b16 %v481
    %v717 = vunpack.c.l.b16 %v482
    %v718 = vunpack.c.h.b16 %v482
    %v719 = vunpack.c.l.b16 %v483
    %v720 = vunpack.c.h.b16 %v483
    %v721 = vunpack.c.l.b16 %v484
    %v722 = vunpack.c.h.b16 %v484
    %v723 = vunpack.c.l.b16 %v485
    %v724 = vunpack.c.h.b16 %v485
    %v725 = vunpack.c.l.b16 %v486
    %v726 = vunpack.c.h.b16 %v486
    %v727 = vunpack.c.l.b16 %v487
    %v728 = vunpack.c.h.b16 %v487
    %v729 = vunpack.c.l.b16 %v488
    %v730 = vunpack.c.l.b16 %v489
    %v731 = vunpack.c.h.b16 %v489
    %v732 = vunpack.c.l.b16 %v490
    %v733 = vunpack.c.h.b16 %v490
    %v734 = vunpack.c.l.b16 %v491
    %v735 = vunpack.c.h.b16 %v491
    %v736 = vunpack.c.l.b16 %v492
    %v737 = vunpack.c.h.b16 %v492
    %v738 = vunpack.c.l.b16 %v493
    %v739 = vunpack.c.h.b16 %v493
    %v740 = vunpack.c.l.b16 %v494
    %v741 = vunpack.c.h.b16 %v494
    %v742 = vunpack.c.l.b16 %v495
    %v743 = vunpack.c.h.b16 %v495
    %v744 = vunpack.c.l.b16 %v496
    %v745 = vunpack.c.h.b16 %v496
    %v746 = vunpack.c.l.b16 %v497
    %v747 = vunpack.c.l.b16 %v498
    %v748 = vunpack.c.h.b16 %v498
    %v749 = vunpack.c.l.b16 %v499
    %v750 = vunpack.c.h.b16 %v499
    %v751 = vunpack.c.l.b16 %v500
    %v752 = vunpack.c.h.b16 %v500
    %v753 = vunpack.c.l.b16 %v501
    %v754 = vunpack.c.h.b16 %v501
    %v755 = vunpack.c.l.b16 %v502
    %v756 = vunpack.c.h.b16 %v502
    %v757 = vunpack.c.l.b16 %v503
    %v758 = vunpack.c.h.b16 %v503
    %v759 = vunpack.c.l.b16 %v504
    %v760 = vunpack.c.h.b16 %v504
    %v761 = vunpack.c.l.b16 %v505
    %v762 = vunpack.c.h.b16 %v505
    %v763 = vunpack.c.l.b16 %v506
    %v764 = vunpack.c.l.b16 %v507
    %v765 = vunpack.c.h.b16 %v507
    %v766 = vunpack.c.l.b16 %v508
    %v767 = vunpack.c.h.b16 %v508
    %v768 = vunpack.c.l.b16 %v509
    %v769 = vunpack.c.h.b16 %v509
    %v770 = vunpack.c.l.b16 %v510
    %v771 = vunpack.c.h.b16 %v510
    %v772 = vunpack.c.l.b16 %v511
    %v773 = vunpack.c.h.b16 %v511
    %v774 = vunpack.c.l.b16 %v512
    %v775 = vunpack.c.h.b16 %v512
    %v776 = vunpack.c.l.b16 %v513
    %v777 = vunpack.c.h.b16 %v513
    %v778 = vunpack.c.l.b16 %v514
    %v779 = vunpack.c.h.b16 %v514
    %v780 = vunpack.c.l.b16 %v515
    %v781 = vunpack.c.l.b16 %v516
    %v782 = vunpack.c.h.b16 %v516
    %v783 = vunpack.c.l.b16 %v517
    %v784 = vunpack.c.h.b16 %v517
    %v785 = vunpack.c.l.b16 %v518
    %v786 = vunpack.c.h.b16 %v518
    %v787 = vunpack.c.l.b16 %v519
    %v788 = vunpack.c.h.b16 %v519
    %v789 = vunpack.c.l.b16 %v520
    %v790 = vunpack.c.h.b16 %v520
    %v791 = vunpack.c.l.b16 %v521
    %v792 = vunpack.c.h.b16 %v521
    %v793 = vunpack.c.l.b16 %v522
    %v794 = vunpack.c.h.b16 %v522
    %v795 = vunpack.c.l.b16 %v523
    %v796 = vunpack.c.h.b16 %v523
    %v797 = vunpack.c.l.b16 %v524
    %v798 = vunpack.c.l.b16 %v525
    %v799 = vunpack.c.h.b16 %v525
    %v800 = vunpack.c.l.b16 %v526
    %v801 = vunpack.c.h.b16 %v526
    %v802 = vunpack.c.l.b16 %v527
    %v803 = vunpack.c.h.b16 %v527
    %v804 = vunpack.c.l.b16 %v528
    %v805 = vunpack.c.h.b16 %v528
    %v806 = vunpack.c.l.b16 %v529
    %v807 = vunpack.c.h.b16 %v529
    %v808 = vunpack.c.l.b16 %v530
    %v809 = vunpack.c.h.b16 %v530
    %v810 = vunpack.c.l.b16 %v531
    %v811 = vunpack.c.h.b16 %v531
    %v812 = vunpack.c.l.b16 %v532
    %v813 = vunpack.c.h.b16 %v532
    %v814 = vunpack.c.l.b16 %v533
    %v815 = vunpack.c.l.b16 %v534
    %v816 = vunpack.c.h.b16 %v534
    %v817 = vunpack.c.l.b16 %v535
    %v818 = vunpack.c.h.b16 %v535
    %v819 = vunpack.c.l.b16 %v536
    %v820 = vunpack.c.h.b16 %v536
    %v821 = vunpack.c.l.b16 %v537
    %v822 = vunpack.c.h.b16 %v537
    %v823 = vunpack.c.l.b16 %v538
    %v824 = vunpack.c.h.b16 %v538
    %v825 = vunpack.c.l.b16 %v539
    %v826 = vunpack.c.h.b16 %v539
    %v827 = vunpack.c.l.b16 %v540
    %v828 = vunpack.c.h.b16 %v540
    %v829 = vunpack.c.l.b16 %v541
    %v830 = vunpack.c.h.b16 %v541
    %v831 = vunpack.c.l.b16 %v542
    %v832 = vpack.c.b16 %v662, %v645
    %v833 = vpack.c.b16 %v663, %v646
    %v834 = vpack.c.b16 %v664, %v647
    %v835 = vpack.c.b16 %v665, %v648
    %v836 = vpack.c.b16 %v666, %v649
    %v837 = vpack.c.b16 %v667, %v650
    %v838 = vpack.c.b16 %v668, %v651
    %v839 = vpack.c.b16 %v669, %v652
    %v840 = vpack.c.b16 %v670, %v653
    %v841 = vpack.c.b16 %v671, %v654
    %v842 = vpack.c.b16 %v672, %v655
    %v843 = vpack.c.b16 %v673, %v656
    %v844 = vpack.c.b16 %v674, %v657
    %v845 = vpack.c.b16 %v675, %v658
    %v846 = vpack.c.b16 %v676, %v659
    %v847 = vpack.c.b16 %v677, %v660
    %v848 = vpack.c.b16 %v678, %v661
    %v849 = vpack.c.b16 %v696, %v679
    %v850 = vpack.c.b16 %v697, %v680
    %v851 = vpack.c.b16 %v698, %v681
    %v852 = vpack.c.b16 %v699, %v682
    %v853 = vpack.c.b16 %v700, %v683
    %v854 = vpack.c.b16 %v701, %v684
    %v855 = vpack.c.b16 %v702, %v685
    %v856 = vpack.c.b16 %v703, %v686
    %v857 = vpack.c.b16 %v704, %v687
    %v858 = vpack.c.b16 %v705, %v688
    %v859 = vpack.c.b16 %v706, %v689
    %v860 = vpack.c.b16 %v707, %v690
    %v861 = vpack.c.b16 %v708, %v691
    %v862 = vpack.c.b16 %v709, %v692
    %v863 = vpack.c.b16 %v710, %v693
    %v864 = vpack.c.b16 %v711, %v694
    %v865 = vpack.c.b16 %v712, %v695
    %v866 = vpack.c.b16 %v730, %v713
    %v867 = vpack.c.b16 %v731, %v714
    %v868 = vpack.c.b16 %v732, %v715
    %v869 = vpack.c.b16 %v733, %v716
    %v870 = vpack.c.b16 %v734, %v717
    %v871 = vpack.c.b16 %v735, %v718
    %v872 = vpack.c.b16 %v736, %v719
    %v873 = vpack.c.b16 %v737, %v720
    %v874 = vpack.c.b16 %v738, %v721
    %v875 = vpack.c.b16 %v739, %v722
    %v876 = vpack.c.b16 %v740, %v723
    %v877 = vpack.c.b16 %v741, %v724
    %v878 = vpack.c.b16 %v742, %v725
    %v879 = vpack.c.b16 %v743, %v726
    %v880 = vpack.c.b16 %v744, %v727
    %v881 = vpack.c.b16 %v745, %v728
    %v882 = vpack.c.b16 %v746, %v729
    %v883 = vpack.c.b16 %v764, %v747
    %v884 = vpack.c.b16 %v765, %v748
    %v885 = vpack.c.b16 %v766, %v749
    %v886 = vpack.c.b16 %v767, %v750
    %v887 = vpack.c.b16 %v768, %v751
    %v888 = vpack.c.b16 %v769, %v752
    %v889 = vpack.c.b16 %v770, %v753
    %v890 = vpack.c.b16 %v771, %v754
    %v891 = vpack.c.b16 %v772, %v755
    %v892 = vpack.c.b16 %v773, %v756
    %v893 = vpack.c.b16 %v774, %v757
    %v894 = vpack.c.b16 %v775, %v758
    %v895 = vpack.c.b16 %v776, %v759
    %v896 = vpack.c.b16 %v777, %v760
    %v897 = vpack.c.b16 %v778, %v761
    %v898 = vpack.c.b16 %v779, %v762
    %v899 = vpack.c.b16 %v780, %v763
    %v900 = vpack.c.b16 %v798, %v781
    %v901 = vpack.c.b16 %v799, %v782
    %v902 = vpack.c.b16 %v800, %v783
    %v903 = vpack.c.b16 %v801, %v784
    %v904 = vpack.c.b16 %v802, %v785
    %v905 = vpack.c.b16 %v803, %v786
    %v906 = vpack.c.b16 %v804, %v787
    %v907 = vpack.c.b16 %v805, %v788
    %v908 = vpack.c.b16 %v806, %v789
    %v909 = vpack.c.b16 %v807, %v790
    %v910 = vpack.c.b16 %v808, %v791
    %v911 = vpack.c.b16 %v809, %v792
    %v912 = vpack.c.b16 %v810, %v793
    %v913 = vpack.c.b16 %v811, %v794
    %v914 = vpack.c.b16 %v812, %v795
    %v915 = vpack.c.b16 %v813, %v796
    %v916 = vpack.c.b16 %v814, %v797
    %v917 = vpack.c.b16 %v815, %v815
    %v918 = vpack.c.b16 %v816, %v816
    %v919 = vpack.c.b16 %v817, %v817
    %v920 = vpack.c.b16 %v818, %v818
    %v921 = vpack.c.b16 %v819, %v819
    %v922 = vpack.c.b16 %v820, %v820
    %v923 = vpack.c.b16 %v821, %v821
    %v924 = vpack.c.b16 %v822, %v822
    %v925 = vpack.c.b16 %v823, %v823
    %v926 = vpack.c.b16 %v824, %v824
    %v927 = vpack.c.b16 %v825, %v825
    %v928 = vpack.c.b16 %v826, %v826
    %v929 = vpack.c.b16 %v827, %v827
    %v930 = vpack.c.b16 %v828, %v828
    %v931 = vpack.c.b16 %v829, %v829
    %v932 = vpack.c.b16 %v830, %v830
    %v933 = vpack.c.b16 %v831, %v831
    %v1022 = vperm.slane %v543, 0
    %v1023 = vperm.slane %v543, 1
    %v1024 = vperm.slane %v543, 2
    %v1025 = vperm.slane %v543, 3
    %v1026 = vperm.slane %v543, 4
    %v1027 = vperm.slane %v543, 5
    %v1028 = vperm.slane %v543, 6
    %v1029 = vperm.slane %v543, 7
    %v1030 = vperm.slane %v544, 0
    %v1031 = vperm.slane %v544, 1
    %v1032 = vperm.slane %v544, 2
    %v1033 = vperm.slane %v544, 3
    %v1034 = vperm.slane %v544, 4
    %v1035 = vperm.slane %v544, 5
    %v1036 = vperm.slane %v544, 6
    %v1037 = vperm.slane %v544, 7
    %v1038 = vperm.slane %v545, 0
    %vm1056 = vcmask 703488
    %v1058 = vsel %vm1056, %v443, 0
    %vm1060 = vcmask 1042432
    %v1062 = vsel %vm1060, %v917, 0
    %v1065 = vsel %vm1060, %v918, 0
    %v1068 = vsel %vm1060, %v919, 0
    %v1071 = vsel %vm1060, %v920, 0
    %v1074 = vsel %vm1060, %v921, 0
    %v1077 = vsel %vm1060, %v922, 0
    %v1080 = vsel %vm1060, %v923, 0
    %v1083 = vsel %vm1060, %v924, 0
    %v1086 = vsel %vm1060, %v925, 0
    %v1089 = vsel %vm1060, %v926, 0
    %v1092 = vsel %vm1060, %v927, 0
    %v1095 = vsel %vm1060, %v928, 0
    %v1098 = vsel %vm1060, %v929, 0
    %v1101 = vsel %vm1060, %v930, 0
    %v1104 = vsel %vm1060, %v931, 0
    %v1107 = vsel %vm1060, %v932, 0
    %v1110 = vsel %vm1060, %v933, 0
    %1112 = vmatpush.bf16.msra.mxu0 0
    %1113 = vmatpush.bf16.msra.mxu0 0
    %1114 = vmatpush.bf16.msra.mxu0 %v1062
    %1115 = vmatpush.bf16.msra.mxu0 %v900
    %1116 = vmatpush.bf16.msra.mxu0 %v883
    %1117 = vmatpush.bf16.msra.mxu0 %v866
    %1118 = vmatpush.bf16.msra.mxu0 %v849
    %1119 = vmatpush.bf16.msra.mxu0 %v832
    %1120 = vmatmul.bf16.gmra.mxu0 %v1058
    %v1121 = vpop.f32.mrf.mxu0
    %v1122 = vadd.f32 %v1022, %v1121
    %v1123 = vpop.f32.mrf.mxu0
    %1124 = vdwg.mxu0
    %1125 = vmatpush.bf16.msra.mxu0 0
    %1126 = vmatpush.bf16.msra.mxu0 0
    %1127 = vmatpush.bf16.msra.mxu0 %v1065
    %1128 = vmatpush.bf16.msra.mxu0 %v901
    %1129 = vmatpush.bf16.msra.mxu0 %v884
    %1130 = vmatpush.bf16.msra.mxu0 %v867
    %1131 = vmatpush.bf16.msra.mxu0 %v850
    %1132 = vmatpush.bf16.msra.mxu0 %v833
    %1133 = vmatmul.bf16.gmra.mxu0 %v1058
    %v1134 = vpop.f32.mrf.mxu0
    %v1135 = vadd.f32 %v1023, %v1134
    %v1136 = vpop.f32.mrf.mxu0
    %1137 = vdwg.mxu0
    %1138 = vmatpush.bf16.msra.mxu0 0
    %1139 = vmatpush.bf16.msra.mxu0 0
    %1140 = vmatpush.bf16.msra.mxu0 %v1068
    %1141 = vmatpush.bf16.msra.mxu0 %v902
    %1142 = vmatpush.bf16.msra.mxu0 %v885
    %1143 = vmatpush.bf16.msra.mxu0 %v868
    %1144 = vmatpush.bf16.msra.mxu0 %v851
    %1145 = vmatpush.bf16.msra.mxu0 %v834
    %1146 = vmatmul.bf16.gmra.mxu0 %v1058
    %v1147 = vpop.f32.mrf.mxu0
    %v1148 = vadd.f32 %v1024, %v1147
    %v1149 = vpop.f32.mrf.mxu0
    %1150 = vdwg.mxu0
    %1151 = vmatpush.bf16.msra.mxu0 0
    %1152 = vmatpush.bf16.msra.mxu0 0
    %1153 = vmatpush.bf16.msra.mxu0 %v1071
    %1154 = vmatpush.bf16.msra.mxu0 %v903
    %1155 = vmatpush.bf16.msra.mxu0 %v886
    %1156 = vmatpush.bf16.msra.mxu0 %v869
    %1157 = vmatpush.bf16.msra.mxu0 %v852
    %1158 = vmatpush.bf16.msra.mxu0 %v835
    %1159 = vmatmul.bf16.gmra.mxu0 %v1058
    %v1160 = vpop.f32.mrf.mxu0
    %v1161 = vadd.f32 %v1025, %v1160
    %v1162 = vpop.f32.mrf.mxu0
    %1163 = vdwg.mxu0
    %1164 = vmatpush.bf16.msra.mxu0 0
    %1165 = vmatpush.bf16.msra.mxu0 0
    %1166 = vmatpush.bf16.msra.mxu0 %v1074
    %1167 = vmatpush.bf16.msra.mxu0 %v904
    %1168 = vmatpush.bf16.msra.mxu0 %v887
    %1169 = vmatpush.bf16.msra.mxu0 %v870
    %1170 = vmatpush.bf16.msra.mxu0 %v853
    %1171 = vmatpush.bf16.msra.mxu0 %v836
    %1172 = vmatmul.bf16.gmra.mxu0 %v1058
    %v1173 = vpop.f32.mrf.mxu0
    %v1174 = vadd.f32 %v1026, %v1173
    %v1175 = vpop.f32.mrf.mxu0
    %1176 = vdwg.mxu0
    %1177 = vmatpush.bf16.msra.mxu0 0
    %1178 = vmatpush.bf16.msra.mxu0 0
    %1179 = vmatpush.bf16.msra.mxu0 %v1077
    %1180 = vmatpush.bf16.msra.mxu0 %v905
    %1181 = vmatpush.bf16.msra.mxu0 %v888
    %1182 = vmatpush.bf16.msra.mxu0 %v871
    %1183 = vmatpush.bf16.msra.mxu0 %v854
    %1184 = vmatpush.bf16.msra.mxu0 %v837
    %1185 = vmatmul.bf16.gmra.mxu0 %v1058
    %v1186 = vpop.f32.mrf.mxu0
    %v1187 = vadd.f32 %v1027, %v1186
    %v1188 = vpop.f32.mrf.mxu0
    %1189 = vdwg.mxu0
    %1190 = vmatpush.bf16.msra.mxu0 0
    %1191 = vmatpush.bf16.msra.mxu0 0
    %1192 = vmatpush.bf16.msra.mxu0 %v1080
    %1193 = vmatpush.bf16.msra.mxu0 %v906
    %1194 = vmatpush.bf16.msra.mxu0 %v889
    %1195 = vmatpush.bf16.msra.mxu0 %v872
    %1196 = vmatpush.bf16.msra.mxu0 %v855
    %1197 = vmatpush.bf16.msra.mxu0 %v838
    %1198 = vmatmul.bf16.gmra.mxu0 %v1058
    %v1199 = vpop.f32.mrf.mxu0
    %v1200 = vadd.f32 %v1028, %v1199
    %v1201 = vpop.f32.mrf.mxu0
    %1202 = vdwg.mxu0
    %1203 = vmatpush.bf16.msra.mxu0 0
    %1204 = vmatpush.bf16.msra.mxu0 0
    %1205 = vmatpush.bf16.msra.mxu0 %v1083
    %1206 = vmatpush.bf16.msra.mxu0 %v907
    %1207 = vmatpush.bf16.msra.mxu0 %v890
    %1208 = vmatpush.bf16.msra.mxu0 %v873
    %1209 = vmatpush.bf16.msra.mxu0 %v856
    %1210 = vmatpush.bf16.msra.mxu0 %v839
    %1211 = vmatmul.bf16.gmra.mxu0 %v1058
    %v1212 = vpop.f32.mrf.mxu0
    %v1213 = vadd.f32 %v1029, %v1212
    %v1214 = vpop.f32.mrf.mxu0
    %1215 = vdwg.mxu0
    %1216 = vmatpush.bf16.msra.mxu0 0
    %1217 = vmatpush.bf16.msra.mxu0 0
    %1218 = vmatpush.bf16.msra.mxu0 %v1086
    %1219 = vmatpush.bf16.msra.mxu0 %v908
    %1220 = vmatpush.bf16.msra.mxu0 %v891
    %1221 = vmatpush.bf16.msra.mxu0 %v874
    %1222 = vmatpush.bf16.msra.mxu0 %v857
    %1223 = vmatpush.bf16.msra.mxu0 %v840
    %1224 = vmatmul.bf16.gmra.mxu0 %v1058
    %v1225 = vpop.f32.mrf.mxu0
    %v1226 = vadd.f32 %v1030, %v1225
    %v1227 = vpop.f32.mrf.mxu0
    %1228 = vdwg.mxu0
    %1229 = vmatpush.bf16.msra.mxu0 0
    %1230 = vmatpush.bf16.msra.mxu0 0
    %1231 = vmatpush.bf16.msra.mxu0 %v1089
    %1232 = vmatpush.bf16.msra.mxu0 %v909
    %1233 = vmatpush.bf16.msra.mxu0 %v892
    %1234 = vmatpush.bf16.msra.mxu0 %v875
    %1235 = vmatpush.bf16.msra.mxu0 %v858
    %1236 = vmatpush.bf16.msra.mxu0 %v841
    %1237 = vmatmul.bf16.gmra.mxu0 %v1058
    %v1238 = vpop.f32.mrf.mxu0
    %v1239 = vadd.f32 %v1031, %v1238
    %v1240 = vpop.f32.mrf.mxu0
    %1241 = vdwg.mxu0
    %1242 = vmatpush.bf16.msra.mxu0 0
    %1243 = vmatpush.bf16.msra.mxu0 0
    %1244 = vmatpush.bf16.msra.mxu0 %v1092
    %1245 = vmatpush.bf16.msra.mxu0 %v910
    %1246 = vmatpush.bf16.msra.mxu0 %v893
    %1247 = vmatpush.bf16.msra.mxu0 %v876
    %1248 = vmatpush.bf16.msra.mxu0 %v859
    %1249 = vmatpush.bf16.msra.mxu0 %v842
    %1250 = vmatmul.bf16.gmra.mxu0 %v1058
    %v1251 = vpop.f32.mrf.mxu0
    %v1252 = vadd.f32 %v1032, %v1251
    %v1253 = vpop.f32.mrf.mxu0
    %1254 = vdwg.mxu0
    %1255 = vmatpush.bf16.msra.mxu0 0
    %1256 = vmatpush.bf16.msra.mxu0 0
    %1257 = vmatpush.bf16.msra.mxu0 %v1095
    %1258 = vmatpush.bf16.msra.mxu0 %v911
    %1259 = vmatpush.bf16.msra.mxu0 %v894
    %1260 = vmatpush.bf16.msra.mxu0 %v877
    %1261 = vmatpush.bf16.msra.mxu0 %v860
    %1262 = vmatpush.bf16.msra.mxu0 %v843
    %1263 = vmatmul.bf16.gmra.mxu0 %v1058
    %v1264 = vpop.f32.mrf.mxu0
    %v1265 = vadd.f32 %v1033, %v1264
    %v1266 = vpop.f32.mrf.mxu0
    %1267 = vdwg.mxu0
    %1268 = vmatpush.bf16.msra.mxu0 0
    %1269 = vmatpush.bf16.msra.mxu0 0
    %1270 = vmatpush.bf16.msra.mxu0 %v1098
    %1271 = vmatpush.bf16.msra.mxu0 %v912
    %1272 = vmatpush.bf16.msra.mxu0 %v895
    %1273 = vmatpush.bf16.msra.mxu0 %v878
    %1274 = vmatpush.bf16.msra.mxu0 %v861
    %1275 = vmatpush.bf16.msra.mxu0 %v844
    %1276 = vmatmul.bf16.gmra.mxu0 %v1058
    %v1277 = vpop.f32.mrf.mxu0
    %v1278 = vadd.f32 %v1034, %v1277
    %v1279 = vpop.f32.mrf.mxu0
    %1280 = vdwg.mxu0
    %1281 = vmatpush.bf16.msra.mxu0 0
    %1282 = vmatpush.bf16.msra.mxu0 0
    %1283 = vmatpush.bf16.msra.mxu0 %v1101
    %1284 = vmatpush.bf16.msra.mxu0 %v913
    %1285 = vmatpush.bf16.msra.mxu0 %v896
    %1286 = vmatpush.bf16.msra.mxu0 %v879
    %1287 = vmatpush.bf16.msra.mxu0 %v862
    %1288 = vmatpush.bf16.msra.mxu0 %v845
    %1289 = vmatmul.bf16.gmra.mxu0 %v1058
    %v1290 = vpop.f32.mrf.mxu0
    %v1291 = vadd.f32 %v1035, %v1290
    %v1292 = vpop.f32.mrf.mxu0
    %1293 = vdwg.mxu0
    %1294 = vmatpush.bf16.msra.mxu0 0
    %1295 = vmatpush.bf16.msra.mxu0 0
    %1296 = vmatpush.bf16.msra.mxu0 %v1104
    %1297 = vmatpush.bf16.msra.mxu0 %v914
    %1298 = vmatpush.bf16.msra.mxu0 %v897
    %1299 = vmatpush.bf16.msra.mxu0 %v880
    %1300 = vmatpush.bf16.msra.mxu0 %v863
    %1301 = vmatpush.bf16.msra.mxu0 %v846
    %1302 = vmatmul.bf16.gmra.mxu0 %v1058
    %v1303 = vpop.f32.mrf.mxu0
    %v1304 = vadd.f32 %v1036, %v1303
    %v1305 = vpop.f32.mrf.mxu0
    %1306 = vdwg.mxu0
    %1307 = vmatpush.bf16.msra.mxu0 0
    %1308 = vmatpush.bf16.msra.mxu0 0
    %1309 = vmatpush.bf16.msra.mxu0 %v1107
    %1310 = vmatpush.bf16.msra.mxu0 %v915
    %1311 = vmatpush.bf16.msra.mxu0 %v898
    %1312 = vmatpush.bf16.msra.mxu0 %v881
    %1313 = vmatpush.bf16.msra.mxu0 %v864
    %1314 = vmatpush.bf16.msra.mxu0 %v847
    %1315 = vmatmul.bf16.gmra.mxu0 %v1058
    %v1316 = vpop.f32.mrf.mxu0
    %v1317 = vadd.f32 %v1037, %v1316
    %v1318 = vpop.f32.mrf.mxu0
    %1319 = vdwg.mxu0
    %1320 = vmatpush.bf16.msra.mxu0 0
    %1321 = vmatpush.bf16.msra.mxu0 0
    %1322 = vmatpush.bf16.msra.mxu0 %v1110
    %1323 = vmatpush.bf16.msra.mxu0 %v916
    %1324 = vmatpush.bf16.msra.mxu0 %v899
    %1325 = vmatpush.bf16.msra.mxu0 %v882
    %1326 = vmatpush.bf16.msra.mxu0 %v865
    %1327 = vmatpush.bf16.msra.mxu0 %v848
    %1328 = vmatmul.bf16.gmra.mxu0 %v1058
    %v1329 = vpop.f32.mrf.mxu0
    %v1330 = vadd.f32 %v1038, %v1329
    %v1331 = vpop.f32.mrf.mxu0
    %1332 = vdwg.mxu0
    %v1333 = vxor.u32 %v1122, 2147483648
    %v1334 = vxor.u32 %v1135, 2147483648
    %v1335 = vxor.u32 %v1148, 2147483648
    %v1336 = vxor.u32 %v1161, 2147483648
    %v1337 = vxor.u32 %v1174, 2147483648
    %v1338 = vxor.u32 %v1187, 2147483648
    %v1339 = vxor.u32 %v1200, 2147483648
    %v1340 = vxor.u32 %v1213, 2147483648
    %v1341 = vxor.u32 %v1226, 2147483648
    %v1342 = vxor.u32 %v1239, 2147483648
    %v1343 = vxor.u32 %v1252, 2147483648
    %v1344 = vxor.u32 %v1265, 2147483648
    %v1345 = vxor.u32 %v1278, 2147483648
    %v1346 = vxor.u32 %v1291, 2147483648
    %v1347 = vxor.u32 %v1304, 2147483648
    %v1348 = vxor.u32 %v1317, 2147483648
    %v1349 = vxor.u32 %v1330, 2147483648
    %v1350 = vmul.f32 %v1333, 1.442695
    %v1351 = vpow.pop %v1350
    %v1352 = vmul.f32 %v1334, 1.442695
    %v1353 = vpow.pop %v1352
    %v1354 = vmul.f32 %v1335, 1.442695
    %v1355 = vpow.pop %v1354
    %v1356 = vmul.f32 %v1336, 1.442695
    %v1357 = vpow.pop %v1356
    %v1358 = vmul.f32 %v1337, 1.442695
    %v1359 = vpow.pop %v1358
    %v1360 = vmul.f32 %v1338, 1.442695
    %v1361 = vpow.pop %v1360
    %v1362 = vmul.f32 %v1339, 1.442695
    %v1363 = vpow.pop %v1362
    %v1364 = vmul.f32 %v1340, 1.442695
    %v1365 = vpow.pop %v1364
    %v1366 = vmul.f32 %v1341, 1.442695
    %v1367 = vpow.pop %v1366
    %v1368 = vmul.f32 %v1342, 1.442695
    %v1369 = vpow.pop %v1368
    %v1370 = vmul.f32 %v1343, 1.442695
    %v1371 = vpow.pop %v1370
    %v1372 = vmul.f32 %v1344, 1.442695
    %v1373 = vpow.pop %v1372
    %v1374 = vmul.f32 %v1345, 1.442695
    %v1375 = vpow.pop %v1374
    %v1376 = vmul.f32 %v1346, 1.442695
    %v1377 = vpow.pop %v1376
    %v1378 = vmul.f32 %v1347, 1.442695
    %v1379 = vpow.pop %v1378
    %v1380 = vmul.f32 %v1348, 1.442695
    %v1381 = vpow.pop %v1380
    %v1382 = vmul.f32 %v1349, 1.442695
    %v1383 = vpow.pop %v1382
    %v1384 = vadd.f32 %v1351, 1.0
    %v1385 = vadd.f32 %v1353, 1.0
    %v1386 = vadd.f32 %v1355, 1.0
    %v1387 = vadd.f32 %v1357, 1.0
    %v1388 = vadd.f32 %v1359, 1.0
    %v1389 = vadd.f32 %v1361, 1.0
    %v1390 = vadd.f32 %v1363, 1.0
    %v1391 = vadd.f32 %v1365, 1.0
    %v1392 = vadd.f32 %v1367, 1.0
    %v1393 = vadd.f32 %v1369, 1.0
    %v1394 = vadd.f32 %v1371, 1.0
    %v1395 = vadd.f32 %v1373, 1.0
    %v1396 = vadd.f32 %v1375, 1.0
    %v1397 = vadd.f32 %v1377, 1.0
    %v1398 = vadd.f32 %v1379, 1.0
    %v1399 = vadd.f32 %v1381, 1.0
    %v1400 = vadd.f32 %v1383, 1.0
    %v1401 = vrcp.pop %v1384
    %v1402 = vmul.f32 %v1384, %v1401
    %v1403 = vsub.f32 1.0, %v1402
    %v1404 = vmul.f32 %v1401, %v1403
    %v1405 = vadd.f32 %v1401, %v1404
    %vm1406 = vweird.f32 %v1384
    %vm1407 = vweird.f32 %v1401
    %vm1408 = vmor %vm1406, %vm1407
    %v1409 = vsel %vm1408, %v1401, %v1405
    %v1410 = vand.u32 2147483647, %v1384
    %vm1411 = vcmp.eq.f32.partialorder %v1410, 8.507059e+37
    %v1412 = vand.u32 %v1384, 2147483648
    %v1413 = vor.u32 1.1754944e-38, %v1412
    %v1414 = vsel %vm1411, %v1413, %v1409
    %v1415 = vmul.f32 1.0, %v1414
    %v1416 = vrcp.pop %v1385
    %v1417 = vmul.f32 %v1385, %v1416
    %v1418 = vsub.f32 1.0, %v1417
    %v1419 = vmul.f32 %v1416, %v1418
    %v1420 = vadd.f32 %v1416, %v1419
    %vm1421 = vweird.f32 %v1385
    %vm1422 = vweird.f32 %v1416
    %vm1423 = vmor %vm1421, %vm1422
    %v1424 = vsel %vm1423, %v1416, %v1420
    %v1425 = vand.u32 2147483647, %v1385
    %vm1426 = vcmp.eq.f32.partialorder %v1425, 8.507059e+37
    %v1427 = vand.u32 %v1385, 2147483648
    %v1428 = vor.u32 1.1754944e-38, %v1427
    %v1429 = vsel %vm1426, %v1428, %v1424
    %v1430 = vmul.f32 1.0, %v1429
    %v1431 = vrcp.pop %v1386
    %v1432 = vmul.f32 %v1386, %v1431
    %v1433 = vsub.f32 1.0, %v1432
    %v1434 = vmul.f32 %v1431, %v1433
    %v1435 = vadd.f32 %v1431, %v1434
    %vm1436 = vweird.f32 %v1386
    %vm1437 = vweird.f32 %v1431
    %vm1438 = vmor %vm1436, %vm1437
    %v1439 = vsel %vm1438, %v1431, %v1435
    %v1440 = vand.u32 2147483647, %v1386
    %vm1441 = vcmp.eq.f32.partialorder %v1440, 8.507059e+37
    %v1442 = vand.u32 %v1386, 2147483648
    %v1443 = vor.u32 1.1754944e-38, %v1442
    %v1444 = vsel %vm1441, %v1443, %v1439
    %v1445 = vmul.f32 1.0, %v1444
    %v1446 = vrcp.pop %v1387
    %v1447 = vmul.f32 %v1387, %v1446
    %v1448 = vsub.f32 1.0, %v1447
    %v1449 = vmul.f32 %v1446, %v1448
    %v1450 = vadd.f32 %v1446, %v1449
    %vm1451 = vweird.f32 %v1387
    %vm1452 = vweird.f32 %v1446
    %vm1453 = vmor %vm1451, %vm1452
    %v1454 = vsel %vm1453, %v1446, %v1450
    %v1455 = vand.u32 2147483647, %v1387
    %vm1456 = vcmp.eq.f32.partialorder %v1455, 8.507059e+37
    %v1457 = vand.u32 %v1387, 2147483648
    %v1458 = vor.u32 1.1754944e-38, %v1457
    %v1459 = vsel %vm1456, %v1458, %v1454
    %v1460 = vmul.f32 1.0, %v1459
    %v1461 = vrcp.pop %v1388
    %v1462 = vmul.f32 %v1388, %v1461
    %v1463 = vsub.f32 1.0, %v1462
    %v1464 = vmul.f32 %v1461, %v1463
    %v1465 = vadd.f32 %v1461, %v1464
    %vm1466 = vweird.f32 %v1388
    %vm1467 = vweird.f32 %v1461
    %vm1468 = vmor %vm1466, %vm1467
    %v1469 = vsel %vm1468, %v1461, %v1465
    %v1470 = vand.u32 2147483647, %v1388
    %vm1471 = vcmp.eq.f32.partialorder %v1470, 8.507059e+37
    %v1472 = vand.u32 %v1388, 2147483648
    %v1473 = vor.u32 1.1754944e-38, %v1472
    %v1474 = vsel %vm1471, %v1473, %v1469
    %v1475 = vmul.f32 1.0, %v1474
    %v1476 = vrcp.pop %v1389
    %v1477 = vmul.f32 %v1389, %v1476
    %v1478 = vsub.f32 1.0, %v1477
    %v1479 = vmul.f32 %v1476, %v1478
    %v1480 = vadd.f32 %v1476, %v1479
    %vm1481 = vweird.f32 %v1389
    %vm1482 = vweird.f32 %v1476
    %vm1483 = vmor %vm1481, %vm1482
    %v1484 = vsel %vm1483, %v1476, %v1480
    %v1485 = vand.u32 2147483647, %v1389
    %vm1486 = vcmp.eq.f32.partialorder %v1485, 8.507059e+37
    %v1487 = vand.u32 %v1389, 2147483648
    %v1488 = vor.u32 1.1754944e-38, %v1487
    %v1489 = vsel %vm1486, %v1488, %v1484
    %v1490 = vmul.f32 1.0, %v1489
    %v1491 = vrcp.pop %v1390
    %v1492 = vmul.f32 %v1390, %v1491
    %v1493 = vsub.f32 1.0, %v1492
    %v1494 = vmul.f32 %v1491, %v1493
    %v1495 = vadd.f32 %v1491, %v1494
    %vm1496 = vweird.f32 %v1390
    %vm1497 = vweird.f32 %v1491
    %vm1498 = vmor %vm1496, %vm1497
    %v1499 = vsel %vm1498, %v1491, %v1495
    %v1500 = vand.u32 2147483647, %v1390
    %vm1501 = vcmp.eq.f32.partialorder %v1500, 8.507059e+37
    %v1502 = vand.u32 %v1390, 2147483648
    %v1503 = vor.u32 1.1754944e-38, %v1502
    %v1504 = vsel %vm1501, %v1503, %v1499
    %v1505 = vmul.f32 1.0, %v1504
    %v1506 = vrcp.pop %v1391
    %v1507 = vmul.f32 %v1391, %v1506
    %v1508 = vsub.f32 1.0, %v1507
    %v1509 = vmul.f32 %v1506, %v1508
    %v1510 = vadd.f32 %v1506, %v1509
    %vm1511 = vweird.f32 %v1391
    %vm1512 = vweird.f32 %v1506
    %vm1513 = vmor %vm1511, %vm1512
    %v1514 = vsel %vm1513, %v1506, %v1510
    %v1515 = vand.u32 2147483647, %v1391
    %vm1516 = vcmp.eq.f32.partialorder %v1515, 8.507059e+37
    %v1517 = vand.u32 %v1391, 2147483648
    %v1518 = vor.u32 1.1754944e-38, %v1517
    %v1519 = vsel %vm1516, %v1518, %v1514
    %v1520 = vmul.f32 1.0, %v1519
    %v1521 = vrcp.pop %v1392
    %v1522 = vmul.f32 %v1392, %v1521
    %v1523 = vsub.f32 1.0, %v1522
    %v1524 = vmul.f32 %v1521, %v1523
    %v1525 = vadd.f32 %v1521, %v1524
    %vm1526 = vweird.f32 %v1392
    %vm1527 = vweird.f32 %v1521
    %vm1528 = vmor %vm1526, %vm1527
    %v1529 = vsel %vm1528, %v1521, %v1525
    %v1530 = vand.u32 2147483647, %v1392
    %vm1531 = vcmp.eq.f32.partialorder %v1530, 8.507059e+37
    %v1532 = vand.u32 %v1392, 2147483648
    %v1533 = vor.u32 1.1754944e-38, %v1532
    %v1534 = vsel %vm1531, %v1533, %v1529
    %v1535 = vmul.f32 1.0, %v1534
    %v1536 = vrcp.pop %v1393
    %v1537 = vmul.f32 %v1393, %v1536
    %v1538 = vsub.f32 1.0, %v1537
    %v1539 = vmul.f32 %v1536, %v1538
    %v1540 = vadd.f32 %v1536, %v1539
    %vm1541 = vweird.f32 %v1393
    %vm1542 = vweird.f32 %v1536
    %vm1543 = vmor %vm1541, %vm1542
    %v1544 = vsel %vm1543, %v1536, %v1540
    %v1545 = vand.u32 2147483647, %v1393
    %vm1546 = vcmp.eq.f32.partialorder %v1545, 8.507059e+37
    %v1547 = vand.u32 %v1393, 2147483648
    %v1548 = vor.u32 1.1754944e-38, %v1547
    %v1549 = vsel %vm1546, %v1548, %v1544
    %v1550 = vmul.f32 1.0, %v1549
    %v1551 = vrcp.pop %v1394
    %v1552 = vmul.f32 %v1394, %v1551
    %v1553 = vsub.f32 1.0, %v1552
    %v1554 = vmul.f32 %v1551, %v1553
    %v1555 = vadd.f32 %v1551, %v1554
    %vm1556 = vweird.f32 %v1394
    %vm1557 = vweird.f32 %v1551
    %vm1558 = vmor %vm1556, %vm1557
    %v1559 = vsel %vm1558, %v1551, %v1555
    %v1560 = vand.u32 2147483647, %v1394
    %vm1561 = vcmp.eq.f32.partialorder %v1560, 8.507059e+37
    %v1562 = vand.u32 %v1394, 2147483648
    %v1563 = vor.u32 1.1754944e-38, %v1562
    %v1564 = vsel %vm1561, %v1563, %v1559
    %v1565 = vmul.f32 1.0, %v1564
    %v1566 = vrcp.pop %v1395
    %v1567 = vmul.f32 %v1395, %v1566
    %v1568 = vsub.f32 1.0, %v1567
    %v1569 = vmul.f32 %v1566, %v1568
    %v1570 = vadd.f32 %v1566, %v1569
    %vm1571 = vweird.f32 %v1395
    %vm1572 = vweird.f32 %v1566
    %vm1573 = vmor %vm1571, %vm1572
    %v1574 = vsel %vm1573, %v1566, %v1570
    %v1575 = vand.u32 2147483647, %v1395
    %vm1576 = vcmp.eq.f32.partialorder %v1575, 8.507059e+37
    %v1577 = vand.u32 %v1395, 2147483648
    %v1578 = vor.u32 1.1754944e-38, %v1577
    %v1579 = vsel %vm1576, %v1578, %v1574
    %v1580 = vmul.f32 1.0, %v1579
    %v1581 = vrcp.pop %v1396
    %v1582 = vmul.f32 %v1396, %v1581
    %v1583 = vsub.f32 1.0, %v1582
    %v1584 = vmul.f32 %v1581, %v1583
    %v1585 = vadd.f32 %v1581, %v1584
    %vm1586 = vweird.f32 %v1396
    %vm1587 = vweird.f32 %v1581
    %vm1588 = vmor %vm1586, %vm1587
    %v1589 = vsel %vm1588, %v1581, %v1585
    %v1590 = vand.u32 2147483647, %v1396
    %vm1591 = vcmp.eq.f32.partialorder %v1590, 8.507059e+37
    %v1592 = vand.u32 %v1396, 2147483648
    %v1593 = vor.u32 1.1754944e-38, %v1592
    %v1594 = vsel %vm1591, %v1593, %v1589
    %v1595 = vmul.f32 1.0, %v1594
    %v1596 = vrcp.pop %v1397
    %v1597 = vmul.f32 %v1397, %v1596
    %v1598 = vsub.f32 1.0, %v1597
    %v1599 = vmul.f32 %v1596, %v1598
    %v1600 = vadd.f32 %v1596, %v1599
    %vm1601 = vweird.f32 %v1397
    %vm1602 = vweird.f32 %v1596
    %vm1603 = vmor %vm1601, %vm1602
    %v1604 = vsel %vm1603, %v1596, %v1600
    %v1605 = vand.u32 2147483647, %v1397
    %vm1606 = vcmp.eq.f32.partialorder %v1605, 8.507059e+37
    %v1607 = vand.u32 %v1397, 2147483648
    %v1608 = vor.u32 1.1754944e-38, %v1607
    %v1609 = vsel %vm1606, %v1608, %v1604
    %v1610 = vmul.f32 1.0, %v1609
    %v1611 = vrcp.pop %v1398
    %v1612 = vmul.f32 %v1398, %v1611
    %v1613 = vsub.f32 1.0, %v1612
    %v1614 = vmul.f32 %v1611, %v1613
    %v1615 = vadd.f32 %v1611, %v1614
    %vm1616 = vweird.f32 %v1398
    %vm1617 = vweird.f32 %v1611
    %vm1618 = vmor %vm1616, %vm1617
    %v1619 = vsel %vm1618, %v1611, %v1615
    %v1620 = vand.u32 2147483647, %v1398
    %vm1621 = vcmp.eq.f32.partialorder %v1620, 8.507059e+37
    %v1622 = vand.u32 %v1398, 2147483648
    %v1623 = vor.u32 1.1754944e-38, %v1622
    %v1624 = vsel %vm1621, %v1623, %v1619
    %v1625 = vmul.f32 1.0, %v1624
    %v1626 = vrcp.pop %v1399
    %v1627 = vmul.f32 %v1399, %v1626
    %v1628 = vsub.f32 1.0, %v1627
    %v1629 = vmul.f32 %v1626, %v1628
    %v1630 = vadd.f32 %v1626, %v1629
    %vm1631 = vweird.f32 %v1399
    %vm1632 = vweird.f32 %v1626
    %vm1633 = vmor %vm1631, %vm1632
    %v1634 = vsel %vm1633, %v1626, %v1630
    %v1635 = vand.u32 2147483647, %v1399
    %vm1636 = vcmp.eq.f32.partialorder %v1635, 8.507059e+37
    %v1637 = vand.u32 %v1399, 2147483648
    %v1638 = vor.u32 1.1754944e-38, %v1637
    %v1639 = vsel %vm1636, %v1638, %v1634
    %v1640 = vmul.f32 1.0, %v1639
    %v1641 = vrcp.pop %v1400
    %v1642 = vmul.f32 %v1400, %v1641
    %v1643 = vsub.f32 1.0, %v1642
    %v1644 = vmul.f32 %v1641, %v1643
    %v1645 = vadd.f32 %v1641, %v1644
    %vm1646 = vweird.f32 %v1400
    %vm1647 = vweird.f32 %v1641
    %vm1648 = vmor %vm1646, %vm1647
    %v1649 = vsel %vm1648, %v1641, %v1645
    %v1650 = vand.u32 2147483647, %v1400
    %vm1651 = vcmp.eq.f32.partialorder %v1650, 8.507059e+37
    %v1652 = vand.u32 %v1400, 2147483648
    %v1653 = vor.u32 1.1754944e-38, %v1652
    %v1654 = vsel %vm1651, %v1653, %v1649
    %v1655 = vmul.f32 1.0, %v1654
    %v1656 = vld [vmem:[%s1] sm:$0xff]
    %v1657 = vld [vmem:[%s1 + $0x8] sm:$0xff]
    %v1658 = vld [vmem:[%s1 + $0x10] sm:$0xff]
    %v1659 = vld [vmem:[%s1 + $0x18] sm:$0xff]
    %v1660 = vld [vmem:[%s1 + $0x20] sm:$0xff]
    %v1661 = vld [vmem:[%s1 + $0x28] sm:$0xff]
    %v1662 = vld [vmem:[%s1 + $0x30] sm:$0xff]
    %v1663 = vld [vmem:[%s1 + $0x38] sm:$0xff]
    %v1664 = vld [vmem:[%s1 + $0x40] sm:$0xf]
    %v1665 = vld [vmem:[%s1 + $0x44] sm:$0xff]
    %v1666 = vld [vmem:[%s1 + $0x4c] sm:$0xff]
    %v1667 = vld [vmem:[%s1 + $0x54] sm:$0xff]
    %v1668 = vld [vmem:[%s1 + $0x5c] sm:$0xff]
    %v1669 = vld [vmem:[%s1 + $0x64] sm:$0xff]
    %v1670 = vld [vmem:[%s1 + $0x6c] sm:$0xff]
    %v1671 = vld [vmem:[%s1 + $0x74] sm:$0xff]
    %v1672 = vld [vmem:[%s1 + $0x7c] sm:$0xff]
    %v1673 = vld [vmem:[%s1 + $0x84] sm:$0xf]
    %v1674 = vld [vmem:[%s1 + $0x88] sm:$0xff]
    %v1675 = vld [vmem:[%s1 + $0x90] sm:$0xff]
    %v1676 = vld [vmem:[%s1 + $0x98] sm:$0xff]
    %v1677 = vld [vmem:[%s1 + $0xa0] sm:$0xff]
    %v1678 = vld [vmem:[%s1 + $0xa8] sm:$0xff]
    %v1679 = vld [vmem:[%s1 + $0xb0] sm:$0xff]
    %v1680 = vld [vmem:[%s1 + $0xb8] sm:$0xff]
    %v1681 = vld [vmem:[%s1 + $0xc0] sm:$0xff]
    %v1682 = vld [vmem:[%s1 + $0xc8] sm:$0xf]
    %v1683 = vld [vmem:[%s1 + $0xcc] sm:$0xff]
    %v1684 = vld [vmem:[%s1 + $0xd4] sm:$0xff]
    %v1685 = vld [vmem:[%s1 + $0xdc] sm:$0xff]
    %v1686 = vld [vmem:[%s1 + $0xe4] sm:$0xff]
    %v1687 = vld [vmem:[%s1 + $0xec] sm:$0xff]
    %v1688 = vld [vmem:[%s1 + $0xf4] sm:$0xff]
    %v1689 = vld [vmem:[%s1 + $0xfc] sm:$0xff]
    %v1690 = vld [vmem:[%s1 + $0x104] sm:$0xff]
    %v1691 = vld [vmem:[%s1 + $0x10c] sm:$0xf]
    %v1692 = vld [vmem:[%s1 + $0x110] sm:$0xff]
    %v1693 = vld [vmem:[%s1 + $0x118] sm:$0xff]
    %v1694 = vld [vmem:[%s1 + $0x120] sm:$0xff]
    %v1695 = vld [vmem:[%s1 + $0x128] sm:$0xff]
    %v1696 = vld [vmem:[%s1 + $0x130] sm:$0xff]
    %v1697 = vld [vmem:[%s1 + $0x138] sm:$0xff]
    %v1698 = vld [vmem:[%s1 + $0x140] sm:$0xff]
    %v1699 = vld [vmem:[%s1 + $0x148] sm:$0xff]
    %v1700 = vld [vmem:[%s1 + $0x150] sm:$0xf]
    %v1701 = vld [vmem:[%s1 + $0x154] sm:$0xff]
    %v1702 = vld [vmem:[%s1 + $0x15c] sm:$0xff]
    %v1703 = vld [vmem:[%s1 + $0x164] sm:$0xff]
    %v1704 = vld [vmem:[%s1 + $0x16c] sm:$0xff]
    %v1705 = vld [vmem:[%s1 + $0x174] sm:$0xff]
    %v1706 = vld [vmem:[%s1 + $0x17c] sm:$0xff]
    %v1707 = vld [vmem:[%s1 + $0x184] sm:$0xff]
    %v1708 = vld [vmem:[%s1 + $0x18c] sm:$0xff]
    %v1709 = vld [vmem:[%s1 + $0x194] sm:$0xf]
    %v1710 = vld [vmem:[%s1 + $0x198] sm:$0xff]
    %v1711 = vld [vmem:[%s1 + $0x1a0] sm:$0xff]
    %v1712 = vld [vmem:[%s1 + $0x1a8] sm:$0xff]
    %v1713 = vld [vmem:[%s1 + $0x1b0] sm:$0xff]
    %v1714 = vld [vmem:[%s1 + $0x1b8] sm:$0xff]
    %v1715 = vld [vmem:[%s1 + $0x1c0] sm:$0xff]
    %v1716 = vld [vmem:[%s1 + $0x1c8] sm:$0xff]
    %v1717 = vld [vmem:[%s1 + $0x1d0] sm:$0xff]
    %v1718 = vld [vmem:[%s1 + $0x1d8] sm:$0xf]
    %v1719 = vunpack.c.l.bf16 %v1656
    %v1720 = vunpack.c.h.bf16 %v1656
    %v1721 = vunpack.c.l.bf16 %v1657
    %v1722 = vunpack.c.h.bf16 %v1657
    %v1723 = vunpack.c.l.bf16 %v1658
    %v1724 = vunpack.c.h.bf16 %v1658
    %v1725 = vunpack.c.l.bf16 %v1659
    %v1726 = vunpack.c.h.bf16 %v1659
    %v1727 = vunpack.c.l.bf16 %v1660
    %v1728 = vunpack.c.h.bf16 %v1660
    %v1729 = vunpack.c.l.bf16 %v1661
    %v1730 = vunpack.c.h.bf16 %v1661
    %v1731 = vunpack.c.l.bf16 %v1662
    %v1732 = vunpack.c.h.bf16 %v1662
    %v1733 = vunpack.c.l.bf16 %v1663
    %v1734 = vunpack.c.h.bf16 %v1663
    %v1735 = vunpack.c.l.bf16 %v1664
    %v1736 = vunpack.c.l.bf16 %v1665
    %v1737 = vunpack.c.h.bf16 %v1665
    %v1738 = vunpack.c.l.bf16 %v1666
    %v1739 = vunpack.c.h.bf16 %v1666
    %v1740 = vunpack.c.l.bf16 %v1667
    %v1741 = vunpack.c.h.bf16 %v1667
    %v1742 = vunpack.c.l.bf16 %v1668
    %v1743 = vunpack.c.h.bf16 %v1668
    %v1744 = vunpack.c.l.bf16 %v1669
    %v1745 = vunpack.c.h.bf16 %v1669
    %v1746 = vunpack.c.l.bf16 %v1670
    %v1747 = vunpack.c.h.bf16 %v1670
    %v1748 = vunpack.c.l.bf16 %v1671
    %v1749 = vunpack.c.h.bf16 %v1671
    %v1750 = vunpack.c.l.bf16 %v1672
    %v1751 = vunpack.c.h.bf16 %v1672
    %v1752 = vunpack.c.l.bf16 %v1673
    %v1753 = vunpack.c.l.bf16 %v1674
    %v1754 = vunpack.c.h.bf16 %v1674
    %v1755 = vunpack.c.l.bf16 %v1675
    %v1756 = vunpack.c.h.bf16 %v1675
    %v1757 = vunpack.c.l.bf16 %v1676
    %v1758 = vunpack.c.h.bf16 %v1676
    %v1759 = vunpack.c.l.bf16 %v1677
    %v1760 = vunpack.c.h.bf16 %v1677
    %v1761 = vunpack.c.l.bf16 %v1678
    %v1762 = vunpack.c.h.bf16 %v1678
    %v1763 = vunpack.c.l.bf16 %v1679
    %v1764 = vunpack.c.h.bf16 %v1679
    %v1765 = vunpack.c.l.bf16 %v1680
    %v1766 = vunpack.c.h.bf16 %v1680
    %v1767 = vunpack.c.l.bf16 %v1681
    %v1768 = vunpack.c.h.bf16 %v1681
    %v1769 = vunpack.c.l.bf16 %v1682
    %v1770 = vunpack.c.l.bf16 %v1683
    %v1771 = vunpack.c.h.bf16 %v1683
    %v1772 = vunpack.c.l.bf16 %v1684
    %v1773 = vunpack.c.h.bf16 %v1684
    %v1774 = vunpack.c.l.bf16 %v1685
    %v1775 = vunpack.c.h.bf16 %v1685
    %v1776 = vunpack.c.l.bf16 %v1686
    %v1777 = vunpack.c.h.bf16 %v1686
    %v1778 = vunpack.c.l.bf16 %v1687
    %v1779 = vunpack.c.h.bf16 %v1687
    %v1780 = vunpack.c.l.bf16 %v1688
    %v1781 = vunpack.c.h.bf16 %v1688
    %v1782 = vunpack.c.l.bf16 %v1689
    %v1783 = vunpack.c.h.bf16 %v1689
    %v1784 = vunpack.c.l.bf16 %v1690
    %v1785 = vunpack.c.h.bf16 %v1690
    %v1786 = vunpack.c.l.bf16 %v1691
    %v1787 = vunpack.c.l.bf16 %v1692
    %v1788 = vunpack.c.h.bf16 %v1692
    %v1789 = vunpack.c.l.bf16 %v1693
    %v1790 = vunpack.c.h.bf16 %v1693
    %v1791 = vunpack.c.l.bf16 %v1694
    %v1792 = vunpack.c.h.bf16 %v1694
    %v1793 = vunpack.c.l.bf16 %v1695
    %v1794 = vunpack.c.h.bf16 %v1695
    %v1795 = vunpack.c.l.bf16 %v1696
    %v1796 = vunpack.c.h.bf16 %v1696
    %v1797 = vunpack.c.l.bf16 %v1697
    %v1798 = vunpack.c.h.bf16 %v1697
    %v1799 = vunpack.c.l.bf16 %v1698
    %v1800 = vunpack.c.h.bf16 %v1698
    %v1801 = vunpack.c.l.bf16 %v1699
    %v1802 = vunpack.c.h.bf16 %v1699
    %v1803 = vunpack.c.l.bf16 %v1700
    %v1804 = vunpack.c.l.bf16 %v1701
    %v1805 = vunpack.c.h.bf16 %v1701
    %v1806 = vunpack.c.l.bf16 %v1702
    %v1807 = vunpack.c.h.bf16 %v1702
    %v1808 = vunpack.c.l.bf16 %v1703
    %v1809 = vunpack.c.h.bf16 %v1703
    %v1810 = vunpack.c.l.bf16 %v1704
    %v1811 = vunpack.c.h.bf16 %v1704
    %v1812 = vunpack.c.l.bf16 %v1705
    %v1813 = vunpack.c.h.bf16 %v1705
    %v1814 = vunpack.c.l.bf16 %v1706
    %v1815 = vunpack.c.h.bf16 %v1706
    %v1816 = vunpack.c.l.bf16 %v1707
    %v1817 = vunpack.c.h.bf16 %v1707
    %v1818 = vunpack.c.l.bf16 %v1708
    %v1819 = vunpack.c.h.bf16 %v1708
    %v1820 = vunpack.c.l.bf16 %v1709
    %v1821 = vunpack.c.l.bf16 %v1710
    %v1822 = vunpack.c.h.bf16 %v1710
    %v1823 = vunpack.c.l.bf16 %v1711
    %v1824 = vunpack.c.h.bf16 %v1711
    %v1825 = vunpack.c.l.bf16 %v1712
    %v1826 = vunpack.c.h.bf16 %v1712
    %v1827 = vunpack.c.l.bf16 %v1713
    %v1828 = vunpack.c.h.bf16 %v1713
    %v1829 = vunpack.c.l.bf16 %v1714
    %v1830 = vunpack.c.h.bf16 %v1714
    %v1831 = vunpack.c.l.bf16 %v1715
    %v1832 = vunpack.c.h.bf16 %v1715
    %v1833 = vunpack.c.l.bf16 %v1716
    %v1834 = vunpack.c.h.bf16 %v1716
    %v1835 = vunpack.c.l.bf16 %v1717
    %v1836 = vunpack.c.h.bf16 %v1717
    %v1837 = vunpack.c.l.bf16 %v1718
    %v1838 = vperm.slane %v1415, 0
    %v1839 = vperm.slane %v1430, 0
    %v1840 = vperm.slane %v1445, 0
    %v1841 = vperm.slane %v1460, 0
    %v1842 = vperm.slane %v1475, 0
    %v1843 = vperm.slane %v1490, 0
    %v1844 = vperm.slane %v1505, 0
    %v1845 = vperm.slane %v1520, 0
    %v1846 = vperm.slane %v1535, 0
    %v1847 = vperm.slane %v1550, 0
    %v1848 = vperm.slane %v1565, 0
    %v1849 = vperm.slane %v1580, 0
    %v1850 = vperm.slane %v1595, 0
    %v1851 = vperm.slane %v1610, 0
    %v1852 = vperm.slane %v1625, 0
    %v1853 = vperm.slane %v1640, 0
    %v1854 = vperm.slane %v1655, 0
    %v1855 = vmul.f32 %v1719, %v1838
    %v1856 = vmul.f32 %v1720, %v1839
    %v1857 = vmul.f32 %v1721, %v1840
    %v1858 = vmul.f32 %v1722, %v1841
    %v1859 = vmul.f32 %v1723, %v1842
    %v1860 = vmul.f32 %v1724, %v1843
    %v1861 = vmul.f32 %v1725, %v1844
    %v1862 = vmul.f32 %v1726, %v1845
    %v1863 = vmul.f32 %v1727, %v1846
    %v1864 = vmul.f32 %v1728, %v1847
    %v1865 = vmul.f32 %v1729, %v1848
    %v1866 = vmul.f32 %v1730, %v1849
    %v1867 = vmul.f32 %v1731, %v1850
    %v1868 = vmul.f32 %v1732, %v1851
    %v1869 = vmul.f32 %v1733, %v1852
    %v1870 = vmul.f32 %v1734, %v1853
    %v1871 = vmul.f32 %v1735, %v1854
    %v1872 = vmul.f32 %v1736, %v1838
    %v1873 = vmul.f32 %v1737, %v1839
    %v1874 = vmul.f32 %v1738, %v1840
    %v1875 = vmul.f32 %v1739, %v1841
    %v1876 = vmul.f32 %v1740, %v1842
    %v1877 = vmul.f32 %v1741, %v1843
    %v1878 = vmul.f32 %v1742, %v1844
    %v1879 = vmul.f32 %v1743, %v1845
    %v1880 = vmul.f32 %v1744, %v1846
    %v1881 = vmul.f32 %v1745, %v1847
    %v1882 = vmul.f32 %v1746, %v1848
    %v1883 = vmul.f32 %v1747, %v1849
    %v1884 = vmul.f32 %v1748, %v1850
    %v1885 = vmul.f32 %v1749, %v1851
    %v1886 = vmul.f32 %v1750, %v1852
    %v1887 = vmul.f32 %v1751, %v1853
    %v1888 = vmul.f32 %v1752, %v1854
    %v1889 = vmul.f32 %v1753, %v1838
    %v1890 = vmul.f32 %v1754, %v1839
    %v1891 = vmul.f32 %v1755, %v1840
    %v1892 = vmul.f32 %v1756, %v1841
    %v1893 = vmul.f32 %v1757, %v1842
    %v1894 = vmul.f32 %v1758, %v1843
    %v1895 = vmul.f32 %v1759, %v1844
    %v1896 = vmul.f32 %v1760, %v1845
    %v1897 = vmul.f32 %v1761, %v1846
    %v1898 = vmul.f32 %v1762, %v1847
    %v1899 = vmul.f32 %v1763, %v1848
    %v1900 = vmul.f32 %v1764, %v1849
    %v1901 = vmul.f32 %v1765, %v1850
    %v1902 = vmul.f32 %v1766, %v1851
    %v1903 = vmul.f32 %v1767, %v1852
    %v1904 = vmul.f32 %v1768, %v1853
    %v1905 = vmul.f32 %v1769, %v1854
    %v1906 = vmul.f32 %v1770, %v1838
    %v1907 = vmul.f32 %v1771, %v1839
    %v1908 = vmul.f32 %v1772, %v1840
    %v1909 = vmul.f32 %v1773, %v1841
    %v1910 = vmul.f32 %v1774, %v1842
    %v1911 = vmul.f32 %v1775, %v1843
    %v1912 = vmul.f32 %v1776, %v1844
    %v1913 = vmul.f32 %v1777, %v1845
    %v1914 = vmul.f32 %v1778, %v1846
    %v1915 = vmul.f32 %v1779, %v1847
    %v1916 = vmul.f32 %v1780, %v1848
    %v1917 = vmul.f32 %v1781, %v1849
    %v1918 = vmul.f32 %v1782, %v1850
    %v1919 = vmul.f32 %v1783, %v1851
    %v1920 = vmul.f32 %v1784, %v1852
    %v1921 = vmul.f32 %v1785, %v1853
    %v1922 = vmul.f32 %v1786, %v1854
    %v1923 = vmul.f32 %v1787, %v1838
    %v1924 = vmul.f32 %v1788, %v1839
    %v1925 = vmul.f32 %v1789, %v1840
    %v1926 = vmul.f32 %v1790, %v1841
    %v1927 = vmul.f32 %v1791, %v1842
    %v1928 = vmul.f32 %v1792, %v1843
    %v1929 = vmul.f32 %v1793, %v1844
    %v1930 = vmul.f32 %v1794, %v1845
    %v1931 = vmul.f32 %v1795, %v1846
    %v1932 = vmul.f32 %v1796, %v1847
    %v1933 = vmul.f32 %v1797, %v1848
    %v1934 = vmul.f32 %v1798, %v1849
    %v1935 = vmul.f32 %v1799, %v1850
    %v1936 = vmul.f32 %v1800, %v1851
    %v1937 = vmul.f32 %v1801, %v1852
    %v1938 = vmul.f32 %v1802, %v1853
    %v1939 = vmul.f32 %v1803, %v1854
    %v1940 = vmul.f32 %v1804, %v1838
    %v1941 = vmul.f32 %v1805, %v1839
    %v1942 = vmul.f32 %v1806, %v1840
    %v1943 = vmul.f32 %v1807, %v1841
    %v1944 = vmul.f32 %v1808, %v1842
    %v1945 = vmul.f32 %v1809, %v1843
    %v1946 = vmul.f32 %v1810, %v1844
    %v1947 = vmul.f32 %v1811, %v1845
    %v1948 = vmul.f32 %v1812, %v1846
    %v1949 = vmul.f32 %v1813, %v1847
    %v1950 = vmul.f32 %v1814, %v1848
    %v1951 = vmul.f32 %v1815, %v1849
    %v1952 = vmul.f32 %v1816, %v1850
    %v1953 = vmul.f32 %v1817, %v1851
    %v1954 = vmul.f32 %v1818, %v1852
    %v1955 = vmul.f32 %v1819, %v1853
    %v1956 = vmul.f32 %v1820, %v1854
    %v1957 = vmul.f32 %v1821, %v1838
    %v1958 = vmul.f32 %v1822, %v1839
    %v1959 = vmul.f32 %v1823, %v1840
    %v1960 = vmul.f32 %v1824, %v1841
    %v1961 = vmul.f32 %v1825, %v1842
    %v1962 = vmul.f32 %v1826, %v1843
    %v1963 = vmul.f32 %v1827, %v1844
    %v1964 = vmul.f32 %v1828, %v1845
    %v1965 = vmul.f32 %v1829, %v1846
    %v1966 = vmul.f32 %v1830, %v1847
    %v1967 = vmul.f32 %v1831, %v1848
    %v1968 = vmul.f32 %v1832, %v1849
    %v1969 = vmul.f32 %v1833, %v1850
    %v1970 = vmul.f32 %v1834, %v1851
    %v1971 = vmul.f32 %v1835, %v1852
    %v1972 = vmul.f32 %v1836, %v1853
    %v1973 = vmul.f32 %v1837, %v1854
    %v1974 = vpack.c.bf16 %v1856, %v1855
    %v1975 = vpack.c.bf16 %v1858, %v1857
    %v1976 = vpack.c.bf16 %v1860, %v1859
    %v1977 = vpack.c.bf16 %v1862, %v1861
    %v1978 = vpack.c.bf16 %v1864, %v1863
    %v1979 = vpack.c.bf16 %v1866, %v1865
    %v1980 = vpack.c.bf16 %v1868, %v1867
    %v1981 = vpack.c.bf16 %v1870, %v1869
    %v1982 = vpack.c.bf16 %v1871, %v1871
    %v1983 = vpack.c.bf16 %v1873, %v1872
    %v1984 = vpack.c.bf16 %v1875, %v1874
    %v1985 = vpack.c.bf16 %v1877, %v1876
    %v1986 = vpack.c.bf16 %v1879, %v1878
    %v1987 = vpack.c.bf16 %v1881, %v1880
    %v1988 = vpack.c.bf16 %v1883, %v1882
    %v1989 = vpack.c.bf16 %v1885, %v1884
    %v1990 = vpack.c.bf16 %v1887, %v1886
    %v1991 = vpack.c.bf16 %v1888, %v1888
    %v1992 = vpack.c.bf16 %v1890, %v1889
    %v1993 = vpack.c.bf16 %v1892, %v1891
    %v1994 = vpack.c.bf16 %v1894, %v1893
    %v1995 = vpack.c.bf16 %v1896, %v1895
    %v1996 = vpack.c.bf16 %v1898, %v1897
    %v1997 = vpack.c.bf16 %v1900, %v1899
    %v1998 = vpack.c.bf16 %v1902, %v1901
    %v1999 = vpack.c.bf16 %v1904, %v1903
    %v2000 = vpack.c.bf16 %v1905, %v1905
    %v2001 = vpack.c.bf16 %v1907, %v1906
    %v2002 = vpack.c.bf16 %v1909, %v1908
    %v2003 = vpack.c.bf16 %v1911, %v1910
    %v2004 = vpack.c.bf16 %v1913, %v1912
    %v2005 = vpack.c.bf16 %v1915, %v1914
    %v2006 = vpack.c.bf16 %v1917, %v1916
    %v2007 = vpack.c.bf16 %v1919, %v1918
    %v2008 = vpack.c.bf16 %v1921, %v1920
    %v2009 = vpack.c.bf16 %v1922, %v1922
    %v2010 = vpack.c.bf16 %v1924, %v1923
    %v2011 = vpack.c.bf16 %v1926, %v1925
    %v2012 = vpack.c.bf16 %v1928, %v1927
    %v2013 = vpack.c.bf16 %v1930, %v1929
    %v2014 = vpack.c.bf16 %v1932, %v1931
    %v2015 = vpack.c.bf16 %v1934, %v1933
    %v2016 = vpack.c.bf16 %v1936, %v1935
    %v2017 = vpack.c.bf16 %v1938, %v1937
    %v2018 = vpack.c.bf16 %v1939, %v1939
    %v2019 = vpack.c.bf16 %v1941, %v1940
    %v2020 = vpack.c.bf16 %v1943, %v1942
    %v2021 = vpack.c.bf16 %v1945, %v1944
    %v2022 = vpack.c.bf16 %v1947, %v1946
    %v2023 = vpack.c.bf16 %v1949, %v1948
    %v2024 = vpack.c.bf16 %v1951, %v1950
    %v2025 = vpack.c.bf16 %v1953, %v1952
    %v2026 = vpack.c.bf16 %v1955, %v1954
    %v2027 = vpack.c.bf16 %v1956, %v1956
    %v2028 = vpack.c.bf16 %v1958, %v1957
    %v2029 = vpack.c.bf16 %v1960, %v1959
    %v2030 = vpack.c.bf16 %v1962, %v1961
    %v2031 = vpack.c.bf16 %v1964, %v1963
    %v2032 = vpack.c.bf16 %v1966, %v1965
    %v2033 = vpack.c.bf16 %v1968, %v1967
    %v2034 = vpack.c.bf16 %v1970, %v1969
    %v2035 = vpack.c.bf16 %v1972, %v1971
    %v2036 = vpack.c.bf16 %v1973, %v1973
    %s2037 = smul.u32 4, 128
    %s2038 = smul.u32 %s2037, 3
    %s2039 = sshll.u32 %s2038, 4
    %2040 = dma.done [#allocation4], %s2039
    %s2041 = scalar_lea.sflag [#allocation4], 1
    // Predicated region
    $region49: #{se_conv_bn.1} parent=1 // pred_check
      _
    $region50: #{se_conv_bn.1} parent=1 // pred_check_branch
      %2043 = sbr.rel (0) target = $region52
    $region51: #{se_conv_bn.1} parent=1 // pred_region
      loop: start=0, step=1, limit=1
      $region53: #{se_conv_bn.1} parent=51 // loop_pre_header
        _
      $region54: #{se_conv_bn.1} parent=51 // loop_header
        %s2045 = sphi 0, %s2049
        %p2046 = scmp.ge.s32.totalorder %s2045, 1
        %s2050 = sphi %s5, %s5
        %s2051 = sphi [#allocation3], [#allocation3]
      $region55: #{se_conv_bn.1} parent=51 // loop_header_branch
        %2048 = sbr.rel (%p2046) target = $region59
      $region56: #{se_conv_bn.1} parent=51 // loop_body
        %v2052 = vld [vmem:[%s2050] sm:$0xff]
        %2053 = vst [vmem:[%s2051] sm:$0xff] %v2052
        %v2054 = vld [vmem:[%s2050 + $0x8] sm:$0xff]
        %2055 = vst [vmem:[%s2051 + $0x8] sm:$0xff] %v2054
        %v2056 = vld [vmem:[%s2050 + $0x10] sm:$0xff]
        %2057 = vst [vmem:[%s2051 + $0x10] sm:$0xff] %v2056
        %v2058 = vld [vmem:[%s2050 + $0x18] sm:$0xff]
        %2059 = vst [vmem:[%s2051 + $0x18] sm:$0xff] %v2058
        %v2060 = vld [vmem:[%s2050 + $0x20] sm:$0xff]
        %2061 = vst [vmem:[%s2051 + $0x20] sm:$0xff] %v2060
        %v2062 = vld [vmem:[%s2050 + $0x28] sm:$0xff]
        %2063 = vst [vmem:[%s2051 + $0x28] sm:$0xff] %v2062
        %v2064 = vld [vmem:[%s2050 + $0x30] sm:$0xff]
        %2065 = vst [vmem:[%s2051 + $0x30] sm:$0xff] %v2064
        %v2066 = vld [vmem:[%s2050 + $0x38] sm:$0xff]
        %2067 = vst [vmem:[%s2051 + $0x38] sm:$0xff] %v2066
        %v2068 = vld [vmem:[%s2050 + $0x40] sm:$0xff]
        %2069 = vst [vmem:[%s2051 + $0x40] sm:$0xff] %v2068
        %v2070 = vld [vmem:[%s2050 + $0x48] sm:$0xff]
        %2071 = vst [vmem:[%s2051 + $0x48] sm:$0xff] %v2070
        %v2072 = vld [vmem:[%s2050 + $0x50] sm:$0xff]
        %2073 = vst [vmem:[%s2051 + $0x50] sm:$0xff] %v2072
        %v2074 = vld [vmem:[%s2050 + $0x58] sm:$0xff]
        %2075 = vst [vmem:[%s2051 + $0x58] sm:$0xff] %v2074
        %v2076 = vld [vmem:[%s2050 + $0x60] sm:$0xff]
        %2077 = vst [vmem:[%s2051 + $0x60] sm:$0xff] %v2076
        %v2078 = vld [vmem:[%s2050 + $0x68] sm:$0xff]
        %2079 = vst [vmem:[%s2051 + $0x68] sm:$0xff] %v2078
        %v2080 = vld [vmem:[%s2050 + $0x70] sm:$0xff]
        %2081 = vst [vmem:[%s2051 + $0x70] sm:$0xff] %v2080
        %v2082 = vld [vmem:[%s2050 + $0x78] sm:$0xff]
        %2083 = vst [vmem:[%s2051 + $0x78] sm:$0xff] %v2082
        %v2084 = vld [vmem:[%s2050 + $0x80] sm:$0xff]
        %2085 = vst [vmem:[%s2051 + $0x80] sm:$0xff] %v2084
        %v2086 = vld [vmem:[%s2050 + $0x88] sm:$0xff]
        %2087 = vst [vmem:[%s2051 + $0x88] sm:$0xff] %v2086
        %v2088 = vld [vmem:[%s2050 + $0x90] sm:$0xff]
        %2089 = vst [vmem:[%s2051 + $0x90] sm:$0xff] %v2088
        %v2090 = vld [vmem:[%s2050 + $0x98] sm:$0xff]
        %2091 = vst [vmem:[%s2051 + $0x98] sm:$0xff] %v2090
        %v2092 = vld [vmem:[%s2050 + $0xa0] sm:$0xff]
        %2093 = vst [vmem:[%s2051 + $0xa0] sm:$0xff] %v2092
        %v2094 = vld [vmem:[%s2050 + $0xa8] sm:$0xff]
        %2095 = vst [vmem:[%s2051 + $0xa8] sm:$0xff] %v2094
        %v2096 = vld [vmem:[%s2050 + $0xb0] sm:$0xff]
        %2097 = vst [vmem:[%s2051 + $0xb0] sm:$0xff] %v2096
        %v2098 = vld [vmem:[%s2050 + $0xb8] sm:$0xff]
        %2099 = vst [vmem:[%s2051 + $0xb8] sm:$0xff] %v2098
        %v2100 = vld [vmem:[%s2050 + $0xc0] sm:$0xff]
        %2101 = vst [vmem:[%s2051 + $0xc0] sm:$0xff] %v2100
        %v2102 = vld [vmem:[%s2050 + $0xc8] sm:$0xff]
        %2103 = vst [vmem:[%s2051 + $0xc8] sm:$0xff] %v2102
        %v2104 = vld [vmem:[%s2050 + $0xd0] sm:$0xff]
        %2105 = vst [vmem:[%s2051 + $0xd0] sm:$0xff] %v2104
        %v2106 = vld [vmem:[%s2050 + $0xd8] sm:$0xff]
        %2107 = vst [vmem:[%s2051 + $0xd8] sm:$0xff] %v2106
        %v2108 = vld [vmem:[%s2050 + $0xe0] sm:$0xff]
        %2109 = vst [vmem:[%s2051 + $0xe0] sm:$0xff] %v2108
        %v2110 = vld [vmem:[%s2050 + $0xe8] sm:$0xff]
        %2111 = vst [vmem:[%s2051 + $0xe8] sm:$0xff] %v2110
        %v2112 = vld [vmem:[%s2050 + $0xf0] sm:$0xff]
        %2113 = vst [vmem:[%s2051 + $0xf0] sm:$0xff] %v2112
        %v2114 = vld [vmem:[%s2050 + $0xf8] sm:$0xff]
        %2115 = vst [vmem:[%s2051 + $0xf8] sm:$0xff] %v2114
        %v2116 = vld [vmem:[%s2050 + $0x100] sm:$0xff]
        %2117 = vst [vmem:[%s2051 + $0x100] sm:$0xff] %v2116
        %v2118 = vld [vmem:[%s2050 + $0x108] sm:$0xff]
        %2119 = vst [vmem:[%s2051 + $0x108] sm:$0xff] %v2118
        %v2120 = vld [vmem:[%s2050 + $0x110] sm:$0xff]
        %2121 = vst [vmem:[%s2051 + $0x110] sm:$0xff] %v2120
        %v2122 = vld [vmem:[%s2050 + $0x118] sm:$0xff]
        %2123 = vst [vmem:[%s2051 + $0x118] sm:$0xff] %v2122
        %v2124 = vld [vmem:[%s2050 + $0x120] sm:$0xff]
        %2125 = vst [vmem:[%s2051 + $0x120] sm:$0xff] %v2124
        %v2126 = vld [vmem:[%s2050 + $0x128] sm:$0xff]
        %2127 = vst [vmem:[%s2051 + $0x128] sm:$0xff] %v2126
        %v2128 = vld [vmem:[%s2050 + $0x130] sm:$0xff]
        %2129 = vst [vmem:[%s2051 + $0x130] sm:$0xff] %v2128
        %v2130 = vld [vmem:[%s2050 + $0x138] sm:$0xff]
        %2131 = vst [vmem:[%s2051 + $0x138] sm:$0xff] %v2130
        %v2132 = vld [vmem:[%s2050 + $0x140] sm:$0xff]
        %2133 = vst [vmem:[%s2051 + $0x140] sm:$0xff] %v2132
        %v2134 = vld [vmem:[%s2050 + $0x148] sm:$0xff]
        %2135 = vst [vmem:[%s2051 + $0x148] sm:$0xff] %v2134
        %v2136 = vld [vmem:[%s2050 + $0x150] sm:$0xff]
        %2137 = vst [vmem:[%s2051 + $0x150] sm:$0xff] %v2136
        %v2138 = vld [vmem:[%s2050 + $0x158] sm:$0xff]
        %2139 = vst [vmem:[%s2051 + $0x158] sm:$0xff] %v2138
        %v2140 = vld [vmem:[%s2050 + $0x160] sm:$0xff]
        %2141 = vst [vmem:[%s2051 + $0x160] sm:$0xff] %v2140
        %v2142 = vld [vmem:[%s2050 + $0x168] sm:$0xff]
        %2143 = vst [vmem:[%s2051 + $0x168] sm:$0xff] %v2142
        %v2144 = vld [vmem:[%s2050 + $0x170] sm:$0xff]
        %2145 = vst [vmem:[%s2051 + $0x170] sm:$0xff] %v2144
        %v2146 = vld [vmem:[%s2050 + $0x178] sm:$0xff]
        %2147 = vst [vmem:[%s2051 + $0x178] sm:$0xff] %v2146
        %v2148 = vld [vmem:[%s2050 + $0x180] sm:$0xff]
        %2149 = vst [vmem:[%s2051 + $0x180] sm:$0xff] %v2148
        %v2150 = vld [vmem:[%s2050 + $0x188] sm:$0xff]
        %2151 = vst [vmem:[%s2051 + $0x188] sm:$0xff] %v2150
        %v2152 = vld [vmem:[%s2050 + $0x190] sm:$0xff]
        %2153 = vst [vmem:[%s2051 + $0x190] sm:$0xff] %v2152
        %v2154 = vld [vmem:[%s2050 + $0x198] sm:$0xff]
        %2155 = vst [vmem:[%s2051 + $0x198] sm:$0xff] %v2154
        %v2156 = vld [vmem:[%s2050 + $0x1a0] sm:$0xff]
        %2157 = vst [vmem:[%s2051 + $0x1a0] sm:$0xff] %v2156
        %v2158 = vld [vmem:[%s2050 + $0x1a8] sm:$0xff]
        %2159 = vst [vmem:[%s2051 + $0x1a8] sm:$0xff] %v2158
        %v2160 = vld [vmem:[%s2050 + $0x1b0] sm:$0xff]
        %2161 = vst [vmem:[%s2051 + $0x1b0] sm:$0xff] %v2160
        %v2162 = vld [vmem:[%s2050 + $0x1b8] sm:$0xff]
        %2163 = vst [vmem:[%s2051 + $0x1b8] sm:$0xff] %v2162
        %v2164 = vld [vmem:[%s2050 + $0x1c0] sm:$0xff]
        %2165 = vst [vmem:[%s2051 + $0x1c0] sm:$0xff] %v2164
        %v2166 = vld [vmem:[%s2050 + $0x1c8] sm:$0xff]
        %2167 = vst [vmem:[%s2051 + $0x1c8] sm:$0xff] %v2166
        %v2168 = vld [vmem:[%s2050 + $0x1d0] sm:$0xff]
        %2169 = vst [vmem:[%s2051 + $0x1d0] sm:$0xff] %v2168
        %v2170 = vld [vmem:[%s2050 + $0x1d8] sm:$0xff]
        %2171 = vst [vmem:[%s2051 + $0x1d8] sm:$0xff] %v2170
        %v2172 = vld [vmem:[%s2050 + $0x1e0] sm:$0xff]
        %2173 = vst [vmem:[%s2051 + $0x1e0] sm:$0xff] %v2172
        %v2174 = vld [vmem:[%s2050 + $0x1e8] sm:$0xff]
        %2175 = vst [vmem:[%s2051 + $0x1e8] sm:$0xff] %v2174
        %v2176 = vld [vmem:[%s2050 + $0x1f0] sm:$0xff]
        %2177 = vst [vmem:[%s2051 + $0x1f0] sm:$0xff] %v2176
        %v2178 = vld [vmem:[%s2050 + $0x1f8] sm:$0xff]
        %2179 = vst [vmem:[%s2051 + $0x1f8] sm:$0xff] %v2178
        %v2180 = vld [vmem:[%s2050 + $0x200] sm:$0xff]
        %2181 = vst [vmem:[%s2051 + $0x200] sm:$0xff] %v2180
        %v2182 = vld [vmem:[%s2050 + $0x208] sm:$0xff]
        %2183 = vst [vmem:[%s2051 + $0x208] sm:$0xff] %v2182
        %v2184 = vld [vmem:[%s2050 + $0x210] sm:$0xff]
        %2185 = vst [vmem:[%s2051 + $0x210] sm:$0xff] %v2184
        %v2186 = vld [vmem:[%s2050 + $0x218] sm:$0xff]
        %2187 = vst [vmem:[%s2051 + $0x218] sm:$0xff] %v2186
        %v2188 = vld [vmem:[%s2050 + $0x220] sm:$0xff]
        %2189 = vst [vmem:[%s2051 + $0x220] sm:$0xff] %v2188
        %v2190 = vld [vmem:[%s2050 + $0x228] sm:$0xff]
        %2191 = vst [vmem:[%s2051 + $0x228] sm:$0xff] %v2190
        %v2192 = vld [vmem:[%s2050 + $0x230] sm:$0xff]
        %2193 = vst [vmem:[%s2051 + $0x230] sm:$0xff] %v2192
        %v2194 = vld [vmem:[%s2050 + $0x238] sm:$0xff]
        %2195 = vst [vmem:[%s2051 + $0x238] sm:$0xff] %v2194
        %v2196 = vld [vmem:[%s2050 + $0x240] sm:$0xff]
        %2197 = vst [vmem:[%s2051 + $0x240] sm:$0xff] %v2196
        %v2198 = vld [vmem:[%s2050 + $0x248] sm:$0xff]
        %2199 = vst [vmem:[%s2051 + $0x248] sm:$0xff] %v2198
        %v2200 = vld [vmem:[%s2050 + $0x250] sm:$0xff]
        %2201 = vst [vmem:[%s2051 + $0x250] sm:$0xff] %v2200
        %v2202 = vld [vmem:[%s2050 + $0x258] sm:$0xff]
        %2203 = vst [vmem:[%s2051 + $0x258] sm:$0xff] %v2202
        %v2204 = vld [vmem:[%s2050 + $0x260] sm:$0xff]
        %2205 = vst [vmem:[%s2051 + $0x260] sm:$0xff] %v2204
        %v2206 = vld [vmem:[%s2050 + $0x268] sm:$0xff]
        %2207 = vst [vmem:[%s2051 + $0x268] sm:$0xff] %v2206
        %v2208 = vld [vmem:[%s2050 + $0x270] sm:$0xff]
        %2209 = vst [vmem:[%s2051 + $0x270] sm:$0xff] %v2208
        %v2210 = vld [vmem:[%s2050 + $0x278] sm:$0xff]
        %2211 = vst [vmem:[%s2051 + $0x278] sm:$0xff] %v2210
        %v2212 = vld [vmem:[%s2050 + $0x280] sm:$0xff]
        %2213 = vst [vmem:[%s2051 + $0x280] sm:$0xff] %v2212
        %v2214 = vld [vmem:[%s2050 + $0x288] sm:$0xff]
        %2215 = vst [vmem:[%s2051 + $0x288] sm:$0xff] %v2214
        %v2216 = vld [vmem:[%s2050 + $0x290] sm:$0xff]
        %2217 = vst [vmem:[%s2051 + $0x290] sm:$0xff] %v2216
        %v2218 = vld [vmem:[%s2050 + $0x298] sm:$0xff]
        %2219 = vst [vmem:[%s2051 + $0x298] sm:$0xff] %v2218
        %v2220 = vld [vmem:[%s2050 + $0x2a0] sm:$0xff]
        %2221 = vst [vmem:[%s2051 + $0x2a0] sm:$0xff] %v2220
        %v2222 = vld [vmem:[%s2050 + $0x2a8] sm:$0xff]
        %2223 = vst [vmem:[%s2051 + $0x2a8] sm:$0xff] %v2222
        %v2224 = vld [vmem:[%s2050 + $0x2b0] sm:$0xff]
        %2225 = vst [vmem:[%s2051 + $0x2b0] sm:$0xff] %v2224
        %v2226 = vld [vmem:[%s2050 + $0x2b8] sm:$0xff]
        %2227 = vst [vmem:[%s2051 + $0x2b8] sm:$0xff] %v2226
        %v2228 = vld [vmem:[%s2050 + $0x2c0] sm:$0xff]
        %2229 = vst [vmem:[%s2051 + $0x2c0] sm:$0xff] %v2228
        %v2230 = vld [vmem:[%s2050 + $0x2c8] sm:$0xff]
        %2231 = vst [vmem:[%s2051 + $0x2c8] sm:$0xff] %v2230
        %v2232 = vld [vmem:[%s2050 + $0x2d0] sm:$0xff]
        %2233 = vst [vmem:[%s2051 + $0x2d0] sm:$0xff] %v2232
        %v2234 = vld [vmem:[%s2050 + $0x2d8] sm:$0xff]
        %2235 = vst [vmem:[%s2051 + $0x2d8] sm:$0xff] %v2234
        %v2236 = vld [vmem:[%s2050 + $0x2e0] sm:$0xff]
        %2237 = vst [vmem:[%s2051 + $0x2e0] sm:$0xff] %v2236
        %v2238 = vld [vmem:[%s2050 + $0x2e8] sm:$0xff]
        %2239 = vst [vmem:[%s2051 + $0x2e8] sm:$0xff] %v2238
        %v2240 = vld [vmem:[%s2050 + $0x2f0] sm:$0xff]
        %2241 = vst [vmem:[%s2051 + $0x2f0] sm:$0xff] %v2240
        %v2242 = vld [vmem:[%s2050 + $0x2f8] sm:$0xff]
        %2243 = vst [vmem:[%s2051 + $0x2f8] sm:$0xff] %v2242
        %v2244 = vld [vmem:[%s2050 + $0x300] sm:$0xff]
        %2245 = vst [vmem:[%s2051 + $0x300] sm:$0xff] %v2244
        %v2246 = vld [vmem:[%s2050 + $0x308] sm:$0xff]
        %2247 = vst [vmem:[%s2051 + $0x308] sm:$0xff] %v2246
        %v2248 = vld [vmem:[%s2050 + $0x310] sm:$0xff]
        %2249 = vst [vmem:[%s2051 + $0x310] sm:$0xff] %v2248
        %v2250 = vld [vmem:[%s2050 + $0x318] sm:$0xff]
        %2251 = vst [vmem:[%s2051 + $0x318] sm:$0xff] %v2250
        %v2252 = vld [vmem:[%s2050 + $0x320] sm:$0xff]
        %2253 = vst [vmem:[%s2051 + $0x320] sm:$0xff] %v2252
        %v2254 = vld [vmem:[%s2050 + $0x328] sm:$0xff]
        %2255 = vst [vmem:[%s2051 + $0x328] sm:$0xff] %v2254
        %v2256 = vld [vmem:[%s2050 + $0x330] sm:$0xff]
        %2257 = vst [vmem:[%s2051 + $0x330] sm:$0xff] %v2256
        %v2258 = vld [vmem:[%s2050 + $0x338] sm:$0xff]
        %2259 = vst [vmem:[%s2051 + $0x338] sm:$0xff] %v2258
        %v2260 = vld [vmem:[%s2050 + $0x340] sm:$0xff]
        %2261 = vst [vmem:[%s2051 + $0x340] sm:$0xff] %v2260
        %v2262 = vld [vmem:[%s2050 + $0x348] sm:$0xff]
        %2263 = vst [vmem:[%s2051 + $0x348] sm:$0xff] %v2262
        %v2264 = vld [vmem:[%s2050 + $0x350] sm:$0xff]
        %2265 = vst [vmem:[%s2051 + $0x350] sm:$0xff] %v2264
        %v2266 = vld [vmem:[%s2050 + $0x358] sm:$0xff]
        %2267 = vst [vmem:[%s2051 + $0x358] sm:$0xff] %v2266
        %v2268 = vld [vmem:[%s2050 + $0x360] sm:$0xff]
        %2269 = vst [vmem:[%s2051 + $0x360] sm:$0xff] %v2268
        %v2270 = vld [vmem:[%s2050 + $0x368] sm:$0xff]
        %2271 = vst [vmem:[%s2051 + $0x368] sm:$0xff] %v2270
        %v2272 = vld [vmem:[%s2050 + $0x370] sm:$0xff]
        %2273 = vst [vmem:[%s2051 + $0x370] sm:$0xff] %v2272
        %v2274 = vld [vmem:[%s2050 + $0x378] sm:$0xff]
        %2275 = vst [vmem:[%s2051 + $0x378] sm:$0xff] %v2274
        %v2276 = vld [vmem:[%s2050 + $0x380] sm:$0xff]
        %2277 = vst [vmem:[%s2051 + $0x380] sm:$0xff] %v2276
        %v2278 = vld [vmem:[%s2050 + $0x388] sm:$0xff]
        %2279 = vst [vmem:[%s2051 + $0x388] sm:$0xff] %v2278
        %v2280 = vld [vmem:[%s2050 + $0x390] sm:$0xff]
        %2281 = vst [vmem:[%s2051 + $0x390] sm:$0xff] %v2280
        %v2282 = vld [vmem:[%s2050 + $0x398] sm:$0xff]
        %2283 = vst [vmem:[%s2051 + $0x398] sm:$0xff] %v2282
        %v2284 = vld [vmem:[%s2050 + $0x3a0] sm:$0xff]
        %2285 = vst [vmem:[%s2051 + $0x3a0] sm:$0xff] %v2284
        %v2286 = vld [vmem:[%s2050 + $0x3a8] sm:$0xff]
        %2287 = vst [vmem:[%s2051 + $0x3a8] sm:$0xff] %v2286
        %v2288 = vld [vmem:[%s2050 + $0x3b0] sm:$0xff]
        %2289 = vst [vmem:[%s2051 + $0x3b0] sm:$0xff] %v2288
        %v2290 = vld [vmem:[%s2050 + $0x3b8] sm:$0xff]
        %2291 = vst [vmem:[%s2051 + $0x3b8] sm:$0xff] %v2290
        %v2292 = vld [vmem:[%s2050 + $0x3c0] sm:$0xff]
        %2293 = vst [vmem:[%s2051 + $0x3c0] sm:$0xff] %v2292
        %v2294 = vld [vmem:[%s2050 + $0x3c8] sm:$0xff]
        %2295 = vst [vmem:[%s2051 + $0x3c8] sm:$0xff] %v2294
        %v2296 = vld [vmem:[%s2050 + $0x3d0] sm:$0xff]
        %2297 = vst [vmem:[%s2051 + $0x3d0] sm:$0xff] %v2296
        %v2298 = vld [vmem:[%s2050 + $0x3d8] sm:$0xff]
        %2299 = vst [vmem:[%s2051 + $0x3d8] sm:$0xff] %v2298
        %v2300 = vld [vmem:[%s2050 + $0x3e0] sm:$0xff]
        %2301 = vst [vmem:[%s2051 + $0x3e0] sm:$0xff] %v2300
        %v2302 = vld [vmem:[%s2050 + $0x3e8] sm:$0xff]
        %2303 = vst [vmem:[%s2051 + $0x3e8] sm:$0xff] %v2302
        %v2304 = vld [vmem:[%s2050 + $0x3f0] sm:$0xff]
        %2305 = vst [vmem:[%s2051 + $0x3f0] sm:$0xff] %v2304
        %v2306 = vld [vmem:[%s2050 + $0x3f8] sm:$0xff]
        %2307 = vst [vmem:[%s2051 + $0x3f8] sm:$0xff] %v2306
        %v2308 = vld [vmem:[%s2050 + $0x400] sm:$0xff]
        %2309 = vst [vmem:[%s2051 + $0x400] sm:$0xff] %v2308
        %v2310 = vld [vmem:[%s2050 + $0x408] sm:$0xff]
        %2311 = vst [vmem:[%s2051 + $0x408] sm:$0xff] %v2310
        %v2312 = vld [vmem:[%s2050 + $0x410] sm:$0xff]
        %2313 = vst [vmem:[%s2051 + $0x410] sm:$0xff] %v2312
        %v2314 = vld [vmem:[%s2050 + $0x418] sm:$0xff]
        %2315 = vst [vmem:[%s2051 + $0x418] sm:$0xff] %v2314
        %v2316 = vld [vmem:[%s2050 + $0x420] sm:$0xff]
        %2317 = vst [vmem:[%s2051 + $0x420] sm:$0xff] %v2316
        %v2318 = vld [vmem:[%s2050 + $0x428] sm:$0xff]
        %2319 = vst [vmem:[%s2051 + $0x428] sm:$0xff] %v2318
        %v2320 = vld [vmem:[%s2050 + $0x430] sm:$0xff]
        %2321 = vst [vmem:[%s2051 + $0x430] sm:$0xff] %v2320
        %v2322 = vld [vmem:[%s2050 + $0x438] sm:$0xff]
        %2323 = vst [vmem:[%s2051 + $0x438] sm:$0xff] %v2322
        %v2324 = vld [vmem:[%s2050 + $0x440] sm:$0xff]
        %2325 = vst [vmem:[%s2051 + $0x440] sm:$0xff] %v2324
        %v2326 = vld [vmem:[%s2050 + $0x448] sm:$0xff]
        %2327 = vst [vmem:[%s2051 + $0x448] sm:$0xff] %v2326
        %v2328 = vld [vmem:[%s2050 + $0x450] sm:$0xff]
        %2329 = vst [vmem:[%s2051 + $0x450] sm:$0xff] %v2328
        %v2330 = vld [vmem:[%s2050 + $0x458] sm:$0xff]
        %2331 = vst [vmem:[%s2051 + $0x458] sm:$0xff] %v2330
        %v2332 = vld [vmem:[%s2050 + $0x460] sm:$0xff]
        %2333 = vst [vmem:[%s2051 + $0x460] sm:$0xff] %v2332
        %v2334 = vld [vmem:[%s2050 + $0x468] sm:$0xff]
        %2335 = vst [vmem:[%s2051 + $0x468] sm:$0xff] %v2334
        %v2336 = vld [vmem:[%s2050 + $0x470] sm:$0xff]
        %2337 = vst [vmem:[%s2051 + $0x470] sm:$0xff] %v2336
        %v2338 = vld [vmem:[%s2050 + $0x478] sm:$0xff]
        %2339 = vst [vmem:[%s2051 + $0x478] sm:$0xff] %v2338
        %v2340 = vld [vmem:[%s2050 + $0x480] sm:$0xff]
        %2341 = vst [vmem:[%s2051 + $0x480] sm:$0xff] %v2340
        %v2342 = vld [vmem:[%s2050 + $0x488] sm:$0xff]
        %2343 = vst [vmem:[%s2051 + $0x488] sm:$0xff] %v2342
        %v2344 = vld [vmem:[%s2050 + $0x490] sm:$0xff]
        %2345 = vst [vmem:[%s2051 + $0x490] sm:$0xff] %v2344
        %v2346 = vld [vmem:[%s2050 + $0x498] sm:$0xff]
        %2347 = vst [vmem:[%s2051 + $0x498] sm:$0xff] %v2346
        %v2348 = vld [vmem:[%s2050 + $0x4a0] sm:$0xff]
        %2349 = vst [vmem:[%s2051 + $0x4a0] sm:$0xff] %v2348
        %v2350 = vld [vmem:[%s2050 + $0x4a8] sm:$0xff]
        %2351 = vst [vmem:[%s2051 + $0x4a8] sm:$0xff] %v2350
        %v2352 = vld [vmem:[%s2050 + $0x4b0] sm:$0xff]
        %2353 = vst [vmem:[%s2051 + $0x4b0] sm:$0xff] %v2352
        %v2354 = vld [vmem:[%s2050 + $0x4b8] sm:$0xff]
        %2355 = vst [vmem:[%s2051 + $0x4b8] sm:$0xff] %v2354
        %v2356 = vld [vmem:[%s2050 + $0x4c0] sm:$0xff]
        %2357 = vst [vmem:[%s2051 + $0x4c0] sm:$0xff] %v2356
        %v2358 = vld [vmem:[%s2050 + $0x4c8] sm:$0xff]
        %2359 = vst [vmem:[%s2051 + $0x4c8] sm:$0xff] %v2358
        %v2360 = vld [vmem:[%s2050 + $0x4d0] sm:$0xff]
        %2361 = vst [vmem:[%s2051 + $0x4d0] sm:$0xff] %v2360
        %v2362 = vld [vmem:[%s2050 + $0x4d8] sm:$0xff]
        %2363 = vst [vmem:[%s2051 + $0x4d8] sm:$0xff] %v2362
        %v2364 = vld [vmem:[%s2050 + $0x4e0] sm:$0xff]
        %2365 = vst [vmem:[%s2051 + $0x4e0] sm:$0xff] %v2364
        %v2366 = vld [vmem:[%s2050 + $0x4e8] sm:$0xff]
        %2367 = vst [vmem:[%s2051 + $0x4e8] sm:$0xff] %v2366
        %v2368 = vld [vmem:[%s2050 + $0x4f0] sm:$0xff]
        %2369 = vst [vmem:[%s2051 + $0x4f0] sm:$0xff] %v2368
        %v2370 = vld [vmem:[%s2050 + $0x4f8] sm:$0xff]
        %2371 = vst [vmem:[%s2051 + $0x4f8] sm:$0xff] %v2370
        %v2372 = vld [vmem:[%s2050 + $0x500] sm:$0xff]
        %2373 = vst [vmem:[%s2051 + $0x500] sm:$0xff] %v2372
        %v2374 = vld [vmem:[%s2050 + $0x508] sm:$0xff]
        %2375 = vst [vmem:[%s2051 + $0x508] sm:$0xff] %v2374
        %v2376 = vld [vmem:[%s2050 + $0x510] sm:$0xff]
        %2377 = vst [vmem:[%s2051 + $0x510] sm:$0xff] %v2376
        %v2378 = vld [vmem:[%s2050 + $0x518] sm:$0xff]
        %2379 = vst [vmem:[%s2051 + $0x518] sm:$0xff] %v2378
        %v2380 = vld [vmem:[%s2050 + $0x520] sm:$0xff]
        %2381 = vst [vmem:[%s2051 + $0x520] sm:$0xff] %v2380
        %v2382 = vld [vmem:[%s2050 + $0x528] sm:$0xff]
        %2383 = vst [vmem:[%s2051 + $0x528] sm:$0xff] %v2382
        %v2384 = vld [vmem:[%s2050 + $0x530] sm:$0xff]
        %2385 = vst [vmem:[%s2051 + $0x530] sm:$0xff] %v2384
        %v2386 = vld [vmem:[%s2050 + $0x538] sm:$0xff]
        %2387 = vst [vmem:[%s2051 + $0x538] sm:$0xff] %v2386
        %v2388 = vld [vmem:[%s2050 + $0x540] sm:$0xff]
        %2389 = vst [vmem:[%s2051 + $0x540] sm:$0xff] %v2388
        %v2390 = vld [vmem:[%s2050 + $0x548] sm:$0xff]
        %2391 = vst [vmem:[%s2051 + $0x548] sm:$0xff] %v2390
        %v2392 = vld [vmem:[%s2050 + $0x550] sm:$0xff]
        %2393 = vst [vmem:[%s2051 + $0x550] sm:$0xff] %v2392
        %v2394 = vld [vmem:[%s2050 + $0x558] sm:$0xff]
        %2395 = vst [vmem:[%s2051 + $0x558] sm:$0xff] %v2394
        %v2396 = vld [vmem:[%s2050 + $0x560] sm:$0xff]
        %2397 = vst [vmem:[%s2051 + $0x560] sm:$0xff] %v2396
        %v2398 = vld [vmem:[%s2050 + $0x568] sm:$0xff]
        %2399 = vst [vmem:[%s2051 + $0x568] sm:$0xff] %v2398
        %v2400 = vld [vmem:[%s2050 + $0x570] sm:$0xff]
        %2401 = vst [vmem:[%s2051 + $0x570] sm:$0xff] %v2400
        %v2402 = vld [vmem:[%s2050 + $0x578] sm:$0xff]
        %2403 = vst [vmem:[%s2051 + $0x578] sm:$0xff] %v2402
        %v2404 = vld [vmem:[%s2050 + $0x580] sm:$0xff]
        %2405 = vst [vmem:[%s2051 + $0x580] sm:$0xff] %v2404
        %v2406 = vld [vmem:[%s2050 + $0x588] sm:$0xff]
        %2407 = vst [vmem:[%s2051 + $0x588] sm:$0xff] %v2406
        %v2408 = vld [vmem:[%s2050 + $0x590] sm:$0xff]
        %2409 = vst [vmem:[%s2051 + $0x590] sm:$0xff] %v2408
        %v2410 = vld [vmem:[%s2050 + $0x598] sm:$0xff]
        %2411 = vst [vmem:[%s2051 + $0x598] sm:$0xff] %v2410
        %v2412 = vld [vmem:[%s2050 + $0x5a0] sm:$0xff]
        %2413 = vst [vmem:[%s2051 + $0x5a0] sm:$0xff] %v2412
        %v2414 = vld [vmem:[%s2050 + $0x5a8] sm:$0xff]
        %2415 = vst [vmem:[%s2051 + $0x5a8] sm:$0xff] %v2414
        %v2416 = vld [vmem:[%s2050 + $0x5b0] sm:$0xff]
        %2417 = vst [vmem:[%s2051 + $0x5b0] sm:$0xff] %v2416
        %v2418 = vld [vmem:[%s2050 + $0x5b8] sm:$0xff]
        %2419 = vst [vmem:[%s2051 + $0x5b8] sm:$0xff] %v2418
        %v2420 = vld [vmem:[%s2050 + $0x5c0] sm:$0xff]
        %2421 = vst [vmem:[%s2051 + $0x5c0] sm:$0xff] %v2420
        %v2422 = vld [vmem:[%s2050 + $0x5c8] sm:$0xff]
        %2423 = vst [vmem:[%s2051 + $0x5c8] sm:$0xff] %v2422
        %v2424 = vld [vmem:[%s2050 + $0x5d0] sm:$0xff]
        %2425 = vst [vmem:[%s2051 + $0x5d0] sm:$0xff] %v2424
        %v2426 = vld [vmem:[%s2050 + $0x5d8] sm:$0xff]
        %2427 = vst [vmem:[%s2051 + $0x5d8] sm:$0xff] %v2426
        %v2428 = vld [vmem:[%s2050 + $0x5e0] sm:$0xff]
        %2429 = vst [vmem:[%s2051 + $0x5e0] sm:$0xff] %v2428
        %v2430 = vld [vmem:[%s2050 + $0x5e8] sm:$0xff]
        %2431 = vst [vmem:[%s2051 + $0x5e8] sm:$0xff] %v2430
        %v2432 = vld [vmem:[%s2050 + $0x5f0] sm:$0xff]
        %2433 = vst [vmem:[%s2051 + $0x5f0] sm:$0xff] %v2432
        %v2434 = vld [vmem:[%s2050 + $0x5f8] sm:$0xff]
        %2435 = vst [vmem:[%s2051 + $0x5f8] sm:$0xff] %v2434
        %v2436 = vld [vmem:[%s2050 + $0x600] sm:$0xff]
        %2437 = vst [vmem:[%s2051 + $0x600] sm:$0xff] %v2436
        %v2438 = vld [vmem:[%s2050 + $0x608] sm:$0xff]
        %2439 = vst [vmem:[%s2051 + $0x608] sm:$0xff] %v2438
        %v2440 = vld [vmem:[%s2050 + $0x610] sm:$0xff]
        %2441 = vst [vmem:[%s2051 + $0x610] sm:$0xff] %v2440
      $region57: #{se_conv_bn.1} parent=51 // loop_footer
        %s2049 = sadd.s32 1, %s2045
      $region58: #{se_conv_bn.1} parent=51 // loop_footer_branch
        %2044 = sbr.rel target = $region54
      $region59: #{se_conv_bn.1} parent=51 // loop_exit
        _
    $region52: #{se_conv_bn.1} parent=1 // pred_fallthru
      _
    // Predicated region
    $region60: #{se_conv_bn.1} parent=1 // pred_check
      _
    $region61: #{se_conv_bn.1} parent=1 // pred_check_branch
      %2443 = sbr.rel target = $region63
    $region62: #{se_conv_bn.1} parent=1 // pred_region
      _
    $region63: #{se_conv_bn.1} parent=1 // pred_fallthru
      _
    // Predicated region
    $region64: #{se_conv_bn.1} parent=1 // pred_check
      _
    $region65: #{se_conv_bn.1} parent=1 // pred_check_branch
      %2446 = sbr.rel (0) target = $region67
    $region66: #{se_conv_bn.1} parent=1 // pred_region
      %2447 = vsyncadd %s2041, 24960
    $region67: #{se_conv_bn.1} parent=1 // pred_fallthru
      _
    %v2448 = vld [vmem:[#allocation2] sm:$0xff]
    %v2449 = vld [vmem:[#allocation2 + $0x8] sm:$0xf]
    %v2450 = vld [vmem:[#allocation2 + $0xc] sm:$0xff]
    %v2451 = vld [vmem:[#allocation2 + $0x14] sm:$0xf]
    %v2452 = vld [vmem:[#allocation2 + $0x18] sm:$0xff]
    %v2453 = vld [vmem:[#allocation2 + $0x20] sm:$0xf]
    %v2454 = vld [vmem:[#allocation2 + $0x24] sm:$0xff]
    %v2455 = vld [vmem:[#allocation2 + $0x2c] sm:$0xf]
    %v2456 = vld [vmem:[#allocation2 + $0x30] sm:$0xff]
    %v2457 = vld [vmem:[#allocation2 + $0x38] sm:$0xf]
    %v2458 = vld [vmem:[#allocation2 + $0x3c] sm:$0xff]
    %v2459 = vld [vmem:[#allocation2 + $0x44] sm:$0xf]
    %v2460 = vld [vmem:[#allocation2 + $0x48] sm:$0xff]
    %v2461 = vld [vmem:[#allocation2 + $0x50] sm:$0xf]
    %v2462 = vld [vmem:[#allocation2 + $0x54] sm:$0xff]
    %v2463 = vld [vmem:[#allocation2 + $0x5c] sm:$0xf]
    %v2464 = vld [vmem:[#allocation2 + $0x60] sm:$0xff]
    %v2465 = vld [vmem:[#allocation2 + $0x68] sm:$0xf]
    %v2466 = vld [vmem:[#allocation2 + $0x6c] sm:$0xff]
    %v2467 = vld [vmem:[#allocation2 + $0x74] sm:$0xf]
    %v2468 = vld [vmem:[#allocation2 + $0x78] sm:$0xff]
    %v2469 = vld [vmem:[#allocation2 + $0x80] sm:$0xf]
    %v2470 = vld [vmem:[#allocation2 + $0x84] sm:$0xff]
    %v2471 = vld [vmem:[#allocation2 + $0x8c] sm:$0xf]
    %v2472 = vld [vmem:[#allocation2 + $0x90] sm:$0xff]
    %v2473 = vld [vmem:[#allocation2 + $0x98] sm:$0xf]
    %v2474 = vld [vmem:[#allocation2 + $0x9c] sm:$0xff]
    %v2475 = vld [vmem:[#allocation2 + $0xa4] sm:$0xf]
    %v2476 = vld [vmem:[#allocation2 + $0xa8] sm:$0xff]
    %v2477 = vld [vmem:[#allocation2 + $0xb0] sm:$0xf]
    %v2478 = vld [vmem:[#allocation2 + $0xb4] sm:$0xff]
    %v2479 = vld [vmem:[#allocation2 + $0xbc] sm:$0xf]
    %v2480 = vld [vmem:[#allocation2 + $0xc0] sm:$0xff]
    %v2481 = vld [vmem:[#allocation2 + $0xc8] sm:$0xf]
    %v2482 = vld [vmem:[#allocation2 + $0xcc] sm:$0xff]
    %v2483 = vld [vmem:[#allocation2 + $0xd4] sm:$0xf]
    %v2484 = vld [vmem:[#allocation2 + $0xd8] sm:$0xff]
    %v2485 = vld [vmem:[#allocation2 + $0xe0] sm:$0xf]
    %v2486 = vld [vmem:[#allocation2 + $0xe4] sm:$0xff]
    %v2487 = vld [vmem:[#allocation2 + $0xec] sm:$0xf]
    %v2488 = vld [vmem:[#allocation2 + $0xf0] sm:$0xff]
    %v2489 = vld [vmem:[#allocation2 + $0xf8] sm:$0xf]
    %v2490 = vld [vmem:[#allocation2 + $0xfc] sm:$0xff]
    %v2491 = vld [vmem:[#allocation2 + $0x104] sm:$0xf]
    %v2492 = vld [vmem:[#allocation2 + $0x108] sm:$0xff]
    %v2493 = vld [vmem:[#allocation2 + $0x110] sm:$0xf]
    %v2494 = vld [vmem:[#allocation2 + $0x114] sm:$0xff]
    %v2495 = vld [vmem:[#allocation2 + $0x11c] sm:$0xf]
    %v2496 = vld [vmem:[#allocation2 + $0x120] sm:$0xff]
    %v2497 = vld [vmem:[#allocation2 + $0x128] sm:$0xf]
    %v2498 = vld [vmem:[#allocation2 + $0x12c] sm:$0xff]
    %v2499 = vld [vmem:[#allocation2 + $0x134] sm:$0xf]
    %v2500 = vld [vmem:[#allocation2 + $0x138] sm:$0xff]
    %v2501 = vld [vmem:[#allocation2 + $0x140] sm:$0xf]
    %v2502 = vld [vmem:[#allocation2 + $0x144] sm:$0xff]
    %v2503 = vld [vmem:[#allocation2 + $0x14c] sm:$0xf]
    %v2504 = vld [vmem:[#allocation2 + $0x150] sm:$0xff]
    %v2505 = vld [vmem:[#allocation2 + $0x158] sm:$0xf]
    %v2506 = vld [vmem:[#allocation2 + $0x15c] sm:$0xff]
    %v2507 = vld [vmem:[#allocation2 + $0x164] sm:$0xf]
    %v2508 = vld [vmem:[#allocation2 + $0x168] sm:$0xff]
    %v2509 = vld [vmem:[#allocation2 + $0x170] sm:$0xf]
    %v2510 = vld [vmem:[#allocation2 + $0x174] sm:$0xff]
    %v2511 = vld [vmem:[#allocation2 + $0x17c] sm:$0xf]
    %v2512 = vld [vmem:[#allocation2 + $0x180] sm:$0xff]
    %v2513 = vld [vmem:[#allocation2 + $0x188] sm:$0xf]
    %v2514 = vld [vmem:[#allocation2 + $0x18c] sm:$0xff]
    %v2515 = vld [vmem:[#allocation2 + $0x194] sm:$0xf]
    %v2516 = vld [vmem:[#allocation2 + $0x198] sm:$0xff]
    %v2517 = vld [vmem:[#allocation2 + $0x1a0] sm:$0xf]
    %v2518 = vld [vmem:[#allocation2 + $0x1a4] sm:$0xff]
    %v2519 = vld [vmem:[#allocation2 + $0x1ac] sm:$0xf]
    %v2520 = vld [vmem:[#allocation2 + $0x1b0] sm:$0xff]
    %v2521 = vld [vmem:[#allocation2 + $0x1b8] sm:$0xf]
    %v2522 = vld [vmem:[#allocation2 + $0x1bc] sm:$0xff]
    %v2523 = vld [vmem:[#allocation2 + $0x1c4] sm:$0xf]
    %v2524 = vld [vmem:[#allocation2 + $0x1c8] sm:$0xff]
    %v2525 = vld [vmem:[#allocation2 + $0x1d0] sm:$0xf]
    %v2526 = vld [vmem:[#allocation2 + $0x1d4] sm:$0xff]
    %v2527 = vld [vmem:[#allocation2 + $0x1dc] sm:$0xf]
    %v2528 = vld [vmem:[#allocation2 + $0x1e0] sm:$0xff]
    %v2529 = vld [vmem:[#allocation2 + $0x1e8] sm:$0xf]
    %v2530 = vld [vmem:[#allocation2 + $0x1ec] sm:$0xff]
    %v2531 = vld [vmem:[#allocation2 + $0x1f4] sm:$0xf]
    %v2532 = vld [vmem:[#allocation2 + $0x1f8] sm:$0xff]
    %v2533 = vld [vmem:[#allocation2 + $0x200] sm:$0xf]
    %v2534 = vld [vmem:[#allocation2 + $0x204] sm:$0xff]
    %v2535 = vld [vmem:[#allocation2 + $0x20c] sm:$0xf]
    %v2536 = vld [vmem:[#allocation2 + $0x210] sm:$0xff]
    %v2537 = vld [vmem:[#allocation2 + $0x218] sm:$0xf]
    %v2538 = vld [vmem:[#allocation2 + $0x21c] sm:$0xff]
    %v2539 = vld [vmem:[#allocation2 + $0x224] sm:$0xf]
    %v2540 = vld [vmem:[#allocation2 + $0x228] sm:$0xff]
    %v2541 = vld [vmem:[#allocation2 + $0x230] sm:$0xf]
    %v2542 = vld [vmem:[#allocation2 + $0x234] sm:$0xff]
    %v2543 = vld [vmem:[#allocation2 + $0x23c] sm:$0xf]
    %v2544 = vld [vmem:[#allocation2 + $0x240] sm:$0xff]
    %v2545 = vld [vmem:[#allocation2 + $0x248] sm:$0xf]
    %v2546 = vld [vmem:[#allocation2 + $0x24c] sm:$0xff]
    %v2547 = vld [vmem:[#allocation2 + $0x254] sm:$0xf]
    %v2548 = vld [vmem:[#allocation2 + $0x258] sm:$0xff]
    %v2549 = vld [vmem:[#allocation2 + $0x260] sm:$0xf]
    %v2550 = vld [vmem:[#allocation2 + $0x264] sm:$0xff]
    %v2551 = vld [vmem:[#allocation2 + $0x26c] sm:$0xf]
    %v2552 = vld [vmem:[#allocation2 + $0x270] sm:$0xff]
    %v2553 = vld [vmem:[#allocation2 + $0x278] sm:$0xf]
    %v2554 = vld [vmem:[#allocation2 + $0x27c] sm:$0xff]
    %v2555 = vld [vmem:[#allocation2 + $0x284] sm:$0xf]
    %v2556 = vld [vmem:[#allocation2 + $0x288] sm:$0xff]
    %v2557 = vld [vmem:[#allocation2 + $0x290] sm:$0xf]
    %v2558 = vld [vmem:[#allocation2 + $0x294] sm:$0xff]
    %v2559 = vld [vmem:[#allocation2 + $0x29c] sm:$0xf]
    %v2560 = vld [vmem:[#allocation2 + $0x2a0] sm:$0xff]
    %v2561 = vld [vmem:[#allocation2 + $0x2a8] sm:$0xf]
    %v2562 = vld [vmem:[#allocation2 + $0x2ac] sm:$0xff]
    %v2563 = vld [vmem:[#allocation2 + $0x2b4] sm:$0xf]
    %v2564 = vld [vmem:[#allocation2 + $0x2b8] sm:$0xff]
    %v2565 = vld [vmem:[#allocation2 + $0x2c0] sm:$0xf]
    %v2566 = vld [vmem:[#allocation2 + $0x2c4] sm:$0xff]
    %v2567 = vld [vmem:[#allocation2 + $0x2cc] sm:$0xf]
    %v2568 = vld [vmem:[#allocation2 + $0x2d0] sm:$0xff]
    %v2569 = vld [vmem:[#allocation2 + $0x2d8] sm:$0xf]
    %v2570 = vld [vmem:[#allocation2 + $0x2dc] sm:$0xff]
    %v2571 = vld [vmem:[#allocation2 + $0x2e4] sm:$0xf]
    %v2572 = vld [vmem:[#allocation2 + $0x2e8] sm:$0xff]
    %v2573 = vld [vmem:[#allocation2 + $0x2f0] sm:$0xf]
    %v2574 = vld [vmem:[#allocation2 + $0x2f4] sm:$0xff]
    %v2575 = vld [vmem:[#allocation2 + $0x2fc] sm:$0xf]
    %v2576 = vld [vmem:[#allocation2 + $0x300] sm:$0xff]
    %v2577 = vld [vmem:[#allocation2 + $0x308] sm:$0xf]
    %v2578 = vld [vmem:[#allocation2 + $0x30c] sm:$0xff]
    %v2579 = vld [vmem:[#allocation2 + $0x314] sm:$0xf]
    %v2580 = vld [vmem:[#allocation2 + $0x318] sm:$0xff]
    %v2581 = vld [vmem:[#allocation2 + $0x320] sm:$0xf]
    %v2582 = vld [vmem:[#allocation2 + $0x324] sm:$0xff]
    %v2583 = vld [vmem:[#allocation2 + $0x32c] sm:$0xf]
    %v2584 = vld [vmem:[#allocation2 + $0x330] sm:$0xff]
    %v2585 = vld [vmem:[#allocation2 + $0x338] sm:$0xf]
    %v2586 = vld [vmem:[#allocation2 + $0x33c] sm:$0xff]
    %v2587 = vld [vmem:[#allocation2 + $0x344] sm:$0xf]
    %v2588 = vld [vmem:[#allocation2 + $0x348] sm:$0xff]
    %v2589 = vld [vmem:[#allocation2 + $0x350] sm:$0xf]
    %v2590 = vld [vmem:[#allocation2 + $0x354] sm:$0xff]
    %v2591 = vld [vmem:[#allocation2 + $0x35c] sm:$0xf]
    %v2592 = vld [vmem:[#allocation2 + $0x360] sm:$0xff]
    %v2593 = vld [vmem:[#allocation2 + $0x368] sm:$0xf]
    %v2594 = vld [vmem:[#allocation2 + $0x36c] sm:$0xff]
    %v2595 = vld [vmem:[#allocation2 + $0x374] sm:$0xf]
    %v2596 = vld [vmem:[#allocation2 + $0x378] sm:$0xff]
    %v2597 = vld [vmem:[#allocation2 + $0x380] sm:$0xf]
    %v2598 = vld [vmem:[#allocation2 + $0x384] sm:$0xff]
    %v2599 = vld [vmem:[#allocation2 + $0x38c] sm:$0xf]
    %v2600 = vld [vmem:[#allocation2 + $0x390] sm:$0xff]
    %v2601 = vld [vmem:[#allocation2 + $0x398] sm:$0xf]
    %v2602 = vld [vmem:[#allocation2 + $0x39c] sm:$0xff]
    %v2603 = vld [vmem:[#allocation2 + $0x3a4] sm:$0xf]
    %v2604 = vld [vmem:[#allocation2 + $0x3a8] sm:$0xff]
    %v2605 = vld [vmem:[#allocation2 + $0x3b0] sm:$0xf]
    %v2606 = vld [vmem:[#allocation2 + $0x3b4] sm:$0xff]
    %v2607 = vld [vmem:[#allocation2 + $0x3bc] sm:$0xf]
    %v2608 = vld [vmem:[#allocation2 + $0x3c0] sm:$0xff]
    %v2609 = vld [vmem:[#allocation2 + $0x3c8] sm:$0xf]
    %v2610 = vld [vmem:[#allocation2 + $0x3cc] sm:$0xff]
    %v2611 = vld [vmem:[#allocation2 + $0x3d4] sm:$0xf]
    %v2612 = vld [vmem:[#allocation2 + $0x3d8] sm:$0xff]
    %v2613 = vld [vmem:[#allocation2 + $0x3e0] sm:$0xf]
    %v2614 = vld [vmem:[#allocation2 + $0x3e4] sm:$0xff]
    %v2615 = vld [vmem:[#allocation2 + $0x3ec] sm:$0xf]
    %v2616 = vld [vmem:[#allocation2 + $0x3f0] sm:$0xff]
    %v2617 = vld [vmem:[#allocation2 + $0x3f8] sm:$0xf]
    %v2618 = vld [vmem:[#allocation2 + $0x3fc] sm:$0xff]
    %v2619 = vld [vmem:[#allocation2 + $0x404] sm:$0xf]
    %v2620 = vld [vmem:[#allocation2 + $0x408] sm:$0xff]
    %v2621 = vld [vmem:[#allocation2 + $0x410] sm:$0xf]
    %v2622 = vld [vmem:[#allocation2 + $0x414] sm:$0xff]
    %v2623 = vld [vmem:[#allocation2 + $0x41c] sm:$0xf]
    %v2624 = vld [vmem:[#allocation2 + $0x420] sm:$0xff]
    %v2625 = vld [vmem:[#allocation2 + $0x428] sm:$0xf]
    %v2626 = vld [vmem:[#allocation2 + $0x42c] sm:$0xff]
    %v2627 = vld [vmem:[#allocation2 + $0x434] sm:$0xf]
    %v2628 = vld [vmem:[#allocation2 + $0x438] sm:$0xff]
    %v2629 = vld [vmem:[#allocation2 + $0x440] sm:$0xf]
    %v2630 = vld [vmem:[#allocation2 + $0x444] sm:$0xff]
    %v2631 = vld [vmem:[#allocation2 + $0x44c] sm:$0xf]
    %v2632 = vld [vmem:[#allocation2 + $0x450] sm:$0xff]
    %v2633 = vld [vmem:[#allocation2 + $0x458] sm:$0xf]
    %v2634 = vld [vmem:[#allocation2 + $0x45c] sm:$0xff]
    %v2635 = vld [vmem:[#allocation2 + $0x464] sm:$0xf]
    %v2636 = vld [vmem:[#allocation2 + $0x468] sm:$0xff]
    %v2637 = vld [vmem:[#allocation2 + $0x470] sm:$0xf]
    %v2638 = vld [vmem:[#allocation2 + $0x474] sm:$0xff]
    %v2639 = vld [vmem:[#allocation2 + $0x47c] sm:$0xf]
    %v2640 = vld [vmem:[#allocation2 + $0x480] sm:$0xff]
    %v2641 = vld [vmem:[#allocation2 + $0x488] sm:$0xf]
    %v2642 = vld [vmem:[#allocation2 + $0x48c] sm:$0xff]
    %v2643 = vld [vmem:[#allocation2 + $0x494] sm:$0xf]
    %v2644 = vld [vmem:[#allocation2 + $0x498] sm:$0xff]
    %v2645 = vld [vmem:[#allocation2 + $0x4a0] sm:$0xf]
    %v2646 = vld [vmem:[#allocation2 + $0x4a4] sm:$0xff]
    %v2647 = vld [vmem:[#allocation2 + $0x4ac] sm:$0xf]
    %v2648 = vld [vmem:[#allocation2 + $0x4b0] sm:$0xff]
    %v2649 = vld [vmem:[#allocation2 + $0x4b8] sm:$0xf]
    %v2650 = vld [vmem:[#allocation2 + $0x4bc] sm:$0xff]
    %v2651 = vld [vmem:[#allocation2 + $0x4c4] sm:$0xf]
    %v2652 = vld [vmem:[#allocation2 + $0x4c8] sm:$0xff]
    %v2653 = vld [vmem:[#allocation2 + $0x4d0] sm:$0xf]
    %v2654 = vld [vmem:[#allocation2 + $0x4d4] sm:$0xff]
    %v2655 = vld [vmem:[#allocation2 + $0x4dc] sm:$0xf]
    %v2656 = vld [vmem:[#allocation2 + $0x4e0] sm:$0xff]
    %v2657 = vld [vmem:[#allocation2 + $0x4e8] sm:$0xf]
    %v2658 = vld [vmem:[#allocation2 + $0x4ec] sm:$0xff]
    %v2659 = vld [vmem:[#allocation2 + $0x4f4] sm:$0xf]
    %v2660 = vld [vmem:[#allocation2 + $0x4f8] sm:$0xff]
    %v2661 = vld [vmem:[#allocation2 + $0x500] sm:$0xf]
    %v2662 = vld [vmem:[#allocation2 + $0x504] sm:$0xff]
    %v2663 = vld [vmem:[#allocation2 + $0x50c] sm:$0xf]
    %v2664 = vld [vmem:[#allocation2 + $0x510] sm:$0xff]
    %v2665 = vld [vmem:[#allocation2 + $0x518] sm:$0xf]
    %v2666 = vld [vmem:[#allocation2 + $0x51c] sm:$0xff]
    %v2667 = vld [vmem:[#allocation2 + $0x524] sm:$0xf]
    %v2668 = vld [vmem:[#allocation2 + $0x528] sm:$0xff]
    %v2669 = vld [vmem:[#allocation2 + $0x530] sm:$0xf]
    %v2670 = vld [vmem:[#allocation2 + $0x534] sm:$0xff]
    %v2671 = vld [vmem:[#allocation2 + $0x53c] sm:$0xf]
    %v2672 = vld [vmem:[#allocation2 + $0x540] sm:$0xff]
    %v2673 = vld [vmem:[#allocation2 + $0x548] sm:$0xf]
    %v2674 = vld [vmem:[#allocation2 + $0x54c] sm:$0xff]
    %v2675 = vld [vmem:[#allocation2 + $0x554] sm:$0xf]
    %v2676 = vld [vmem:[#allocation2 + $0x558] sm:$0xff]
    %v2677 = vld [vmem:[#allocation2 + $0x560] sm:$0xf]
    %v2678 = vld [vmem:[#allocation2 + $0x564] sm:$0xff]
    %v2679 = vld [vmem:[#allocation2 + $0x56c] sm:$0xf]
    %v2680 = vld [vmem:[#allocation2 + $0x570] sm:$0xff]
    %v2681 = vld [vmem:[#allocation2 + $0x578] sm:$0xf]
    %v2682 = vld [vmem:[#allocation2 + $0x57c] sm:$0xff]
    %v2683 = vld [vmem:[#allocation2 + $0x584] sm:$0xf]
    %v2684 = vld [vmem:[#allocation2 + $0x588] sm:$0xff]
    %v2685 = vld [vmem:[#allocation2 + $0x590] sm:$0xf]
    %v2686 = vld [vmem:[#allocation2 + $0x594] sm:$0xff]
    %v2687 = vld [vmem:[#allocation2 + $0x59c] sm:$0xf]
    %v2688 = vld [vmem:[#allocation2 + $0x5a0] sm:$0xff]
    %v2689 = vld [vmem:[#allocation2 + $0x5a8] sm:$0xf]
    %v2690 = vld [vmem:[#allocation2 + $0x5ac] sm:$0xff]
    %v2691 = vld [vmem:[#allocation2 + $0x5b4] sm:$0xf]
    %v2692 = vld [vmem:[#allocation2 + $0x5b8] sm:$0xff]
    %v2693 = vld [vmem:[#allocation2 + $0x5c0] sm:$0xf]
    %v2694 = vld [vmem:[#allocation2 + $0x5c4] sm:$0xff]
    %v2695 = vld [vmem:[#allocation2 + $0x5cc] sm:$0xf]
    %v2696 = vld [vmem:[#allocation2 + $0x5d0] sm:$0xff]
    %v2697 = vld [vmem:[#allocation2 + $0x5d8] sm:$0xf]
    %v2698 = vld [vmem:[#allocation2 + $0x5dc] sm:$0xff]
    %v2699 = vld [vmem:[#allocation2 + $0x5e4] sm:$0xf]
    %v2700 = vld [vmem:[#allocation2 + $0x5e8] sm:$0xff]
    %v2701 = vld [vmem:[#allocation2 + $0x5f0] sm:$0xf]
    %v2702 = vld [vmem:[#allocation2 + $0x5f4] sm:$0xff]
    %v2703 = vld [vmem:[#allocation2 + $0x5fc] sm:$0xf]
    %s2704 = smul.u32 4, 130
    %s2705 = smul.u32 %s2704, 3
    %s2706 = sshll.u32 %s2705, 4
    %2707 = dma.done %s2041, %s2706
    %v2708 = vld [vmem:[#allocation3] sm:$0xff]
    %v2709 = vld [vmem:[#allocation3 + $0x8] sm:$0xf]
    %v2710 = vld [vmem:[#allocation3 + $0xc] sm:$0xff]
    %v2711 = vld [vmem:[#allocation3 + $0x14] sm:$0xf]
    %v2712 = vld [vmem:[#allocation3 + $0x18] sm:$0xff]
    %v2713 = vld [vmem:[#allocation3 + $0x20] sm:$0xf]
    %v2714 = vld [vmem:[#allocation3 + $0x24] sm:$0xff]
    %v2715 = vld [vmem:[#allocation3 + $0x2c] sm:$0xf]
    %v2716 = vld [vmem:[#allocation3 + $0x30] sm:$0xff]
    %v2717 = vld [vmem:[#allocation3 + $0x38] sm:$0xf]
    %v2718 = vld [vmem:[#allocation3 + $0x3c] sm:$0xff]
    %v2719 = vld [vmem:[#allocation3 + $0x44] sm:$0xf]
    %v2720 = vld [vmem:[#allocation3 + $0x48] sm:$0xff]
    %v2721 = vld [vmem:[#allocation3 + $0x50] sm:$0xf]
    %v2722 = vld [vmem:[#allocation3 + $0x54] sm:$0xff]
    %v2723 = vld [vmem:[#allocation3 + $0x5c] sm:$0xf]
    %v2724 = vld [vmem:[#allocation3 + $0x60] sm:$0xff]
    %v2725 = vld [vmem:[#allocation3 + $0x68] sm:$0xf]
    %v2726 = vld [vmem:[#allocation3 + $0x6c] sm:$0xff]
    %v2727 = vld [vmem:[#allocation3 + $0x74] sm:$0xf]
    %v2728 = vld [vmem:[#allocation3 + $0x78] sm:$0xff]
    %v2729 = vld [vmem:[#allocation3 + $0x80] sm:$0xf]
    %v2730 = vld [vmem:[#allocation3 + $0x84] sm:$0xff]
    %v2731 = vld [vmem:[#allocation3 + $0x8c] sm:$0xf]
    %v2732 = vld [vmem:[#allocation3 + $0x90] sm:$0xff]
    %v2733 = vld [vmem:[#allocation3 + $0x98] sm:$0xf]
    %v2734 = vld [vmem:[#allocation3 + $0x9c] sm:$0xff]
    %v2735 = vld [vmem:[#allocation3 + $0xa4] sm:$0xf]
    %v2736 = vld [vmem:[#allocation3 + $0xa8] sm:$0xff]
    %v2737 = vld [vmem:[#allocation3 + $0xb0] sm:$0xf]
    %v2738 = vld [vmem:[#allocation3 + $0xb4] sm:$0xff]
    %v2739 = vld [vmem:[#allocation3 + $0xbc] sm:$0xf]
    %v2740 = vld [vmem:[#allocation3 + $0xc0] sm:$0xff]
    %v2741 = vld [vmem:[#allocation3 + $0xc8] sm:$0xf]
    %v2742 = vld [vmem:[#allocation3 + $0xcc] sm:$0xff]
    %v2743 = vld [vmem:[#allocation3 + $0xd4] sm:$0xf]
    %v2744 = vld [vmem:[#allocation3 + $0xd8] sm:$0xff]
    %v2745 = vld [vmem:[#allocation3 + $0xe0] sm:$0xf]
    %v2746 = vld [vmem:[#allocation3 + $0xe4] sm:$0xff]
    %v2747 = vld [vmem:[#allocation3 + $0xec] sm:$0xf]
    %v2748 = vld [vmem:[#allocation3 + $0xf0] sm:$0xff]
    %v2749 = vld [vmem:[#allocation3 + $0xf8] sm:$0xf]
    %v2750 = vld [vmem:[#allocation3 + $0xfc] sm:$0xff]
    %v2751 = vld [vmem:[#allocation3 + $0x104] sm:$0xf]
    %v2752 = vld [vmem:[#allocation3 + $0x108] sm:$0xff]
    %v2753 = vld [vmem:[#allocation3 + $0x110] sm:$0xf]
    %v2754 = vld [vmem:[#allocation3 + $0x114] sm:$0xff]
    %v2755 = vld [vmem:[#allocation3 + $0x11c] sm:$0xf]
    %v2756 = vld [vmem:[#allocation3 + $0x120] sm:$0xff]
    %v2757 = vld [vmem:[#allocation3 + $0x128] sm:$0xf]
    %v2758 = vld [vmem:[#allocation3 + $0x12c] sm:$0xff]
    %v2759 = vld [vmem:[#allocation3 + $0x134] sm:$0xf]
    %v2760 = vld [vmem:[#allocation3 + $0x138] sm:$0xff]
    %v2761 = vld [vmem:[#allocation3 + $0x140] sm:$0xf]
    %v2762 = vld [vmem:[#allocation3 + $0x144] sm:$0xff]
    %v2763 = vld [vmem:[#allocation3 + $0x14c] sm:$0xf]
    %v2764 = vld [vmem:[#allocation3 + $0x150] sm:$0xff]
    %v2765 = vld [vmem:[#allocation3 + $0x158] sm:$0xf]
    %v2766 = vld [vmem:[#allocation3 + $0x15c] sm:$0xff]
    %v2767 = vld [vmem:[#allocation3 + $0x164] sm:$0xf]
    %v2768 = vld [vmem:[#allocation3 + $0x168] sm:$0xff]
    %v2769 = vld [vmem:[#allocation3 + $0x170] sm:$0xf]
    %v2770 = vld [vmem:[#allocation3 + $0x174] sm:$0xff]
    %v2771 = vld [vmem:[#allocation3 + $0x17c] sm:$0xf]
    %v2772 = vld [vmem:[#allocation3 + $0x180] sm:$0xff]
    %v2773 = vld [vmem:[#allocation3 + $0x188] sm:$0xf]
    %v2774 = vld [vmem:[#allocation3 + $0x18c] sm:$0xff]
    %v2775 = vld [vmem:[#allocation3 + $0x194] sm:$0xf]
    %v2776 = vld [vmem:[#allocation3 + $0x198] sm:$0xff]
    %v2777 = vld [vmem:[#allocation3 + $0x1a0] sm:$0xf]
    %v2778 = vld [vmem:[#allocation3 + $0x1a4] sm:$0xff]
    %v2779 = vld [vmem:[#allocation3 + $0x1ac] sm:$0xf]
    %v2780 = vld [vmem:[#allocation3 + $0x1b0] sm:$0xff]
    %v2781 = vld [vmem:[#allocation3 + $0x1b8] sm:$0xf]
    %v2782 = vld [vmem:[#allocation3 + $0x1bc] sm:$0xff]
    %v2783 = vld [vmem:[#allocation3 + $0x1c4] sm:$0xf]
    %v2784 = vld [vmem:[#allocation3 + $0x1c8] sm:$0xff]
    %v2785 = vld [vmem:[#allocation3 + $0x1d0] sm:$0xf]
    %v2786 = vld [vmem:[#allocation3 + $0x1d4] sm:$0xff]
    %v2787 = vld [vmem:[#allocation3 + $0x1dc] sm:$0xf]
    %v2788 = vld [vmem:[#allocation3 + $0x1e0] sm:$0xff]
    %v2789 = vld [vmem:[#allocation3 + $0x1e8] sm:$0xf]
    %v2790 = vld [vmem:[#allocation3 + $0x1ec] sm:$0xff]
    %v2791 = vld [vmem:[#allocation3 + $0x1f4] sm:$0xf]
    %v2792 = vld [vmem:[#allocation3 + $0x1f8] sm:$0xff]
    %v2793 = vld [vmem:[#allocation3 + $0x200] sm:$0xf]
    %v2794 = vld [vmem:[#allocation3 + $0x204] sm:$0xff]
    %v2795 = vld [vmem:[#allocation3 + $0x20c] sm:$0xf]
    %v2796 = vld [vmem:[#allocation3 + $0x210] sm:$0xff]
    %v2797 = vld [vmem:[#allocation3 + $0x218] sm:$0xf]
    %v2798 = vld [vmem:[#allocation3 + $0x21c] sm:$0xff]
    %v2799 = vld [vmem:[#allocation3 + $0x224] sm:$0xf]
    %v2800 = vld [vmem:[#allocation3 + $0x228] sm:$0xff]
    %v2801 = vld [vmem:[#allocation3 + $0x230] sm:$0xf]
    %v2802 = vld [vmem:[#allocation3 + $0x234] sm:$0xff]
    %v2803 = vld [vmem:[#allocation3 + $0x23c] sm:$0xf]
    %v2804 = vld [vmem:[#allocation3 + $0x240] sm:$0xff]
    %v2805 = vld [vmem:[#allocation3 + $0x248] sm:$0xf]
    %v2806 = vld [vmem:[#allocation3 + $0x24c] sm:$0xff]
    %v2807 = vld [vmem:[#allocation3 + $0x254] sm:$0xf]
    %v2808 = vld [vmem:[#allocation3 + $0x258] sm:$0xff]
    %v2809 = vld [vmem:[#allocation3 + $0x260] sm:$0xf]
    %v2810 = vld [vmem:[#allocation3 + $0x264] sm:$0xff]
    %v2811 = vld [vmem:[#allocation3 + $0x26c] sm:$0xf]
    %v2812 = vld [vmem:[#allocation3 + $0x270] sm:$0xff]
    %v2813 = vld [vmem:[#allocation3 + $0x278] sm:$0xf]
    %v2814 = vld [vmem:[#allocation3 + $0x27c] sm:$0xff]
    %v2815 = vld [vmem:[#allocation3 + $0x284] sm:$0xf]
    %v2816 = vld [vmem:[#allocation3 + $0x288] sm:$0xff]
    %v2817 = vld [vmem:[#allocation3 + $0x290] sm:$0xf]
    %v2818 = vld [vmem:[#allocation3 + $0x294] sm:$0xff]
    %v2819 = vld [vmem:[#allocation3 + $0x29c] sm:$0xf]
    %v2820 = vld [vmem:[#allocation3 + $0x2a0] sm:$0xff]
    %v2821 = vld [vmem:[#allocation3 + $0x2a8] sm:$0xf]
    %v2822 = vld [vmem:[#allocation3 + $0x2ac] sm:$0xff]
    %v2823 = vld [vmem:[#allocation3 + $0x2b4] sm:$0xf]
    %v2824 = vld [vmem:[#allocation3 + $0x2b8] sm:$0xff]
    %v2825 = vld [vmem:[#allocation3 + $0x2c0] sm:$0xf]
    %v2826 = vld [vmem:[#allocation3 + $0x2c4] sm:$0xff]
    %v2827 = vld [vmem:[#allocation3 + $0x2cc] sm:$0xf]
    %v2828 = vld [vmem:[#allocation3 + $0x2d0] sm:$0xff]
    %v2829 = vld [vmem:[#allocation3 + $0x2d8] sm:$0xf]
    %v2830 = vld [vmem:[#allocation3 + $0x2dc] sm:$0xff]
    %v2831 = vld [vmem:[#allocation3 + $0x2e4] sm:$0xf]
    %v2832 = vld [vmem:[#allocation3 + $0x2e8] sm:$0xff]
    %v2833 = vld [vmem:[#allocation3 + $0x2f0] sm:$0xf]
    %v2834 = vld [vmem:[#allocation3 + $0x2f4] sm:$0xff]
    %v2835 = vld [vmem:[#allocation3 + $0x2fc] sm:$0xf]
    %v2836 = vld [vmem:[#allocation3 + $0x300] sm:$0xff]
    %v2837 = vld [vmem:[#allocation3 + $0x308] sm:$0xf]
    %v2838 = vld [vmem:[#allocation3 + $0x30c] sm:$0xff]
    %v2839 = vld [vmem:[#allocation3 + $0x314] sm:$0xf]
    %v2840 = vld [vmem:[#allocation3 + $0x318] sm:$0xff]
    %v2841 = vld [vmem:[#allocation3 + $0x320] sm:$0xf]
    %v2842 = vld [vmem:[#allocation3 + $0x324] sm:$0xff]
    %v2843 = vld [vmem:[#allocation3 + $0x32c] sm:$0xf]
    %v2844 = vld [vmem:[#allocation3 + $0x330] sm:$0xff]
    %v2845 = vld [vmem:[#allocation3 + $0x338] sm:$0xf]
    %v2846 = vld [vmem:[#allocation3 + $0x33c] sm:$0xff]
    %v2847 = vld [vmem:[#allocation3 + $0x344] sm:$0xf]
    %v2848 = vld [vmem:[#allocation3 + $0x348] sm:$0xff]
    %v2849 = vld [vmem:[#allocation3 + $0x350] sm:$0xf]
    %v2850 = vld [vmem:[#allocation3 + $0x354] sm:$0xff]
    %v2851 = vld [vmem:[#allocation3 + $0x35c] sm:$0xf]
    %v2852 = vld [vmem:[#allocation3 + $0x360] sm:$0xff]
    %v2853 = vld [vmem:[#allocation3 + $0x368] sm:$0xf]
    %v2854 = vld [vmem:[#allocation3 + $0x36c] sm:$0xff]
    %v2855 = vld [vmem:[#allocation3 + $0x374] sm:$0xf]
    %v2856 = vld [vmem:[#allocation3 + $0x378] sm:$0xff]
    %v2857 = vld [vmem:[#allocation3 + $0x380] sm:$0xf]
    %v2858 = vld [vmem:[#allocation3 + $0x384] sm:$0xff]
    %v2859 = vld [vmem:[#allocation3 + $0x38c] sm:$0xf]
    %v2860 = vld [vmem:[#allocation3 + $0x390] sm:$0xff]
    %v2861 = vld [vmem:[#allocation3 + $0x398] sm:$0xf]
    %v2862 = vld [vmem:[#allocation3 + $0x39c] sm:$0xff]
    %v2863 = vld [vmem:[#allocation3 + $0x3a4] sm:$0xf]
    %v2864 = vld [vmem:[#allocation3 + $0x3a8] sm:$0xff]
    %v2865 = vld [vmem:[#allocation3 + $0x3b0] sm:$0xf]
    %v2866 = vld [vmem:[#allocation3 + $0x3b4] sm:$0xff]
    %v2867 = vld [vmem:[#allocation3 + $0x3bc] sm:$0xf]
    %v2868 = vld [vmem:[#allocation3 + $0x3c0] sm:$0xff]
    %v2869 = vld [vmem:[#allocation3 + $0x3c8] sm:$0xf]
    %v2870 = vld [vmem:[#allocation3 + $0x3cc] sm:$0xff]
    %v2871 = vld [vmem:[#allocation3 + $0x3d4] sm:$0xf]
    %v2872 = vld [vmem:[#allocation3 + $0x3d8] sm:$0xff]
    %v2873 = vld [vmem:[#allocation3 + $0x3e0] sm:$0xf]
    %v2874 = vld [vmem:[#allocation3 + $0x3e4] sm:$0xff]
    %v2875 = vld [vmem:[#allocation3 + $0x3ec] sm:$0xf]
    %v2876 = vld [vmem:[#allocation3 + $0x3f0] sm:$0xff]
    %v2877 = vld [vmem:[#allocation3 + $0x3f8] sm:$0xf]
    %v2878 = vld [vmem:[#allocation3 + $0x3fc] sm:$0xff]
    %v2879 = vld [vmem:[#allocation3 + $0x404] sm:$0xf]
    %v2880 = vld [vmem:[#allocation3 + $0x408] sm:$0xff]
    %v2881 = vld [vmem:[#allocation3 + $0x410] sm:$0xf]
    %v2882 = vld [vmem:[#allocation3 + $0x414] sm:$0xff]
    %v2883 = vld [vmem:[#allocation3 + $0x41c] sm:$0xf]
    %v2884 = vld [vmem:[#allocation3 + $0x420] sm:$0xff]
    %v2885 = vld [vmem:[#allocation3 + $0x428] sm:$0xf]
    %v2886 = vld [vmem:[#allocation3 + $0x42c] sm:$0xff]
    %v2887 = vld [vmem:[#allocation3 + $0x434] sm:$0xf]
    %v2888 = vld [vmem:[#allocation3 + $0x438] sm:$0xff]
    %v2889 = vld [vmem:[#allocation3 + $0x440] sm:$0xf]
    %v2890 = vld [vmem:[#allocation3 + $0x444] sm:$0xff]
    %v2891 = vld [vmem:[#allocation3 + $0x44c] sm:$0xf]
    %v2892 = vld [vmem:[#allocation3 + $0x450] sm:$0xff]
    %v2893 = vld [vmem:[#allocation3 + $0x458] sm:$0xf]
    %v2894 = vld [vmem:[#allocation3 + $0x45c] sm:$0xff]
    %v2895 = vld [vmem:[#allocation3 + $0x464] sm:$0xf]
    %v2896 = vld [vmem:[#allocation3 + $0x468] sm:$0xff]
    %v2897 = vld [vmem:[#allocation3 + $0x470] sm:$0xf]
    %v2898 = vld [vmem:[#allocation3 + $0x474] sm:$0xff]
    %v2899 = vld [vmem:[#allocation3 + $0x47c] sm:$0xf]
    %v2900 = vld [vmem:[#allocation3 + $0x480] sm:$0xff]
    %v2901 = vld [vmem:[#allocation3 + $0x488] sm:$0xf]
    %v2902 = vld [vmem:[#allocation3 + $0x48c] sm:$0xff]
    %v2903 = vld [vmem:[#allocation3 + $0x494] sm:$0xf]
    %v2904 = vld [vmem:[#allocation3 + $0x498] sm:$0xff]
    %v2905 = vld [vmem:[#allocation3 + $0x4a0] sm:$0xf]
    %v2906 = vld [vmem:[#allocation3 + $0x4a4] sm:$0xff]
    %v2907 = vld [vmem:[#allocation3 + $0x4ac] sm:$0xf]
    %v2908 = vld [vmem:[#allocation3 + $0x4b0] sm:$0xff]
    %v2909 = vld [vmem:[#allocation3 + $0x4b8] sm:$0xf]
    %v2910 = vld [vmem:[#allocation3 + $0x4bc] sm:$0xff]
    %v2911 = vld [vmem:[#allocation3 + $0x4c4] sm:$0xf]
    %v2912 = vld [vmem:[#allocation3 + $0x4c8] sm:$0xff]
    %v2913 = vld [vmem:[#allocation3 + $0x4d0] sm:$0xf]
    %v2914 = vld [vmem:[#allocation3 + $0x4d4] sm:$0xff]
    %v2915 = vld [vmem:[#allocation3 + $0x4dc] sm:$0xf]
    %v2916 = vld [vmem:[#allocation3 + $0x4e0] sm:$0xff]
    %v2917 = vld [vmem:[#allocation3 + $0x4e8] sm:$0xf]
    %v2918 = vld [vmem:[#allocation3 + $0x4ec] sm:$0xff]
    %v2919 = vld [vmem:[#allocation3 + $0x4f4] sm:$0xf]
    %v2920 = vld [vmem:[#allocation3 + $0x4f8] sm:$0xff]
    %v2921 = vld [vmem:[#allocation3 + $0x500] sm:$0xf]
    %v2922 = vld [vmem:[#allocation3 + $0x504] sm:$0xff]
    %v2923 = vld [vmem:[#allocation3 + $0x50c] sm:$0xf]
    %v2924 = vld [vmem:[#allocation3 + $0x510] sm:$0xff]
    %v2925 = vld [vmem:[#allocation3 + $0x518] sm:$0xf]
    %v2926 = vld [vmem:[#allocation3 + $0x51c] sm:$0xff]
    %v2927 = vld [vmem:[#allocation3 + $0x524] sm:$0xf]
    %v2928 = vld [vmem:[#allocation3 + $0x528] sm:$0xff]
    %v2929 = vld [vmem:[#allocation3 + $0x530] sm:$0xf]
    %v2930 = vld [vmem:[#allocation3 + $0x534] sm:$0xff]
    %v2931 = vld [vmem:[#allocation3 + $0x53c] sm:$0xf]
    %v2932 = vld [vmem:[#allocation3 + $0x540] sm:$0xff]
    %v2933 = vld [vmem:[#allocation3 + $0x548] sm:$0xf]
    %v2934 = vld [vmem:[#allocation3 + $0x54c] sm:$0xff]
    %v2935 = vld [vmem:[#allocation3 + $0x554] sm:$0xf]
    %v2936 = vld [vmem:[#allocation3 + $0x558] sm:$0xff]
    %v2937 = vld [vmem:[#allocation3 + $0x560] sm:$0xf]
    %v2938 = vld [vmem:[#allocation3 + $0x564] sm:$0xff]
    %v2939 = vld [vmem:[#allocation3 + $0x56c] sm:$0xf]
    %v2940 = vld [vmem:[#allocation3 + $0x570] sm:$0xff]
    %v2941 = vld [vmem:[#allocation3 + $0x578] sm:$0xf]
    %v2942 = vld [vmem:[#allocation3 + $0x57c] sm:$0xff]
    %v2943 = vld [vmem:[#allocation3 + $0x584] sm:$0xf]
    %v2944 = vld [vmem:[#allocation3 + $0x588] sm:$0xff]
    %v2945 = vld [vmem:[#allocation3 + $0x590] sm:$0xf]
    %v2946 = vld [vmem:[#allocation3 + $0x594] sm:$0xff]
    %v2947 = vld [vmem:[#allocation3 + $0x59c] sm:$0xf]
    %v2948 = vld [vmem:[#allocation3 + $0x5a0] sm:$0xff]
    %v2949 = vld [vmem:[#allocation3 + $0x5a8] sm:$0xf]
    %v2950 = vld [vmem:[#allocation3 + $0x5ac] sm:$0xff]
    %v2951 = vld [vmem:[#allocation3 + $0x5b4] sm:$0xf]
    %v2952 = vld [vmem:[#allocation3 + $0x5b8] sm:$0xff]
    %v2953 = vld [vmem:[#allocation3 + $0x5c0] sm:$0xf]
    %v2954 = vld [vmem:[#allocation3 + $0x5c4] sm:$0xff]
    %v2955 = vld [vmem:[#allocation3 + $0x5cc] sm:$0xf]
    %v2956 = vld [vmem:[#allocation3 + $0x5d0] sm:$0xff]
    %v2957 = vld [vmem:[#allocation3 + $0x5d8] sm:$0xf]
    %v2958 = vld [vmem:[#allocation3 + $0x5dc] sm:$0xff]
    %v2959 = vld [vmem:[#allocation3 + $0x5e4] sm:$0xf]
    %v2960 = vld [vmem:[#allocation3 + $0x5e8] sm:$0xff]
    %v2961 = vld [vmem:[#allocation3 + $0x5f0] sm:$0xf]
    %v2962 = vld [vmem:[#allocation3 + $0x5f4] sm:$0xff]
    %v2963 = vld [vmem:[#allocation3 + $0x5fc] sm:$0xf]
    %v2964 = vld [vmem:[#allocation3 + $0x600] sm:$0xff]
    %v2965 = vld [vmem:[#allocation3 + $0x608] sm:$0xf]
    %v2966 = vld [vmem:[#allocation3 + $0x60c] sm:$0xff]
    %v2967 = vld [vmem:[#allocation3 + $0x614] sm:$0xf]
    %v3003 = vunpack.c.l.b16 %v1978
    %v3004 = vunpack.c.h.b16 %v1978
    %v3005 = vunpack.c.l.b16 %v1979
    %v3006 = vunpack.c.h.b16 %v1979
    %v3007 = vunpack.c.l.b16 %v1980
    %v3008 = vunpack.c.h.b16 %v1980
    %v3009 = vunpack.c.l.b16 %v1981
    %v3010 = vunpack.c.h.b16 %v1981
    %v3011 = vunpack.c.l.b16 %v1982
    %v3012 = vunpack.c.l.b16 %v1987
    %v3013 = vunpack.c.h.b16 %v1987
    %v3014 = vunpack.c.l.b16 %v1988
    %v3015 = vunpack.c.h.b16 %v1988
    %v3016 = vunpack.c.l.b16 %v1989
    %v3017 = vunpack.c.h.b16 %v1989
    %v3018 = vunpack.c.l.b16 %v1990
    %v3019 = vunpack.c.h.b16 %v1990
    %v3020 = vunpack.c.l.b16 %v1991
    %v3021 = vunpack.c.l.b16 %v1996
    %v3022 = vunpack.c.h.b16 %v1996
    %v3023 = vunpack.c.l.b16 %v1997
    %v3024 = vunpack.c.h.b16 %v1997
    %v3025 = vunpack.c.l.b16 %v1998
    %v3026 = vunpack.c.h.b16 %v1998
    %v3027 = vunpack.c.l.b16 %v1999
    %v3028 = vunpack.c.h.b16 %v1999
    %v3029 = vunpack.c.l.b16 %v2000
    %v3030 = vunpack.c.l.b16 %v2005
    %v3031 = vunpack.c.h.b16 %v2005
    %v3032 = vunpack.c.l.b16 %v2006
    %v3033 = vunpack.c.h.b16 %v2006
    %v3034 = vunpack.c.l.b16 %v2007
    %v3035 = vunpack.c.h.b16 %v2007
    %v3036 = vunpack.c.l.b16 %v2008
    %v3037 = vunpack.c.h.b16 %v2008
    %v3038 = vunpack.c.l.b16 %v2009
    %v3039 = vunpack.c.l.b16 %v2014
    %v3040 = vunpack.c.h.b16 %v2014
    %v3041 = vunpack.c.l.b16 %v2015
    %v3042 = vunpack.c.h.b16 %v2015
    %v3043 = vunpack.c.l.b16 %v2016
    %v3044 = vunpack.c.h.b16 %v2016
    %v3045 = vunpack.c.l.b16 %v2017
    %v3046 = vunpack.c.h.b16 %v2017
    %v3047 = vunpack.c.l.b16 %v2018
    %v3048 = vunpack.c.l.b16 %v2023
    %v3049 = vunpack.c.h.b16 %v2023
    %v3050 = vunpack.c.l.b16 %v2024
    %v3051 = vunpack.c.h.b16 %v2024
    %v3052 = vunpack.c.l.b16 %v2025
    %v3053 = vunpack.c.h.b16 %v2025
    %v3054 = vunpack.c.l.b16 %v2026
    %v3055 = vunpack.c.h.b16 %v2026
    %v3056 = vunpack.c.l.b16 %v2027
    %v3057 = vunpack.c.l.b16 %v2032
    %v3058 = vunpack.c.h.b16 %v2032
    %v3059 = vunpack.c.l.b16 %v2033
    %v3060 = vunpack.c.h.b16 %v2033
    %v3061 = vunpack.c.l.b16 %v2034
    %v3062 = vunpack.c.h.b16 %v2034
    %v3063 = vunpack.c.l.b16 %v2035
    %v3064 = vunpack.c.h.b16 %v2035
    %v3065 = vunpack.c.l.b16 %v2036
    %v3066 = vpack.c.b16 %v3012, %v3003
    %v3067 = vpack.c.b16 %v3013, %v3004
    %v3068 = vpack.c.b16 %v3014, %v3005
    %v3069 = vpack.c.b16 %v3015, %v3006
    %v3070 = vpack.c.b16 %v3016, %v3007
    %v3071 = vpack.c.b16 %v3017, %v3008
    %v3072 = vpack.c.b16 %v3018, %v3009
    %v3073 = vpack.c.b16 %v3019, %v3010
    %v3074 = vpack.c.b16 %v3020, %v3011
    %v3075 = vpack.c.b16 %v3030, %v3021
    %v3076 = vpack.c.b16 %v3031, %v3022
    %v3077 = vpack.c.b16 %v3032, %v3023
    %v3078 = vpack.c.b16 %v3033, %v3024
    %v3079 = vpack.c.b16 %v3034, %v3025
    %v3080 = vpack.c.b16 %v3035, %v3026
    %v3081 = vpack.c.b16 %v3036, %v3027
    %v3082 = vpack.c.b16 %v3037, %v3028
    %v3083 = vpack.c.b16 %v3038, %v3029
    %v3084 = vpack.c.b16 %v3048, %v3039
    %v3085 = vpack.c.b16 %v3049, %v3040
    %v3086 = vpack.c.b16 %v3050, %v3041
    %v3087 = vpack.c.b16 %v3051, %v3042
    %v3088 = vpack.c.b16 %v3052, %v3043
    %v3089 = vpack.c.b16 %v3053, %v3044
    %v3090 = vpack.c.b16 %v3054, %v3045
    %v3091 = vpack.c.b16 %v3055, %v3046
    %v3092 = vpack.c.b16 %v3056, %v3047
    %v3093 = vpack.c.b16 %v3057, %v3057
    %v3094 = vpack.c.b16 %v3058, %v3058
    %v3095 = vpack.c.b16 %v3059, %v3059
    %v3096 = vpack.c.b16 %v3060, %v3060
    %v3097 = vpack.c.b16 %v3061, %v3061
    %v3098 = vpack.c.b16 %v3062, %v3062
    %v3099 = vpack.c.b16 %v3063, %v3063
    %v3100 = vpack.c.b16 %v3064, %v3064
    %v3101 = vpack.c.b16 %v3065, %v3065
    %v3394 = vunpack.c.l.b16 %v2708
    %v3395 = vunpack.c.h.b16 %v2708
    %v3396 = vunpack.c.l.b16 %v2709
    %v3397 = vunpack.c.l.b16 %v2710
    %v3398 = vunpack.c.h.b16 %v2710
    %v3399 = vunpack.c.l.b16 %v2711
    %v3400 = vunpack.c.l.b16 %v2712
    %v3401 = vunpack.c.h.b16 %v2712
    %v3402 = vunpack.c.l.b16 %v2713
    %v3403 = vunpack.c.l.b16 %v2714
    %v3404 = vunpack.c.h.b16 %v2714
    %v3405 = vunpack.c.l.b16 %v2715
    %v3406 = vunpack.c.l.b16 %v2716
    %v3407 = vunpack.c.h.b16 %v2716
    %v3408 = vunpack.c.l.b16 %v2717
    %v3409 = vunpack.c.l.b16 %v2718
    %v3410 = vunpack.c.h.b16 %v2718
    %v3411 = vunpack.c.l.b16 %v2719
    %v3412 = vunpack.c.l.b16 %v2720
    %v3413 = vunpack.c.h.b16 %v2720
    %v3414 = vunpack.c.l.b16 %v2721
    %v3415 = vunpack.c.l.b16 %v2722
    %v3416 = vunpack.c.h.b16 %v2722
    %v3417 = vunpack.c.l.b16 %v2723
    %v3418 = vunpack.c.l.b16 %v2724
    %v3419 = vunpack.c.h.b16 %v2724
    %v3420 = vunpack.c.l.b16 %v2725
    %v3421 = vunpack.c.l.b16 %v2726
    %v3422 = vunpack.c.h.b16 %v2726
    %v3423 = vunpack.c.l.b16 %v2727
    %v3424 = vunpack.c.l.b16 %v2728
    %v3425 = vunpack.c.h.b16 %v2728
    %v3426 = vunpack.c.l.b16 %v2729
    %v3427 = vunpack.c.l.b16 %v2730
    %v3428 = vunpack.c.h.b16 %v2730
    %v3429 = vunpack.c.l.b16 %v2731
    %v3430 = vunpack.c.l.b16 %v2732
    %v3431 = vunpack.c.h.b16 %v2732
    %v3432 = vunpack.c.l.b16 %v2733
    %v3433 = vunpack.c.l.b16 %v2734
    %v3434 = vunpack.c.h.b16 %v2734
    %v3435 = vunpack.c.l.b16 %v2735
    %v3436 = vunpack.c.l.b16 %v2736
    %v3437 = vunpack.c.h.b16 %v2736
    %v3438 = vunpack.c.l.b16 %v2737
    %v3439 = vunpack.c.l.b16 %v2738
    %v3440 = vunpack.c.h.b16 %v2738
    %v3441 = vunpack.c.l.b16 %v2739
    %v3442 = vunpack.c.l.b16 %v2740
    %v3443 = vunpack.c.h.b16 %v2740
    %v3444 = vunpack.c.l.b16 %v2741
    %v3445 = vunpack.c.l.b16 %v2742
    %v3446 = vunpack.c.h.b16 %v2742
    %v3447 = vunpack.c.l.b16 %v2743
    %v3448 = vunpack.c.l.b16 %v2744
    %v3449 = vunpack.c.h.b16 %v2744
    %v3450 = vunpack.c.l.b16 %v2745
    %v3451 = vunpack.c.l.b16 %v2746
    %v3452 = vunpack.c.h.b16 %v2746
    %v3453 = vunpack.c.l.b16 %v2747
    %v3454 = vunpack.c.l.b16 %v2748
    %v3455 = vunpack.c.h.b16 %v2748
    %v3456 = vunpack.c.l.b16 %v2749
    %v3457 = vunpack.c.l.b16 %v2750
    %v3458 = vunpack.c.h.b16 %v2750
    %v3459 = vunpack.c.l.b16 %v2751
    %v3460 = vunpack.c.l.b16 %v2752
    %v3461 = vunpack.c.h.b16 %v2752
    %v3462 = vunpack.c.l.b16 %v2753
    %v3463 = vunpack.c.l.b16 %v2754
    %v3464 = vunpack.c.h.b16 %v2754
    %v3465 = vunpack.c.l.b16 %v2755
    %v3466 = vunpack.c.l.b16 %v2756
    %v3467 = vunpack.c.h.b16 %v2756
    %v3468 = vunpack.c.l.b16 %v2757
    %v3469 = vunpack.c.l.b16 %v2758
    %v3470 = vunpack.c.h.b16 %v2758
    %v3471 = vunpack.c.l.b16 %v2759
    %v3472 = vunpack.c.l.b16 %v2760
    %v3473 = vunpack.c.h.b16 %v2760
    %v3474 = vunpack.c.l.b16 %v2761
    %v3475 = vunpack.c.l.b16 %v2762
    %v3476 = vunpack.c.h.b16 %v2762
    %v3477 = vunpack.c.l.b16 %v2763
    %v3478 = vunpack.c.l.b16 %v2764
    %v3479 = vunpack.c.h.b16 %v2764
    %v3480 = vunpack.c.l.b16 %v2765
    %v3481 = vunpack.c.l.b16 %v2766
    %v3482 = vunpack.c.h.b16 %v2766
    %v3483 = vunpack.c.l.b16 %v2767
    %v3484 = vunpack.c.l.b16 %v2768
    %v3485 = vunpack.c.h.b16 %v2768
    %v3486 = vunpack.c.l.b16 %v2769
    %v3487 = vunpack.c.l.b16 %v2770
    %v3488 = vunpack.c.h.b16 %v2770
    %v3489 = vunpack.c.l.b16 %v2771
    %v3490 = vunpack.c.l.b16 %v2772
    %v3491 = vunpack.c.h.b16 %v2772
    %v3492 = vunpack.c.l.b16 %v2773
    %v3493 = vunpack.c.l.b16 %v2774
    %v3494 = vunpack.c.h.b16 %v2774
    %v3495 = vunpack.c.l.b16 %v2775
    %v3496 = vunpack.c.l.b16 %v2776
    %v3497 = vunpack.c.h.b16 %v2776
    %v3498 = vunpack.c.l.b16 %v2777
    %v3499 = vunpack.c.l.b16 %v2778
    %v3500 = vunpack.c.h.b16 %v2778
    %v3501 = vunpack.c.l.b16 %v2779
    %v3502 = vunpack.c.l.b16 %v2780
    %v3503 = vunpack.c.h.b16 %v2780
    %v3504 = vunpack.c.l.b16 %v2781
    %v3505 = vunpack.c.l.b16 %v2782
    %v3506 = vunpack.c.h.b16 %v2782
    %v3507 = vunpack.c.l.b16 %v2783
    %v3508 = vunpack.c.l.b16 %v2784
    %v3509 = vunpack.c.h.b16 %v2784
    %v3510 = vunpack.c.l.b16 %v2785
    %v3511 = vunpack.c.l.b16 %v2786
    %v3512 = vunpack.c.h.b16 %v2786
    %v3513 = vunpack.c.l.b16 %v2787
    %v3514 = vunpack.c.l.b16 %v2788
    %v3515 = vunpack.c.h.b16 %v2788
    %v3516 = vunpack.c.l.b16 %v2789
    %v3517 = vunpack.c.l.b16 %v2790
    %v3518 = vunpack.c.h.b16 %v2790
    %v3519 = vunpack.c.l.b16 %v2791
    %v3520 = vunpack.c.l.b16 %v2792
    %v3521 = vunpack.c.h.b16 %v2792
    %v3522 = vunpack.c.l.b16 %v2793
    %v3523 = vunpack.c.l.b16 %v2794
    %v3524 = vunpack.c.h.b16 %v2794
    %v3525 = vunpack.c.l.b16 %v2795
    %v3526 = vunpack.c.l.b16 %v2796
    %v3527 = vunpack.c.h.b16 %v2796
    %v3528 = vunpack.c.l.b16 %v2797
    %v3529 = vunpack.c.l.b16 %v2798
    %v3530 = vunpack.c.h.b16 %v2798
    %v3531 = vunpack.c.l.b16 %v2799
    %v3532 = vunpack.c.l.b16 %v2800
    %v3533 = vunpack.c.h.b16 %v2800
    %v3534 = vunpack.c.l.b16 %v2801
    %v3535 = vunpack.c.l.b16 %v2802
    %v3536 = vunpack.c.h.b16 %v2802
    %v3537 = vunpack.c.l.b16 %v2803
    %v3538 = vunpack.c.l.b16 %v2804
    %v3539 = vunpack.c.h.b16 %v2804
    %v3540 = vunpack.c.l.b16 %v2805
    %v3541 = vunpack.c.l.b16 %v2806
    %v3542 = vunpack.c.h.b16 %v2806
    %v3543 = vunpack.c.l.b16 %v2807
    %v3544 = vunpack.c.l.b16 %v2808
    %v3545 = vunpack.c.h.b16 %v2808
    %v3546 = vunpack.c.l.b16 %v2809
    %v3547 = vunpack.c.l.b16 %v2810
    %v3548 = vunpack.c.h.b16 %v2810
    %v3549 = vunpack.c.l.b16 %v2811
    %v3550 = vunpack.c.l.b16 %v2812
    %v3551 = vunpack.c.h.b16 %v2812
    %v3552 = vunpack.c.l.b16 %v2813
    %v3553 = vunpack.c.l.b16 %v2814
    %v3554 = vunpack.c.h.b16 %v2814
    %v3555 = vunpack.c.l.b16 %v2815
    %v3556 = vunpack.c.l.b16 %v2816
    %v3557 = vunpack.c.h.b16 %v2816
    %v3558 = vunpack.c.l.b16 %v2817
    %v3559 = vunpack.c.l.b16 %v2818
    %v3560 = vunpack.c.h.b16 %v2818
    %v3561 = vunpack.c.l.b16 %v2819
    %v3562 = vunpack.c.l.b16 %v2820
    %v3563 = vunpack.c.h.b16 %v2820
    %v3564 = vunpack.c.l.b16 %v2821
    %v3565 = vunpack.c.l.b16 %v2822
    %v3566 = vunpack.c.h.b16 %v2822
    %v3567 = vunpack.c.l.b16 %v2823
    %v3568 = vunpack.c.l.b16 %v2824
    %v3569 = vunpack.c.h.b16 %v2824
    %v3570 = vunpack.c.l.b16 %v2825
    %v3571 = vunpack.c.l.b16 %v2826
    %v3572 = vunpack.c.h.b16 %v2826
    %v3573 = vunpack.c.l.b16 %v2827
    %v3574 = vunpack.c.l.b16 %v2828
    %v3575 = vunpack.c.h.b16 %v2828
    %v3576 = vunpack.c.l.b16 %v2829
    %v3577 = vunpack.c.l.b16 %v2830
    %v3578 = vunpack.c.h.b16 %v2830
    %v3579 = vunpack.c.l.b16 %v2831
    %v3580 = vunpack.c.l.b16 %v2832
    %v3581 = vunpack.c.h.b16 %v2832
    %v3582 = vunpack.c.l.b16 %v2833
    %v3583 = vunpack.c.l.b16 %v2834
    %v3584 = vunpack.c.h.b16 %v2834
    %v3585 = vunpack.c.l.b16 %v2835
    %v3586 = vunpack.c.l.b16 %v2836
    %v3587 = vunpack.c.h.b16 %v2836
    %v3588 = vunpack.c.l.b16 %v2837
    %v3589 = vunpack.c.l.b16 %v2838
    %v3590 = vunpack.c.h.b16 %v2838
    %v3591 = vunpack.c.l.b16 %v2839
    %v3592 = vunpack.c.l.b16 %v2840
    %v3593 = vunpack.c.h.b16 %v2840
    %v3594 = vunpack.c.l.b16 %v2841
    %v3595 = vunpack.c.l.b16 %v2842
    %v3596 = vunpack.c.h.b16 %v2842
    %v3597 = vunpack.c.l.b16 %v2843
    %v3598 = vunpack.c.l.b16 %v2844
    %v3599 = vunpack.c.h.b16 %v2844
    %v3600 = vunpack.c.l.b16 %v2845
    %v3601 = vunpack.c.l.b16 %v2846
    %v3602 = vunpack.c.h.b16 %v2846
    %v3603 = vunpack.c.l.b16 %v2847
    %v3604 = vunpack.c.l.b16 %v2848
    %v3605 = vunpack.c.h.b16 %v2848
    %v3606 = vunpack.c.l.b16 %v2849
    %v3607 = vunpack.c.l.b16 %v2850
    %v3608 = vunpack.c.h.b16 %v2850
    %v3609 = vunpack.c.l.b16 %v2851
    %v3610 = vunpack.c.l.b16 %v2852
    %v3611 = vunpack.c.h.b16 %v2852
    %v3612 = vunpack.c.l.b16 %v2853
    %v3613 = vunpack.c.l.b16 %v2854
    %v3614 = vunpack.c.h.b16 %v2854
    %v3615 = vunpack.c.l.b16 %v2855
    %v3616 = vunpack.c.l.b16 %v2856
    %v3617 = vunpack.c.h.b16 %v2856
    %v3618 = vunpack.c.l.b16 %v2857
    %v3619 = vunpack.c.l.b16 %v2858
    %v3620 = vunpack.c.h.b16 %v2858
    %v3621 = vunpack.c.l.b16 %v2859
    %v3622 = vunpack.c.l.b16 %v2860
    %v3623 = vunpack.c.h.b16 %v2860
    %v3624 = vunpack.c.l.b16 %v2861
    %v3625 = vunpack.c.l.b16 %v2862
    %v3626 = vunpack.c.h.b16 %v2862
    %v3627 = vunpack.c.l.b16 %v2863
    %v3628 = vunpack.c.l.b16 %v2864
    %v3629 = vunpack.c.h.b16 %v2864
    %v3630 = vunpack.c.l.b16 %v2865
    %v3631 = vunpack.c.l.b16 %v2866
    %v3632 = vunpack.c.h.b16 %v2866
    %v3633 = vunpack.c.l.b16 %v2867
    %v3634 = vunpack.c.l.b16 %v2868
    %v3635 = vunpack.c.h.b16 %v2868
    %v3636 = vunpack.c.l.b16 %v2869
    %v3637 = vunpack.c.l.b16 %v2870
    %v3638 = vunpack.c.h.b16 %v2870
    %v3639 = vunpack.c.l.b16 %v2871
    %v3640 = vunpack.c.l.b16 %v2872
    %v3641 = vunpack.c.h.b16 %v2872
    %v3642 = vunpack.c.l.b16 %v2873
    %v3643 = vunpack.c.l.b16 %v2874
    %v3644 = vunpack.c.h.b16 %v2874
    %v3645 = vunpack.c.l.b16 %v2875
    %v3646 = vunpack.c.l.b16 %v2876
    %v3647 = vunpack.c.h.b16 %v2876
    %v3648 = vunpack.c.l.b16 %v2877
    %v3649 = vunpack.c.l.b16 %v2878
    %v3650 = vunpack.c.h.b16 %v2878
    %v3651 = vunpack.c.l.b16 %v2879
    %v3652 = vunpack.c.l.b16 %v2880
    %v3653 = vunpack.c.h.b16 %v2880
    %v3654 = vunpack.c.l.b16 %v2881
    %v3655 = vunpack.c.l.b16 %v2882
    %v3656 = vunpack.c.h.b16 %v2882
    %v3657 = vunpack.c.l.b16 %v2883
    %v3658 = vunpack.c.l.b16 %v2884
    %v3659 = vunpack.c.h.b16 %v2884
    %v3660 = vunpack.c.l.b16 %v2885
    %v3661 = vunpack.c.l.b16 %v2886
    %v3662 = vunpack.c.h.b16 %v2886
    %v3663 = vunpack.c.l.b16 %v2887
    %v3664 = vunpack.c.l.b16 %v2888
    %v3665 = vunpack.c.h.b16 %v2888
    %v3666 = vunpack.c.l.b16 %v2889
    %v3667 = vunpack.c.l.b16 %v2890
    %v3668 = vunpack.c.h.b16 %v2890
    %v3669 = vunpack.c.l.b16 %v2891
    %v3670 = vunpack.c.l.b16 %v2892
    %v3671 = vunpack.c.h.b16 %v2892
    %v3672 = vunpack.c.l.b16 %v2893
    %v3673 = vunpack.c.l.b16 %v2894
    %v3674 = vunpack.c.h.b16 %v2894
    %v3675 = vunpack.c.l.b16 %v2895
    %v3676 = vunpack.c.l.b16 %v2896
    %v3677 = vunpack.c.h.b16 %v2896
    %v3678 = vunpack.c.l.b16 %v2897
    %v3679 = vunpack.c.l.b16 %v2898
    %v3680 = vunpack.c.h.b16 %v2898
    %v3681 = vunpack.c.l.b16 %v2899
    %v3682 = vunpack.c.l.b16 %v2900
    %v3683 = vunpack.c.h.b16 %v2900
    %v3684 = vunpack.c.l.b16 %v2901
    %v3685 = vunpack.c.l.b16 %v2902
    %v3686 = vunpack.c.h.b16 %v2902
    %v3687 = vunpack.c.l.b16 %v2903
    %v3688 = vunpack.c.l.b16 %v2904
    %v3689 = vunpack.c.h.b16 %v2904
    %v3690 = vunpack.c.l.b16 %v2905
    %v3691 = vunpack.c.l.b16 %v2906
    %v3692 = vunpack.c.h.b16 %v2906
    %v3693 = vunpack.c.l.b16 %v2907
    %v3694 = vunpack.c.l.b16 %v2908
    %v3695 = vunpack.c.h.b16 %v2908
    %v3696 = vunpack.c.l.b16 %v2909
    %v3697 = vunpack.c.l.b16 %v2910
    %v3698 = vunpack.c.h.b16 %v2910
    %v3699 = vunpack.c.l.b16 %v2911
    %v3700 = vunpack.c.l.b16 %v2912
    %v3701 = vunpack.c.h.b16 %v2912
    %v3702 = vunpack.c.l.b16 %v2913
    %v3703 = vunpack.c.l.b16 %v2914
    %v3704 = vunpack.c.h.b16 %v2914
    %v3705 = vunpack.c.l.b16 %v2915
    %v3706 = vunpack.c.l.b16 %v2916
    %v3707 = vunpack.c.h.b16 %v2916
    %v3708 = vunpack.c.l.b16 %v2917
    %v3709 = vunpack.c.l.b16 %v2918
    %v3710 = vunpack.c.h.b16 %v2918
    %v3711 = vunpack.c.l.b16 %v2919
    %v3712 = vunpack.c.l.b16 %v2920
    %v3713 = vunpack.c.h.b16 %v2920
    %v3714 = vunpack.c.l.b16 %v2921
    %v3715 = vunpack.c.l.b16 %v2922
    %v3716 = vunpack.c.h.b16 %v2922
    %v3717 = vunpack.c.l.b16 %v2923
    %v3718 = vunpack.c.l.b16 %v2924
    %v3719 = vunpack.c.h.b16 %v2924
    %v3720 = vunpack.c.l.b16 %v2925
    %v3721 = vunpack.c.l.b16 %v2926
    %v3722 = vunpack.c.h.b16 %v2926
    %v3723 = vunpack.c.l.b16 %v2927
    %v3724 = vunpack.c.l.b16 %v2928
    %v3725 = vunpack.c.h.b16 %v2928
    %v3726 = vunpack.c.l.b16 %v2929
    %v3727 = vunpack.c.l.b16 %v2930
    %v3728 = vunpack.c.h.b16 %v2930
    %v3729 = vunpack.c.l.b16 %v2931
    %v3730 = vunpack.c.l.b16 %v2932
    %v3731 = vunpack.c.h.b16 %v2932
    %v3732 = vunpack.c.l.b16 %v2933
    %v3733 = vunpack.c.l.b16 %v2934
    %v3734 = vunpack.c.h.b16 %v2934
    %v3735 = vunpack.c.l.b16 %v2935
    %v3736 = vunpack.c.l.b16 %v2936
    %v3737 = vunpack.c.h.b16 %v2936
    %v3738 = vunpack.c.l.b16 %v2937
    %v3739 = vunpack.c.l.b16 %v2938
    %v3740 = vunpack.c.h.b16 %v2938
    %v3741 = vunpack.c.l.b16 %v2939
    %v3742 = vunpack.c.l.b16 %v2940
    %v3743 = vunpack.c.h.b16 %v2940
    %v3744 = vunpack.c.l.b16 %v2941
    %v3745 = vunpack.c.l.b16 %v2942
    %v3746 = vunpack.c.h.b16 %v2942
    %v3747 = vunpack.c.l.b16 %v2943
    %v3748 = vunpack.c.l.b16 %v2944
    %v3749 = vunpack.c.h.b16 %v2944
    %v3750 = vunpack.c.l.b16 %v2945
    %v3751 = vunpack.c.l.b16 %v2946
    %v3752 = vunpack.c.h.b16 %v2946
    %v3753 = vunpack.c.l.b16 %v2947
    %v3754 = vunpack.c.l.b16 %v2948
    %v3755 = vunpack.c.h.b16 %v2948
    %v3756 = vunpack.c.l.b16 %v2949
    %v3757 = vunpack.c.l.b16 %v2950
    %v3758 = vunpack.c.h.b16 %v2950
    %v3759 = vunpack.c.l.b16 %v2951
    %v3760 = vunpack.c.l.b16 %v2952
    %v3761 = vunpack.c.h.b16 %v2952
    %v3762 = vunpack.c.l.b16 %v2953
    %v3763 = vunpack.c.l.b16 %v2954
    %v3764 = vunpack.c.h.b16 %v2954
    %v3765 = vunpack.c.l.b16 %v2955
    %v3766 = vunpack.c.l.b16 %v2956
    %v3767 = vunpack.c.h.b16 %v2956
    %v3768 = vunpack.c.l.b16 %v2957
    %v3769 = vunpack.c.l.b16 %v2958
    %v3770 = vunpack.c.h.b16 %v2958
    %v3771 = vunpack.c.l.b16 %v2959
    %v3772 = vunpack.c.l.b16 %v2960
    %v3773 = vunpack.c.h.b16 %v2960
    %v3774 = vunpack.c.l.b16 %v2961
    %v3775 = vunpack.c.l.b16 %v2962
    %v3776 = vunpack.c.h.b16 %v2962
    %v3777 = vunpack.c.l.b16 %v2963
    %v3778 = vunpack.c.l.b16 %v2964
    %v3779 = vunpack.c.h.b16 %v2964
    %v3780 = vunpack.c.l.b16 %v2965
    %v3781 = vunpack.c.l.b16 %v2966
    %v3782 = vunpack.c.h.b16 %v2966
    %v3783 = vunpack.c.l.b16 %v2967
    %v3784 = vpack.c.b16 %v3397, %v3394
    %v3785 = vpack.c.b16 %v3398, %v3395
    %v3786 = vpack.c.b16 %v3399, %v3396
    %v3787 = vpack.c.b16 %v3403, %v3400
    %v3788 = vpack.c.b16 %v3404, %v3401
    %v3789 = vpack.c.b16 %v3405, %v3402
    %v3790 = vpack.c.b16 %v3409, %v3406
    %v3791 = vpack.c.b16 %v3410, %v3407
    %v3792 = vpack.c.b16 %v3411, %v3408
    %v3793 = vpack.c.b16 %v3415, %v3412
    %v3794 = vpack.c.b16 %v3416, %v3413
    %v3795 = vpack.c.b16 %v3417, %v3414
    %v3796 = vpack.c.b16 %v3421, %v3418
    %v3797 = vpack.c.b16 %v3422, %v3419
    %v3798 = vpack.c.b16 %v3423, %v3420
    %v3799 = vpack.c.b16 %v3427, %v3424
    %v3800 = vpack.c.b16 %v3428, %v3425
    %v3801 = vpack.c.b16 %v3429, %v3426
    %v3802 = vpack.c.b16 %v3433, %v3430
    %v3803 = vpack.c.b16 %v3434, %v3431
    %v3804 = vpack.c.b16 %v3435, %v3432
    %v3805 = vpack.c.b16 %v3439, %v3436
    %v3806 = vpack.c.b16 %v3440, %v3437
    %v3807 = vpack.c.b16 %v3441, %v3438
    %v3808 = vpack.c.b16 %v3445, %v3442
    %v3809 = vpack.c.b16 %v3446, %v3443
    %v3810 = vpack.c.b16 %v3447, %v3444
    %v3811 = vpack.c.b16 %v3451, %v3448
    %v3812 = vpack.c.b16 %v3452, %v3449
    %v3813 = vpack.c.b16 %v3453, %v3450
    %v3814 = vpack.c.b16 %v3457, %v3454
    %v3815 = vpack.c.b16 %v3458, %v3455
    %v3816 = vpack.c.b16 %v3459, %v3456
    %v3817 = vpack.c.b16 %v3463, %v3460
    %v3818 = vpack.c.b16 %v3464, %v3461
    %v3819 = vpack.c.b16 %v3465, %v3462
    %v3820 = vpack.c.b16 %v3469, %v3466
    %v3821 = vpack.c.b16 %v3470, %v3467
    %v3822 = vpack.c.b16 %v3471, %v3468
    %v3823 = vpack.c.b16 %v3475, %v3472
    %v3824 = vpack.c.b16 %v3476, %v3473
    %v3825 = vpack.c.b16 %v3477, %v3474
    %v3826 = vpack.c.b16 %v3481, %v3478
    %v3827 = vpack.c.b16 %v3482, %v3479
    %v3828 = vpack.c.b16 %v3483, %v3480
    %v3829 = vpack.c.b16 %v3487, %v3484
    %v3830 = vpack.c.b16 %v3488, %v3485
    %v3831 = vpack.c.b16 %v3489, %v3486
    %v3832 = vpack.c.b16 %v3493, %v3490
    %v3833 = vpack.c.b16 %v3494, %v3491
    %v3834 = vpack.c.b16 %v3495, %v3492
    %v3835 = vpack.c.b16 %v3499, %v3496
    %v3836 = vpack.c.b16 %v3500, %v3497
    %v3837 = vpack.c.b16 %v3501, %v3498
    %v3838 = vpack.c.b16 %v3505, %v3502
    %v3839 = vpack.c.b16 %v3506, %v3503
    %v3840 = vpack.c.b16 %v3507, %v3504
    %v3841 = vpack.c.b16 %v3511, %v3508
    %v3842 = vpack.c.b16 %v3512, %v3509
    %v3843 = vpack.c.b16 %v3513, %v3510
    %v3844 = vpack.c.b16 %v3517, %v3514
    %v3845 = vpack.c.b16 %v3518, %v3515
    %v3846 = vpack.c.b16 %v3519, %v3516
    %v3847 = vpack.c.b16 %v3523, %v3520
    %v3848 = vpack.c.b16 %v3524, %v3521
    %v3849 = vpack.c.b16 %v3525, %v3522
    %v3850 = vpack.c.b16 %v3529, %v3526
    %v3851 = vpack.c.b16 %v3530, %v3527
    %v3852 = vpack.c.b16 %v3531, %v3528
    %v3853 = vpack.c.b16 %v3535, %v3532
    %v3854 = vpack.c.b16 %v3536, %v3533
    %v3855 = vpack.c.b16 %v3537, %v3534
    %v3856 = vpack.c.b16 %v3541, %v3538
    %v3857 = vpack.c.b16 %v3542, %v3539
    %v3858 = vpack.c.b16 %v3543, %v3540
    %v3859 = vpack.c.b16 %v3547, %v3544
    %v3860 = vpack.c.b16 %v3548, %v3545
    %v3861 = vpack.c.b16 %v3549, %v3546
    %v3862 = vpack.c.b16 %v3553, %v3550
    %v3863 = vpack.c.b16 %v3554, %v3551
    %v3864 = vpack.c.b16 %v3555, %v3552
    %v3865 = vpack.c.b16 %v3559, %v3556
    %v3866 = vpack.c.b16 %v3560, %v3557
    %v3867 = vpack.c.b16 %v3561, %v3558
    %v3868 = vpack.c.b16 %v3565, %v3562
    %v3869 = vpack.c.b16 %v3566, %v3563
    %v3870 = vpack.c.b16 %v3567, %v3564
    %v3871 = vpack.c.b16 %v3571, %v3568
    %v3872 = vpack.c.b16 %v3572, %v3569
    %v3873 = vpack.c.b16 %v3573, %v3570
    %v3874 = vpack.c.b16 %v3577, %v3574
    %v3875 = vpack.c.b16 %v3578, %v3575
    %v3876 = vpack.c.b16 %v3579, %v3576
    %v3877 = vpack.c.b16 %v3583, %v3580
    %v3878 = vpack.c.b16 %v3584, %v3581
    %v3879 = vpack.c.b16 %v3585, %v3582
    %v3880 = vpack.c.b16 %v3589, %v3586
    %v3881 = vpack.c.b16 %v3590, %v3587
    %v3882 = vpack.c.b16 %v3591, %v3588
    %v3883 = vpack.c.b16 %v3595, %v3592
    %v3884 = vpack.c.b16 %v3596, %v3593
    %v3885 = vpack.c.b16 %v3597, %v3594
    %v3886 = vpack.c.b16 %v3601, %v3598
    %v3887 = vpack.c.b16 %v3602, %v3599
    %v3888 = vpack.c.b16 %v3603, %v3600
    %v3889 = vpack.c.b16 %v3607, %v3604
    %v3890 = vpack.c.b16 %v3608, %v3605
    %v3891 = vpack.c.b16 %v3609, %v3606
    %v3892 = vpack.c.b16 %v3613, %v3610
    %v3893 = vpack.c.b16 %v3614, %v3611
    %v3894 = vpack.c.b16 %v3615, %v3612
    %v3895 = vpack.c.b16 %v3619, %v3616
    %v3896 = vpack.c.b16 %v3620, %v3617
    %v3897 = vpack.c.b16 %v3621, %v3618
    %v3898 = vpack.c.b16 %v3625, %v3622
    %v3899 = vpack.c.b16 %v3626, %v3623
    %v3900 = vpack.c.b16 %v3627, %v3624
    %v3901 = vpack.c.b16 %v3631, %v3628
    %v3902 = vpack.c.b16 %v3632, %v3629
    %v3903 = vpack.c.b16 %v3633, %v3630
    %v3904 = vpack.c.b16 %v3637, %v3634
    %v3905 = vpack.c.b16 %v3638, %v3635
    %v3906 = vpack.c.b16 %v3639, %v3636
    %v3907 = vpack.c.b16 %v3643, %v3640
    %v3908 = vpack.c.b16 %v3644, %v3641
    %v3909 = vpack.c.b16 %v3645, %v3642
    %v3910 = vpack.c.b16 %v3649, %v3646
    %v3911 = vpack.c.b16 %v3650, %v3647
    %v3912 = vpack.c.b16 %v3651, %v3648
    %v3913 = vpack.c.b16 %v3655, %v3652
    %v3914 = vpack.c.b16 %v3656, %v3653
    %v3915 = vpack.c.b16 %v3657, %v3654
    %v3916 = vpack.c.b16 %v3661, %v3658
    %v3917 = vpack.c.b16 %v3662, %v3659
    %v3918 = vpack.c.b16 %v3663, %v3660
    %v3919 = vpack.c.b16 %v3667, %v3664
    %v3920 = vpack.c.b16 %v3668, %v3665
    %v3921 = vpack.c.b16 %v3669, %v3666
    %v3922 = vpack.c.b16 %v3673, %v3670
    %v3923 = vpack.c.b16 %v3674, %v3671
    %v3924 = vpack.c.b16 %v3675, %v3672
    %v3925 = vpack.c.b16 %v3679, %v3676
    %v3926 = vpack.c.b16 %v3680, %v3677
    %v3927 = vpack.c.b16 %v3681, %v3678
    %v3928 = vpack.c.b16 %v3685, %v3682
    %v3929 = vpack.c.b16 %v3686, %v3683
    %v3930 = vpack.c.b16 %v3687, %v3684
    %v3931 = vpack.c.b16 %v3691, %v3688
    %v3932 = vpack.c.b16 %v3692, %v3689
    %v3933 = vpack.c.b16 %v3693, %v3690
    %v3934 = vpack.c.b16 %v3697, %v3694
    %v3935 = vpack.c.b16 %v3698, %v3695
    %v3936 = vpack.c.b16 %v3699, %v3696
    %v3937 = vpack.c.b16 %v3703, %v3700
    %v3938 = vpack.c.b16 %v3704, %v3701
    %v3939 = vpack.c.b16 %v3705, %v3702
    %v3940 = vpack.c.b16 %v3709, %v3706
    %v3941 = vpack.c.b16 %v3710, %v3707
    %v3942 = vpack.c.b16 %v3711, %v3708
    %v3943 = vpack.c.b16 %v3715, %v3712
    %v3944 = vpack.c.b16 %v3716, %v3713
    %v3945 = vpack.c.b16 %v3717, %v3714
    %v3946 = vpack.c.b16 %v3721, %v3718
    %v3947 = vpack.c.b16 %v3722, %v3719
    %v3948 = vpack.c.b16 %v3723, %v3720
    %v3949 = vpack.c.b16 %v3727, %v3724
    %v3950 = vpack.c.b16 %v3728, %v3725
    %v3951 = vpack.c.b16 %v3729, %v3726
    %v3952 = vpack.c.b16 %v3733, %v3730
    %v3953 = vpack.c.b16 %v3734, %v3731
    %v3954 = vpack.c.b16 %v3735, %v3732
    %v3955 = vpack.c.b16 %v3739, %v3736
    %v3956 = vpack.c.b16 %v3740, %v3737
    %v3957 = vpack.c.b16 %v3741, %v3738
    %v3958 = vpack.c.b16 %v3745, %v3742
    %v3959 = vpack.c.b16 %v3746, %v3743
    %v3960 = vpack.c.b16 %v3747, %v3744
    %v3961 = vpack.c.b16 %v3751, %v3748
    %v3962 = vpack.c.b16 %v3752, %v3749
    %v3963 = vpack.c.b16 %v3753, %v3750
    %v3964 = vpack.c.b16 %v3757, %v3754
    %v3965 = vpack.c.b16 %v3758, %v3755
    %v3966 = vpack.c.b16 %v3759, %v3756
    %v3967 = vpack.c.b16 %v3763, %v3760
    %v3968 = vpack.c.b16 %v3764, %v3761
    %v3969 = vpack.c.b16 %v3765, %v3762
    %v3970 = vpack.c.b16 %v3769, %v3766
    %v3971 = vpack.c.b16 %v3770, %v3767
    %v3972 = vpack.c.b16 %v3771, %v3768
    %v3973 = vpack.c.b16 %v3775, %v3772
    %v3974 = vpack.c.b16 %v3776, %v3773
    %v3975 = vpack.c.b16 %v3777, %v3774
    %v3976 = vpack.c.b16 %v3781, %v3778
    %v3977 = vpack.c.b16 %v3782, %v3779
    %v3978 = vpack.c.b16 %v3783, %v3780
    %vm4174 = vcmask 130048
    %v4176 = vsel %vm4174, %v3074, 0
    %v4179 = vsel %vm4174, %v3083, 0
    %v4182 = vsel %vm4174, %v3092, 0
    %v4185 = vsel %vm4174, %v3101, 0
    %4187 = vmatpush.bf16.msra.mxu0 %v3805
    %4188 = vmatpush.bf16.msra.mxu0 %v3802
    %4189 = vmatpush.bf16.msra.mxu0 %v3799
    %4190 = vmatpush.bf16.msra.mxu0 %v3796
    %4191 = vmatpush.bf16.msra.mxu0 %v3793
    %4192 = vmatpush.bf16.msra.mxu0 %v3790
    %4193 = vmatpush.bf16.msra.mxu0 %v3787
    %4194 = vmatpush.bf16.msra.mxu0 %v3784
    %4195 = vmatmul.bf16.gmra.mxu0 %v3066
    %v4196 = vpop.f32.mrf.mxu0
    %v4197 = vadd.f32 0.0, %v4196
    %v4198 = vpop.f32.mrf.mxu0
    %v4199 = vadd.f32 0.0, %v4198
    %4200 = vmatmul.bf16.gmra.mxu0 %v3075
    %v4201 = vpop.f32.mrf.mxu0
    %v4202 = vadd.f32 0.0, %v4201
    %v4203 = vpop.f32.mrf.mxu0
    %v4204 = vadd.f32 0.0, %v4203
    %4205 = vmatmul.bf16.gmra.mxu0 %v3084
    %v4206 = vpop.f32.mrf.mxu0
    %v4207 = vadd.f32 0.0, %v4206
    %v4208 = vpop.f32.mrf.mxu0
    %v4209 = vadd.f32 0.0, %v4208
    %4210 = vmatmul.bf16.gmra.mxu0 %v3093
    %v4211 = vpop.f32.mrf.mxu0
    %v4212 = vadd.f32 0.0, %v4211
    %v4213 = vpop.f32.mrf.mxu0
    %4214 = vdwg.mxu0
    %4215 = vmatpush.bf16.msra.mxu0 %v3829
    %4216 = vmatpush.bf16.msra.mxu0 %v3826
    %4217 = vmatpush.bf16.msra.mxu0 %v3823
    %4218 = vmatpush.bf16.msra.mxu0 %v3820
    %4219 = vmatpush.bf16.msra.mxu0 %v3817
    %4220 = vmatpush.bf16.msra.mxu0 %v3814
    %4221 = vmatpush.bf16.msra.mxu0 %v3811
    %4222 = vmatpush.bf16.msra.mxu0 %v3808
    %4223 = vmatmul.bf16.gmra.mxu0 %v3067
    %v4224 = vpop.f32.mrf.mxu0
    %v4225 = vadd.f32 %v4197, %v4224
    %v4226 = vpop.f32.mrf.mxu0
    %v4227 = vadd.f32 %v4199, %v4226
    %4228 = vmatmul.bf16.gmra.mxu0 %v3076
    %v4229 = vpop.f32.mrf.mxu0
    %v4230 = vadd.f32 %v4202, %v4229
    %v4231 = vpop.f32.mrf.mxu0
    %v4232 = vadd.f32 %v4204, %v4231
    %4233 = vmatmul.bf16.gmra.mxu0 %v3085
    %v4234 = vpop.f32.mrf.mxu0
    %v4235 = vadd.f32 %v4207, %v4234
    %v4236 = vpop.f32.mrf.mxu0
    %v4237 = vadd.f32 %v4209, %v4236
    %4238 = vmatmul.bf16.gmra.mxu0 %v3094
    %v4239 = vpop.f32.mrf.mxu0
    %v4240 = vadd.f32 %v4212, %v4239
    %v4241 = vpop.f32.mrf.mxu0
    %4242 = vdwg.mxu0
    %4243 = vmatpush.bf16.msra.mxu0 %v3853
    %4244 = vmatpush.bf16.msra.mxu0 %v3850
    %4245 = vmatpush.bf16.msra.mxu0 %v3847
    %4246 = vmatpush.bf16.msra.mxu0 %v3844
    %4247 = vmatpush.bf16.msra.mxu0 %v3841
    %4248 = vmatpush.bf16.msra.mxu0 %v3838
    %4249 = vmatpush.bf16.msra.mxu0 %v3835
    %4250 = vmatpush.bf16.msra.mxu0 %v3832
    %4251 = vmatmul.bf16.gmra.mxu0 %v3068
    %v4252 = vpop.f32.mrf.mxu0
    %v4253 = vadd.f32 %v4225, %v4252
    %v4254 = vpop.f32.mrf.mxu0
    %v4255 = vadd.f32 %v4227, %v4254
    %4256 = vmatmul.bf16.gmra.mxu0 %v3077
    %v4257 = vpop.f32.mrf.mxu0
    %v4258 = vadd.f32 %v4230, %v4257
    %v4259 = vpop.f32.mrf.mxu0
    %v4260 = vadd.f32 %v4232, %v4259
    %4261 = vmatmul.bf16.gmra.mxu0 %v3086
    %v4262 = vpop.f32.mrf.mxu0
    %v4263 = vadd.f32 %v4235, %v4262
    %v4264 = vpop.f32.mrf.mxu0
    %v4265 = vadd.f32 %v4237, %v4264
    %4266 = vmatmul.bf16.gmra.mxu0 %v3095
    %v4267 = vpop.f32.mrf.mxu0
    %v4268 = vadd.f32 %v4240, %v4267
    %v4269 = vpop.f32.mrf.mxu0
    %4270 = vdwg.mxu0
    %4271 = vmatpush.bf16.msra.mxu0 %v3877
    %4272 = vmatpush.bf16.msra.mxu0 %v3874
    %4273 = vmatpush.bf16.msra.mxu0 %v3871
    %4274 = vmatpush.bf16.msra.mxu0 %v3868
    %4275 = vmatpush.bf16.msra.mxu0 %v3865
    %4276 = vmatpush.bf16.msra.mxu0 %v3862
    %4277 = vmatpush.bf16.msra.mxu0 %v3859
    %4278 = vmatpush.bf16.msra.mxu0 %v3856
    %4279 = vmatmul.bf16.gmra.mxu0 %v3069
    %v4280 = vpop.f32.mrf.mxu0
    %v4281 = vadd.f32 %v4253, %v4280
    %v4282 = vpop.f32.mrf.mxu0
    %v4283 = vadd.f32 %v4255, %v4282
    %4284 = vmatmul.bf16.gmra.mxu0 %v3078
    %v4285 = vpop.f32.mrf.mxu0
    %v4286 = vadd.f32 %v4258, %v4285
    %v4287 = vpop.f32.mrf.mxu0
    %v4288 = vadd.f32 %v4260, %v4287
    %4289 = vmatmul.bf16.gmra.mxu0 %v3087
    %v4290 = vpop.f32.mrf.mxu0
    %v4291 = vadd.f32 %v4263, %v4290
    %v4292 = vpop.f32.mrf.mxu0
    %v4293 = vadd.f32 %v4265, %v4292
    %4294 = vmatmul.bf16.gmra.mxu0 %v3096
    %v4295 = vpop.f32.mrf.mxu0
    %v4296 = vadd.f32 %v4268, %v4295
    %v4297 = vpop.f32.mrf.mxu0
    %4298 = vdwg.mxu0
    %4299 = vmatpush.bf16.msra.mxu0 %v3901
    %4300 = vmatpush.bf16.msra.mxu0 %v3898
    %4301 = vmatpush.bf16.msra.mxu0 %v3895
    %4302 = vmatpush.bf16.msra.mxu0 %v3892
    %4303 = vmatpush.bf16.msra.mxu0 %v3889
    %4304 = vmatpush.bf16.msra.mxu0 %v3886
    %4305 = vmatpush.bf16.msra.mxu0 %v3883
    %4306 = vmatpush.bf16.msra.mxu0 %v3880
    %4307 = vmatmul.bf16.gmra.mxu0 %v3070
    %v4308 = vpop.f32.mrf.mxu0
    %v4309 = vadd.f32 %v4281, %v4308
    %v4310 = vpop.f32.mrf.mxu0
    %v4311 = vadd.f32 %v4283, %v4310
    %4312 = vmatmul.bf16.gmra.mxu0 %v3079
    %v4313 = vpop.f32.mrf.mxu0
    %v4314 = vadd.f32 %v4286, %v4313
    %v4315 = vpop.f32.mrf.mxu0
    %v4316 = vadd.f32 %v4288, %v4315
    %4317 = vmatmul.bf16.gmra.mxu0 %v3088
    %v4318 = vpop.f32.mrf.mxu0
    %v4319 = vadd.f32 %v4291, %v4318
    %v4320 = vpop.f32.mrf.mxu0
    %v4321 = vadd.f32 %v4293, %v4320
    %4322 = vmatmul.bf16.gmra.mxu0 %v3097
    %v4323 = vpop.f32.mrf.mxu0
    %v4324 = vadd.f32 %v4296, %v4323
    %v4325 = vpop.f32.mrf.mxu0
    %4326 = vdwg.mxu0
    %4327 = vmatpush.bf16.msra.mxu0 %v3925
    %4328 = vmatpush.bf16.msra.mxu0 %v3922
    %4329 = vmatpush.bf16.msra.mxu0 %v3919
    %4330 = vmatpush.bf16.msra.mxu0 %v3916
    %4331 = vmatpush.bf16.msra.mxu0 %v3913
    %4332 = vmatpush.bf16.msra.mxu0 %v3910
    %4333 = vmatpush.bf16.msra.mxu0 %v3907
    %4334 = vmatpush.bf16.msra.mxu0 %v3904
    %4335 = vmatmul.bf16.gmra.mxu0 %v3071
    %v4336 = vpop.f32.mrf.mxu0
    %v4337 = vadd.f32 %v4309, %v4336
    %v4338 = vpop.f32.mrf.mxu0
    %v4339 = vadd.f32 %v4311, %v4338
    %4340 = vmatmul.bf16.gmra.mxu0 %v3080
    %v4341 = vpop.f32.mrf.mxu0
    %v4342 = vadd.f32 %v4314, %v4341
    %v4343 = vpop.f32.mrf.mxu0
    %v4344 = vadd.f32 %v4316, %v4343
    %4345 = vmatmul.bf16.gmra.mxu0 %v3089
    %v4346 = vpop.f32.mrf.mxu0
    %v4347 = vadd.f32 %v4319, %v4346
    %v4348 = vpop.f32.mrf.mxu0
    %v4349 = vadd.f32 %v4321, %v4348
    %4350 = vmatmul.bf16.gmra.mxu0 %v3098
    %v4351 = vpop.f32.mrf.mxu0
    %v4352 = vadd.f32 %v4324, %v4351
    %v4353 = vpop.f32.mrf.mxu0
    %4354 = vdwg.mxu0
    %4355 = vmatpush.bf16.msra.mxu0 %v3949
    %4356 = vmatpush.bf16.msra.mxu0 %v3946
    %4357 = vmatpush.bf16.msra.mxu0 %v3943
    %4358 = vmatpush.bf16.msra.mxu0 %v3940
    %4359 = vmatpush.bf16.msra.mxu0 %v3937
    %4360 = vmatpush.bf16.msra.mxu0 %v3934
    %4361 = vmatpush.bf16.msra.mxu0 %v3931
    %4362 = vmatpush.bf16.msra.mxu0 %v3928
    %4363 = vmatmul.bf16.gmra.mxu0 %v3072
    %v4364 = vpop.f32.mrf.mxu0
    %v4365 = vadd.f32 %v4337, %v4364
    %v4366 = vpop.f32.mrf.mxu0
    %v4367 = vadd.f32 %v4339, %v4366
    %4368 = vmatmul.bf16.gmra.mxu0 %v3081
    %v4369 = vpop.f32.mrf.mxu0
    %v4370 = vadd.f32 %v4342, %v4369
    %v4371 = vpop.f32.mrf.mxu0
    %v4372 = vadd.f32 %v4344, %v4371
    %4373 = vmatmul.bf16.gmra.mxu0 %v3090
    %v4374 = vpop.f32.mrf.mxu0
    %v4375 = vadd.f32 %v4347, %v4374
    %v4376 = vpop.f32.mrf.mxu0
    %v4377 = vadd.f32 %v4349, %v4376
    %4378 = vmatmul.bf16.gmra.mxu0 %v3099
    %v4379 = vpop.f32.mrf.mxu0
    %v4380 = vadd.f32 %v4352, %v4379
    %v4381 = vpop.f32.mrf.mxu0
    %4382 = vdwg.mxu0
    %4383 = vmatpush.bf16.msra.mxu0 %v3973
    %4384 = vmatpush.bf16.msra.mxu0 %v3970
    %4385 = vmatpush.bf16.msra.mxu0 %v3967
    %4386 = vmatpush.bf16.msra.mxu0 %v3964
    %4387 = vmatpush.bf16.msra.mxu0 %v3961
    %4388 = vmatpush.bf16.msra.mxu0 %v3958
    %4389 = vmatpush.bf16.msra.mxu0 %v3955
    %4390 = vmatpush.bf16.msra.mxu0 %v3952
    %4391 = vmatmul.bf16.gmra.mxu0 %v3073
    %v4392 = vpop.f32.mrf.mxu0
    %v4393 = vadd.f32 %v4365, %v4392
    %v4394 = vpop.f32.mrf.mxu0
    %v4395 = vadd.f32 %v4367, %v4394
    %4396 = vmatmul.bf16.gmra.mxu0 %v3082
    %v4397 = vpop.f32.mrf.mxu0
    %v4398 = vadd.f32 %v4370, %v4397
    %v4399 = vpop.f32.mrf.mxu0
    %v4400 = vadd.f32 %v4372, %v4399
    %4401 = vmatmul.bf16.gmra.mxu0 %v3091
    %v4402 = vpop.f32.mrf.mxu0
    %v4403 = vadd.f32 %v4375, %v4402
    %v4404 = vpop.f32.mrf.mxu0
    %v4405 = vadd.f32 %v4377, %v4404
    %4406 = vmatmul.bf16.gmra.mxu0 %v3100
    %v4407 = vpop.f32.mrf.mxu0
    %v4408 = vadd.f32 %v4380, %v4407
    %v4409 = vpop.f32.mrf.mxu0
    %4410 = vdwg.mxu0
    %4411 = vmatpush.bf16.msra.mxu0 0
    %4412 = vmatpush.bf16.msra.mxu0 0
    %4413 = vmatpush.bf16.msra.mxu0 0
    %4414 = vmatpush.bf16.msra.mxu0 0
    %4415 = vmatpush.bf16.msra.mxu0 0
    %4416 = vmatpush.bf16.msra.mxu0 0
    %4417 = vmatpush.bf16.msra.mxu0 0
    %4418 = vmatpush.bf16.msra.mxu0 %v3976
    %4419 = vmatmul.bf16.gmra.mxu0 %v4176
    %v4420 = vpop.f32.mrf.mxu0
    %v4421 = vadd.f32 %v4393, %v4420
    %v4422 = vpop.f32.mrf.mxu0
    %v4423 = vadd.f32 %v4395, %v4422
    %4424 = vmatmul.bf16.gmra.mxu0 %v4179
    %v4425 = vpop.f32.mrf.mxu0
    %v4426 = vadd.f32 %v4398, %v4425
    %v4427 = vpop.f32.mrf.mxu0
    %v4428 = vadd.f32 %v4400, %v4427
    %4429 = vmatmul.bf16.gmra.mxu0 %v4182
    %v4430 = vpop.f32.mrf.mxu0
    %v4431 = vadd.f32 %v4403, %v4430
    %v4432 = vpop.f32.mrf.mxu0
    %v4433 = vadd.f32 %v4405, %v4432
    %4434 = vmatmul.bf16.gmra.mxu0 %v4185
    %v4435 = vpop.f32.mrf.mxu0
    %v4436 = vadd.f32 %v4408, %v4435
    %v4437 = vpop.f32.mrf.mxu0
    %4438 = vdwg.mxu0
    %4439 = vmatpush.bf16.msra.mxu0 %v3806
    %4440 = vmatpush.bf16.msra.mxu0 %v3803
    %4441 = vmatpush.bf16.msra.mxu0 %v3800
    %4442 = vmatpush.bf16.msra.mxu0 %v3797
    %4443 = vmatpush.bf16.msra.mxu0 %v3794
    %4444 = vmatpush.bf16.msra.mxu0 %v3791
    %4445 = vmatpush.bf16.msra.mxu0 %v3788
    %4446 = vmatpush.bf16.msra.mxu0 %v3785
    %4447 = vmatmul.bf16.gmra.mxu0 %v3066
    %v4448 = vpop.f32.mrf.mxu0
    %v4449 = vadd.f32 0.0, %v4448
    %v4450 = vpop.f32.mrf.mxu0
    %v4451 = vadd.f32 0.0, %v4450
    %4452 = vmatmul.bf16.gmra.mxu0 %v3075
    %v4453 = vpop.f32.mrf.mxu0
    %v4454 = vadd.f32 0.0, %v4453
    %v4455 = vpop.f32.mrf.mxu0
    %v4456 = vadd.f32 0.0, %v4455
    %4457 = vmatmul.bf16.gmra.mxu0 %v3084
    %v4458 = vpop.f32.mrf.mxu0
    %v4459 = vadd.f32 0.0, %v4458
    %v4460 = vpop.f32.mrf.mxu0
    %v4461 = vadd.f32 0.0, %v4460
    %4462 = vmatmul.bf16.gmra.mxu0 %v3093
    %v4463 = vpop.f32.mrf.mxu0
    %v4464 = vadd.f32 0.0, %v4463
    %v4465 = vpop.f32.mrf.mxu0
    %4466 = vdwg.mxu0
    %4467 = vmatpush.bf16.msra.mxu0 %v3830
    %4468 = vmatpush.bf16.msra.mxu0 %v3827
    %4469 = vmatpush.bf16.msra.mxu0 %v3824
    %4470 = vmatpush.bf16.msra.mxu0 %v3821
    %4471 = vmatpush.bf16.msra.mxu0 %v3818
    %4472 = vmatpush.bf16.msra.mxu0 %v3815
    %4473 = vmatpush.bf16.msra.mxu0 %v3812
    %4474 = vmatpush.bf16.msra.mxu0 %v3809
    %4475 = vmatmul.bf16.gmra.mxu0 %v3067
    %v4476 = vpop.f32.mrf.mxu0
    %v4477 = vadd.f32 %v4449, %v4476
    %v4478 = vpop.f32.mrf.mxu0
    %v4479 = vadd.f32 %v4451, %v4478
    %4480 = vmatmul.bf16.gmra.mxu0 %v3076
    %v4481 = vpop.f32.mrf.mxu0
    %v4482 = vadd.f32 %v4454, %v4481
    %v4483 = vpop.f32.mrf.mxu0
    %v4484 = vadd.f32 %v4456, %v4483
    %4485 = vmatmul.bf16.gmra.mxu0 %v3085
    %v4486 = vpop.f32.mrf.mxu0
    %v4487 = vadd.f32 %v4459, %v4486
    %v4488 = vpop.f32.mrf.mxu0
    %v4489 = vadd.f32 %v4461, %v4488
    %4490 = vmatmul.bf16.gmra.mxu0 %v3094
    %v4491 = vpop.f32.mrf.mxu0
    %v4492 = vadd.f32 %v4464, %v4491
    %v4493 = vpop.f32.mrf.mxu0
    %4494 = vdwg.mxu0
    %4495 = vmatpush.bf16.msra.mxu0 %v3854
    %4496 = vmatpush.bf16.msra.mxu0 %v3851
    %4497 = vmatpush.bf16.msra.mxu0 %v3848
    %4498 = vmatpush.bf16.msra.mxu0 %v3845
    %4499 = vmatpush.bf16.msra.mxu0 %v3842
    %4500 = vmatpush.bf16.msra.mxu0 %v3839
    %4501 = vmatpush.bf16.msra.mxu0 %v3836
    %4502 = vmatpush.bf16.msra.mxu0 %v3833
    %4503 = vmatmul.bf16.gmra.mxu0 %v3068
    %v4504 = vpop.f32.mrf.mxu0
    %v4505 = vadd.f32 %v4477, %v4504
    %v4506 = vpop.f32.mrf.mxu0
    %v4507 = vadd.f32 %v4479, %v4506
    %4508 = vmatmul.bf16.gmra.mxu0 %v3077
    %v4509 = vpop.f32.mrf.mxu0
    %v4510 = vadd.f32 %v4482, %v4509
    %v4511 = vpop.f32.mrf.mxu0
    %v4512 = vadd.f32 %v4484, %v4511
    %4513 = vmatmul.bf16.gmra.mxu0 %v3086
    %v4514 = vpop.f32.mrf.mxu0
    %v4515 = vadd.f32 %v4487, %v4514
    %v4516 = vpop.f32.mrf.mxu0
    %v4517 = vadd.f32 %v4489, %v4516
    %4518 = vmatmul.bf16.gmra.mxu0 %v3095
    %v4519 = vpop.f32.mrf.mxu0
    %v4520 = vadd.f32 %v4492, %v4519
    %v4521 = vpop.f32.mrf.mxu0
    %4522 = vdwg.mxu0
    %4523 = vmatpush.bf16.msra.mxu0 %v3878
    %4524 = vmatpush.bf16.msra.mxu0 %v3875
    %4525 = vmatpush.bf16.msra.mxu0 %v3872
    %4526 = vmatpush.bf16.msra.mxu0 %v3869
    %4527 = vmatpush.bf16.msra.mxu0 %v3866
    %4528 = vmatpush.bf16.msra.mxu0 %v3863
    %4529 = vmatpush.bf16.msra.mxu0 %v3860
    %4530 = vmatpush.bf16.msra.mxu0 %v3857
    %4531 = vmatmul.bf16.gmra.mxu0 %v3069
    %v4532 = vpop.f32.mrf.mxu0
    %v4533 = vadd.f32 %v4505, %v4532
    %v4534 = vpop.f32.mrf.mxu0
    %v4535 = vadd.f32 %v4507, %v4534
    %4536 = vmatmul.bf16.gmra.mxu0 %v3078
    %v4537 = vpop.f32.mrf.mxu0
    %v4538 = vadd.f32 %v4510, %v4537
    %v4539 = vpop.f32.mrf.mxu0
    %v4540 = vadd.f32 %v4512, %v4539
    %4541 = vmatmul.bf16.gmra.mxu0 %v3087
    %v4542 = vpop.f32.mrf.mxu0
    %v4543 = vadd.f32 %v4515, %v4542
    %v4544 = vpop.f32.mrf.mxu0
    %v4545 = vadd.f32 %v4517, %v4544
    %4546 = vmatmul.bf16.gmra.mxu0 %v3096
    %v4547 = vpop.f32.mrf.mxu0
    %v4548 = vadd.f32 %v4520, %v4547
    %v4549 = vpop.f32.mrf.mxu0
    %4550 = vdwg.mxu0
    %4551 = vmatpush.bf16.msra.mxu0 %v3902
    %4552 = vmatpush.bf16.msra.mxu0 %v3899
    %4553 = vmatpush.bf16.msra.mxu0 %v3896
    %4554 = vmatpush.bf16.msra.mxu0 %v3893
    %4555 = vmatpush.bf16.msra.mxu0 %v3890
    %4556 = vmatpush.bf16.msra.mxu0 %v3887
    %4557 = vmatpush.bf16.msra.mxu0 %v3884
    %4558 = vmatpush.bf16.msra.mxu0 %v3881
    %4559 = vmatmul.bf16.gmra.mxu0 %v3070
    %v4560 = vpop.f32.mrf.mxu0
    %v4561 = vadd.f32 %v4533, %v4560
    %v4562 = vpop.f32.mrf.mxu0
    %v4563 = vadd.f32 %v4535, %v4562
    %4564 = vmatmul.bf16.gmra.mxu0 %v3079
    %v4565 = vpop.f32.mrf.mxu0
    %v4566 = vadd.f32 %v4538, %v4565
    %v4567 = vpop.f32.mrf.mxu0
    %v4568 = vadd.f32 %v4540, %v4567
    %4569 = vmatmul.bf16.gmra.mxu0 %v3088
    %v4570 = vpop.f32.mrf.mxu0
    %v4571 = vadd.f32 %v4543, %v4570
    %v4572 = vpop.f32.mrf.mxu0
    %v4573 = vadd.f32 %v4545, %v4572
    %4574 = vmatmul.bf16.gmra.mxu0 %v3097
    %v4575 = vpop.f32.mrf.mxu0
    %v4576 = vadd.f32 %v4548, %v4575
    %v4577 = vpop.f32.mrf.mxu0
    %4578 = vdwg.mxu0
    %4579 = vmatpush.bf16.msra.mxu0 %v3926
    %4580 = vmatpush.bf16.msra.mxu0 %v3923
    %4581 = vmatpush.bf16.msra.mxu0 %v3920
    %4582 = vmatpush.bf16.msra.mxu0 %v3917
    %4583 = vmatpush.bf16.msra.mxu0 %v3914
    %4584 = vmatpush.bf16.msra.mxu0 %v3911
    %4585 = vmatpush.bf16.msra.mxu0 %v3908
    %4586 = vmatpush.bf16.msra.mxu0 %v3905
    %4587 = vmatmul.bf16.gmra.mxu0 %v3071
    %v4588 = vpop.f32.mrf.mxu0
    %v4589 = vadd.f32 %v4561, %v4588
    %v4590 = vpop.f32.mrf.mxu0
    %v4591 = vadd.f32 %v4563, %v4590
    %4592 = vmatmul.bf16.gmra.mxu0 %v3080
    %v4593 = vpop.f32.mrf.mxu0
    %v4594 = vadd.f32 %v4566, %v4593
    %v4595 = vpop.f32.mrf.mxu0
    %v4596 = vadd.f32 %v4568, %v4595
    %4597 = vmatmul.bf16.gmra.mxu0 %v3089
    %v4598 = vpop.f32.mrf.mxu0
    %v4599 = vadd.f32 %v4571, %v4598
    %v4600 = vpop.f32.mrf.mxu0
    %v4601 = vadd.f32 %v4573, %v4600
    %4602 = vmatmul.bf16.gmra.mxu0 %v3098
    %v4603 = vpop.f32.mrf.mxu0
    %v4604 = vadd.f32 %v4576, %v4603
    %v4605 = vpop.f32.mrf.mxu0
    %4606 = vdwg.mxu0
    %4607 = vmatpush.bf16.msra.mxu0 %v3950
    %4608 = vmatpush.bf16.msra.mxu0 %v3947
    %4609 = vmatpush.bf16.msra.mxu0 %v3944
    %4610 = vmatpush.bf16.msra.mxu0 %v3941
    %4611 = vmatpush.bf16.msra.mxu0 %v3938
    %4612 = vmatpush.bf16.msra.mxu0 %v3935
    %4613 = vmatpush.bf16.msra.mxu0 %v3932
    %4614 = vmatpush.bf16.msra.mxu0 %v3929
    %4615 = vmatmul.bf16.gmra.mxu0 %v3072
    %v4616 = vpop.f32.mrf.mxu0
    %v4617 = vadd.f32 %v4589, %v4616
    %v4618 = vpop.f32.mrf.mxu0
    %v4619 = vadd.f32 %v4591, %v4618
    %4620 = vmatmul.bf16.gmra.mxu0 %v3081
    %v4621 = vpop.f32.mrf.mxu0
    %v4622 = vadd.f32 %v4594, %v4621
    %v4623 = vpop.f32.mrf.mxu0
    %v4624 = vadd.f32 %v4596, %v4623
    %4625 = vmatmul.bf16.gmra.mxu0 %v3090
    %v4626 = vpop.f32.mrf.mxu0
    %v4627 = vadd.f32 %v4599, %v4626
    %v4628 = vpop.f32.mrf.mxu0
    %v4629 = vadd.f32 %v4601, %v4628
    %4630 = vmatmul.bf16.gmra.mxu0 %v3099
    %v4631 = vpop.f32.mrf.mxu0
    %v4632 = vadd.f32 %v4604, %v4631
    %v4633 = vpop.f32.mrf.mxu0
    %4634 = vdwg.mxu0
    %4635 = vmatpush.bf16.msra.mxu0 %v3974
    %4636 = vmatpush.bf16.msra.mxu0 %v3971
    %4637 = vmatpush.bf16.msra.mxu0 %v3968
    %4638 = vmatpush.bf16.msra.mxu0 %v3965
    %4639 = vmatpush.bf16.msra.mxu0 %v3962
    %4640 = vmatpush.bf16.msra.mxu0 %v3959
    %4641 = vmatpush.bf16.msra.mxu0 %v3956
    %4642 = vmatpush.bf16.msra.mxu0 %v3953
    %4643 = vmatmul.bf16.gmra.mxu0 %v3073
    %v4644 = vpop.f32.mrf.mxu0
    %v4645 = vadd.f32 %v4617, %v4644
    %v4646 = vpop.f32.mrf.mxu0
    %v4647 = vadd.f32 %v4619, %v4646
    %4648 = vmatmul.bf16.gmra.mxu0 %v3082
    %v4649 = vpop.f32.mrf.mxu0
    %v4650 = vadd.f32 %v4622, %v4649
    %v4651 = vpop.f32.mrf.mxu0
    %v4652 = vadd.f32 %v4624, %v4651
    %4653 = vmatmul.bf16.gmra.mxu0 %v3091
    %v4654 = vpop.f32.mrf.mxu0
    %v4655 = vadd.f32 %v4627, %v4654
    %v4656 = vpop.f32.mrf.mxu0
    %v4657 = vadd.f32 %v4629, %v4656
    %4658 = vmatmul.bf16.gmra.mxu0 %v3100
    %v4659 = vpop.f32.mrf.mxu0
    %v4660 = vadd.f32 %v4632, %v4659
    %v4661 = vpop.f32.mrf.mxu0
    %4662 = vdwg.mxu0
    %4663 = vmatpush.bf16.msra.mxu0 0
    %4664 = vmatpush.bf16.msra.mxu0 0
    %4665 = vmatpush.bf16.msra.mxu0 0
    %4666 = vmatpush.bf16.msra.mxu0 0
    %4667 = vmatpush.bf16.msra.mxu0 0
    %4668 = vmatpush.bf16.msra.mxu0 0
    %4669 = vmatpush.bf16.msra.mxu0 0
    %4670 = vmatpush.bf16.msra.mxu0 %v3977
    %4671 = vmatmul.bf16.gmra.mxu0 %v4176
    %v4672 = vpop.f32.mrf.mxu0
    %v4673 = vadd.f32 %v4645, %v4672
    %v4674 = vpop.f32.mrf.mxu0
    %v4675 = vadd.f32 %v4647, %v4674
    %4676 = vmatmul.bf16.gmra.mxu0 %v4179
    %v4677 = vpop.f32.mrf.mxu0
    %v4678 = vadd.f32 %v4650, %v4677
    %v4679 = vpop.f32.mrf.mxu0
    %v4680 = vadd.f32 %v4652, %v4679
    %4681 = vmatmul.bf16.gmra.mxu0 %v4182
    %v4682 = vpop.f32.mrf.mxu0
    %v4683 = vadd.f32 %v4655, %v4682
    %v4684 = vpop.f32.mrf.mxu0
    %v4685 = vadd.f32 %v4657, %v4684
    %4686 = vmatmul.bf16.gmra.mxu0 %v4185
    %v4687 = vpop.f32.mrf.mxu0
    %v4688 = vadd.f32 %v4660, %v4687
    %v4689 = vpop.f32.mrf.mxu0
    %4690 = vdwg.mxu0
    %4691 = vmatpush.bf16.msra.mxu0 %v3807
    %4692 = vmatpush.bf16.msra.mxu0 %v3804
    %4693 = vmatpush.bf16.msra.mxu0 %v3801
    %4694 = vmatpush.bf16.msra.mxu0 %v3798
    %4695 = vmatpush.bf16.msra.mxu0 %v3795
    %4696 = vmatpush.bf16.msra.mxu0 %v3792
    %4697 = vmatpush.bf16.msra.mxu0 %v3789
    %4698 = vmatpush.bf16.msra.mxu0 %v3786
    %4699 = vmatmul.bf16.gmra.mxu0 %v3066
    %v4700 = vpop.f32.mrf.mxu0
    %v4701 = vadd.f32 0.0, %v4700
    %v4702 = vpop.f32.mrf.mxu0
    %v4703 = vadd.f32 0.0, %v4702
    %4704 = vmatmul.bf16.gmra.mxu0 %v3075
    %v4705 = vpop.f32.mrf.mxu0
    %v4706 = vadd.f32 0.0, %v4705
    %v4707 = vpop.f32.mrf.mxu0
    %v4708 = vadd.f32 0.0, %v4707
    %4709 = vmatmul.bf16.gmra.mxu0 %v3084
    %v4710 = vpop.f32.mrf.mxu0
    %v4711 = vadd.f32 0.0, %v4710
    %v4712 = vpop.f32.mrf.mxu0
    %v4713 = vadd.f32 0.0, %v4712
    %4714 = vmatmul.bf16.gmra.mxu0 %v3093
    %v4715 = vpop.f32.mrf.mxu0
    %v4716 = vadd.f32 0.0, %v4715
    %v4717 = vpop.f32.mrf.mxu0
    %4718 = vdwg.mxu0
    %4719 = vmatpush.bf16.msra.mxu0 %v3831
    %4720 = vmatpush.bf16.msra.mxu0 %v3828
    %4721 = vmatpush.bf16.msra.mxu0 %v3825
    %4722 = vmatpush.bf16.msra.mxu0 %v3822
    %4723 = vmatpush.bf16.msra.mxu0 %v3819
    %4724 = vmatpush.bf16.msra.mxu0 %v3816
    %4725 = vmatpush.bf16.msra.mxu0 %v3813
    %4726 = vmatpush.bf16.msra.mxu0 %v3810
    %4727 = vmatmul.bf16.gmra.mxu0 %v3067
    %v4728 = vpop.f32.mrf.mxu0
    %v4729 = vadd.f32 %v4701, %v4728
    %v4730 = vpop.f32.mrf.mxu0
    %v4731 = vadd.f32 %v4703, %v4730
    %4732 = vmatmul.bf16.gmra.mxu0 %v3076
    %v4733 = vpop.f32.mrf.mxu0
    %v4734 = vadd.f32 %v4706, %v4733
    %v4735 = vpop.f32.mrf.mxu0
    %v4736 = vadd.f32 %v4708, %v4735
    %4737 = vmatmul.bf16.gmra.mxu0 %v3085
    %v4738 = vpop.f32.mrf.mxu0
    %v4739 = vadd.f32 %v4711, %v4738
    %v4740 = vpop.f32.mrf.mxu0
    %v4741 = vadd.f32 %v4713, %v4740
    %4742 = vmatmul.bf16.gmra.mxu0 %v3094
    %v4743 = vpop.f32.mrf.mxu0
    %v4744 = vadd.f32 %v4716, %v4743
    %v4745 = vpop.f32.mrf.mxu0
    %4746 = vdwg.mxu0
    %4747 = vmatpush.bf16.msra.mxu0 %v3855
    %4748 = vmatpush.bf16.msra.mxu0 %v3852
    %4749 = vmatpush.bf16.msra.mxu0 %v3849
    %4750 = vmatpush.bf16.msra.mxu0 %v3846
    %4751 = vmatpush.bf16.msra.mxu0 %v3843
    %4752 = vmatpush.bf16.msra.mxu0 %v3840
    %4753 = vmatpush.bf16.msra.mxu0 %v3837
    %4754 = vmatpush.bf16.msra.mxu0 %v3834
    %4755 = vmatmul.bf16.gmra.mxu0 %v3068
    %v4756 = vpop.f32.mrf.mxu0
    %v4757 = vadd.f32 %v4729, %v4756
    %v4758 = vpop.f32.mrf.mxu0
    %v4759 = vadd.f32 %v4731, %v4758
    %4760 = vmatmul.bf16.gmra.mxu0 %v3077
    %v4761 = vpop.f32.mrf.mxu0
    %v4762 = vadd.f32 %v4734, %v4761
    %v4763 = vpop.f32.mrf.mxu0
    %v4764 = vadd.f32 %v4736, %v4763
    %4765 = vmatmul.bf16.gmra.mxu0 %v3086
    %v4766 = vpop.f32.mrf.mxu0
    %v4767 = vadd.f32 %v4739, %v4766
    %v4768 = vpop.f32.mrf.mxu0
    %v4769 = vadd.f32 %v4741, %v4768
    %4770 = vmatmul.bf16.gmra.mxu0 %v3095
    %v4771 = vpop.f32.mrf.mxu0
    %v4772 = vadd.f32 %v4744, %v4771
    %v4773 = vpop.f32.mrf.mxu0
    %4774 = vdwg.mxu0
    %4775 = vmatpush.bf16.msra.mxu0 %v3879
    %4776 = vmatpush.bf16.msra.mxu0 %v3876
    %4777 = vmatpush.bf16.msra.mxu0 %v3873
    %4778 = vmatpush.bf16.msra.mxu0 %v3870
    %4779 = vmatpush.bf16.msra.mxu0 %v3867
    %4780 = vmatpush.bf16.msra.mxu0 %v3864
    %4781 = vmatpush.bf16.msra.mxu0 %v3861
    %4782 = vmatpush.bf16.msra.mxu0 %v3858
    %4783 = vmatmul.bf16.gmra.mxu0 %v3069
    %v4784 = vpop.f32.mrf.mxu0
    %v4785 = vadd.f32 %v4757, %v4784
    %v4786 = vpop.f32.mrf.mxu0
    %v4787 = vadd.f32 %v4759, %v4786
    %4788 = vmatmul.bf16.gmra.mxu0 %v3078
    %v4789 = vpop.f32.mrf.mxu0
    %v4790 = vadd.f32 %v4762, %v4789
    %v4791 = vpop.f32.mrf.mxu0
    %v4792 = vadd.f32 %v4764, %v4791
    %4793 = vmatmul.bf16.gmra.mxu0 %v3087
    %v4794 = vpop.f32.mrf.mxu0
    %v4795 = vadd.f32 %v4767, %v4794
    %v4796 = vpop.f32.mrf.mxu0
    %v4797 = vadd.f32 %v4769, %v4796
    %4798 = vmatmul.bf16.gmra.mxu0 %v3096
    %v4799 = vpop.f32.mrf.mxu0
    %v4800 = vadd.f32 %v4772, %v4799
    %v4801 = vpop.f32.mrf.mxu0
    %4802 = vdwg.mxu0
    %4803 = vmatpush.bf16.msra.mxu0 %v3903
    %4804 = vmatpush.bf16.msra.mxu0 %v3900
    %4805 = vmatpush.bf16.msra.mxu0 %v3897
    %4806 = vmatpush.bf16.msra.mxu0 %v3894
    %4807 = vmatpush.bf16.msra.mxu0 %v3891
    %4808 = vmatpush.bf16.msra.mxu0 %v3888
    %4809 = vmatpush.bf16.msra.mxu0 %v3885
    %4810 = vmatpush.bf16.msra.mxu0 %v3882
    %4811 = vmatmul.bf16.gmra.mxu0 %v3070
    %v4812 = vpop.f32.mrf.mxu0
    %v4813 = vadd.f32 %v4785, %v4812
    %v4814 = vpop.f32.mrf.mxu0
    %v4815 = vadd.f32 %v4787, %v4814
    %4816 = vmatmul.bf16.gmra.mxu0 %v3079
    %v4817 = vpop.f32.mrf.mxu0
    %v4818 = vadd.f32 %v4790, %v4817
    %v4819 = vpop.f32.mrf.mxu0
    %v4820 = vadd.f32 %v4792, %v4819
    %4821 = vmatmul.bf16.gmra.mxu0 %v3088
    %v4822 = vpop.f32.mrf.mxu0
    %v4823 = vadd.f32 %v4795, %v4822
    %v4824 = vpop.f32.mrf.mxu0
    %v4825 = vadd.f32 %v4797, %v4824
    %4826 = vmatmul.bf16.gmra.mxu0 %v3097
    %v4827 = vpop.f32.mrf.mxu0
    %v4828 = vadd.f32 %v4800, %v4827
    %v4829 = vpop.f32.mrf.mxu0
    %4830 = vdwg.mxu0
    %4831 = vmatpush.bf16.msra.mxu0 %v3927
    %4832 = vmatpush.bf16.msra.mxu0 %v3924
    %4833 = vmatpush.bf16.msra.mxu0 %v3921
    %4834 = vmatpush.bf16.msra.mxu0 %v3918
    %4835 = vmatpush.bf16.msra.mxu0 %v3915
    %4836 = vmatpush.bf16.msra.mxu0 %v3912
    %4837 = vmatpush.bf16.msra.mxu0 %v3909
    %4838 = vmatpush.bf16.msra.mxu0 %v3906
    %4839 = vmatmul.bf16.gmra.mxu0 %v3071
    %v4840 = vpop.f32.mrf.mxu0
    %v4841 = vadd.f32 %v4813, %v4840
    %v4842 = vpop.f32.mrf.mxu0
    %v4843 = vadd.f32 %v4815, %v4842
    %4844 = vmatmul.bf16.gmra.mxu0 %v3080
    %v4845 = vpop.f32.mrf.mxu0
    %v4846 = vadd.f32 %v4818, %v4845
    %v4847 = vpop.f32.mrf.mxu0
    %v4848 = vadd.f32 %v4820, %v4847
    %4849 = vmatmul.bf16.gmra.mxu0 %v3089
    %v4850 = vpop.f32.mrf.mxu0
    %v4851 = vadd.f32 %v4823, %v4850
    %v4852 = vpop.f32.mrf.mxu0
    %v4853 = vadd.f32 %v4825, %v4852
    %4854 = vmatmul.bf16.gmra.mxu0 %v3098
    %v4855 = vpop.f32.mrf.mxu0
    %v4856 = vadd.f32 %v4828, %v4855
    %v4857 = vpop.f32.mrf.mxu0
    %4858 = vdwg.mxu0
    %4859 = vmatpush.bf16.msra.mxu0 %v3951
    %4860 = vmatpush.bf16.msra.mxu0 %v3948
    %4861 = vmatpush.bf16.msra.mxu0 %v3945
    %4862 = vmatpush.bf16.msra.mxu0 %v3942
    %4863 = vmatpush.bf16.msra.mxu0 %v3939
    %4864 = vmatpush.bf16.msra.mxu0 %v3936
    %4865 = vmatpush.bf16.msra.mxu0 %v3933
    %4866 = vmatpush.bf16.msra.mxu0 %v3930
    %4867 = vmatmul.bf16.gmra.mxu0 %v3072
    %v4868 = vpop.f32.mrf.mxu0
    %v4869 = vadd.f32 %v4841, %v4868
    %v4870 = vpop.f32.mrf.mxu0
    %v4871 = vadd.f32 %v4843, %v4870
    %4872 = vmatmul.bf16.gmra.mxu0 %v3081
    %v4873 = vpop.f32.mrf.mxu0
    %v4874 = vadd.f32 %v4846, %v4873
    %v4875 = vpop.f32.mrf.mxu0
    %v4876 = vadd.f32 %v4848, %v4875
    %4877 = vmatmul.bf16.gmra.mxu0 %v3090
    %v4878 = vpop.f32.mrf.mxu0
    %v4879 = vadd.f32 %v4851, %v4878
    %v4880 = vpop.f32.mrf.mxu0
    %v4881 = vadd.f32 %v4853, %v4880
    %4882 = vmatmul.bf16.gmra.mxu0 %v3099
    %v4883 = vpop.f32.mrf.mxu0
    %v4884 = vadd.f32 %v4856, %v4883
    %v4885 = vpop.f32.mrf.mxu0
    %4886 = vdwg.mxu0
    %4887 = vmatpush.bf16.msra.mxu0 %v3975
    %4888 = vmatpush.bf16.msra.mxu0 %v3972
    %4889 = vmatpush.bf16.msra.mxu0 %v3969
    %4890 = vmatpush.bf16.msra.mxu0 %v3966
    %4891 = vmatpush.bf16.msra.mxu0 %v3963
    %4892 = vmatpush.bf16.msra.mxu0 %v3960
    %4893 = vmatpush.bf16.msra.mxu0 %v3957
    %4894 = vmatpush.bf16.msra.mxu0 %v3954
    %4895 = vmatmul.bf16.gmra.mxu0 %v3073
    %v4896 = vpop.f32.mrf.mxu0
    %v4897 = vadd.f32 %v4869, %v4896
    %v4898 = vpop.f32.mrf.mxu0
    %v4899 = vadd.f32 %v4871, %v4898
    %4900 = vmatmul.bf16.gmra.mxu0 %v3082
    %v4901 = vpop.f32.mrf.mxu0
    %v4902 = vadd.f32 %v4874, %v4901
    %v4903 = vpop.f32.mrf.mxu0
    %v4904 = vadd.f32 %v4876, %v4903
    %4905 = vmatmul.bf16.gmra.mxu0 %v3091
    %v4906 = vpop.f32.mrf.mxu0
    %v4907 = vadd.f32 %v4879, %v4906
    %v4908 = vpop.f32.mrf.mxu0
    %v4909 = vadd.f32 %v4881, %v4908
    %4910 = vmatmul.bf16.gmra.mxu0 %v3100
    %v4911 = vpop.f32.mrf.mxu0
    %v4912 = vadd.f32 %v4884, %v4911
    %v4913 = vpop.f32.mrf.mxu0
    %4914 = vdwg.mxu0
    %4915 = vmatpush.bf16.msra.mxu0 0
    %4916 = vmatpush.bf16.msra.mxu0 0
    %4917 = vmatpush.bf16.msra.mxu0 0
    %4918 = vmatpush.bf16.msra.mxu0 0
    %4919 = vmatpush.bf16.msra.mxu0 0
    %4920 = vmatpush.bf16.msra.mxu0 0
    %4921 = vmatpush.bf16.msra.mxu0 0
    %4922 = vmatpush.bf16.msra.mxu0 %v3978
    %4923 = vmatmul.bf16.gmra.mxu0 %v4176
    %v4924 = vpop.f32.mrf.mxu0
    %v4925 = vadd.f32 %v4897, %v4924
    %v4926 = vpop.f32.mrf.mxu0
    %v4927 = vadd.f32 %v4899, %v4926
    %4928 = vmatmul.bf16.gmra.mxu0 %v4179
    %v4929 = vpop.f32.mrf.mxu0
    %v4930 = vadd.f32 %v4902, %v4929
    %v4931 = vpop.f32.mrf.mxu0
    %v4932 = vadd.f32 %v4904, %v4931
    %4933 = vmatmul.bf16.gmra.mxu0 %v4182
    %v4934 = vpop.f32.mrf.mxu0
    %v4935 = vadd.f32 %v4907, %v4934
    %v4936 = vpop.f32.mrf.mxu0
    %v4937 = vadd.f32 %v4909, %v4936
    %4938 = vmatmul.bf16.gmra.mxu0 %v4185
    %v4939 = vpop.f32.mrf.mxu0
    %v4940 = vadd.f32 %v4912, %v4939
    %v4941 = vpop.f32.mrf.mxu0
    %4942 = vdwg.mxu0
    %v4971 = vunpack.c.l.b16 %v1974
    %v4972 = vunpack.c.h.b16 %v1974
    %v4973 = vunpack.c.l.b16 %v1975
    %v4974 = vunpack.c.h.b16 %v1975
    %v4975 = vunpack.c.l.b16 %v1976
    %v4976 = vunpack.c.h.b16 %v1976
    %v4977 = vunpack.c.l.b16 %v1977
    %v4978 = vunpack.c.h.b16 %v1977
    %v4979 = vunpack.c.l.b16 %v1983
    %v4980 = vunpack.c.h.b16 %v1983
    %v4981 = vunpack.c.l.b16 %v1984
    %v4982 = vunpack.c.h.b16 %v1984
    %v4983 = vunpack.c.l.b16 %v1985
    %v4984 = vunpack.c.h.b16 %v1985
    %v4985 = vunpack.c.l.b16 %v1986
    %v4986 = vunpack.c.h.b16 %v1986
    %v4987 = vunpack.c.l.b16 %v1992
    %v4988 = vunpack.c.h.b16 %v1992
    %v4989 = vunpack.c.l.b16 %v1993
    %v4990 = vunpack.c.h.b16 %v1993
    %v4991 = vunpack.c.l.b16 %v1994
    %v4992 = vunpack.c.h.b16 %v1994
    %v4993 = vunpack.c.l.b16 %v1995
    %v4994 = vunpack.c.h.b16 %v1995
    %v4995 = vunpack.c.l.b16 %v2001
    %v4996 = vunpack.c.h.b16 %v2001
    %v4997 = vunpack.c.l.b16 %v2002
    %v4998 = vunpack.c.h.b16 %v2002
    %v4999 = vunpack.c.l.b16 %v2003
    %v5000 = vunpack.c.h.b16 %v2003
    %v5001 = vunpack.c.l.b16 %v2004
    %v5002 = vunpack.c.h.b16 %v2004
    %v5003 = vunpack.c.l.b16 %v2010
    %v5004 = vunpack.c.h.b16 %v2010
    %v5005 = vunpack.c.l.b16 %v2011
    %v5006 = vunpack.c.h.b16 %v2011
    %v5007 = vunpack.c.l.b16 %v2012
    %v5008 = vunpack.c.h.b16 %v2012
    %v5009 = vunpack.c.l.b16 %v2013
    %v5010 = vunpack.c.h.b16 %v2013
    %v5011 = vunpack.c.l.b16 %v2019
    %v5012 = vunpack.c.h.b16 %v2019
    %v5013 = vunpack.c.l.b16 %v2020
    %v5014 = vunpack.c.h.b16 %v2020
    %v5015 = vunpack.c.l.b16 %v2021
    %v5016 = vunpack.c.h.b16 %v2021
    %v5017 = vunpack.c.l.b16 %v2022
    %v5018 = vunpack.c.h.b16 %v2022
    %v5019 = vunpack.c.l.b16 %v2028
    %v5020 = vunpack.c.h.b16 %v2028
    %v5021 = vunpack.c.l.b16 %v2029
    %v5022 = vunpack.c.h.b16 %v2029
    %v5023 = vunpack.c.l.b16 %v2030
    %v5024 = vunpack.c.h.b16 %v2030
    %v5025 = vunpack.c.l.b16 %v2031
    %v5026 = vunpack.c.h.b16 %v2031
    %v5027 = vpack.c.b16 %v4979, %v4971
    %v5028 = vpack.c.b16 %v4980, %v4972
    %v5029 = vpack.c.b16 %v4981, %v4973
    %v5030 = vpack.c.b16 %v4982, %v4974
    %v5031 = vpack.c.b16 %v4983, %v4975
    %v5032 = vpack.c.b16 %v4984, %v4976
    %v5033 = vpack.c.b16 %v4985, %v4977
    %v5034 = vpack.c.b16 %v4986, %v4978
    %v5035 = vpack.c.b16 %v4995, %v4987
    %v5036 = vpack.c.b16 %v4996, %v4988
    %v5037 = vpack.c.b16 %v4997, %v4989
    %v5038 = vpack.c.b16 %v4998, %v4990
    %v5039 = vpack.c.b16 %v4999, %v4991
    %v5040 = vpack.c.b16 %v5000, %v4992
    %v5041 = vpack.c.b16 %v5001, %v4993
    %v5042 = vpack.c.b16 %v5002, %v4994
    %v5043 = vpack.c.b16 %v5011, %v5003
    %v5044 = vpack.c.b16 %v5012, %v5004
    %v5045 = vpack.c.b16 %v5013, %v5005
    %v5046 = vpack.c.b16 %v5014, %v5006
    %v5047 = vpack.c.b16 %v5015, %v5007
    %v5048 = vpack.c.b16 %v5016, %v5008
    %v5049 = vpack.c.b16 %v5017, %v5009
    %v5050 = vpack.c.b16 %v5018, %v5010
    %v5051 = vpack.c.b16 %v5019, %v5019
    %v5052 = vpack.c.b16 %v5020, %v5020
    %v5053 = vpack.c.b16 %v5021, %v5021
    %v5054 = vpack.c.b16 %v5022, %v5022
    %v5055 = vpack.c.b16 %v5023, %v5023
    %v5056 = vpack.c.b16 %v5024, %v5024
    %v5057 = vpack.c.b16 %v5025, %v5025
    %v5058 = vpack.c.b16 %v5026, %v5026
    %v5347 = vunpack.c.l.b16 %v2448
    %v5348 = vunpack.c.h.b16 %v2448
    %v5349 = vunpack.c.l.b16 %v2449
    %v5350 = vunpack.c.l.b16 %v2450
    %v5351 = vunpack.c.h.b16 %v2450
    %v5352 = vunpack.c.l.b16 %v2451
    %v5353 = vunpack.c.l.b16 %v2452
    %v5354 = vunpack.c.h.b16 %v2452
    %v5355 = vunpack.c.l.b16 %v2453
    %v5356 = vunpack.c.l.b16 %v2454
    %v5357 = vunpack.c.h.b16 %v2454
    %v5358 = vunpack.c.l.b16 %v2455
    %v5359 = vunpack.c.l.b16 %v2456
    %v5360 = vunpack.c.h.b16 %v2456
    %v5361 = vunpack.c.l.b16 %v2457
    %v5362 = vunpack.c.l.b16 %v2458
    %v5363 = vunpack.c.h.b16 %v2458
    %v5364 = vunpack.c.l.b16 %v2459
    %v5365 = vunpack.c.l.b16 %v2460
    %v5366 = vunpack.c.h.b16 %v2460
    %v5367 = vunpack.c.l.b16 %v2461
    %v5368 = vunpack.c.l.b16 %v2462
    %v5369 = vunpack.c.h.b16 %v2462
    %v5370 = vunpack.c.l.b16 %v2463
    %v5371 = vunpack.c.l.b16 %v2464
    %v5372 = vunpack.c.h.b16 %v2464
    %v5373 = vunpack.c.l.b16 %v2465
    %v5374 = vunpack.c.l.b16 %v2466
    %v5375 = vunpack.c.h.b16 %v2466
    %v5376 = vunpack.c.l.b16 %v2467
    %v5377 = vunpack.c.l.b16 %v2468
    %v5378 = vunpack.c.h.b16 %v2468
    %v5379 = vunpack.c.l.b16 %v2469
    %v5380 = vunpack.c.l.b16 %v2470
    %v5381 = vunpack.c.h.b16 %v2470
    %v5382 = vunpack.c.l.b16 %v2471
    %v5383 = vunpack.c.l.b16 %v2472
    %v5384 = vunpack.c.h.b16 %v2472
    %v5385 = vunpack.c.l.b16 %v2473
    %v5386 = vunpack.c.l.b16 %v2474
    %v5387 = vunpack.c.h.b16 %v2474
    %v5388 = vunpack.c.l.b16 %v2475
    %v5389 = vunpack.c.l.b16 %v2476
    %v5390 = vunpack.c.h.b16 %v2476
    %v5391 = vunpack.c.l.b16 %v2477
    %v5392 = vunpack.c.l.b16 %v2478
    %v5393 = vunpack.c.h.b16 %v2478
    %v5394 = vunpack.c.l.b16 %v2479
    %v5395 = vunpack.c.l.b16 %v2480
    %v5396 = vunpack.c.h.b16 %v2480
    %v5397 = vunpack.c.l.b16 %v2481
    %v5398 = vunpack.c.l.b16 %v2482
    %v5399 = vunpack.c.h.b16 %v2482
    %v5400 = vunpack.c.l.b16 %v2483
    %v5401 = vunpack.c.l.b16 %v2484
    %v5402 = vunpack.c.h.b16 %v2484
    %v5403 = vunpack.c.l.b16 %v2485
    %v5404 = vunpack.c.l.b16 %v2486
    %v5405 = vunpack.c.h.b16 %v2486
    %v5406 = vunpack.c.l.b16 %v2487
    %v5407 = vunpack.c.l.b16 %v2488
    %v5408 = vunpack.c.h.b16 %v2488
    %v5409 = vunpack.c.l.b16 %v2489
    %v5410 = vunpack.c.l.b16 %v2490
    %v5411 = vunpack.c.h.b16 %v2490
    %v5412 = vunpack.c.l.b16 %v2491
    %v5413 = vunpack.c.l.b16 %v2492
    %v5414 = vunpack.c.h.b16 %v2492
    %v5415 = vunpack.c.l.b16 %v2493
    %v5416 = vunpack.c.l.b16 %v2494
    %v5417 = vunpack.c.h.b16 %v2494
    %v5418 = vunpack.c.l.b16 %v2495
    %v5419 = vunpack.c.l.b16 %v2496
    %v5420 = vunpack.c.h.b16 %v2496
    %v5421 = vunpack.c.l.b16 %v2497
    %v5422 = vunpack.c.l.b16 %v2498
    %v5423 = vunpack.c.h.b16 %v2498
    %v5424 = vunpack.c.l.b16 %v2499
    %v5425 = vunpack.c.l.b16 %v2500
    %v5426 = vunpack.c.h.b16 %v2500
    %v5427 = vunpack.c.l.b16 %v2501
    %v5428 = vunpack.c.l.b16 %v2502
    %v5429 = vunpack.c.h.b16 %v2502
    %v5430 = vunpack.c.l.b16 %v2503
    %v5431 = vunpack.c.l.b16 %v2504
    %v5432 = vunpack.c.h.b16 %v2504
    %v5433 = vunpack.c.l.b16 %v2505
    %v5434 = vunpack.c.l.b16 %v2506
    %v5435 = vunpack.c.h.b16 %v2506
    %v5436 = vunpack.c.l.b16 %v2507
    %v5437 = vunpack.c.l.b16 %v2508
    %v5438 = vunpack.c.h.b16 %v2508
    %v5439 = vunpack.c.l.b16 %v2509
    %v5440 = vunpack.c.l.b16 %v2510
    %v5441 = vunpack.c.h.b16 %v2510
    %v5442 = vunpack.c.l.b16 %v2511
    %v5443 = vunpack.c.l.b16 %v2512
    %v5444 = vunpack.c.h.b16 %v2512
    %v5445 = vunpack.c.l.b16 %v2513
    %v5446 = vunpack.c.l.b16 %v2514
    %v5447 = vunpack.c.h.b16 %v2514
    %v5448 = vunpack.c.l.b16 %v2515
    %v5449 = vunpack.c.l.b16 %v2516
    %v5450 = vunpack.c.h.b16 %v2516
    %v5451 = vunpack.c.l.b16 %v2517
    %v5452 = vunpack.c.l.b16 %v2518
    %v5453 = vunpack.c.h.b16 %v2518
    %v5454 = vunpack.c.l.b16 %v2519
    %v5455 = vunpack.c.l.b16 %v2520
    %v5456 = vunpack.c.h.b16 %v2520
    %v5457 = vunpack.c.l.b16 %v2521
    %v5458 = vunpack.c.l.b16 %v2522
    %v5459 = vunpack.c.h.b16 %v2522
    %v5460 = vunpack.c.l.b16 %v2523
    %v5461 = vunpack.c.l.b16 %v2524
    %v5462 = vunpack.c.h.b16 %v2524
    %v5463 = vunpack.c.l.b16 %v2525
    %v5464 = vunpack.c.l.b16 %v2526
    %v5465 = vunpack.c.h.b16 %v2526
    %v5466 = vunpack.c.l.b16 %v2527
    %v5467 = vunpack.c.l.b16 %v2528
    %v5468 = vunpack.c.h.b16 %v2528
    %v5469 = vunpack.c.l.b16 %v2529
    %v5470 = vunpack.c.l.b16 %v2530
    %v5471 = vunpack.c.h.b16 %v2530
    %v5472 = vunpack.c.l.b16 %v2531
    %v5473 = vunpack.c.l.b16 %v2532
    %v5474 = vunpack.c.h.b16 %v2532
    %v5475 = vunpack.c.l.b16 %v2533
    %v5476 = vunpack.c.l.b16 %v2534
    %v5477 = vunpack.c.h.b16 %v2534
    %v5478 = vunpack.c.l.b16 %v2535
    %v5479 = vunpack.c.l.b16 %v2536
    %v5480 = vunpack.c.h.b16 %v2536
    %v5481 = vunpack.c.l.b16 %v2537
    %v5482 = vunpack.c.l.b16 %v2538
    %v5483 = vunpack.c.h.b16 %v2538
    %v5484 = vunpack.c.l.b16 %v2539
    %v5485 = vunpack.c.l.b16 %v2540
    %v5486 = vunpack.c.h.b16 %v2540
    %v5487 = vunpack.c.l.b16 %v2541
    %v5488 = vunpack.c.l.b16 %v2542
    %v5489 = vunpack.c.h.b16 %v2542
    %v5490 = vunpack.c.l.b16 %v2543
    %v5491 = vunpack.c.l.b16 %v2544
    %v5492 = vunpack.c.h.b16 %v2544
    %v5493 = vunpack.c.l.b16 %v2545
    %v5494 = vunpack.c.l.b16 %v2546
    %v5495 = vunpack.c.h.b16 %v2546
    %v5496 = vunpack.c.l.b16 %v2547
    %v5497 = vunpack.c.l.b16 %v2548
    %v5498 = vunpack.c.h.b16 %v2548
    %v5499 = vunpack.c.l.b16 %v2549
    %v5500 = vunpack.c.l.b16 %v2550
    %v5501 = vunpack.c.h.b16 %v2550
    %v5502 = vunpack.c.l.b16 %v2551
    %v5503 = vunpack.c.l.b16 %v2552
    %v5504 = vunpack.c.h.b16 %v2552
    %v5505 = vunpack.c.l.b16 %v2553
    %v5506 = vunpack.c.l.b16 %v2554
    %v5507 = vunpack.c.h.b16 %v2554
    %v5508 = vunpack.c.l.b16 %v2555
    %v5509 = vunpack.c.l.b16 %v2556
    %v5510 = vunpack.c.h.b16 %v2556
    %v5511 = vunpack.c.l.b16 %v2557
    %v5512 = vunpack.c.l.b16 %v2558
    %v5513 = vunpack.c.h.b16 %v2558
    %v5514 = vunpack.c.l.b16 %v2559
    %v5515 = vunpack.c.l.b16 %v2560
    %v5516 = vunpack.c.h.b16 %v2560
    %v5517 = vunpack.c.l.b16 %v2561
    %v5518 = vunpack.c.l.b16 %v2562
    %v5519 = vunpack.c.h.b16 %v2562
    %v5520 = vunpack.c.l.b16 %v2563
    %v5521 = vunpack.c.l.b16 %v2564
    %v5522 = vunpack.c.h.b16 %v2564
    %v5523 = vunpack.c.l.b16 %v2565
    %v5524 = vunpack.c.l.b16 %v2566
    %v5525 = vunpack.c.h.b16 %v2566
    %v5526 = vunpack.c.l.b16 %v2567
    %v5527 = vunpack.c.l.b16 %v2568
    %v5528 = vunpack.c.h.b16 %v2568
    %v5529 = vunpack.c.l.b16 %v2569
    %v5530 = vunpack.c.l.b16 %v2570
    %v5531 = vunpack.c.h.b16 %v2570
    %v5532 = vunpack.c.l.b16 %v2571
    %v5533 = vunpack.c.l.b16 %v2572
    %v5534 = vunpack.c.h.b16 %v2572
    %v5535 = vunpack.c.l.b16 %v2573
    %v5536 = vunpack.c.l.b16 %v2574
    %v5537 = vunpack.c.h.b16 %v2574
    %v5538 = vunpack.c.l.b16 %v2575
    %v5539 = vunpack.c.l.b16 %v2576
    %v5540 = vunpack.c.h.b16 %v2576
    %v5541 = vunpack.c.l.b16 %v2577
    %v5542 = vunpack.c.l.b16 %v2578
    %v5543 = vunpack.c.h.b16 %v2578
    %v5544 = vunpack.c.l.b16 %v2579
    %v5545 = vunpack.c.l.b16 %v2580
    %v5546 = vunpack.c.h.b16 %v2580
    %v5547 = vunpack.c.l.b16 %v2581
    %v5548 = vunpack.c.l.b16 %v2582
    %v5549 = vunpack.c.h.b16 %v2582
    %v5550 = vunpack.c.l.b16 %v2583
    %v5551 = vunpack.c.l.b16 %v2584
    %v5552 = vunpack.c.h.b16 %v2584
    %v5553 = vunpack.c.l.b16 %v2585
    %v5554 = vunpack.c.l.b16 %v2586
    %v5555 = vunpack.c.h.b16 %v2586
    %v5556 = vunpack.c.l.b16 %v2587
    %v5557 = vunpack.c.l.b16 %v2588
    %v5558 = vunpack.c.h.b16 %v2588
    %v5559 = vunpack.c.l.b16 %v2589
    %v5560 = vunpack.c.l.b16 %v2590
    %v5561 = vunpack.c.h.b16 %v2590
    %v5562 = vunpack.c.l.b16 %v2591
    %v5563 = vunpack.c.l.b16 %v2592
    %v5564 = vunpack.c.h.b16 %v2592
    %v5565 = vunpack.c.l.b16 %v2593
    %v5566 = vunpack.c.l.b16 %v2594
    %v5567 = vunpack.c.h.b16 %v2594
    %v5568 = vunpack.c.l.b16 %v2595
    %v5569 = vunpack.c.l.b16 %v2596
    %v5570 = vunpack.c.h.b16 %v2596
    %v5571 = vunpack.c.l.b16 %v2597
    %v5572 = vunpack.c.l.b16 %v2598
    %v5573 = vunpack.c.h.b16 %v2598
    %v5574 = vunpack.c.l.b16 %v2599
    %v5575 = vunpack.c.l.b16 %v2600
    %v5576 = vunpack.c.h.b16 %v2600
    %v5577 = vunpack.c.l.b16 %v2601
    %v5578 = vunpack.c.l.b16 %v2602
    %v5579 = vunpack.c.h.b16 %v2602
    %v5580 = vunpack.c.l.b16 %v2603
    %v5581 = vunpack.c.l.b16 %v2604
    %v5582 = vunpack.c.h.b16 %v2604
    %v5583 = vunpack.c.l.b16 %v2605
    %v5584 = vunpack.c.l.b16 %v2606
    %v5585 = vunpack.c.h.b16 %v2606
    %v5586 = vunpack.c.l.b16 %v2607
    %v5587 = vunpack.c.l.b16 %v2608
    %v5588 = vunpack.c.h.b16 %v2608
    %v5589 = vunpack.c.l.b16 %v2609
    %v5590 = vunpack.c.l.b16 %v2610
    %v5591 = vunpack.c.h.b16 %v2610
    %v5592 = vunpack.c.l.b16 %v2611
    %v5593 = vunpack.c.l.b16 %v2612
    %v5594 = vunpack.c.h.b16 %v2612
    %v5595 = vunpack.c.l.b16 %v2613
    %v5596 = vunpack.c.l.b16 %v2614
    %v5597 = vunpack.c.h.b16 %v2614
    %v5598 = vunpack.c.l.b16 %v2615
    %v5599 = vunpack.c.l.b16 %v2616
    %v5600 = vunpack.c.h.b16 %v2616
    %v5601 = vunpack.c.l.b16 %v2617
    %v5602 = vunpack.c.l.b16 %v2618
    %v5603 = vunpack.c.h.b16 %v2618
    %v5604 = vunpack.c.l.b16 %v2619
    %v5605 = vunpack.c.l.b16 %v2620
    %v5606 = vunpack.c.h.b16 %v2620
    %v5607 = vunpack.c.l.b16 %v2621
    %v5608 = vunpack.c.l.b16 %v2622
    %v5609 = vunpack.c.h.b16 %v2622
    %v5610 = vunpack.c.l.b16 %v2623
    %v5611 = vunpack.c.l.b16 %v2624
    %v5612 = vunpack.c.h.b16 %v2624
    %v5613 = vunpack.c.l.b16 %v2625
    %v5614 = vunpack.c.l.b16 %v2626
    %v5615 = vunpack.c.h.b16 %v2626
    %v5616 = vunpack.c.l.b16 %v2627
    %v5617 = vunpack.c.l.b16 %v2628
    %v5618 = vunpack.c.h.b16 %v2628
    %v5619 = vunpack.c.l.b16 %v2629
    %v5620 = vunpack.c.l.b16 %v2630
    %v5621 = vunpack.c.h.b16 %v2630
    %v5622 = vunpack.c.l.b16 %v2631
    %v5623 = vunpack.c.l.b16 %v2632
    %v5624 = vunpack.c.h.b16 %v2632
    %v5625 = vunpack.c.l.b16 %v2633
    %v5626 = vunpack.c.l.b16 %v2634
    %v5627 = vunpack.c.h.b16 %v2634
    %v5628 = vunpack.c.l.b16 %v2635
    %v5629 = vunpack.c.l.b16 %v2636
    %v5630 = vunpack.c.h.b16 %v2636
    %v5631 = vunpack.c.l.b16 %v2637
    %v5632 = vunpack.c.l.b16 %v2638
    %v5633 = vunpack.c.h.b16 %v2638
    %v5634 = vunpack.c.l.b16 %v2639
    %v5635 = vunpack.c.l.b16 %v2640
    %v5636 = vunpack.c.h.b16 %v2640
    %v5637 = vunpack.c.l.b16 %v2641
    %v5638 = vunpack.c.l.b16 %v2642
    %v5639 = vunpack.c.h.b16 %v2642
    %v5640 = vunpack.c.l.b16 %v2643
    %v5641 = vunpack.c.l.b16 %v2644
    %v5642 = vunpack.c.h.b16 %v2644
    %v5643 = vunpack.c.l.b16 %v2645
    %v5644 = vunpack.c.l.b16 %v2646
    %v5645 = vunpack.c.h.b16 %v2646
    %v5646 = vunpack.c.l.b16 %v2647
    %v5647 = vunpack.c.l.b16 %v2648
    %v5648 = vunpack.c.h.b16 %v2648
    %v5649 = vunpack.c.l.b16 %v2649
    %v5650 = vunpack.c.l.b16 %v2650
    %v5651 = vunpack.c.h.b16 %v2650
    %v5652 = vunpack.c.l.b16 %v2651
    %v5653 = vunpack.c.l.b16 %v2652
    %v5654 = vunpack.c.h.b16 %v2652
    %v5655 = vunpack.c.l.b16 %v2653
    %v5656 = vunpack.c.l.b16 %v2654
    %v5657 = vunpack.c.h.b16 %v2654
    %v5658 = vunpack.c.l.b16 %v2655
    %v5659 = vunpack.c.l.b16 %v2656
    %v5660 = vunpack.c.h.b16 %v2656
    %v5661 = vunpack.c.l.b16 %v2657
    %v5662 = vunpack.c.l.b16 %v2658
    %v5663 = vunpack.c.h.b16 %v2658
    %v5664 = vunpack.c.l.b16 %v2659
    %v5665 = vunpack.c.l.b16 %v2660
    %v5666 = vunpack.c.h.b16 %v2660
    %v5667 = vunpack.c.l.b16 %v2661
    %v5668 = vunpack.c.l.b16 %v2662
    %v5669 = vunpack.c.h.b16 %v2662
    %v5670 = vunpack.c.l.b16 %v2663
    %v5671 = vunpack.c.l.b16 %v2664
    %v5672 = vunpack.c.h.b16 %v2664
    %v5673 = vunpack.c.l.b16 %v2665
    %v5674 = vunpack.c.l.b16 %v2666
    %v5675 = vunpack.c.h.b16 %v2666
    %v5676 = vunpack.c.l.b16 %v2667
    %v5677 = vunpack.c.l.b16 %v2668
    %v5678 = vunpack.c.h.b16 %v2668
    %v5679 = vunpack.c.l.b16 %v2669
    %v5680 = vunpack.c.l.b16 %v2670
    %v5681 = vunpack.c.h.b16 %v2670
    %v5682 = vunpack.c.l.b16 %v2671
    %v5683 = vunpack.c.l.b16 %v2672
    %v5684 = vunpack.c.h.b16 %v2672
    %v5685 = vunpack.c.l.b16 %v2673
    %v5686 = vunpack.c.l.b16 %v2674
    %v5687 = vunpack.c.h.b16 %v2674
    %v5688 = vunpack.c.l.b16 %v2675
    %v5689 = vunpack.c.l.b16 %v2676
    %v5690 = vunpack.c.h.b16 %v2676
    %v5691 = vunpack.c.l.b16 %v2677
    %v5692 = vunpack.c.l.b16 %v2678
    %v5693 = vunpack.c.h.b16 %v2678
    %v5694 = vunpack.c.l.b16 %v2679
    %v5695 = vunpack.c.l.b16 %v2680
    %v5696 = vunpack.c.h.b16 %v2680
    %v5697 = vunpack.c.l.b16 %v2681
    %v5698 = vunpack.c.l.b16 %v2682
    %v5699 = vunpack.c.h.b16 %v2682
    %v5700 = vunpack.c.l.b16 %v2683
    %v5701 = vunpack.c.l.b16 %v2684
    %v5702 = vunpack.c.h.b16 %v2684
    %v5703 = vunpack.c.l.b16 %v2685
    %v5704 = vunpack.c.l.b16 %v2686
    %v5705 = vunpack.c.h.b16 %v2686
    %v5706 = vunpack.c.l.b16 %v2687
    %v5707 = vunpack.c.l.b16 %v2688
    %v5708 = vunpack.c.h.b16 %v2688
    %v5709 = vunpack.c.l.b16 %v2689
    %v5710 = vunpack.c.l.b16 %v2690
    %v5711 = vunpack.c.h.b16 %v2690
    %v5712 = vunpack.c.l.b16 %v2691
    %v5713 = vunpack.c.l.b16 %v2692
    %v5714 = vunpack.c.h.b16 %v2692
    %v5715 = vunpack.c.l.b16 %v2693
    %v5716 = vunpack.c.l.b16 %v2694
    %v5717 = vunpack.c.h.b16 %v2694
    %v5718 = vunpack.c.l.b16 %v2695
    %v5719 = vunpack.c.l.b16 %v2696
    %v5720 = vunpack.c.h.b16 %v2696
    %v5721 = vunpack.c.l.b16 %v2697
    %v5722 = vunpack.c.l.b16 %v2698
    %v5723 = vunpack.c.h.b16 %v2698
    %v5724 = vunpack.c.l.b16 %v2699
    %v5725 = vunpack.c.l.b16 %v2700
    %v5726 = vunpack.c.h.b16 %v2700
    %v5727 = vunpack.c.l.b16 %v2701
    %v5728 = vunpack.c.l.b16 %v2702
    %v5729 = vunpack.c.h.b16 %v2702
    %v5730 = vunpack.c.l.b16 %v2703
    %v5731 = vpack.c.b16 %v5350, %v5347
    %v5732 = vpack.c.b16 %v5351, %v5348
    %v5733 = vpack.c.b16 %v5352, %v5349
    %v5734 = vpack.c.b16 %v5356, %v5353
    %v5735 = vpack.c.b16 %v5357, %v5354
    %v5736 = vpack.c.b16 %v5358, %v5355
    %v5737 = vpack.c.b16 %v5362, %v5359
    %v5738 = vpack.c.b16 %v5363, %v5360
    %v5739 = vpack.c.b16 %v5364, %v5361
    %v5740 = vpack.c.b16 %v5368, %v5365
    %v5741 = vpack.c.b16 %v5369, %v5366
    %v5742 = vpack.c.b16 %v5370, %v5367
    %v5743 = vpack.c.b16 %v5374, %v5371
    %v5744 = vpack.c.b16 %v5375, %v5372
    %v5745 = vpack.c.b16 %v5376, %v5373
    %v5746 = vpack.c.b16 %v5380, %v5377
    %v5747 = vpack.c.b16 %v5381, %v5378
    %v5748 = vpack.c.b16 %v5382, %v5379
    %v5749 = vpack.c.b16 %v5386, %v5383
    %v5750 = vpack.c.b16 %v5387, %v5384
    %v5751 = vpack.c.b16 %v5388, %v5385
    %v5752 = vpack.c.b16 %v5392, %v5389
    %v5753 = vpack.c.b16 %v5393, %v5390
    %v5754 = vpack.c.b16 %v5394, %v5391
    %v5755 = vpack.c.b16 %v5398, %v5395
    %v5756 = vpack.c.b16 %v5399, %v5396
    %v5757 = vpack.c.b16 %v5400, %v5397
    %v5758 = vpack.c.b16 %v5404, %v5401
    %v5759 = vpack.c.b16 %v5405, %v5402
    %v5760 = vpack.c.b16 %v5406, %v5403
    %v5761 = vpack.c.b16 %v5410, %v5407
    %v5762 = vpack.c.b16 %v5411, %v5408
    %v5763 = vpack.c.b16 %v5412, %v5409
    %v5764 = vpack.c.b16 %v5416, %v5413
    %v5765 = vpack.c.b16 %v5417, %v5414
    %v5766 = vpack.c.b16 %v5418, %v5415
    %v5767 = vpack.c.b16 %v5422, %v5419
    %v5768 = vpack.c.b16 %v5423, %v5420
    %v5769 = vpack.c.b16 %v5424, %v5421
    %v5770 = vpack.c.b16 %v5428, %v5425
    %v5771 = vpack.c.b16 %v5429, %v5426
    %v5772 = vpack.c.b16 %v5430, %v5427
    %v5773 = vpack.c.b16 %v5434, %v5431
    %v5774 = vpack.c.b16 %v5435, %v5432
    %v5775 = vpack.c.b16 %v5436, %v5433
    %v5776 = vpack.c.b16 %v5440, %v5437
    %v5777 = vpack.c.b16 %v5441, %v5438
    %v5778 = vpack.c.b16 %v5442, %v5439
    %v5779 = vpack.c.b16 %v5446, %v5443
    %v5780 = vpack.c.b16 %v5447, %v5444
    %v5781 = vpack.c.b16 %v5448, %v5445
    %v5782 = vpack.c.b16 %v5452, %v5449
    %v5783 = vpack.c.b16 %v5453, %v5450
    %v5784 = vpack.c.b16 %v5454, %v5451
    %v5785 = vpack.c.b16 %v5458, %v5455
    %v5786 = vpack.c.b16 %v5459, %v5456
    %v5787 = vpack.c.b16 %v5460, %v5457
    %v5788 = vpack.c.b16 %v5464, %v5461
    %v5789 = vpack.c.b16 %v5465, %v5462
    %v5790 = vpack.c.b16 %v5466, %v5463
    %v5791 = vpack.c.b16 %v5470, %v5467
    %v5792 = vpack.c.b16 %v5471, %v5468
    %v5793 = vpack.c.b16 %v5472, %v5469
    %v5794 = vpack.c.b16 %v5476, %v5473
    %v5795 = vpack.c.b16 %v5477, %v5474
    %v5796 = vpack.c.b16 %v5478, %v5475
    %v5797 = vpack.c.b16 %v5482, %v5479
    %v5798 = vpack.c.b16 %v5483, %v5480
    %v5799 = vpack.c.b16 %v5484, %v5481
    %v5800 = vpack.c.b16 %v5488, %v5485
    %v5801 = vpack.c.b16 %v5489, %v5486
    %v5802 = vpack.c.b16 %v5490, %v5487
    %v5803 = vpack.c.b16 %v5494, %v5491
    %v5804 = vpack.c.b16 %v5495, %v5492
    %v5805 = vpack.c.b16 %v5496, %v5493
    %v5806 = vpack.c.b16 %v5500, %v5497
    %v5807 = vpack.c.b16 %v5501, %v5498
    %v5808 = vpack.c.b16 %v5502, %v5499
    %v5809 = vpack.c.b16 %v5506, %v5503
    %v5810 = vpack.c.b16 %v5507, %v5504
    %v5811 = vpack.c.b16 %v5508, %v5505
    %v5812 = vpack.c.b16 %v5512, %v5509
    %v5813 = vpack.c.b16 %v5513, %v5510
    %v5814 = vpack.c.b16 %v5514, %v5511
    %v5815 = vpack.c.b16 %v5518, %v5515
    %v5816 = vpack.c.b16 %v5519, %v5516
    %v5817 = vpack.c.b16 %v5520, %v5517
    %v5818 = vpack.c.b16 %v5524, %v5521
    %v5819 = vpack.c.b16 %v5525, %v5522
    %v5820 = vpack.c.b16 %v5526, %v5523
    %v5821 = vpack.c.b16 %v5530, %v5527
    %v5822 = vpack.c.b16 %v5531, %v5528
    %v5823 = vpack.c.b16 %v5532, %v5529
    %v5824 = vpack.c.b16 %v5536, %v5533
    %v5825 = vpack.c.b16 %v5537, %v5534
    %v5826 = vpack.c.b16 %v5538, %v5535
    %v5827 = vpack.c.b16 %v5542, %v5539
    %v5828 = vpack.c.b16 %v5543, %v5540
    %v5829 = vpack.c.b16 %v5544, %v5541
    %v5830 = vpack.c.b16 %v5548, %v5545
    %v5831 = vpack.c.b16 %v5549, %v5546
    %v5832 = vpack.c.b16 %v5550, %v5547
    %v5833 = vpack.c.b16 %v5554, %v5551
    %v5834 = vpack.c.b16 %v5555, %v5552
    %v5835 = vpack.c.b16 %v5556, %v5553
    %v5836 = vpack.c.b16 %v5560, %v5557
    %v5837 = vpack.c.b16 %v5561, %v5558
    %v5838 = vpack.c.b16 %v5562, %v5559
    %v5839 = vpack.c.b16 %v5566, %v5563
    %v5840 = vpack.c.b16 %v5567, %v5564
    %v5841 = vpack.c.b16 %v5568, %v5565
    %v5842 = vpack.c.b16 %v5572, %v5569
    %v5843 = vpack.c.b16 %v5573, %v5570
    %v5844 = vpack.c.b16 %v5574, %v5571
    %v5845 = vpack.c.b16 %v5578, %v5575
    %v5846 = vpack.c.b16 %v5579, %v5576
    %v5847 = vpack.c.b16 %v5580, %v5577
    %v5848 = vpack.c.b16 %v5584, %v5581
    %v5849 = vpack.c.b16 %v5585, %v5582
    %v5850 = vpack.c.b16 %v5586, %v5583
    %v5851 = vpack.c.b16 %v5590, %v5587
    %v5852 = vpack.c.b16 %v5591, %v5588
    %v5853 = vpack.c.b16 %v5592, %v5589
    %v5854 = vpack.c.b16 %v5596, %v5593
    %v5855 = vpack.c.b16 %v5597, %v5594
    %v5856 = vpack.c.b16 %v5598, %v5595
    %v5857 = vpack.c.b16 %v5602, %v5599
    %v5858 = vpack.c.b16 %v5603, %v5600
    %v5859 = vpack.c.b16 %v5604, %v5601
    %v5860 = vpack.c.b16 %v5608, %v5605
    %v5861 = vpack.c.b16 %v5609, %v5606
    %v5862 = vpack.c.b16 %v5610, %v5607
    %v5863 = vpack.c.b16 %v5614, %v5611
    %v5864 = vpack.c.b16 %v5615, %v5612
    %v5865 = vpack.c.b16 %v5616, %v5613
    %v5866 = vpack.c.b16 %v5620, %v5617
    %v5867 = vpack.c.b16 %v5621, %v5618
    %v5868 = vpack.c.b16 %v5622, %v5619
    %v5869 = vpack.c.b16 %v5626, %v5623
    %v5870 = vpack.c.b16 %v5627, %v5624
    %v5871 = vpack.c.b16 %v5628, %v5625
    %v5872 = vpack.c.b16 %v5632, %v5629
    %v5873 = vpack.c.b16 %v5633, %v5630
    %v5874 = vpack.c.b16 %v5634, %v5631
    %v5875 = vpack.c.b16 %v5638, %v5635
    %v5876 = vpack.c.b16 %v5639, %v5636
    %v5877 = vpack.c.b16 %v5640, %v5637
    %v5878 = vpack.c.b16 %v5644, %v5641
    %v5879 = vpack.c.b16 %v5645, %v5642
    %v5880 = vpack.c.b16 %v5646, %v5643
    %v5881 = vpack.c.b16 %v5650, %v5647
    %v5882 = vpack.c.b16 %v5651, %v5648
    %v5883 = vpack.c.b16 %v5652, %v5649
    %v5884 = vpack.c.b16 %v5656, %v5653
    %v5885 = vpack.c.b16 %v5657, %v5654
    %v5886 = vpack.c.b16 %v5658, %v5655
    %v5887 = vpack.c.b16 %v5662, %v5659
    %v5888 = vpack.c.b16 %v5663, %v5660
    %v5889 = vpack.c.b16 %v5664, %v5661
    %v5890 = vpack.c.b16 %v5668, %v5665
    %v5891 = vpack.c.b16 %v5669, %v5666
    %v5892 = vpack.c.b16 %v5670, %v5667
    %v5893 = vpack.c.b16 %v5674, %v5671
    %v5894 = vpack.c.b16 %v5675, %v5672
    %v5895 = vpack.c.b16 %v5676, %v5673
    %v5896 = vpack.c.b16 %v5680, %v5677
    %v5897 = vpack.c.b16 %v5681, %v5678
    %v5898 = vpack.c.b16 %v5682, %v5679
    %v5899 = vpack.c.b16 %v5686, %v5683
    %v5900 = vpack.c.b16 %v5687, %v5684
    %v5901 = vpack.c.b16 %v5688, %v5685
    %v5902 = vpack.c.b16 %v5692, %v5689
    %v5903 = vpack.c.b16 %v5693, %v5690
    %v5904 = vpack.c.b16 %v5694, %v5691
    %v5905 = vpack.c.b16 %v5698, %v5695
    %v5906 = vpack.c.b16 %v5699, %v5696
    %v5907 = vpack.c.b16 %v5700, %v5697
    %v5908 = vpack.c.b16 %v5704, %v5701
    %v5909 = vpack.c.b16 %v5705, %v5702
    %v5910 = vpack.c.b16 %v5706, %v5703
    %v5911 = vpack.c.b16 %v5710, %v5707
    %v5912 = vpack.c.b16 %v5711, %v5708
    %v5913 = vpack.c.b16 %v5712, %v5709
    %v5914 = vpack.c.b16 %v5716, %v5713
    %v5915 = vpack.c.b16 %v5717, %v5714
    %v5916 = vpack.c.b16 %v5718, %v5715
    %v5917 = vpack.c.b16 %v5722, %v5719
    %v5918 = vpack.c.b16 %v5723, %v5720
    %v5919 = vpack.c.b16 %v5724, %v5721
    %v5920 = vpack.c.b16 %v5728, %v5725
    %v5921 = vpack.c.b16 %v5729, %v5726
    %v5922 = vpack.c.b16 %v5730, %v5727
    %6115 = vmatpush.bf16.msra.mxu0 %v5752
    %6116 = vmatpush.bf16.msra.mxu0 %v5749
    %6117 = vmatpush.bf16.msra.mxu0 %v5746
    %6118 = vmatpush.bf16.msra.mxu0 %v5743
    %6119 = vmatpush.bf16.msra.mxu0 %v5740
    %6120 = vmatpush.bf16.msra.mxu0 %v5737
    %6121 = vmatpush.bf16.msra.mxu0 %v5734
    %6122 = vmatpush.bf16.msra.mxu0 %v5731
    %6123 = vmatmul.bf16.gmra.mxu0 %v5027
    %v6124 = vpop.f32.mrf.mxu0
    %v6125 = vadd.f32 %v4421, %v6124
    %v6126 = vpop.f32.mrf.mxu0
    %v6127 = vadd.f32 %v4423, %v6126
    %6128 = vmatmul.bf16.gmra.mxu0 %v5035
    %v6129 = vpop.f32.mrf.mxu0
    %v6130 = vadd.f32 %v4426, %v6129
    %v6131 = vpop.f32.mrf.mxu0
    %v6132 = vadd.f32 %v4428, %v6131
    %6133 = vmatmul.bf16.gmra.mxu0 %v5043
    %v6134 = vpop.f32.mrf.mxu0
    %v6135 = vadd.f32 %v4431, %v6134
    %v6136 = vpop.f32.mrf.mxu0
    %v6137 = vadd.f32 %v4433, %v6136
    %6138 = vmatmul.bf16.gmra.mxu0 %v5051
    %v6139 = vpop.f32.mrf.mxu0
    %v6140 = vadd.f32 %v4436, %v6139
    %v6141 = vpop.f32.mrf.mxu0
    %6142 = vdwg.mxu0
    %6143 = vmatpush.bf16.msra.mxu0 %v5776
    %6144 = vmatpush.bf16.msra.mxu0 %v5773
    %6145 = vmatpush.bf16.msra.mxu0 %v5770
    %6146 = vmatpush.bf16.msra.mxu0 %v5767
    %6147 = vmatpush.bf16.msra.mxu0 %v5764
    %6148 = vmatpush.bf16.msra.mxu0 %v5761
    %6149 = vmatpush.bf16.msra.mxu0 %v5758
    %6150 = vmatpush.bf16.msra.mxu0 %v5755
    %6151 = vmatmul.bf16.gmra.mxu0 %v5028
    %v6152 = vpop.f32.mrf.mxu0
    %v6153 = vadd.f32 %v6125, %v6152
    %v6154 = vpop.f32.mrf.mxu0
    %v6155 = vadd.f32 %v6127, %v6154
    %6156 = vmatmul.bf16.gmra.mxu0 %v5036
    %v6157 = vpop.f32.mrf.mxu0
    %v6158 = vadd.f32 %v6130, %v6157
    %v6159 = vpop.f32.mrf.mxu0
    %v6160 = vadd.f32 %v6132, %v6159
    %6161 = vmatmul.bf16.gmra.mxu0 %v5044
    %v6162 = vpop.f32.mrf.mxu0
    %v6163 = vadd.f32 %v6135, %v6162
    %v6164 = vpop.f32.mrf.mxu0
    %v6165 = vadd.f32 %v6137, %v6164
    %6166 = vmatmul.bf16.gmra.mxu0 %v5052
    %v6167 = vpop.f32.mrf.mxu0
    %v6168 = vadd.f32 %v6140, %v6167
    %v6169 = vpop.f32.mrf.mxu0
    %6170 = vdwg.mxu0
    %6171 = vmatpush.bf16.msra.mxu0 %v5800
    %6172 = vmatpush.bf16.msra.mxu0 %v5797
    %6173 = vmatpush.bf16.msra.mxu0 %v5794
    %6174 = vmatpush.bf16.msra.mxu0 %v5791
    %6175 = vmatpush.bf16.msra.mxu0 %v5788
    %6176 = vmatpush.bf16.msra.mxu0 %v5785
    %6177 = vmatpush.bf16.msra.mxu0 %v5782
    %6178 = vmatpush.bf16.msra.mxu0 %v5779
    %6179 = vmatmul.bf16.gmra.mxu0 %v5029
    %v6180 = vpop.f32.mrf.mxu0
    %v6181 = vadd.f32 %v6153, %v6180
    %v6182 = vpop.f32.mrf.mxu0
    %v6183 = vadd.f32 %v6155, %v6182
    %6184 = vmatmul.bf16.gmra.mxu0 %v5037
    %v6185 = vpop.f32.mrf.mxu0
    %v6186 = vadd.f32 %v6158, %v6185
    %v6187 = vpop.f32.mrf.mxu0
    %v6188 = vadd.f32 %v6160, %v6187
    %6189 = vmatmul.bf16.gmra.mxu0 %v5045
    %v6190 = vpop.f32.mrf.mxu0
    %v6191 = vadd.f32 %v6163, %v6190
    %v6192 = vpop.f32.mrf.mxu0
    %v6193 = vadd.f32 %v6165, %v6192
    %6194 = vmatmul.bf16.gmra.mxu0 %v5053
    %v6195 = vpop.f32.mrf.mxu0
    %v6196 = vadd.f32 %v6168, %v6195
    %v6197 = vpop.f32.mrf.mxu0
    %6198 = vdwg.mxu0
    %6199 = vmatpush.bf16.msra.mxu0 %v5824
    %6200 = vmatpush.bf16.msra.mxu0 %v5821
    %6201 = vmatpush.bf16.msra.mxu0 %v5818
    %6202 = vmatpush.bf16.msra.mxu0 %v5815
    %6203 = vmatpush.bf16.msra.mxu0 %v5812
    %6204 = vmatpush.bf16.msra.mxu0 %v5809
    %6205 = vmatpush.bf16.msra.mxu0 %v5806
    %6206 = vmatpush.bf16.msra.mxu0 %v5803
    %6207 = vmatmul.bf16.gmra.mxu0 %v5030
    %v6208 = vpop.f32.mrf.mxu0
    %v6209 = vadd.f32 %v6181, %v6208
    %v6210 = vpop.f32.mrf.mxu0
    %v6211 = vadd.f32 %v6183, %v6210
    %6212 = vmatmul.bf16.gmra.mxu0 %v5038
    %v6213 = vpop.f32.mrf.mxu0
    %v6214 = vadd.f32 %v6186, %v6213
    %v6215 = vpop.f32.mrf.mxu0
    %v6216 = vadd.f32 %v6188, %v6215
    %6217 = vmatmul.bf16.gmra.mxu0 %v5046
    %v6218 = vpop.f32.mrf.mxu0
    %v6219 = vadd.f32 %v6191, %v6218
    %v6220 = vpop.f32.mrf.mxu0
    %v6221 = vadd.f32 %v6193, %v6220
    %6222 = vmatmul.bf16.gmra.mxu0 %v5054
    %v6223 = vpop.f32.mrf.mxu0
    %v6224 = vadd.f32 %v6196, %v6223
    %v6225 = vpop.f32.mrf.mxu0
    %6226 = vdwg.mxu0
    %6227 = vmatpush.bf16.msra.mxu0 %v5848
    %6228 = vmatpush.bf16.msra.mxu0 %v5845
    %6229 = vmatpush.bf16.msra.mxu0 %v5842
    %6230 = vmatpush.bf16.msra.mxu0 %v5839
    %6231 = vmatpush.bf16.msra.mxu0 %v5836
    %6232 = vmatpush.bf16.msra.mxu0 %v5833
    %6233 = vmatpush.bf16.msra.mxu0 %v5830
    %6234 = vmatpush.bf16.msra.mxu0 %v5827
    %6235 = vmatmul.bf16.gmra.mxu0 %v5031
    %v6236 = vpop.f32.mrf.mxu0
    %v6237 = vadd.f32 %v6209, %v6236
    %v6238 = vpop.f32.mrf.mxu0
    %v6239 = vadd.f32 %v6211, %v6238
    %6240 = vmatmul.bf16.gmra.mxu0 %v5039
    %v6241 = vpop.f32.mrf.mxu0
    %v6242 = vadd.f32 %v6214, %v6241
    %v6243 = vpop.f32.mrf.mxu0
    %v6244 = vadd.f32 %v6216, %v6243
    %6245 = vmatmul.bf16.gmra.mxu0 %v5047
    %v6246 = vpop.f32.mrf.mxu0
    %v6247 = vadd.f32 %v6219, %v6246
    %v6248 = vpop.f32.mrf.mxu0
    %v6249 = vadd.f32 %v6221, %v6248
    %6250 = vmatmul.bf16.gmra.mxu0 %v5055
    %v6251 = vpop.f32.mrf.mxu0
    %v6252 = vadd.f32 %v6224, %v6251
    %v6253 = vpop.f32.mrf.mxu0
    %6254 = vdwg.mxu0
    %6255 = vmatpush.bf16.msra.mxu0 %v5872
    %6256 = vmatpush.bf16.msra.mxu0 %v5869
    %6257 = vmatpush.bf16.msra.mxu0 %v5866
    %6258 = vmatpush.bf16.msra.mxu0 %v5863
    %6259 = vmatpush.bf16.msra.mxu0 %v5860
    %6260 = vmatpush.bf16.msra.mxu0 %v5857
    %6261 = vmatpush.bf16.msra.mxu0 %v5854
    %6262 = vmatpush.bf16.msra.mxu0 %v5851
    %6263 = vmatmul.bf16.gmra.mxu0 %v5032
    %v6264 = vpop.f32.mrf.mxu0
    %v6265 = vadd.f32 %v6237, %v6264
    %v6266 = vpop.f32.mrf.mxu0
    %v6267 = vadd.f32 %v6239, %v6266
    %6268 = vmatmul.bf16.gmra.mxu0 %v5040
    %v6269 = vpop.f32.mrf.mxu0
    %v6270 = vadd.f32 %v6242, %v6269
    %v6271 = vpop.f32.mrf.mxu0
    %v6272 = vadd.f32 %v6244, %v6271
    %6273 = vmatmul.bf16.gmra.mxu0 %v5048
    %v6274 = vpop.f32.mrf.mxu0
    %v6275 = vadd.f32 %v6247, %v6274
    %v6276 = vpop.f32.mrf.mxu0
    %v6277 = vadd.f32 %v6249, %v6276
    %6278 = vmatmul.bf16.gmra.mxu0 %v5056
    %v6279 = vpop.f32.mrf.mxu0
    %v6280 = vadd.f32 %v6252, %v6279
    %v6281 = vpop.f32.mrf.mxu0
    %6282 = vdwg.mxu0
    %6283 = vmatpush.bf16.msra.mxu0 %v5896
    %6284 = vmatpush.bf16.msra.mxu0 %v5893
    %6285 = vmatpush.bf16.msra.mxu0 %v5890
    %6286 = vmatpush.bf16.msra.mxu0 %v5887
    %6287 = vmatpush.bf16.msra.mxu0 %v5884
    %6288 = vmatpush.bf16.msra.mxu0 %v5881
    %6289 = vmatpush.bf16.msra.mxu0 %v5878
    %6290 = vmatpush.bf16.msra.mxu0 %v5875
    %6291 = vmatmul.bf16.gmra.mxu0 %v5033
    %v6292 = vpop.f32.mrf.mxu0
    %v6293 = vadd.f32 %v6265, %v6292
    %v6294 = vpop.f32.mrf.mxu0
    %v6295 = vadd.f32 %v6267, %v6294
    %6296 = vmatmul.bf16.gmra.mxu0 %v5041
    %v6297 = vpop.f32.mrf.mxu0
    %v6298 = vadd.f32 %v6270, %v6297
    %v6299 = vpop.f32.mrf.mxu0
    %v6300 = vadd.f32 %v6272, %v6299
    %6301 = vmatmul.bf16.gmra.mxu0 %v5049
    %v6302 = vpop.f32.mrf.mxu0
    %v6303 = vadd.f32 %v6275, %v6302
    %v6304 = vpop.f32.mrf.mxu0
    %v6305 = vadd.f32 %v6277, %v6304
    %6306 = vmatmul.bf16.gmra.mxu0 %v5057
    %v6307 = vpop.f32.mrf.mxu0
    %v6308 = vadd.f32 %v6280, %v6307
    %v6309 = vpop.f32.mrf.mxu0
    %6310 = vdwg.mxu0
    %6311 = vmatpush.bf16.msra.mxu0 %v5920
    %6312 = vmatpush.bf16.msra.mxu0 %v5917
    %6313 = vmatpush.bf16.msra.mxu0 %v5914
    %6314 = vmatpush.bf16.msra.mxu0 %v5911
    %6315 = vmatpush.bf16.msra.mxu0 %v5908
    %6316 = vmatpush.bf16.msra.mxu0 %v5905
    %6317 = vmatpush.bf16.msra.mxu0 %v5902
    %6318 = vmatpush.bf16.msra.mxu0 %v5899
    %6319 = vmatmul.bf16.gmra.mxu0 %v5034
    %v6320 = vpop.f32.mrf.mxu0
    %v6321 = vadd.f32 %v6293, %v6320
    %v6322 = vpop.f32.mrf.mxu0
    %v6323 = vadd.f32 %v6295, %v6322
    %6324 = vmatmul.bf16.gmra.mxu0 %v5042
    %v6325 = vpop.f32.mrf.mxu0
    %v6326 = vadd.f32 %v6298, %v6325
    %v6327 = vpop.f32.mrf.mxu0
    %v6328 = vadd.f32 %v6300, %v6327
    %6329 = vmatmul.bf16.gmra.mxu0 %v5050
    %v6330 = vpop.f32.mrf.mxu0
    %v6331 = vadd.f32 %v6303, %v6330
    %v6332 = vpop.f32.mrf.mxu0
    %v6333 = vadd.f32 %v6305, %v6332
    %6334 = vmatmul.bf16.gmra.mxu0 %v5058
    %v6335 = vpop.f32.mrf.mxu0
    %v6336 = vadd.f32 %v6308, %v6335
    %v6337 = vpop.f32.mrf.mxu0
    %6338 = vdwg.mxu0
    %6339 = vmatpush.bf16.msra.mxu0 %v5753
    %6340 = vmatpush.bf16.msra.mxu0 %v5750
    %6341 = vmatpush.bf16.msra.mxu0 %v5747
    %6342 = vmatpush.bf16.msra.mxu0 %v5744
    %6343 = vmatpush.bf16.msra.mxu0 %v5741
    %6344 = vmatpush.bf16.msra.mxu0 %v5738
    %6345 = vmatpush.bf16.msra.mxu0 %v5735
    %6346 = vmatpush.bf16.msra.mxu0 %v5732
    %6347 = vmatmul.bf16.gmra.mxu0 %v5027
    %v6348 = vpop.f32.mrf.mxu0
    %v6349 = vadd.f32 %v4673, %v6348
    %v6350 = vpop.f32.mrf.mxu0
    %v6351 = vadd.f32 %v4675, %v6350
    %6352 = vmatmul.bf16.gmra.mxu0 %v5035
    %v6353 = vpop.f32.mrf.mxu0
    %v6354 = vadd.f32 %v4678, %v6353
    %v6355 = vpop.f32.mrf.mxu0
    %v6356 = vadd.f32 %v4680, %v6355
    %6357 = vmatmul.bf16.gmra.mxu0 %v5043
    %v6358 = vpop.f32.mrf.mxu0
    %v6359 = vadd.f32 %v4683, %v6358
    %v6360 = vpop.f32.mrf.mxu0
    %v6361 = vadd.f32 %v4685, %v6360
    %6362 = vmatmul.bf16.gmra.mxu0 %v5051
    %v6363 = vpop.f32.mrf.mxu0
    %v6364 = vadd.f32 %v4688, %v6363
    %v6365 = vpop.f32.mrf.mxu0
    %6366 = vdwg.mxu0
    %6367 = vmatpush.bf16.msra.mxu0 %v5777
    %6368 = vmatpush.bf16.msra.mxu0 %v5774
    %6369 = vmatpush.bf16.msra.mxu0 %v5771
    %6370 = vmatpush.bf16.msra.mxu0 %v5768
    %6371 = vmatpush.bf16.msra.mxu0 %v5765
    %6372 = vmatpush.bf16.msra.mxu0 %v5762
    %6373 = vmatpush.bf16.msra.mxu0 %v5759
    %6374 = vmatpush.bf16.msra.mxu0 %v5756
    %6375 = vmatmul.bf16.gmra.mxu0 %v5028
    %v6376 = vpop.f32.mrf.mxu0
    %v6377 = vadd.f32 %v6349, %v6376
    %v6378 = vpop.f32.mrf.mxu0
    %v6379 = vadd.f32 %v6351, %v6378
    %6380 = vmatmul.bf16.gmra.mxu0 %v5036
    %v6381 = vpop.f32.mrf.mxu0
    %v6382 = vadd.f32 %v6354, %v6381
    %v6383 = vpop.f32.mrf.mxu0
    %v6384 = vadd.f32 %v6356, %v6383
    %6385 = vmatmul.bf16.gmra.mxu0 %v5044
    %v6386 = vpop.f32.mrf.mxu0
    %v6387 = vadd.f32 %v6359, %v6386
    %v6388 = vpop.f32.mrf.mxu0
    %v6389 = vadd.f32 %v6361, %v6388
    %6390 = vmatmul.bf16.gmra.mxu0 %v5052
    %v6391 = vpop.f32.mrf.mxu0
    %v6392 = vadd.f32 %v6364, %v6391
    %v6393 = vpop.f32.mrf.mxu0
    %6394 = vdwg.mxu0
    %6395 = vmatpush.bf16.msra.mxu0 %v5801
    %6396 = vmatpush.bf16.msra.mxu0 %v5798
    %6397 = vmatpush.bf16.msra.mxu0 %v5795
    %6398 = vmatpush.bf16.msra.mxu0 %v5792
    %6399 = vmatpush.bf16.msra.mxu0 %v5789
    %6400 = vmatpush.bf16.msra.mxu0 %v5786
    %6401 = vmatpush.bf16.msra.mxu0 %v5783
    %6402 = vmatpush.bf16.msra.mxu0 %v5780
    %6403 = vmatmul.bf16.gmra.mxu0 %v5029
    %v6404 = vpop.f32.mrf.mxu0
    %v6405 = vadd.f32 %v6377, %v6404
    %v6406 = vpop.f32.mrf.mxu0
    %v6407 = vadd.f32 %v6379, %v6406
    %6408 = vmatmul.bf16.gmra.mxu0 %v5037
    %v6409 = vpop.f32.mrf.mxu0
    %v6410 = vadd.f32 %v6382, %v6409
    %v6411 = vpop.f32.mrf.mxu0
    %v6412 = vadd.f32 %v6384, %v6411
    %6413 = vmatmul.bf16.gmra.mxu0 %v5045
    %v6414 = vpop.f32.mrf.mxu0
    %v6415 = vadd.f32 %v6387, %v6414
    %v6416 = vpop.f32.mrf.mxu0
    %v6417 = vadd.f32 %v6389, %v6416
    %6418 = vmatmul.bf16.gmra.mxu0 %v5053
    %v6419 = vpop.f32.mrf.mxu0
    %v6420 = vadd.f32 %v6392, %v6419
    %v6421 = vpop.f32.mrf.mxu0
    %6422 = vdwg.mxu0
    %6423 = vmatpush.bf16.msra.mxu0 %v5825
    %6424 = vmatpush.bf16.msra.mxu0 %v5822
    %6425 = vmatpush.bf16.msra.mxu0 %v5819
    %6426 = vmatpush.bf16.msra.mxu0 %v5816
    %6427 = vmatpush.bf16.msra.mxu0 %v5813
    %6428 = vmatpush.bf16.msra.mxu0 %v5810
    %6429 = vmatpush.bf16.msra.mxu0 %v5807
    %6430 = vmatpush.bf16.msra.mxu0 %v5804
    %6431 = vmatmul.bf16.gmra.mxu0 %v5030
    %v6432 = vpop.f32.mrf.mxu0
    %v6433 = vadd.f32 %v6405, %v6432
    %v6434 = vpop.f32.mrf.mxu0
    %v6435 = vadd.f32 %v6407, %v6434
    %6436 = vmatmul.bf16.gmra.mxu0 %v5038
    %v6437 = vpop.f32.mrf.mxu0
    %v6438 = vadd.f32 %v6410, %v6437
    %v6439 = vpop.f32.mrf.mxu0
    %v6440 = vadd.f32 %v6412, %v6439
    %6441 = vmatmul.bf16.gmra.mxu0 %v5046
    %v6442 = vpop.f32.mrf.mxu0
    %v6443 = vadd.f32 %v6415, %v6442
    %v6444 = vpop.f32.mrf.mxu0
    %v6445 = vadd.f32 %v6417, %v6444
    %6446 = vmatmul.bf16.gmra.mxu0 %v5054
    %v6447 = vpop.f32.mrf.mxu0
    %v6448 = vadd.f32 %v6420, %v6447
    %v6449 = vpop.f32.mrf.mxu0
    %6450 = vdwg.mxu0
    %6451 = vmatpush.bf16.msra.mxu0 %v5849
    %6452 = vmatpush.bf16.msra.mxu0 %v5846
    %6453 = vmatpush.bf16.msra.mxu0 %v5843
    %6454 = vmatpush.bf16.msra.mxu0 %v5840
    %6455 = vmatpush.bf16.msra.mxu0 %v5837
    %6456 = vmatpush.bf16.msra.mxu0 %v5834
    %6457 = vmatpush.bf16.msra.mxu0 %v5831
    %6458 = vmatpush.bf16.msra.mxu0 %v5828
    %6459 = vmatmul.bf16.gmra.mxu0 %v5031
    %v6460 = vpop.f32.mrf.mxu0
    %v6461 = vadd.f32 %v6433, %v6460
    %v6462 = vpop.f32.mrf.mxu0
    %v6463 = vadd.f32 %v6435, %v6462
    %6464 = vmatmul.bf16.gmra.mxu0 %v5039
    %v6465 = vpop.f32.mrf.mxu0
    %v6466 = vadd.f32 %v6438, %v6465
    %v6467 = vpop.f32.mrf.mxu0
    %v6468 = vadd.f32 %v6440, %v6467
    %6469 = vmatmul.bf16.gmra.mxu0 %v5047
    %v6470 = vpop.f32.mrf.mxu0
    %v6471 = vadd.f32 %v6443, %v6470
    %v6472 = vpop.f32.mrf.mxu0
    %v6473 = vadd.f32 %v6445, %v6472
    %6474 = vmatmul.bf16.gmra.mxu0 %v5055
    %v6475 = vpop.f32.mrf.mxu0
    %v6476 = vadd.f32 %v6448, %v6475
    %v6477 = vpop.f32.mrf.mxu0
    %6478 = vdwg.mxu0
    %6479 = vmatpush.bf16.msra.mxu0 %v5873
    %6480 = vmatpush.bf16.msra.mxu0 %v5870
    %6481 = vmatpush.bf16.msra.mxu0 %v5867
    %6482 = vmatpush.bf16.msra.mxu0 %v5864
    %6483 = vmatpush.bf16.msra.mxu0 %v5861
    %6484 = vmatpush.bf16.msra.mxu0 %v5858
    %6485 = vmatpush.bf16.msra.mxu0 %v5855
    %6486 = vmatpush.bf16.msra.mxu0 %v5852
    %6487 = vmatmul.bf16.gmra.mxu0 %v5032
    %v6488 = vpop.f32.mrf.mxu0
    %v6489 = vadd.f32 %v6461, %v6488
    %v6490 = vpop.f32.mrf.mxu0
    %v6491 = vadd.f32 %v6463, %v6490
    %6492 = vmatmul.bf16.gmra.mxu0 %v5040
    %v6493 = vpop.f32.mrf.mxu0
    %v6494 = vadd.f32 %v6466, %v6493
    %v6495 = vpop.f32.mrf.mxu0
    %v6496 = vadd.f32 %v6468, %v6495
    %6497 = vmatmul.bf16.gmra.mxu0 %v5048
    %v6498 = vpop.f32.mrf.mxu0
    %v6499 = vadd.f32 %v6471, %v6498
    %v6500 = vpop.f32.mrf.mxu0
    %v6501 = vadd.f32 %v6473, %v6500
    %6502 = vmatmul.bf16.gmra.mxu0 %v5056
    %v6503 = vpop.f32.mrf.mxu0
    %v6504 = vadd.f32 %v6476, %v6503
    %v6505 = vpop.f32.mrf.mxu0
    %6506 = vdwg.mxu0
    %6507 = vmatpush.bf16.msra.mxu0 %v5897
    %6508 = vmatpush.bf16.msra.mxu0 %v5894
    %6509 = vmatpush.bf16.msra.mxu0 %v5891
    %6510 = vmatpush.bf16.msra.mxu0 %v5888
    %6511 = vmatpush.bf16.msra.mxu0 %v5885
    %6512 = vmatpush.bf16.msra.mxu0 %v5882
    %6513 = vmatpush.bf16.msra.mxu0 %v5879
    %6514 = vmatpush.bf16.msra.mxu0 %v5876
    %6515 = vmatmul.bf16.gmra.mxu0 %v5033
    %v6516 = vpop.f32.mrf.mxu0
    %v6517 = vadd.f32 %v6489, %v6516
    %v6518 = vpop.f32.mrf.mxu0
    %v6519 = vadd.f32 %v6491, %v6518
    %6520 = vmatmul.bf16.gmra.mxu0 %v5041
    %v6521 = vpop.f32.mrf.mxu0
    %v6522 = vadd.f32 %v6494, %v6521
    %v6523 = vpop.f32.mrf.mxu0
    %v6524 = vadd.f32 %v6496, %v6523
    %6525 = vmatmul.bf16.gmra.mxu0 %v5049
    %v6526 = vpop.f32.mrf.mxu0
    %v6527 = vadd.f32 %v6499, %v6526
    %v6528 = vpop.f32.mrf.mxu0
    %v6529 = vadd.f32 %v6501, %v6528
    %6530 = vmatmul.bf16.gmra.mxu0 %v5057
    %v6531 = vpop.f32.mrf.mxu0
    %v6532 = vadd.f32 %v6504, %v6531
    %v6533 = vpop.f32.mrf.mxu0
    %6534 = vdwg.mxu0
    %6535 = vmatpush.bf16.msra.mxu0 %v5921
    %6536 = vmatpush.bf16.msra.mxu0 %v5918
    %6537 = vmatpush.bf16.msra.mxu0 %v5915
    %6538 = vmatpush.bf16.msra.mxu0 %v5912
    %6539 = vmatpush.bf16.msra.mxu0 %v5909
    %6540 = vmatpush.bf16.msra.mxu0 %v5906
    %6541 = vmatpush.bf16.msra.mxu0 %v5903
    %6542 = vmatpush.bf16.msra.mxu0 %v5900
    %6543 = vmatmul.bf16.gmra.mxu0 %v5034
    %v6544 = vpop.f32.mrf.mxu0
    %v6545 = vadd.f32 %v6517, %v6544
    %v6546 = vpop.f32.mrf.mxu0
    %v6547 = vadd.f32 %v6519, %v6546
    %6548 = vmatmul.bf16.gmra.mxu0 %v5042
    %v6549 = vpop.f32.mrf.mxu0
    %v6550 = vadd.f32 %v6522, %v6549
    %v6551 = vpop.f32.mrf.mxu0
    %v6552 = vadd.f32 %v6524, %v6551
    %6553 = vmatmul.bf16.gmra.mxu0 %v5050
    %v6554 = vpop.f32.mrf.mxu0
    %v6555 = vadd.f32 %v6527, %v6554
    %v6556 = vpop.f32.mrf.mxu0
    %v6557 = vadd.f32 %v6529, %v6556
    %6558 = vmatmul.bf16.gmra.mxu0 %v5058
    %v6559 = vpop.f32.mrf.mxu0
    %v6560 = vadd.f32 %v6532, %v6559
    %v6561 = vpop.f32.mrf.mxu0
    %6562 = vdwg.mxu0
    %6563 = vmatpush.bf16.msra.mxu0 %v5754
    %6564 = vmatpush.bf16.msra.mxu0 %v5751
    %6565 = vmatpush.bf16.msra.mxu0 %v5748
    %6566 = vmatpush.bf16.msra.mxu0 %v5745
    %6567 = vmatpush.bf16.msra.mxu0 %v5742
    %6568 = vmatpush.bf16.msra.mxu0 %v5739
    %6569 = vmatpush.bf16.msra.mxu0 %v5736
    %6570 = vmatpush.bf16.msra.mxu0 %v5733
    %6571 = vmatmul.bf16.gmra.mxu0 %v5027
    %v6572 = vpop.f32.mrf.mxu0
    %v6573 = vadd.f32 %v4925, %v6572
    %v6574 = vpop.f32.mrf.mxu0
    %v6575 = vadd.f32 %v4927, %v6574
    %6576 = vmatmul.bf16.gmra.mxu0 %v5035
    %v6577 = vpop.f32.mrf.mxu0
    %v6578 = vadd.f32 %v4930, %v6577
    %v6579 = vpop.f32.mrf.mxu0
    %v6580 = vadd.f32 %v4932, %v6579
    %6581 = vmatmul.bf16.gmra.mxu0 %v5043
    %v6582 = vpop.f32.mrf.mxu0
    %v6583 = vadd.f32 %v4935, %v6582
    %v6584 = vpop.f32.mrf.mxu0
    %v6585 = vadd.f32 %v4937, %v6584
    %6586 = vmatmul.bf16.gmra.mxu0 %v5051
    %v6587 = vpop.f32.mrf.mxu0
    %v6588 = vadd.f32 %v4940, %v6587
    %v6589 = vpop.f32.mrf.mxu0
    %6590 = vdwg.mxu0
    %6591 = vmatpush.bf16.msra.mxu0 %v5778
    %6592 = vmatpush.bf16.msra.mxu0 %v5775
    %6593 = vmatpush.bf16.msra.mxu0 %v5772
    %6594 = vmatpush.bf16.msra.mxu0 %v5769
    %6595 = vmatpush.bf16.msra.mxu0 %v5766
    %6596 = vmatpush.bf16.msra.mxu0 %v5763
    %6597 = vmatpush.bf16.msra.mxu0 %v5760
    %6598 = vmatpush.bf16.msra.mxu0 %v5757
    %6599 = vmatmul.bf16.gmra.mxu0 %v5028
    %v6600 = vpop.f32.mrf.mxu0
    %v6601 = vadd.f32 %v6573, %v6600
    %v6602 = vpop.f32.mrf.mxu0
    %v6603 = vadd.f32 %v6575, %v6602
    %6604 = vmatmul.bf16.gmra.mxu0 %v5036
    %v6605 = vpop.f32.mrf.mxu0
    %v6606 = vadd.f32 %v6578, %v6605
    %v6607 = vpop.f32.mrf.mxu0
    %v6608 = vadd.f32 %v6580, %v6607
    %6609 = vmatmul.bf16.gmra.mxu0 %v5044
    %v6610 = vpop.f32.mrf.mxu0
    %v6611 = vadd.f32 %v6583, %v6610
    %v6612 = vpop.f32.mrf.mxu0
    %v6613 = vadd.f32 %v6585, %v6612
    %6614 = vmatmul.bf16.gmra.mxu0 %v5052
    %v6615 = vpop.f32.mrf.mxu0
    %v6616 = vadd.f32 %v6588, %v6615
    %v6617 = vpop.f32.mrf.mxu0
    %6618 = vdwg.mxu0
    %6619 = vmatpush.bf16.msra.mxu0 %v5802
    %6620 = vmatpush.bf16.msra.mxu0 %v5799
    %6621 = vmatpush.bf16.msra.mxu0 %v5796
    %6622 = vmatpush.bf16.msra.mxu0 %v5793
    %6623 = vmatpush.bf16.msra.mxu0 %v5790
    %6624 = vmatpush.bf16.msra.mxu0 %v5787
    %6625 = vmatpush.bf16.msra.mxu0 %v5784
    %6626 = vmatpush.bf16.msra.mxu0 %v5781
    %6627 = vmatmul.bf16.gmra.mxu0 %v5029
    %v6628 = vpop.f32.mrf.mxu0
    %v6629 = vadd.f32 %v6601, %v6628
    %v6630 = vpop.f32.mrf.mxu0
    %v6631 = vadd.f32 %v6603, %v6630
    %6632 = vmatmul.bf16.gmra.mxu0 %v5037
    %v6633 = vpop.f32.mrf.mxu0
    %v6634 = vadd.f32 %v6606, %v6633
    %v6635 = vpop.f32.mrf.mxu0
    %v6636 = vadd.f32 %v6608, %v6635
    %6637 = vmatmul.bf16.gmra.mxu0 %v5045
    %v6638 = vpop.f32.mrf.mxu0
    %v6639 = vadd.f32 %v6611, %v6638
    %v6640 = vpop.f32.mrf.mxu0
    %v6641 = vadd.f32 %v6613, %v6640
    %6642 = vmatmul.bf16.gmra.mxu0 %v5053
    %v6643 = vpop.f32.mrf.mxu0
    %v6644 = vadd.f32 %v6616, %v6643
    %v6645 = vpop.f32.mrf.mxu0
    %6646 = vdwg.mxu0
    %6647 = vmatpush.bf16.msra.mxu0 %v5826
    %6648 = vmatpush.bf16.msra.mxu0 %v5823
    %6649 = vmatpush.bf16.msra.mxu0 %v5820
    %6650 = vmatpush.bf16.msra.mxu0 %v5817
    %6651 = vmatpush.bf16.msra.mxu0 %v5814
    %6652 = vmatpush.bf16.msra.mxu0 %v5811
    %6653 = vmatpush.bf16.msra.mxu0 %v5808
    %6654 = vmatpush.bf16.msra.mxu0 %v5805
    %6655 = vmatmul.bf16.gmra.mxu0 %v5030
    %v6656 = vpop.f32.mrf.mxu0
    %v6657 = vadd.f32 %v6629, %v6656
    %v6658 = vpop.f32.mrf.mxu0
    %v6659 = vadd.f32 %v6631, %v6658
    %6660 = vmatmul.bf16.gmra.mxu0 %v5038
    %v6661 = vpop.f32.mrf.mxu0
    %v6662 = vadd.f32 %v6634, %v6661
    %v6663 = vpop.f32.mrf.mxu0
    %v6664 = vadd.f32 %v6636, %v6663
    %6665 = vmatmul.bf16.gmra.mxu0 %v5046
    %v6666 = vpop.f32.mrf.mxu0
    %v6667 = vadd.f32 %v6639, %v6666
    %v6668 = vpop.f32.mrf.mxu0
    %v6669 = vadd.f32 %v6641, %v6668
    %6670 = vmatmul.bf16.gmra.mxu0 %v5054
    %v6671 = vpop.f32.mrf.mxu0
    %v6672 = vadd.f32 %v6644, %v6671
    %v6673 = vpop.f32.mrf.mxu0
    %6674 = vdwg.mxu0
    %6675 = vmatpush.bf16.msra.mxu0 %v5850
    %6676 = vmatpush.bf16.msra.mxu0 %v5847
    %6677 = vmatpush.bf16.msra.mxu0 %v5844
    %6678 = vmatpush.bf16.msra.mxu0 %v5841
    %6679 = vmatpush.bf16.msra.mxu0 %v5838
    %6680 = vmatpush.bf16.msra.mxu0 %v5835
    %6681 = vmatpush.bf16.msra.mxu0 %v5832
    %6682 = vmatpush.bf16.msra.mxu0 %v5829
    %6683 = vmatmul.bf16.gmra.mxu0 %v5031
    %v6684 = vpop.f32.mrf.mxu0
    %v6685 = vadd.f32 %v6657, %v6684
    %v6686 = vpop.f32.mrf.mxu0
    %v6687 = vadd.f32 %v6659, %v6686
    %6688 = vmatmul.bf16.gmra.mxu0 %v5039
    %v6689 = vpop.f32.mrf.mxu0
    %v6690 = vadd.f32 %v6662, %v6689
    %v6691 = vpop.f32.mrf.mxu0
    %v6692 = vadd.f32 %v6664, %v6691
    %6693 = vmatmul.bf16.gmra.mxu0 %v5047
    %v6694 = vpop.f32.mrf.mxu0
    %v6695 = vadd.f32 %v6667, %v6694
    %v6696 = vpop.f32.mrf.mxu0
    %v6697 = vadd.f32 %v6669, %v6696
    %6698 = vmatmul.bf16.gmra.mxu0 %v5055
    %v6699 = vpop.f32.mrf.mxu0
    %v6700 = vadd.f32 %v6672, %v6699
    %v6701 = vpop.f32.mrf.mxu0
    %6702 = vdwg.mxu0
    %6703 = vmatpush.bf16.msra.mxu0 %v5874
    %6704 = vmatpush.bf16.msra.mxu0 %v5871
    %6705 = vmatpush.bf16.msra.mxu0 %v5868
    %6706 = vmatpush.bf16.msra.mxu0 %v5865
    %6707 = vmatpush.bf16.msra.mxu0 %v5862
    %6708 = vmatpush.bf16.msra.mxu0 %v5859
    %6709 = vmatpush.bf16.msra.mxu0 %v5856
    %6710 = vmatpush.bf16.msra.mxu0 %v5853
    %6711 = vmatmul.bf16.gmra.mxu0 %v5032
    %v6712 = vpop.f32.mrf.mxu0
    %v6713 = vadd.f32 %v6685, %v6712
    %v6714 = vpop.f32.mrf.mxu0
    %v6715 = vadd.f32 %v6687, %v6714
    %6716 = vmatmul.bf16.gmra.mxu0 %v5040
    %v6717 = vpop.f32.mrf.mxu0
    %v6718 = vadd.f32 %v6690, %v6717
    %v6719 = vpop.f32.mrf.mxu0
    %v6720 = vadd.f32 %v6692, %v6719
    %6721 = vmatmul.bf16.gmra.mxu0 %v5048
    %v6722 = vpop.f32.mrf.mxu0
    %v6723 = vadd.f32 %v6695, %v6722
    %v6724 = vpop.f32.mrf.mxu0
    %v6725 = vadd.f32 %v6697, %v6724
    %6726 = vmatmul.bf16.gmra.mxu0 %v5056
    %v6727 = vpop.f32.mrf.mxu0
    %v6728 = vadd.f32 %v6700, %v6727
    %v6729 = vpop.f32.mrf.mxu0
    %6730 = vdwg.mxu0
    %6731 = vmatpush.bf16.msra.mxu0 %v5898
    %6732 = vmatpush.bf16.msra.mxu0 %v5895
    %6733 = vmatpush.bf16.msra.mxu0 %v5892
    %6734 = vmatpush.bf16.msra.mxu0 %v5889
    %6735 = vmatpush.bf16.msra.mxu0 %v5886
    %6736 = vmatpush.bf16.msra.mxu0 %v5883
    %6737 = vmatpush.bf16.msra.mxu0 %v5880
    %6738 = vmatpush.bf16.msra.mxu0 %v5877
    %6739 = vmatmul.bf16.gmra.mxu0 %v5033
    %v6740 = vpop.f32.mrf.mxu0
    %v6741 = vadd.f32 %v6713, %v6740
    %v6742 = vpop.f32.mrf.mxu0
    %v6743 = vadd.f32 %v6715, %v6742
    %6744 = vmatmul.bf16.gmra.mxu0 %v5041
    %v6745 = vpop.f32.mrf.mxu0
    %v6746 = vadd.f32 %v6718, %v6745
    %v6747 = vpop.f32.mrf.mxu0
    %v6748 = vadd.f32 %v6720, %v6747
    %6749 = vmatmul.bf16.gmra.mxu0 %v5049
    %v6750 = vpop.f32.mrf.mxu0
    %v6751 = vadd.f32 %v6723, %v6750
    %v6752 = vpop.f32.mrf.mxu0
    %v6753 = vadd.f32 %v6725, %v6752
    %6754 = vmatmul.bf16.gmra.mxu0 %v5057
    %v6755 = vpop.f32.mrf.mxu0
    %v6756 = vadd.f32 %v6728, %v6755
    %v6757 = vpop.f32.mrf.mxu0
    %6758 = vdwg.mxu0
    %6759 = vmatpush.bf16.msra.mxu0 %v5922
    %6760 = vmatpush.bf16.msra.mxu0 %v5919
    %6761 = vmatpush.bf16.msra.mxu0 %v5916
    %6762 = vmatpush.bf16.msra.mxu0 %v5913
    %6763 = vmatpush.bf16.msra.mxu0 %v5910
    %6764 = vmatpush.bf16.msra.mxu0 %v5907
    %6765 = vmatpush.bf16.msra.mxu0 %v5904
    %6766 = vmatpush.bf16.msra.mxu0 %v5901
    %6767 = vmatmul.bf16.gmra.mxu0 %v5034
    %v6768 = vpop.f32.mrf.mxu0
    %v6769 = vadd.f32 %v6741, %v6768
    %v6770 = vpop.f32.mrf.mxu0
    %v6771 = vadd.f32 %v6743, %v6770
    %6772 = vmatmul.bf16.gmra.mxu0 %v5042
    %v6773 = vpop.f32.mrf.mxu0
    %v6774 = vadd.f32 %v6746, %v6773
    %v6775 = vpop.f32.mrf.mxu0
    %v6776 = vadd.f32 %v6748, %v6775
    %6777 = vmatmul.bf16.gmra.mxu0 %v5050
    %v6778 = vpop.f32.mrf.mxu0
    %v6779 = vadd.f32 %v6751, %v6778
    %v6780 = vpop.f32.mrf.mxu0
    %v6781 = vadd.f32 %v6753, %v6780
    %6782 = vmatmul.bf16.gmra.mxu0 %v5058
    %v6783 = vpop.f32.mrf.mxu0
    %v6784 = vadd.f32 %v6756, %v6783
    %v6785 = vpop.f32.mrf.mxu0
    %6786 = vdwg.mxu0
    %v6787 = vadd.f32 %v6321, %v6323
    %v6788 = vadd.f32 %v6787, %v6326
    %v6789 = vadd.f32 %v6788, %v6328
    %v6790 = vadd.f32 %v6789, %v6331
    %v6791 = vadd.f32 %v6790, %v6333
    %v6792 = vadd.f32 %v6791, %v6336
    %v6793 = vrot.slane %v6792, 4
    %v6794 = vadd.f32 %v6792, %v6793
    %v6795 = vrot.slane %v6794, 2
    %v6796 = vadd.f32 %v6794, %v6795
    %v6797 = vrot.slane %v6796, 1
    %v6798 = vadd.f32 %v6796, %v6797
    %v6799 = vadd.f32 %v6545, %v6547
    %v6800 = vadd.f32 %v6799, %v6550
    %v6801 = vadd.f32 %v6800, %v6552
    %v6802 = vadd.f32 %v6801, %v6555
    %v6803 = vadd.f32 %v6802, %v6557
    %v6804 = vadd.f32 %v6803, %v6560
    %v6805 = vrot.slane %v6804, 4
    %v6806 = vadd.f32 %v6804, %v6805
    %v6807 = vrot.slane %v6806, 2
    %v6808 = vadd.f32 %v6806, %v6807
    %v6809 = vrot.slane %v6808, 1
    %v6810 = vadd.f32 %v6808, %v6809
    %v6811 = vadd.f32 %v6769, %v6771
    %v6812 = vadd.f32 %v6811, %v6774
    %v6813 = vadd.f32 %v6812, %v6776
    %v6814 = vadd.f32 %v6813, %v6779
    %v6815 = vadd.f32 %v6814, %v6781
    %v6816 = vadd.f32 %v6815, %v6784
    %v6817 = vrot.slane %v6816, 4
    %v6818 = vadd.f32 %v6816, %v6817
    %v6819 = vrot.slane %v6818, 2
    %v6820 = vadd.f32 %v6818, %v6819
    %v6821 = vrot.slane %v6820, 1
    %v6822 = vadd.f32 %v6820, %v6821
    %v6823 = vmul.f32 %v6321, %v6321
    %v6824 = vmul.f32 %v6545, %v6545
    %v6825 = vmul.f32 %v6769, %v6769
    %v6826 = vmul.f32 %v6323, %v6323
    %v6827 = vmul.f32 %v6547, %v6547
    %v6828 = vmul.f32 %v6771, %v6771
    %v6829 = vmul.f32 %v6326, %v6326
    %v6830 = vmul.f32 %v6550, %v6550
    %v6831 = vmul.f32 %v6774, %v6774
    %v6832 = vmul.f32 %v6328, %v6328
    %v6833 = vmul.f32 %v6552, %v6552
    %v6834 = vmul.f32 %v6776, %v6776
    %v6835 = vmul.f32 %v6331, %v6331
    %v6836 = vmul.f32 %v6555, %v6555
    %v6837 = vmul.f32 %v6779, %v6779
    %v6838 = vmul.f32 %v6333, %v6333
    %v6839 = vmul.f32 %v6557, %v6557
    %v6840 = vmul.f32 %v6781, %v6781
    %v6841 = vmul.f32 %v6336, %v6336
    %v6842 = vmul.f32 %v6560, %v6560
    %v6843 = vmul.f32 %v6784, %v6784
    %v6844 = vadd.f32 %v6823, %v6826
    %v6845 = vadd.f32 %v6844, %v6829
    %v6846 = vadd.f32 %v6845, %v6832
    %v6847 = vadd.f32 %v6846, %v6835
    %v6848 = vadd.f32 %v6847, %v6838
    %v6849 = vadd.f32 %v6848, %v6841
    %v6850 = vrot.slane %v6849, 4
    %v6851 = vadd.f32 %v6849, %v6850
    %v6852 = vrot.slane %v6851, 2
    %v6853 = vadd.f32 %v6851, %v6852
    %v6854 = vrot.slane %v6853, 1
    %v6855 = vadd.f32 %v6853, %v6854
    %v6856 = vadd.f32 %v6824, %v6827
    %v6857 = vadd.f32 %v6856, %v6830
    %v6858 = vadd.f32 %v6857, %v6833
    %v6859 = vadd.f32 %v6858, %v6836
    %v6860 = vadd.f32 %v6859, %v6839
    %v6861 = vadd.f32 %v6860, %v6842
    %v6862 = vrot.slane %v6861, 4
    %v6863 = vadd.f32 %v6861, %v6862
    %v6864 = vrot.slane %v6863, 2
    %v6865 = vadd.f32 %v6863, %v6864
    %v6866 = vrot.slane %v6865, 1
    %v6867 = vadd.f32 %v6865, %v6866
    %v6868 = vadd.f32 %v6825, %v6828
    %v6869 = vadd.f32 %v6868, %v6831
    %v6870 = vadd.f32 %v6869, %v6834
    %v6871 = vadd.f32 %v6870, %v6837
    %v6872 = vadd.f32 %v6871, %v6840
    %v6873 = vadd.f32 %v6872, %v6843
    %v6874 = vrot.slane %v6873, 4
    %v6875 = vadd.f32 %v6873, %v6874
    %v6876 = vrot.slane %v6875, 2
    %v6877 = vadd.f32 %v6875, %v6876
    %v6878 = vrot.slane %v6877, 1
    %v6879 = vadd.f32 %v6877, %v6878
    %v6880 = vmul.f32 %v6798, 0.020408163
    %v6881 = vmul.f32 %v6810, 0.020408163
    %v6882 = vmul.f32 %v6822, 0.020408163
    %v6883 = vmul.f32 %v6855, 0.020408163
    %v6884 = vmul.f32 %v6867, 0.020408163
    %v6885 = vmul.f32 %v6879, 0.020408163
    %v6886 = vmul.f32 %v6880, %v6880
    %v6887 = vmul.f32 %v6881, %v6881
    %v6888 = vmul.f32 %v6882, %v6882
    %v6889 = vsub.f32 %v6883, %v6886
    %v6890 = vsub.f32 %v6884, %v6887
    %v6891 = vsub.f32 %v6885, %v6888
    %v6892 = vadd.f32 %v6889, 0.001
    %v6893 = vadd.f32 %v6890, 0.001
    %v6894 = vadd.f32 %v6891, 0.001
    %v6895 = vrsqrt.pop %v6892
    %v6896 = vmul.f32 %v6895, %v6892
    %v6897 = vmul.f32 %v6896, %v6895
    %v6898 = vmul.f32 0.5, %v6897
    %v6899 = vsub.f32 1.5, %v6898
    %v6900 = vmul.f32 %v6895, %v6899
    %vm6901 = vweird.f32 %v6892
    %vm6902 = vweird.f32 %v6895
    %vm6903 = vmor %vm6901, %vm6902
    %v6904 = vsel %vm6903, %v6895, %v6900
    %v6905 = vrsqrt.pop %v6893
    %v6906 = vmul.f32 %v6905, %v6893
    %v6907 = vmul.f32 %v6906, %v6905
    %v6908 = vmul.f32 0.5, %v6907
    %v6909 = vsub.f32 1.5, %v6908
    %v6910 = vmul.f32 %v6905, %v6909
    %vm6911 = vweird.f32 %v6893
    %vm6912 = vweird.f32 %v6905
    %vm6913 = vmor %vm6911, %vm6912
    %v6914 = vsel %vm6913, %v6905, %v6910
    %v6915 = vrsqrt.pop %v6894
    %v6916 = vmul.f32 %v6915, %v6894
    %v6917 = vmul.f32 %v6916, %v6915
    %v6918 = vmul.f32 0.5, %v6917
    %v6919 = vsub.f32 1.5, %v6918
    %v6920 = vmul.f32 %v6915, %v6919
    %vm6921 = vweird.f32 %v6894
    %vm6922 = vweird.f32 %v6915
    %vm6923 = vmor %vm6921, %vm6922
    %v6924 = vsel %vm6923, %v6915, %v6920
    %v6925 = vld [vmem:[%s6] sm:$0x7]
    %v6927 = vperm.slane %v6925, 0
    %v6928 = vperm.slane %v6925, 1
    %v6929 = vperm.slane %v6925, 2
    %v6933 = vmul.f32 %v6904, %v6927
    %v6934 = vmul.f32 %v6914, %v6928
    %v6935 = vmul.f32 %v6924, %v6929
    %v6936 = vld [vmem:[%s7] sm:$0x7]
    %v6937 = vmul.f32 %v6880, %v6933
    %v6938 = vmul.f32 %v6881, %v6934
    %v6939 = vmul.f32 %v6882, %v6935
    %v6943 = vrot.slane %v6938, 7
    %v6944 = vrot.slane %v6939, 6
    %vm6945 = vcmask 1040384
    %v6946 = vsel %vm6945, %v6937, %v6943
    %vm6947 = vcmask 1041408
    %v6948 = vsel %vm6947, %v6946, %v6944
    %v6950 = vsub.f32 %v6936, %v6948
    %v6951 = vperm.slane %v6933, 0
    %v6952 = vperm.slane %v6934, 0
    %v6953 = vperm.slane %v6935, 0
    %v6954 = vmul.f32 %v6321, %v6951
    %v6955 = vmul.f32 %v6545, %v6952
    %v6956 = vmul.f32 %v6769, %v6953
    %v6957 = vmul.f32 %v6323, %v6951
    %v6958 = vmul.f32 %v6547, %v6952
    %v6959 = vmul.f32 %v6771, %v6953
    %v6960 = vmul.f32 %v6326, %v6951
    %v6961 = vmul.f32 %v6550, %v6952
    %v6962 = vmul.f32 %v6774, %v6953
    %v6963 = vmul.f32 %v6328, %v6951
    %v6964 = vmul.f32 %v6552, %v6952
    %v6965 = vmul.f32 %v6776, %v6953
    %v6966 = vmul.f32 %v6331, %v6951
    %v6967 = vmul.f32 %v6555, %v6952
    %v6968 = vmul.f32 %v6779, %v6953
    %v6969 = vmul.f32 %v6333, %v6951
    %v6970 = vmul.f32 %v6557, %v6952
    %v6971 = vmul.f32 %v6781, %v6953
    %v6972 = vmul.f32 %v6336, %v6951
    %v6973 = vmul.f32 %v6560, %v6952
    %v6974 = vmul.f32 %v6784, %v6953
    %v6976 = vperm.slane %v6950, 0
    %v6977 = vperm.slane %v6950, 1
    %v6978 = vperm.slane %v6950, 2
    %v6982 = vadd.f32 %v6954, %v6976
    %v6983 = vadd.f32 %v6955, %v6977
    %v6984 = vadd.f32 %v6956, %v6978
    %v6985 = vadd.f32 %v6957, %v6976
    %v6986 = vadd.f32 %v6958, %v6977
    %v6987 = vadd.f32 %v6959, %v6978
    %v6988 = vadd.f32 %v6960, %v6976
    %v6989 = vadd.f32 %v6961, %v6977
    %v6990 = vadd.f32 %v6962, %v6978
    %v6991 = vadd.f32 %v6963, %v6976
    %v6992 = vadd.f32 %v6964, %v6977
    %v6993 = vadd.f32 %v6965, %v6978
    %v6994 = vadd.f32 %v6966, %v6976
    %v6995 = vadd.f32 %v6967, %v6977
    %v6996 = vadd.f32 %v6968, %v6978
    %v6997 = vadd.f32 %v6969, %v6976
    %v6998 = vadd.f32 %v6970, %v6977
    %v6999 = vadd.f32 %v6971, %v6978
    %v7000 = vadd.f32 %v6972, %v6976
    %v7001 = vadd.f32 %v6973, %v6977
    %v7002 = vadd.f32 %v6974, %v6978
    %7003 = vxpose.xlu0.b32.start [1/16] %v6982, 128
    %7004 = vxpose.xlu0.b32.cont [2/16] %v6985, 128
    %7005 = vxpose.xlu0.b32.cont [3/16] %v6988, 128
    %7006 = vxpose.xlu0.b32.cont [4/16] %v6991, 128
    %7007 = vxpose.xlu0.b32.cont [5/16] %v6994, 128
    %7008 = vxpose.xlu0.b32.cont [6/16] %v6997, 128
    %7009 = vxpose.xlu0.b32.cont [7/16] %v7000, 128
    %7010 = vxpose.xlu0.b32.cont [8/16] 0.0, 128
    %7011 = vxpose.xlu0.b32.cont [9/16] 0.0, 128
    %7012 = vxpose.xlu0.b32.cont [10/16] 0.0, 128
    %7013 = vxpose.xlu0.b32.cont [11/16] 0.0, 128
    %7014 = vxpose.xlu0.b32.cont [12/16] 0.0, 128
    %7015 = vxpose.xlu0.b32.cont [13/16] 0.0, 128
    %7016 = vxpose.xlu0.b32.cont [14/16] 0.0, 128
    %7017 = vxpose.xlu0.b32.cont [15/16] 0.0, 128
    %7018 = vxpose.xlu0.b32.end [16/16] 0.0, 128
    %v7019 = vpop.trf.xlu0
    %v7020 = vpop.trf.xlu0
    %v7021 = vpop.trf.xlu0
    %v7022 = vpop.trf.xlu0
    %v7023 = vpop.trf.xlu0
    %v7024 = vpop.trf.xlu0
    %v7025 = vpop.trf.xlu0
    %v7026 = vpop.trf.xlu0
    %v7027 = vpop.trf.xlu0
    %v7028 = vpop.trf.xlu0
    %v7029 = vpop.trf.xlu0
    %v7030 = vpop.trf.xlu0
    %v7031 = vpop.trf.xlu0
    %v7032 = vpop.trf.xlu0
    %v7033 = vpop.trf.xlu0
    %v7034 = vpop.trf.xlu0
    %7035 = vxpose.xlu0.b32.start [1/16] %v6983, 128
    %7036 = vxpose.xlu0.b32.cont [2/16] %v6986, 128
    %7037 = vxpose.xlu0.b32.cont [3/16] %v6989, 128
    %7038 = vxpose.xlu0.b32.cont [4/16] %v6992, 128
    %7039 = vxpose.xlu0.b32.cont [5/16] %v6995, 128
    %7040 = vxpose.xlu0.b32.cont [6/16] %v6998, 128
    %7041 = vxpose.xlu0.b32.cont [7/16] %v7001, 128
    %7042 = vxpose.xlu0.b32.cont [8/16] 0.0, 128
    %7043 = vxpose.xlu0.b32.cont [9/16] 0.0, 128
    %7044 = vxpose.xlu0.b32.cont [10/16] 0.0, 128
    %7045 = vxpose.xlu0.b32.cont [11/16] 0.0, 128
    %7046 = vxpose.xlu0.b32.cont [12/16] 0.0, 128
    %7047 = vxpose.xlu0.b32.cont [13/16] 0.0, 128
    %7048 = vxpose.xlu0.b32.cont [14/16] 0.0, 128
    %7049 = vxpose.xlu0.b32.cont [15/16] 0.0, 128
    %7050 = vxpose.xlu0.b32.end [16/16] 0.0, 128
    %v7051 = vpop.trf.xlu0
    %v7052 = vpop.trf.xlu0
    %v7053 = vpop.trf.xlu0
    %v7054 = vpop.trf.xlu0
    %v7055 = vpop.trf.xlu0
    %v7056 = vpop.trf.xlu0
    %v7057 = vpop.trf.xlu0
    %v7058 = vpop.trf.xlu0
    %v7059 = vpop.trf.xlu0
    %v7060 = vpop.trf.xlu0
    %v7061 = vpop.trf.xlu0
    %v7062 = vpop.trf.xlu0
    %v7063 = vpop.trf.xlu0
    %v7064 = vpop.trf.xlu0
    %v7065 = vpop.trf.xlu0
    %v7066 = vpop.trf.xlu0
    %7067 = vxpose.xlu0.b32.start [1/16] %v6984, 128
    %7068 = vxpose.xlu0.b32.cont [2/16] %v6987, 128
    %7069 = vxpose.xlu0.b32.cont [3/16] %v6990, 128
    %7070 = vxpose.xlu0.b32.cont [4/16] %v6993, 128
    %7071 = vxpose.xlu0.b32.cont [5/16] %v6996, 128
    %7072 = vxpose.xlu0.b32.cont [6/16] %v6999, 128
    %7073 = vxpose.xlu0.b32.cont [7/16] %v7002, 128
    %7074 = vxpose.xlu0.b32.cont [8/16] 0.0, 128
    %7075 = vxpose.xlu0.b32.cont [9/16] 0.0, 128
    %7076 = vxpose.xlu0.b32.cont [10/16] 0.0, 128
    %7077 = vxpose.xlu0.b32.cont [11/16] 0.0, 128
    %7078 = vxpose.xlu0.b32.cont [12/16] 0.0, 128
    %7079 = vxpose.xlu0.b32.cont [13/16] 0.0, 128
    %7080 = vxpose.xlu0.b32.cont [14/16] 0.0, 128
    %7081 = vxpose.xlu0.b32.cont [15/16] 0.0, 128
    %7082 = vxpose.xlu0.b32.end [16/16] 0.0, 128
    %v7083 = vpop.trf.xlu0
    %v7084 = vpop.trf.xlu0
    %v7085 = vpop.trf.xlu0
    %v7086 = vpop.trf.xlu0
    %v7087 = vpop.trf.xlu0
    %v7088 = vpop.trf.xlu0
    %v7089 = vpop.trf.xlu0
    %v7090 = vpop.trf.xlu0
    %v7091 = vpop.trf.xlu0
    %v7092 = vpop.trf.xlu0
    %v7093 = vpop.trf.xlu0
    %v7094 = vpop.trf.xlu0
    %v7095 = vpop.trf.xlu0
    %v7096 = vpop.trf.xlu0
    %v7097 = vpop.trf.xlu0
    %v7098 = vpop.trf.xlu0
    %vm7099 = vcmask 400384
    %7100 = vst.msk [vmem:[%s8] sm:$0xff] %vm7099, %v7019
    %7101 = vst.msk [vmem:[%s8 + $0x8] sm:$0xff] %vm7099, %v7020
    %7102 = vst.msk [vmem:[%s8 + $0x10] sm:$0xff] %vm7099, %v7021
    %7103 = vst.msk [vmem:[%s8 + $0x18] sm:$0xff] %vm7099, %v7022
    %7104 = vst.msk [vmem:[%s8 + $0x20] sm:$0xff] %vm7099, %v7023
    %7105 = vst.msk [vmem:[%s8 + $0x28] sm:$0xff] %vm7099, %v7024
    %7106 = vst.msk [vmem:[%s8 + $0x30] sm:$0xff] %vm7099, %v7025
    %7107 = vst.msk [vmem:[%s8 + $0x38] sm:$0xff] %vm7099, %v7026
    %7108 = vst.msk [vmem:[%s8 + $0x40] sm:$0xff] %vm7099, %v7027
    %7109 = vst.msk [vmem:[%s8 + $0x48] sm:$0xff] %vm7099, %v7028
    %7110 = vst.msk [vmem:[%s8 + $0x50] sm:$0xff] %vm7099, %v7029
    %7111 = vst.msk [vmem:[%s8 + $0x58] sm:$0xff] %vm7099, %v7030
    %7112 = vst.msk [vmem:[%s8 + $0x60] sm:$0xff] %vm7099, %v7031
    %7113 = vst.msk [vmem:[%s8 + $0x68] sm:$0xff] %vm7099, %v7032
    %7114 = vst.msk [vmem:[%s8 + $0x70] sm:$0xff] %vm7099, %v7033
    %7115 = vst.msk [vmem:[%s8 + $0x78] sm:$0xff] %vm7099, %v7034
    %7116 = vst.msk [vmem:[%s8 + $0x80] sm:$0xff] %vm7099, %v7051
    %7117 = vst.msk [vmem:[%s8 + $0x88] sm:$0xff] %vm7099, %v7052
    %7118 = vst.msk [vmem:[%s8 + $0x90] sm:$0xff] %vm7099, %v7053
    %7119 = vst.msk [vmem:[%s8 + $0x98] sm:$0xff] %vm7099, %v7054
    %7120 = vst.msk [vmem:[%s8 + $0xa0] sm:$0xff] %vm7099, %v7055
    %7121 = vst.msk [vmem:[%s8 + $0xa8] sm:$0xff] %vm7099, %v7056
    %7122 = vst.msk [vmem:[%s8 + $0xb0] sm:$0xff] %vm7099, %v7057
    %7123 = vst.msk [vmem:[%s8 + $0xb8] sm:$0xff] %vm7099, %v7058
    %7124 = vst.msk [vmem:[%s8 + $0xc0] sm:$0xff] %vm7099, %v7059
    %7125 = vst.msk [vmem:[%s8 + $0xc8] sm:$0xff] %vm7099, %v7060
    %7126 = vst.msk [vmem:[%s8 + $0xd0] sm:$0xff] %vm7099, %v7061
    %7127 = vst.msk [vmem:[%s8 + $0xd8] sm:$0xff] %vm7099, %v7062
    %7128 = vst.msk [vmem:[%s8 + $0xe0] sm:$0xff] %vm7099, %v7063
    %7129 = vst.msk [vmem:[%s8 + $0xe8] sm:$0xff] %vm7099, %v7064
    %7130 = vst.msk [vmem:[%s8 + $0xf0] sm:$0xff] %vm7099, %v7065
    %7131 = vst.msk [vmem:[%s8 + $0xf8] sm:$0xff] %vm7099, %v7066
    %7132 = vst.msk [vmem:[%s8 + $0x100] sm:$0xff] %vm7099, %v7083
    %7133 = vst.msk [vmem:[%s8 + $0x108] sm:$0xff] %vm7099, %v7084
    %7134 = vst.msk [vmem:[%s8 + $0x110] sm:$0xff] %vm7099, %v7085
    %7135 = vst.msk [vmem:[%s8 + $0x118] sm:$0xff] %vm7099, %v7086
    %7136 = vst.msk [vmem:[%s8 + $0x120] sm:$0xff] %vm7099, %v7087
    %7137 = vst.msk [vmem:[%s8 + $0x128] sm:$0xff] %vm7099, %v7088
    %7138 = vst.msk [vmem:[%s8 + $0x130] sm:$0xff] %vm7099, %v7089
    %7139 = vst.msk [vmem:[%s8 + $0x138] sm:$0xff] %vm7099, %v7090
    %7140 = vst.msk [vmem:[%s8 + $0x140] sm:$0xff] %vm7099, %v7091
    %7141 = vst.msk [vmem:[%s8 + $0x148] sm:$0xff] %vm7099, %v7092
    %7142 = vst.msk [vmem:[%s8 + $0x150] sm:$0xff] %vm7099, %v7093
    // Predicated region
    $region68: #{se_conv_bn.1} parent=1 // pred_check
      _
    $region69: #{se_conv_bn.1} parent=1 // pred_check_branch
      %7144 = sbr.rel (0) target = $region71
    $region70: #{se_conv_bn.1} parent=1 // pred_region
      _
    $region71: #{se_conv_bn.1} parent=1 // pred_fallthru
      _
    // Predicated region
    $region72: #{se_conv_bn.1} parent=1 // pred_check
      _
    $region73: #{se_conv_bn.1} parent=1 // pred_check_branch
      %7146 = sbr.rel (0) target = $region75
    $region74: #{se_conv_bn.1} parent=1 // pred_region
      _
    $region75: #{se_conv_bn.1} parent=1 // pred_fallthru
      _
    %7147 = vsyncpa [#allocation6], 1
  %7148 = vsyncmov [#allocation4]
  %s7149 = vpop.sfrf %7148
  %p7150 = scmp.eq.s32.totalorder %s7149, 0
  %p7151 = pneg %p7150
  %7153 = shalt.err (%p7151)
  %s7154 = scalar_lea.sflag [#allocation4], 1
  %7155 = vsyncmov %s7154
  %s7156 = vpop.sfrf %7155
  %p7157 = scmp.eq.s32.totalorder %s7156, 0
  %p7158 = pneg %p7157
  %7160 = shalt.err (%p7158)

</llo_original>
